<compile_context>
chip_gen: v6e
topology: v6e:2x2x1
jax: 0.10.0
libtpu: 0.0.40
codegen_flags: <defaults>
</compile_context>

<pallas_src>
import math

import numpy as np

import jax
import jax.numpy as jnp
from jax.experimental import pallas as pl
from jax.experimental.pallas import tpu as pltpu


# ------------------------------ geometry ----------------------------------- #
_K = 5                                  # conv kernel size
_H = 32                                 # input H = W (CIFAR-10)
_N1 = 28 * 32                           # conv1 wide-grid lanes: oy in [0,28), ox in [0,32)
_P1 = 14                                # pool-1 output spatial size
_L1 = 2 * (_P1 - 1) * 32 + 2 * (_P1 - 1) + 1   # 859 lanes holding pool-1 bases
_W2 = 14                                # conv2 input row stride (14x14 grid)
_N2IN = 200                             # conv2 dense-input lanes (196 real + 4 zero pad)
_N2 = 10 * 14                           # conv2 wide-grid lanes: oy in [0,10), ox in [0,14)
_P2 = 5                                 # pool-2 output spatial size
_L2 = 2 * (_P2 - 1) * _W2 + 2 * (_P2 - 1) + 1  # 121 lanes holding pool-2 bases


def _pick_batch_tile(batch):
    for t in (8, 4, 2, 1):
        if batch % t == 0:
            return t
    return 1


def _pool_downsample_matrix(pool_hw, in_row_stride, in_lanes, out_row_stride, out_lanes):
    """Constant 0/1 gather: lane 2*y*in_stride + 2*x  ->  lane y*out_stride + x."""
    g = np.zeros((in_lanes, out_lanes), np.float32)
    for y in range(pool_hw):
        for x in range(pool_hw):
            g[2 * y * in_row_stride + 2 * x, y * out_row_stride + x] = 1.0
    return jnp.asarray(g, dtype=jnp.bfloat16)


# ------------------------------ fused kernel ------------------------------- #

def _cifar10_fused_kernel(x5_ref, w1_ref, b1_ref, s1_ref, w2_ref, b2_ref,
                          s2_ref, w3_ref, b3_ref, w4_ref, b4_ref,
                          w5_ref, b5_ref, o_ref):
    f32 = jnp.float32
    bf16 = jnp.bfloat16
    tb = x5_ref.shape[0]

    # Hoisted weight loads: everything stays resident across the image loop.
    w1 = [w1_ref[d] for d in range(_K)]            # 5 x (6, 15)    bf16
    b1 = b1_ref[...]                               # (6, 1)         f32
    s1 = s1_ref[...]                               # (859, 200)     bf16
    w2 = [w2_ref[k] for k in range(_K * _K)]       # 25 x (16, 6)   bf16
    b2 = b2_ref[...]                               # (16, 1)        f32
    s2 = s2_ref[...]                               # (121, 25)      bf16
    w3 = [w3_ref[c] for c in range(16)]            # 16 x (25, 120) bf16  (fc1)
    b3 = b3_ref[...]                               # (1, 120)       f32
    w4 = w4_ref[...]                               # (120, 84)      bf16  (fc2)
    b4 = b4_ref[...]                               # (1, 84)        f32
    w5 = w5_ref[...]                               # (84, 10)       bf16  (fc3)
    b5 = b5_ref[...]                               # (1, 10)        f32

    for i in range(tb):                            # static unroll over the batch tile
        x5 = x5_ref[i]                             # (15, 1024) f32, rows = (c, dy)

        # conv1 + bias + ReLU on the 28x32 wide grid (lane p = oy*32 + ox).
        y1 = jnp.dot(w1[0], x5[:, 0:_N1].astype(bf16), preferred_element_type=f32)
        for d in range(1, _K):
            y1 = y1 + jnp.dot(w1[d], x5[:, d:d + _N1].astype(bf16),
                              preferred_element_type=f32)
        y1 = jnp.maximum(y1 + b1, 0.0)             # (6, 896)

        # 2x2/2 max-pool: pooled value for (py,px) lands at lane 2*py*32 + 2*px.
        p1 = jnp.maximum(
            jnp.maximum(y1[:, 0:_L1], y1[:, 1:1 + _L1]),
            jnp.maximum(y1[:, _H:_H + _L1], y1[:, _H + 1:_H + 1 + _L1]))

        # Stride-2 downsample onto the dense 14x14 grid (gather-as-matmul).
        xp2 = jnp.dot(p1.astype(bf16), s1, preferred_element_type=f32)   # (6, 200)

        # conv2 + bias + ReLU on the 10x14 wide grid (lane p = oy*14 + ox).
        y2 = None
        for k in range(_K * _K):
            dy, dx = k // _K, k % _K
            s = dy * _W2 + dx
            t = jnp.dot(w2[k], xp2[:, s:s + _N2].astype(bf16),
                        preferred_element_type=f32)
            y2 = t if y2 is None else y2 + t
        y2 = jnp.maximum(y2 + b2, 0.0)             # (16, 140)

        # Second 2x2/2 max-pool (bases at lanes 2*py*14 + 2*px).
        p2 = jnp.maximum(
            jnp.maximum(y2[:, 0:_L2], y2[:, 1:1 + _L2]),
            jnp.maximum(y2[:, _W2:_W2 + _L2], y2[:, _W2 + 1:_W2 + 1 + _L2]))

        # Downsample-gather to the 5x5 grid: (16, 25), columns = py*5 + px.
        p2g = jnp.dot(p2.astype(bf16), s2, preferred_element_type=f32)

        # fc1: torch.flatten(NCHW) order is (c, py, px); the flatten is folded
        # into per-channel (1,25)@(25,120) matmuls summed over channels.
        f1 = jnp.dot(p2g[0:1, :].astype(bf16), w3[0], preferred_element_type=f32)
        for c in range(1, 16):
            f1 = f1 + jnp.dot(p2g[c:c + 1, :].astype(bf16), w3[c],
                              preferred_element_type=f32)
        f1 = jnp.maximum(f1 + b3, 0.0)             # (1, 120)

        f2 = jnp.maximum(
            jnp.dot(f1.astype(bf16), w4, preferred_element_type=f32) + b4, 0.0)
        f3 = jnp.dot(f2.astype(bf16), w5, preferred_element_type=f32) + b5   # (1, 10)

        # Numerically stable log_softmax.
        m = jnp.max(f3, axis=-1, keepdims=True)
        z = f3 - m
        lse = jnp.log(jnp.sum(jnp.exp(z), axis=-1, keepdims=True))
        o_ref[i] = (z - lse).astype(o_ref.dtype)


# --------------------------------- wrapper ---------------------------------- #

def _full_spec(arr):
    n = arr.ndim
    return pl.BlockSpec(arr.shape, lambda i: (0,) * n)


def cifar10_net_simple_forward(x_nchw, params):
    batch = x_nchw.shape[0]
    tb = _pick_batch_tile(batch)
    bf = jnp.bfloat16
    x = x_nchw.astype(jnp.float32)

    # 5x "dy-stacked" input: row (c*5 + dy) = channel c shifted up by dy rows
    # (zero padded), flattened to lanes y*32 + x.  Conv1 then runs as 5
    # shifted-slice GEMMs with K = 15 (no 25x im2col expansion in HBM).
    shifts = [jnp.pad(x[:, :, dy:, :], ((0, 0), (0, 0), (0, dy), (0, 0)))
              for dy in range(_K)]
    x5 = jnp.stack(shifts, axis=2).reshape(batch, 3 * _K, _H * _H)   # (B, 15, 1024)

    # Conv weights re-laid-out for the shifted-slice GEMMs.
    w1 = jnp.transpose(params["conv1_w"], (3, 0, 1, 2)).reshape(_K, 6, 3 * _K)   # [dx, o, c*5+dy]
    w2 = jnp.transpose(params["conv2_w"], (2, 3, 0, 1)).reshape(_K * _K, 16, 6)  # [dy*5+dx, o, c]
    b1 = params["conv1_b"].reshape(6, 1).astype(jnp.float32)
    b2 = params["conv2_b"].reshape(16, 1).astype(jnp.float32)

    # Constant 0/1 gather matrices for the stride-2 pool downsamples.
    s1 = _pool_downsample_matrix(_P1, _H, _L1, _W2, _N2IN)        # (859, 200)
    s2 = _pool_downsample_matrix(_P2, _W2, _L2, _P2, _P2 * _P2)   # (121, 25)

    # fc weights: fc1 reshaped so the NCHW flatten becomes per-channel GEMMs.
    w3 = params["fc1_w"].reshape(120, 16, 25).transpose(1, 2, 0)  # (16, 25, 120)
    b3 = params["fc1_b"].reshape(1, 120).astype(jnp.float32)
    w4 = params["fc2_w"].T                                        # (120, 84)
    b4 = params["fc2_b"].reshape(1, 84).astype(jnp.float32)
    w5 = params["fc3_w"].T                                        # (84, 10)
    b5 = params["fc3_b"].reshape(1, 10).astype(jnp.float32)

    args = (x5, w1.astype(bf), b1, s1, w2.astype(bf), b2, s2,
            w3.astype(bf), b3, w4.astype(bf), b4, w5.astype(bf), b5)

    in_specs = [pl.BlockSpec((tb, 3 * _K, _H * _H), lambda i: (i, 0, 0))]
    in_specs += [_full_spec(a) for a in args[1:]]

    out = pl.pallas_call(
        _cifar10_fused_kernel,
        out_shape=jax.ShapeDtypeStruct((batch, 1, 10), jnp.float32),
        grid=(batch // tb,),
        in_specs=in_specs,
        out_specs=pl.BlockSpec((tb, 1, 10), lambda i: (i, 0, 0)),
        compiler_params=pltpu.CompilerParams(
            dimension_semantics=("parallel",)),
    )(*args)
    return out.reshape(batch, 10)


# -------------------------- pure-JAX f32 reference -------------------------- #

def _reference_forward(x, params):
    batch = x.shape[0]

    def conv(inp, w, b):                      # inp (B,C,H,W), w (O,C,5,5)
        o_ch, c_ch, k, _ = w.shape
        h, wd = inp.shape[2], inp.shape[3]
        oh, ow = h - k + 1, wd - k + 1
        cols = [inp[:, :, dy:dy + oh, dx:dx + ow] for dy in range(k) for dx in range(k)]
        cols = jnp.stack(cols, axis=2)                                   # (B,C,25,OH,OW)
        cols = cols.transpose(0, 3, 4, 1, 2).reshape(batch * oh * ow, c_ch * k * k)
        y = cols @ w.reshape(o_ch, c_ch * k * k).T + b
        return y.reshape(batch, oh, ow, o_ch).transpose(0, 3, 1, 2)

    def pool(inp):
        b_, c, h, w = inp.shape
        return inp.reshape(b_, c, h // 2, 2, w // 2, 2).max(axis=(3, 5))

    y = pool(jax.nn.relu(conv(x, params["conv1_w"], params["conv1_b"])))
    y = pool(jax.nn.relu(conv(y, params["conv2_w"], params["conv2_b"])))
    y = y.reshape(batch, -1)                     # == torch.flatten(x, 1) on NCHW
    y = jax.nn.relu(y @ params["fc1_w"].T + params["fc1_b"])
    y = jax.nn.relu(y @ params["fc2_w"].T + params["fc2_b"])
    y = y @ params["fc3_w"].T + params["fc3_b"]
    return jax.nn.log_softmax(y, axis=-1)


# -------------------------------- param setup ------------------------------- #

def init_params(key):
    """Deterministic PyTorch-default-style init: U(-1/sqrt(fan_in), 1/sqrt(fan_in))."""
    def u(k, shape, fan_in):
        bound = 1.0 / math.sqrt(fan_in)
        return jax.random.uniform(k, shape, jnp.float32, -bound, bound)

    ks = jax.random.split(key, 10)
    return {
        "conv1_w": u(ks[0], (6, 3, 5, 5), 3 * 5 * 5),
        "conv1_b": u(ks[1], (6,), 3 * 5 * 5),
        "conv2_w": u(ks[2], (16, 6, 5, 5), 6 * 5 * 5),
        "conv2_b": u(ks[3], (16,), 6 * 5 * 5),
        "fc1_w": u(ks[4], (120, 400), 400),
        "fc1_b": u(ks[5], (120,), 400),
        "fc2_w": u(ks[6], (84, 120), 120),
        "fc2_b": u(ks[7], (84,), 120),
        "fc3_w": u(ks[8], (10, 84), 84),
        "fc3_b": u(ks[9], (10,), 84),
    }


if __name__ == "__main__":
    key = jax.random.PRNGKey(0)
    k_x, k_p = jax.random.split(key)
    # fc1 expects 16*5*5 features, which pins the input to 32x32 (CIFAR-10).
    x = jax.random.normal(k_x, (2, 3, 32, 32), dtype=jnp.float32)
    params = init_params(k_p)

    fwd = jax.jit(cifar10_net_simple_forward)
    out = jax.block_until_ready(fwd(x, params))

    assert out.shape == (2, 10), out.shape
    assert bool(jnp.all(jnp.isfinite(out)))
    # log_softmax rows must exponentiate-sum to ~1
    assert bool(jnp.allclose(jnp.sum(jnp.exp(out), axis=1), 1.0, atol=1e-4))
    # matches the f32 reference up to bf16 matmul-input rounding
    ref = _reference_forward(x, params)
    err = float(jnp.max(jnp.abs(out - ref)))
    assert err < 2e-1, f"max abs diff vs reference: {err}"
    print("KERNEL_OK")
</pallas_src>

<mosaic_0001>
module attributes {stable_mosaic.version = 11 : i64} {
  func.func @_cifar10_fused_kernel(%arg0: i32, %arg1: memref<2x15x1024xf32, #tpu.memory_space<vmem>>, %arg2: memref<5x6x15xbf16, #tpu.memory_space<vmem>>, %arg3: memref<6x1xf32, #tpu.memory_space<vmem>>, %arg4: memref<859x200xbf16, #tpu.memory_space<vmem>>, %arg5: memref<25x16x6xbf16, #tpu.memory_space<vmem>>, %arg6: memref<16x1xf32, #tpu.memory_space<vmem>>, %arg7: memref<121x25xbf16, #tpu.memory_space<vmem>>, %arg8: memref<16x25x120xbf16, #tpu.memory_space<vmem>>, %arg9: memref<1x120xf32, #tpu.memory_space<vmem>>, %arg10: memref<120x84xbf16, #tpu.memory_space<vmem>>, %arg11: memref<1x84xf32, #tpu.memory_space<vmem>>, %arg12: memref<84x10xbf16, #tpu.memory_space<vmem>>, %arg13: memref<1x10xf32, #tpu.memory_space<vmem>>, %arg14: memref<2x1x10xf32, #tpu.memory_space<vmem>>) attributes {dimension_semantics = [#tpu.dimension_semantics<parallel>], iteration_bounds = array<i64: 1>, scalar_prefetch = 0 : i64, scratch_operands = 0 : i64, tpu.core_type = #tpu.core_type<tc>, window_params = [{transform_indices = @transform_0, window_bounds = array<i64: 2, 15, 1024>}, {pipeline_mode = #tpu.pipeline_mode<synchronous>, transform_indices = @transform_1, window_bounds = array<i64: 5, 6, 15>}, {pipeline_mode = #tpu.pipeline_mode<synchronous>, transform_indices = @transform_2, window_bounds = array<i64: 6, 1>}, {pipeline_mode = #tpu.pipeline_mode<synchronous>, transform_indices = @transform_3, window_bounds = array<i64: 859, 200>}, {pipeline_mode = #tpu.pipeline_mode<synchronous>, transform_indices = @transform_4, window_bounds = array<i64: 25, 16, 6>}, {pipeline_mode = #tpu.pipeline_mode<synchronous>, transform_indices = @transform_5, window_bounds = array<i64: 16, 1>}, {pipeline_mode = #tpu.pipeline_mode<synchronous>, transform_indices = @transform_6, window_bounds = array<i64: 121, 25>}, {pipeline_mode = #tpu.pipeline_mode<synchronous>, transform_indices = @transform_7, window_bounds = array<i64: 16, 25, 120>}, {pipeline_mode = #tpu.pipeline_mode<synchronous>, transform_indices = @transform_8, window_bounds = array<i64: 1, 120>}, {pipeline_mode = #tpu.pipeline_mode<synchronous>, transform_indices = @transform_9, window_bounds = array<i64: 120, 84>}, {pipeline_mode = #tpu.pipeline_mode<synchronous>, transform_indices = @transform_10, window_bounds = array<i64: 1, 84>}, {pipeline_mode = #tpu.pipeline_mode<synchronous>, transform_indices = @transform_11, window_bounds = array<i64: 84, 10>}, {pipeline_mode = #tpu.pipeline_mode<synchronous>, transform_indices = @transform_12, window_bounds = array<i64: 1, 10>}, {transform_indices = @transform_13, window_bounds = array<i64: 2, 1, 10>}]} {
    %c0 = arith.constant 0 : index
    %c0_0 = arith.constant 0 : index
    %c0_1 = arith.constant 0 : index
    %0 = vector.load %arg2[%c0, %c0_0, %c0_1] : memref<5x6x15xbf16, #tpu.memory_space<vmem>>, vector<1x6x15xbf16>
    %1 = vector.shape_cast %0 : vector<1x6x15xbf16> to vector<6x15xbf16>
    %c1 = arith.constant 1 : index
    %c0_2 = arith.constant 0 : index
    %c0_3 = arith.constant 0 : index
    %2 = vector.load %arg2[%c1, %c0_2, %c0_3] : memref<5x6x15xbf16, #tpu.memory_space<vmem>>, vector<1x6x15xbf16>
    %3 = vector.shape_cast %2 : vector<1x6x15xbf16> to vector<6x15xbf16>
    %c2 = arith.constant 2 : index
    %c0_4 = arith.constant 0 : index
    %c0_5 = arith.constant 0 : index
    %4 = vector.load %arg2[%c2, %c0_4, %c0_5] : memref<5x6x15xbf16, #tpu.memory_space<vmem>>, vector<1x6x15xbf16>
    %5 = vector.shape_cast %4 : vector<1x6x15xbf16> to vector<6x15xbf16>
    %c3 = arith.constant 3 : index
    %c0_6 = arith.constant 0 : index
    %c0_7 = arith.constant 0 : index
    %6 = vector.load %arg2[%c3, %c0_6, %c0_7] : memref<5x6x15xbf16, #tpu.memory_space<vmem>>, vector<1x6x15xbf16>
    %7 = vector.shape_cast %6 : vector<1x6x15xbf16> to vector<6x15xbf16>
    %c4 = arith.constant 4 : index
    %c0_8 = arith.constant 0 : index
    %c0_9 = arith.constant 0 : index
    %8 = vector.load %arg2[%c4, %c0_8, %c0_9] : memref<5x6x15xbf16, #tpu.memory_space<vmem>>, vector<1x6x15xbf16>
    %9 = vector.shape_cast %8 : vector<1x6x15xbf16> to vector<6x15xbf16>
    %c0_10 = arith.constant 0 : index
    %c0_11 = arith.constant 0 : index
    %10 = vector.load %arg3[%c0_10, %c0_11] : memref<6x1xf32, #tpu.memory_space<vmem>>, vector<6x1xf32>
    %c0_12 = arith.constant 0 : index
    %c0_13 = arith.constant 0 : index
    %11 = vector.load %arg4[%c0_12, %c0_13] : memref<859x200xbf16, #tpu.memory_space<vmem>>, vector<859x200xbf16>
    %c0_14 = arith.constant 0 : index
    %c0_15 = arith.constant 0 : index
    %c0_16 = arith.constant 0 : index
    %12 = vector.load %arg5[%c0_14, %c0_15, %c0_16] : memref<25x16x6xbf16, #tpu.memory_space<vmem>>, vector<1x16x6xbf16>
    %13 = vector.shape_cast %12 : vector<1x16x6xbf16> to vector<16x6xbf16>
    %c1_17 = arith.constant 1 : index
    %c0_18 = arith.constant 0 : index
    %c0_19 = arith.constant 0 : index
    %14 = vector.load %arg5[%c1_17, %c0_18, %c0_19] : memref<25x16x6xbf16, #tpu.memory_space<vmem>>, vector<1x16x6xbf16>
    %15 = vector.shape_cast %14 : vector<1x16x6xbf16> to vector<16x6xbf16>
    %c2_20 = arith.constant 2 : index
    %c0_21 = arith.constant 0 : index
    %c0_22 = arith.constant 0 : index
    %16 = vector.load %arg5[%c2_20, %c0_21, %c0_22] : memref<25x16x6xbf16, #tpu.memory_space<vmem>>, vector<1x16x6xbf16>
    %17 = vector.shape_cast %16 : vector<1x16x6xbf16> to vector<16x6xbf16>
    %c3_23 = arith.constant 3 : index
    %c0_24 = arith.constant 0 : index
    %c0_25 = arith.constant 0 : index
    %18 = vector.load %arg5[%c3_23, %c0_24, %c0_25] : memref<25x16x6xbf16, #tpu.memory_space<vmem>>, vector<1x16x6xbf16>
    %19 = vector.shape_cast %18 : vector<1x16x6xbf16> to vector<16x6xbf16>
    %c4_26 = arith.constant 4 : index
    %c0_27 = arith.constant 0 : index
    %c0_28 = arith.constant 0 : index
    %20 = vector.load %arg5[%c4_26, %c0_27, %c0_28] : memref<25x16x6xbf16, #tpu.memory_space<vmem>>, vector<1x16x6xbf16>
    %21 = vector.shape_cast %20 : vector<1x16x6xbf16> to vector<16x6xbf16>
    %c5 = arith.constant 5 : index
    %c0_29 = arith.constant 0 : index
    %c0_30 = arith.constant 0 : index
    %22 = vector.load %arg5[%c5, %c0_29, %c0_30] : memref<25x16x6xbf16, #tpu.memory_space<vmem>>, vector<1x16x6xbf16>
    %23 = vector.shape_cast %22 : vector<1x16x6xbf16> to vector<16x6xbf16>
    %c6 = arith.constant 6 : index
    %c0_31 = arith.constant 0 : index
    %c0_32 = arith.constant 0 : index
    %24 = vector.load %arg5[%c6, %c0_31, %c0_32] : memref<25x16x6xbf16, #tpu.memory_space<vmem>>, vector<1x16x6xbf16>
    %25 = vector.shape_cast %24 : vector<1x16x6xbf16> to vector<16x6xbf16>
    %c7 = arith.constant 7 : index
    %c0_33 = arith.constant 0 : index
    %c0_34 = arith.constant 0 : index
    %26 = vector.load %arg5[%c7, %c0_33, %c0_34] : memref<25x16x6xbf16, #tpu.memory_space<vmem>>, vector<1x16x6xbf16>
    %27 = vector.shape_cast %26 : vector<1x16x6xbf16> to vector<16x6xbf16>
    %c8 = arith.constant 8 : index
    %c0_35 = arith.constant 0 : index
    %c0_36 = arith.constant 0 : index
    %28 = vector.load %arg5[%c8, %c0_35, %c0_36] : memref<25x16x6xbf16, #tpu.memory_space<vmem>>, vector<1x16x6xbf16>
    %29 = vector.shape_cast %28 : vector<1x16x6xbf16> to vector<16x6xbf16>
    %c9 = arith.constant 9 : index
    %c0_37 = arith.constant 0 : index
    %c0_38 = arith.constant 0 : index
    %30 = vector.load %arg5[%c9, %c0_37, %c0_38] : memref<25x16x6xbf16, #tpu.memory_space<vmem>>, vector<1x16x6xbf16>
    %31 = vector.shape_cast %30 : vector<1x16x6xbf16> to vector<16x6xbf16>
    %c10 = arith.constant 10 : index
    %c0_39 = arith.constant 0 : index
    %c0_40 = arith.constant 0 : index
    %32 = vector.load %arg5[%c10, %c0_39, %c0_40] : memref<25x16x6xbf16, #tpu.memory_space<vmem>>, vector<1x16x6xbf16>
    %33 = vector.shape_cast %32 : vector<1x16x6xbf16> to vector<16x6xbf16>
    %c11 = arith.constant 11 : index
    %c0_41 = arith.constant 0 : index
    %c0_42 = arith.constant 0 : index
    %34 = vector.load %arg5[%c11, %c0_41, %c0_42] : memref<25x16x6xbf16, #tpu.memory_space<vmem>>, vector<1x16x6xbf16>
    %35 = vector.shape_cast %34 : vector<1x16x6xbf16> to vector<16x6xbf16>
    %c12 = arith.constant 12 : index
    %c0_43 = arith.constant 0 : index
    %c0_44 = arith.constant 0 : index
    %36 = vector.load %arg5[%c12, %c0_43, %c0_44] : memref<25x16x6xbf16, #tpu.memory_space<vmem>>, vector<1x16x6xbf16>
    %37 = vector.shape_cast %36 : vector<1x16x6xbf16> to vector<16x6xbf16>
    %c13 = arith.constant 13 : index
    %c0_45 = arith.constant 0 : index
    %c0_46 = arith.constant 0 : index
    %38 = vector.load %arg5[%c13, %c0_45, %c0_46] : memref<25x16x6xbf16, #tpu.memory_space<vmem>>, vector<1x16x6xbf16>
    %39 = vector.shape_cast %38 : vector<1x16x6xbf16> to vector<16x6xbf16>
    %c14 = arith.constant 14 : index
    %c0_47 = arith.constant 0 : index
    %c0_48 = arith.constant 0 : index
    %40 = vector.load %arg5[%c14, %c0_47, %c0_48] : memref<25x16x6xbf16, #tpu.memory_space<vmem>>, vector<1x16x6xbf16>
    %41 = vector.shape_cast %40 : vector<1x16x6xbf16> to vector<16x6xbf16>
    %c15 = arith.constant 15 : index
    %c0_49 = arith.constant 0 : index
    %c0_50 = arith.constant 0 : index
    %42 = vector.load %arg5[%c15, %c0_49, %c0_50] : memref<25x16x6xbf16, #tpu.memory_space<vmem>>, vector<1x16x6xbf16>
    %43 = vector.shape_cast %42 : vector<1x16x6xbf16> to vector<16x6xbf16>
    %c16 = arith.constant 16 : index
    %c0_51 = arith.constant 0 : index
    %c0_52 = arith.constant 0 : index
    %44 = vector.load %arg5[%c16, %c0_51, %c0_52] : memref<25x16x6xbf16, #tpu.memory_space<vmem>>, vector<1x16x6xbf16>
    %45 = vector.shape_cast %44 : vector<1x16x6xbf16> to vector<16x6xbf16>
    %c17 = arith.constant 17 : index
    %c0_53 = arith.constant 0 : index
    %c0_54 = arith.constant 0 : index
    %46 = vector.load %arg5[%c17, %c0_53, %c0_54] : memref<25x16x6xbf16, #tpu.memory_space<vmem>>, vector<1x16x6xbf16>
    %47 = vector.shape_cast %46 : vector<1x16x6xbf16> to vector<16x6xbf16>
    %c18 = arith.constant 18 : index
    %c0_55 = arith.constant 0 : index
    %c0_56 = arith.constant 0 : index
    %48 = vector.load %arg5[%c18, %c0_55, %c0_56] : memref<25x16x6xbf16, #tpu.memory_space<vmem>>, vector<1x16x6xbf16>
    %49 = vector.shape_cast %48 : vector<1x16x6xbf16> to vector<16x6xbf16>
    %c19 = arith.constant 19 : index
    %c0_57 = arith.constant 0 : index
    %c0_58 = arith.constant 0 : index
    %50 = vector.load %arg5[%c19, %c0_57, %c0_58] : memref<25x16x6xbf16, #tpu.memory_space<vmem>>, vector<1x16x6xbf16>
    %51 = vector.shape_cast %50 : vector<1x16x6xbf16> to vector<16x6xbf16>
    %c20 = arith.constant 20 : index
    %c0_59 = arith.constant 0 : index
    %c0_60 = arith.constant 0 : index
    %52 = vector.load %arg5[%c20, %c0_59, %c0_60] : memref<25x16x6xbf16, #tpu.memory_space<vmem>>, vector<1x16x6xbf16>
    %53 = vector.shape_cast %52 : vector<1x16x6xbf16> to vector<16x6xbf16>
    %c21 = arith.constant 21 : index
    %c0_61 = arith.constant 0 : index
    %c0_62 = arith.constant 0 : index
    %54 = vector.load %arg5[%c21, %c0_61, %c0_62] : memref<25x16x6xbf16, #tpu.memory_space<vmem>>, vector<1x16x6xbf16>
    %55 = vector.shape_cast %54 : vector<1x16x6xbf16> to vector<16x6xbf16>
    %c22 = arith.constant 22 : index
    %c0_63 = arith.constant 0 : index
    %c0_64 = arith.constant 0 : index
    %56 = vector.load %arg5[%c22, %c0_63, %c0_64] : memref<25x16x6xbf16, #tpu.memory_space<vmem>>, vector<1x16x6xbf16>
    %57 = vector.shape_cast %56 : vector<1x16x6xbf16> to vector<16x6xbf16>
    %c23 = arith.constant 23 : index
    %c0_65 = arith.constant 0 : index
    %c0_66 = arith.constant 0 : index
    %58 = vector.load %arg5[%c23, %c0_65, %c0_66] : memref<25x16x6xbf16, #tpu.memory_space<vmem>>, vector<1x16x6xbf16>
    %59 = vector.shape_cast %58 : vector<1x16x6xbf16> to vector<16x6xbf16>
    %c24 = arith.constant 24 : index
    %c0_67 = arith.constant 0 : index
    %c0_68 = arith.constant 0 : index
    %60 = vector.load %arg5[%c24, %c0_67, %c0_68] : memref<25x16x6xbf16, #tpu.memory_space<vmem>>, vector<1x16x6xbf16>
    %61 = vector.shape_cast %60 : vector<1x16x6xbf16> to vector<16x6xbf16>
    %c0_69 = arith.constant 0 : index
    %c0_70 = arith.constant 0 : index
    %62 = vector.load %arg6[%c0_69, %c0_70] : memref<16x1xf32, #tpu.memory_space<vmem>>, vector<16x1xf32>
    %c0_71 = arith.constant 0 : index
    %c0_72 = arith.constant 0 : index
    %63 = vector.load %arg7[%c0_71, %c0_72] : memref<121x25xbf16, #tpu.memory_space<vmem>>, vector<121x25xbf16>
    %c0_73 = arith.constant 0 : index
    %c0_74 = arith.constant 0 : index
    %c0_75 = arith.constant 0 : index
    %64 = vector.load %arg8[%c0_73, %c0_74, %c0_75] : memref<16x25x120xbf16, #tpu.memory_space<vmem>>, vector<1x25x120xbf16>
    %65 = vector.shape_cast %64 : vector<1x25x120xbf16> to vector<25x120xbf16>
    %c1_76 = arith.constant 1 : index
    %c0_77 = arith.constant 0 : index
    %c0_78 = arith.constant 0 : index
    %66 = vector.load %arg8[%c1_76, %c0_77, %c0_78] : memref<16x25x120xbf16, #tpu.memory_space<vmem>>, vector<1x25x120xbf16>
    %67 = vector.shape_cast %66 : vector<1x25x120xbf16> to vector<25x120xbf16>
    %c2_79 = arith.constant 2 : index
    %c0_80 = arith.constant 0 : index
    %c0_81 = arith.constant 0 : index
    %68 = vector.load %arg8[%c2_79, %c0_80, %c0_81] : memref<16x25x120xbf16, #tpu.memory_space<vmem>>, vector<1x25x120xbf16>
    %69 = vector.shape_cast %68 : vector<1x25x120xbf16> to vector<25x120xbf16>
    %c3_82 = arith.constant 3 : index
    %c0_83 = arith.constant 0 : index
    %c0_84 = arith.constant 0 : index
    %70 = vector.load %arg8[%c3_82, %c0_83, %c0_84] : memref<16x25x120xbf16, #tpu.memory_space<vmem>>, vector<1x25x120xbf16>
    %71 = vector.shape_cast %70 : vector<1x25x120xbf16> to vector<25x120xbf16>
    %c4_85 = arith.constant 4 : index
    %c0_86 = arith.constant 0 : index
    %c0_87 = arith.constant 0 : index
    %72 = vector.load %arg8[%c4_85, %c0_86, %c0_87] : memref<16x25x120xbf16, #tpu.memory_space<vmem>>, vector<1x25x120xbf16>
    %73 = vector.shape_cast %72 : vector<1x25x120xbf16> to vector<25x120xbf16>
    %c5_88 = arith.constant 5 : index
    %c0_89 = arith.constant 0 : index
    %c0_90 = arith.constant 0 : index
    %74 = vector.load %arg8[%c5_88, %c0_89, %c0_90] : memref<16x25x120xbf16, #tpu.memory_space<vmem>>, vector<1x25x120xbf16>
    %75 = vector.shape_cast %74 : vector<1x25x120xbf16> to vector<25x120xbf16>
    %c6_91 = arith.constant 6 : index
    %c0_92 = arith.constant 0 : index
    %c0_93 = arith.constant 0 : index
    %76 = vector.load %arg8[%c6_91, %c0_92, %c0_93] : memref<16x25x120xbf16, #tpu.memory_space<vmem>>, vector<1x25x120xbf16>
    %77 = vector.shape_cast %76 : vector<1x25x120xbf16> to vector<25x120xbf16>
    %c7_94 = arith.constant 7 : index
    %c0_95 = arith.constant 0 : index
    %c0_96 = arith.constant 0 : index
    %78 = vector.load %arg8[%c7_94, %c0_95, %c0_96] : memref<16x25x120xbf16, #tpu.memory_space<vmem>>, vector<1x25x120xbf16>
    %79 = vector.shape_cast %78 : vector<1x25x120xbf16> to vector<25x120xbf16>
    %c8_97 = arith.constant 8 : index
    %c0_98 = arith.constant 0 : index
    %c0_99 = arith.constant 0 : index
    %80 = vector.load %arg8[%c8_97, %c0_98, %c0_99] : memref<16x25x120xbf16, #tpu.memory_space<vmem>>, vector<1x25x120xbf16>
    %81 = vector.shape_cast %80 : vector<1x25x120xbf16> to vector<25x120xbf16>
    %c9_100 = arith.constant 9 : index
    %c0_101 = arith.constant 0 : index
    %c0_102 = arith.constant 0 : index
    %82 = vector.load %arg8[%c9_100, %c0_101, %c0_102] : memref<16x25x120xbf16, #tpu.memory_space<vmem>>, vector<1x25x120xbf16>
    %83 = vector.shape_cast %82 : vector<1x25x120xbf16> to vector<25x120xbf16>
    %c10_103 = arith.constant 10 : index
    %c0_104 = arith.constant 0 : index
    %c0_105 = arith.constant 0 : index
    %84 = vector.load %arg8[%c10_103, %c0_104, %c0_105] : memref<16x25x120xbf16, #tpu.memory_space<vmem>>, vector<1x25x120xbf16>
    %85 = vector.shape_cast %84 : vector<1x25x120xbf16> to vector<25x120xbf16>
    %c11_106 = arith.constant 11 : index
    %c0_107 = arith.constant 0 : index
    %c0_108 = arith.constant 0 : index
    %86 = vector.load %arg8[%c11_106, %c0_107, %c0_108] : memref<16x25x120xbf16, #tpu.memory_space<vmem>>, vector<1x25x120xbf16>
    %87 = vector.shape_cast %86 : vector<1x25x120xbf16> to vector<25x120xbf16>
    %c12_109 = arith.constant 12 : index
    %c0_110 = arith.constant 0 : index
    %c0_111 = arith.constant 0 : index
    %88 = vector.load %arg8[%c12_109, %c0_110, %c0_111] : memref<16x25x120xbf16, #tpu.memory_space<vmem>>, vector<1x25x120xbf16>
    %89 = vector.shape_cast %88 : vector<1x25x120xbf16> to vector<25x120xbf16>
    %c13_112 = arith.constant 13 : index
    %c0_113 = arith.constant 0 : index
    %c0_114 = arith.constant 0 : index
    %90 = vector.load %arg8[%c13_112, %c0_113, %c0_114] : memref<16x25x120xbf16, #tpu.memory_space<vmem>>, vector<1x25x120xbf16>
    %91 = vector.shape_cast %90 : vector<1x25x120xbf16> to vector<25x120xbf16>
    %c14_115 = arith.constant 14 : index
    %c0_116 = arith.constant 0 : index
    %c0_117 = arith.constant 0 : index
    %92 = vector.load %arg8[%c14_115, %c0_116, %c0_117] : memref<16x25x120xbf16, #tpu.memory_space<vmem>>, vector<1x25x120xbf16>
    %93 = vector.shape_cast %92 : vector<1x25x120xbf16> to vector<25x120xbf16>
    %c15_118 = arith.constant 15 : index
    %c0_119 = arith.constant 0 : index
    %c0_120 = arith.constant 0 : index
    %94 = vector.load %arg8[%c15_118, %c0_119, %c0_120] : memref<16x25x120xbf16, #tpu.memory_space<vmem>>, vector<1x25x120xbf16>
    %95 = vector.shape_cast %94 : vector<1x25x120xbf16> to vector<25x120xbf16>
    %c0_121 = arith.constant 0 : index
    %c0_122 = arith.constant 0 : index
    %96 = vector.load %arg9[%c0_121, %c0_122] : memref<1x120xf32, #tpu.memory_space<vmem>>, vector<1x120xf32>
    %c0_123 = arith.constant 0 : index
    %c0_124 = arith.constant 0 : index
    %97 = vector.load %arg10[%c0_123, %c0_124] : memref<120x84xbf16, #tpu.memory_space<vmem>>, vector<120x84xbf16>
    %c0_125 = arith.constant 0 : index
    %c0_126 = arith.constant 0 : index
    %98 = vector.load %arg11[%c0_125, %c0_126] : memref<1x84xf32, #tpu.memory_space<vmem>>, vector<1x84xf32>
    %c0_127 = arith.constant 0 : index
    %c0_128 = arith.constant 0 : index
    %99 = vector.load %arg12[%c0_127, %c0_128] : memref<84x10xbf16, #tpu.memory_space<vmem>>, vector<84x10xbf16>
    %c0_129 = arith.constant 0 : index
    %c0_130 = arith.constant 0 : index
    %100 = vector.load %arg13[%c0_129, %c0_130] : memref<1x10xf32, #tpu.memory_space<vmem>>, vector<1x10xf32>
    %c0_131 = arith.constant 0 : index
    %c0_132 = arith.constant 0 : index
    %c0_133 = arith.constant 0 : index
    %101 = vector.load %arg1[%c0_131, %c0_132, %c0_133] : memref<2x15x1024xf32, #tpu.memory_space<vmem>>, vector<1x15x1024xf32>
    %102 = vector.shape_cast %101 : vector<1x15x1024xf32> to vector<15x1024xf32>
    %103 = vector.extract_strided_slice %102 {offsets = [0, 0], sizes = [15, 896], strides = [1, 1]} : vector<15x1024xf32> to vector<15x896xf32>
    %104 = arith.truncf %103 : vector<15x896xf32> to vector<15x896xbf16>
    %cst = arith.constant dense<0.000000e+00> : vector<6x896xf32>
    %105 = tpu.matmul %1, %104, %cst {dimension_numbers = #tpu.dot_dimension_numbers<[1], [0], [0], [1], [0, 0, 1, 1], [], []>} : vector<6x15xbf16>, vector<15x896xbf16>, vector<6x896xf32> -> vector<6x896xf32>
    %106 = vector.extract_strided_slice %102 {offsets = [0, 1], sizes = [15, 896], strides = [1, 1]} : vector<15x1024xf32> to vector<15x896xf32>
    %107 = arith.truncf %106 : vector<15x896xf32> to vector<15x896xbf16>
    %cst_134 = arith.constant dense<0.000000e+00> : vector<6x896xf32>
    %108 = tpu.matmul %3, %107, %cst_134 {dimension_numbers = #tpu.dot_dimension_numbers<[1], [0], [0], [1], [0, 0, 1, 1], [], []>} : vector<6x15xbf16>, vector<15x896xbf16>, vector<6x896xf32> -> vector<6x896xf32>
    %109 = arith.addf %105, %108 : vector<6x896xf32>
    %110 = vector.extract_strided_slice %102 {offsets = [0, 2], sizes = [15, 896], strides = [1, 1]} : vector<15x1024xf32> to vector<15x896xf32>
    %111 = arith.truncf %110 : vector<15x896xf32> to vector<15x896xbf16>
    %cst_135 = arith.constant dense<0.000000e+00> : vector<6x896xf32>
    %112 = tpu.matmul %5, %111, %cst_135 {dimension_numbers = #tpu.dot_dimension_numbers<[1], [0], [0], [1], [0, 0, 1, 1], [], []>} : vector<6x15xbf16>, vector<15x896xbf16>, vector<6x896xf32> -> vector<6x896xf32>
    %113 = arith.addf %109, %112 : vector<6x896xf32>
    %114 = vector.extract_strided_slice %102 {offsets = [0, 3], sizes = [15, 896], strides = [1, 1]} : vector<15x1024xf32> to vector<15x896xf32>
    %115 = arith.truncf %114 : vector<15x896xf32> to vector<15x896xbf16>
    %cst_136 = arith.constant dense<0.000000e+00> : vector<6x896xf32>
    %116 = tpu.matmul %7, %115, %cst_136 {dimension_numbers = #tpu.dot_dimension_numbers<[1], [0], [0], [1], [0, 0, 1, 1], [], []>} : vector<6x15xbf16>, vector<15x896xbf16>, vector<6x896xf32> -> vector<6x896xf32>
    %117 = arith.addf %113, %116 : vector<6x896xf32>
    %118 = vector.extract_strided_slice %102 {offsets = [0, 4], sizes = [15, 896], strides = [1, 1]} : vector<15x1024xf32> to vector<15x896xf32>
    %119 = arith.truncf %118 : vector<15x896xf32> to vector<15x896xbf16>
    %cst_137 = arith.constant dense<0.000000e+00> : vector<6x896xf32>
    %120 = tpu.matmul %9, %119, %cst_137 {dimension_numbers = #tpu.dot_dimension_numbers<[1], [0], [0], [1], [0, 0, 1, 1], [], []>} : vector<6x15xbf16>, vector<15x896xbf16>, vector<6x896xf32> -> vector<6x896xf32>
    %121 = arith.addf %117, %120 : vector<6x896xf32>
    %122 = vector.broadcast %10 : vector<6x1xf32> to vector<6x896xf32>
    %123 = arith.addf %121, %122 : vector<6x896xf32>
    %cst_138 = arith.constant 0.000000e+00 : f32
    %124 = vector.broadcast %cst_138 : f32 to vector<6x896xf32>
    %125 = arith.maximumf %123, %124 : vector<6x896xf32>
    %126 = vector.extract_strided_slice %125 {offsets = [0, 0], sizes = [6, 859], strides = [1, 1]} : vector<6x896xf32> to vector<6x859xf32>
    %127 = vector.extract_strided_slice %125 {offsets = [0, 1], sizes = [6, 859], strides = [1, 1]} : vector<6x896xf32> to vector<6x859xf32>
    %128 = arith.maximumf %126, %127 : vector<6x859xf32>
    %129 = vector.extract_strided_slice %125 {offsets = [0, 32], sizes = [6, 859], strides = [1, 1]} : vector<6x896xf32> to vector<6x859xf32>
    %130 = vector.extract_strided_slice %125 {offsets = [0, 33], sizes = [6, 859], strides = [1, 1]} : vector<6x896xf32> to vector<6x859xf32>
    %131 = arith.maximumf %129, %130 : vector<6x859xf32>
    %132 = arith.maximumf %128, %131 : vector<6x859xf32>
    %133 = arith.truncf %132 : vector<6x859xf32> to vector<6x859xbf16>
    %cst_139 = arith.constant dense<0.000000e+00> : vector<6x200xf32>
    %134 = tpu.matmul %133, %11, %cst_139 {dimension_numbers = #tpu.dot_dimension_numbers<[1], [0], [0], [1], [0, 0, 1, 1], [], []>} : vector<6x859xbf16>, vector<859x200xbf16>, vector<6x200xf32> -> vector<6x200xf32>
    %135 = vector.extract_strided_slice %134 {offsets = [0, 0], sizes = [6, 140], strides = [1, 1]} : vector<6x200xf32> to vector<6x140xf32>
    %136 = arith.truncf %135 : vector<6x140xf32> to vector<6x140xbf16>
    %cst_140 = arith.constant dense<0.000000e+00> : vector<16x140xf32>
    %137 = tpu.matmul %13, %136, %cst_140 {dimension_numbers = #tpu.dot_dimension_numbers<[1], [0], [0], [1], [0, 0, 1, 1], [], []>} : vector<16x6xbf16>, vector<6x140xbf16>, vector<16x140xf32> -> vector<16x140xf32>
    %138 = vector.extract_strided_slice %134 {offsets = [0, 1], sizes = [6, 140], strides = [1, 1]} : vector<6x200xf32> to vector<6x140xf32>
    %139 = arith.truncf %138 : vector<6x140xf32> to vector<6x140xbf16>
    %cst_141 = arith.constant dense<0.000000e+00> : vector<16x140xf32>
    %140 = tpu.matmul %15, %139, %cst_141 {dimension_numbers = #tpu.dot_dimension_numbers<[1], [0], [0], [1], [0, 0, 1, 1], [], []>} : vector<16x6xbf16>, vector<6x140xbf16>, vector<16x140xf32> -> vector<16x140xf32>
    %141 = arith.addf %137, %140 : vector<16x140xf32>
    %142 = vector.extract_strided_slice %134 {offsets = [0, 2], sizes = [6, 140], strides = [1, 1]} : vector<6x200xf32> to vector<6x140xf32>
    %143 = arith.truncf %142 : vector<6x140xf32> to vector<6x140xbf16>
    %cst_142 = arith.constant dense<0.000000e+00> : vector<16x140xf32>
    %144 = tpu.matmul %17, %143, %cst_142 {dimension_numbers = #tpu.dot_dimension_numbers<[1], [0], [0], [1], [0, 0, 1, 1], [], []>} : vector<16x6xbf16>, vector<6x140xbf16>, vector<16x140xf32> -> vector<16x140xf32>
    %145 = arith.addf %141, %144 : vector<16x140xf32>
    %146 = vector.extract_strided_slice %134 {offsets = [0, 3], sizes = [6, 140], strides = [1, 1]} : vector<6x200xf32> to vector<6x140xf32>
    %147 = arith.truncf %146 : vector<6x140xf32> to vector<6x140xbf16>
    %cst_143 = arith.constant dense<0.000000e+00> : vector<16x140xf32>
    %148 = tpu.matmul %19, %147, %cst_143 {dimension_numbers = #tpu.dot_dimension_numbers<[1], [0], [0], [1], [0, 0, 1, 1], [], []>} : vector<16x6xbf16>, vector<6x140xbf16>, vector<16x140xf32> -> vector<16x140xf32>
    %149 = arith.addf %145, %148 : vector<16x140xf32>
    %150 = vector.extract_strided_slice %134 {offsets = [0, 4], sizes = [6, 140], strides = [1, 1]} : vector<6x200xf32> to vector<6x140xf32>
    %151 = arith.truncf %150 : vector<6x140xf32> to vector<6x140xbf16>
    %cst_144 = arith.constant dense<0.000000e+00> : vector<16x140xf32>
    %152 = tpu.matmul %21, %151, %cst_144 {dimension_numbers = #tpu.dot_dimension_numbers<[1], [0], [0], [1], [0, 0, 1, 1], [], []>} : vector<16x6xbf16>, vector<6x140xbf16>, vector<16x140xf32> -> vector<16x140xf32>
    %153 = arith.addf %149, %152 : vector<16x140xf32>
    %154 = vector.extract_strided_slice %134 {offsets = [0, 14], sizes = [6, 140], strides = [1, 1]} : vector<6x200xf32> to vector<6x140xf32>
    %155 = arith.truncf %154 : vector<6x140xf32> to vector<6x140xbf16>
    %cst_145 = arith.constant dense<0.000000e+00> : vector<16x140xf32>
    %156 = tpu.matmul %23, %155, %cst_145 {dimension_numbers = #tpu.dot_dimension_numbers<[1], [0], [0], [1], [0, 0, 1, 1], [], []>} : vector<16x6xbf16>, vector<6x140xbf16>, vector<16x140xf32> -> vector<16x140xf32>
    %157 = arith.addf %153, %156 : vector<16x140xf32>
    %158 = vector.extract_strided_slice %134 {offsets = [0, 15], sizes = [6, 140], strides = [1, 1]} : vector<6x200xf32> to vector<6x140xf32>
    %159 = arith.truncf %158 : vector<6x140xf32> to vector<6x140xbf16>
    %cst_146 = arith.constant dense<0.000000e+00> : vector<16x140xf32>
    %160 = tpu.matmul %25, %159, %cst_146 {dimension_numbers = #tpu.dot_dimension_numbers<[1], [0], [0], [1], [0, 0, 1, 1], [], []>} : vector<16x6xbf16>, vector<6x140xbf16>, vector<16x140xf32> -> vector<16x140xf32>
    %161 = arith.addf %157, %160 : vector<16x140xf32>
    %162 = vector.extract_strided_slice %134 {offsets = [0, 16], sizes = [6, 140], strides = [1, 1]} : vector<6x200xf32> to vector<6x140xf32>
    %163 = arith.truncf %162 : vector<6x140xf32> to vector<6x140xbf16>
    %cst_147 = arith.constant dense<0.000000e+00> : vector<16x140xf32>
    %164 = tpu.matmul %27, %163, %cst_147 {dimension_numbers = #tpu.dot_dimension_numbers<[1], [0], [0], [1], [0, 0, 1, 1], [], []>} : vector<16x6xbf16>, vector<6x140xbf16>, vector<16x140xf32> -> vector<16x140xf32>
    %165 = arith.addf %161, %164 : vector<16x140xf32>
    %166 = vector.extract_strided_slice %134 {offsets = [0, 17], sizes = [6, 140], strides = [1, 1]} : vector<6x200xf32> to vector<6x140xf32>
    %167 = arith.truncf %166 : vector<6x140xf32> to vector<6x140xbf16>
    %cst_148 = arith.constant dense<0.000000e+00> : vector<16x140xf32>
    %168 = tpu.matmul %29, %167, %cst_148 {dimension_numbers = #tpu.dot_dimension_numbers<[1], [0], [0], [1], [0, 0, 1, 1], [], []>} : vector<16x6xbf16>, vector<6x140xbf16>, vector<16x140xf32> -> vector<16x140xf32>
    %169 = arith.addf %165, %168 : vector<16x140xf32>
    %170 = vector.extract_strided_slice %134 {offsets = [0, 18], sizes = [6, 140], strides = [1, 1]} : vector<6x200xf32> to vector<6x140xf32>
    %171 = arith.truncf %170 : vector<6x140xf32> to vector<6x140xbf16>
    %cst_149 = arith.constant dense<0.000000e+00> : vector<16x140xf32>
    %172 = tpu.matmul %31, %171, %cst_149 {dimension_numbers = #tpu.dot_dimension_numbers<[1], [0], [0], [1], [0, 0, 1, 1], [], []>} : vector<16x6xbf16>, vector<6x140xbf16>, vector<16x140xf32> -> vector<16x140xf32>
    %173 = arith.addf %169, %172 : vector<16x140xf32>
    %174 = vector.extract_strided_slice %134 {offsets = [0, 28], sizes = [6, 140], strides = [1, 1]} : vector<6x200xf32> to vector<6x140xf32>
    %175 = arith.truncf %174 : vector<6x140xf32> to vector<6x140xbf16>
    %cst_150 = arith.constant dense<0.000000e+00> : vector<16x140xf32>
    %176 = tpu.matmul %33, %175, %cst_150 {dimension_numbers = #tpu.dot_dimension_numbers<[1], [0], [0], [1], [0, 0, 1, 1], [], []>} : vector<16x6xbf16>, vector<6x140xbf16>, vector<16x140xf32> -> vector<16x140xf32>
    %177 = arith.addf %173, %176 : vector<16x140xf32>
    %178 = vector.extract_strided_slice %134 {offsets = [0, 29], sizes = [6, 140], strides = [1, 1]} : vector<6x200xf32> to vector<6x140xf32>
    %179 = arith.truncf %178 : vector<6x140xf32> to vector<6x140xbf16>
    %cst_151 = arith.constant dense<0.000000e+00> : vector<16x140xf32>
    %180 = tpu.matmul %35, %179, %cst_151 {dimension_numbers = #tpu.dot_dimension_numbers<[1], [0], [0], [1], [0, 0, 1, 1], [], []>} : vector<16x6xbf16>, vector<6x140xbf16>, vector<16x140xf32> -> vector<16x140xf32>
    %181 = arith.addf %177, %180 : vector<16x140xf32>
    %182 = vector.extract_strided_slice %134 {offsets = [0, 30], sizes = [6, 140], strides = [1, 1]} : vector<6x200xf32> to vector<6x140xf32>
    %183 = arith.truncf %182 : vector<6x140xf32> to vector<6x140xbf16>
    %cst_152 = arith.constant dense<0.000000e+00> : vector<16x140xf32>
    %184 = tpu.matmul %37, %183, %cst_152 {dimension_numbers = #tpu.dot_dimension_numbers<[1], [0], [0], [1], [0, 0, 1, 1], [], []>} : vector<16x6xbf16>, vector<6x140xbf16>, vector<16x140xf32> -> vector<16x140xf32>
    %185 = arith.addf %181, %184 : vector<16x140xf32>
    %186 = vector.extract_strided_slice %134 {offsets = [0, 31], sizes = [6, 140], strides = [1, 1]} : vector<6x200xf32> to vector<6x140xf32>
    %187 = arith.truncf %186 : vector<6x140xf32> to vector<6x140xbf16>
    %cst_153 = arith.constant dense<0.000000e+00> : vector<16x140xf32>
    %188 = tpu.matmul %39, %187, %cst_153 {dimension_numbers = #tpu.dot_dimension_numbers<[1], [0], [0], [1], [0, 0, 1, 1], [], []>} : vector<16x6xbf16>, vector<6x140xbf16>, vector<16x140xf32> -> vector<16x140xf32>
    %189 = arith.addf %185, %188 : vector<16x140xf32>
    %190 = vector.extract_strided_slice %134 {offsets = [0, 32], sizes = [6, 140], strides = [1, 1]} : vector<6x200xf32> to vector<6x140xf32>
    %191 = arith.truncf %190 : vector<6x140xf32> to vector<6x140xbf16>
    %cst_154 = arith.constant dense<0.000000e+00> : vector<16x140xf32>
    %192 = tpu.matmul %41, %191, %cst_154 {dimension_numbers = #tpu.dot_dimension_numbers<[1], [0], [0], [1], [0, 0, 1, 1], [], []>} : vector<16x6xbf16>, vector<6x140xbf16>, vector<16x140xf32> -> vector<16x140xf32>
    %193 = arith.addf %189, %192 : vector<16x140xf32>
    %194 = vector.extract_strided_slice %134 {offsets = [0, 42], sizes = [6, 140], strides = [1, 1]} : vector<6x200xf32> to vector<6x140xf32>
    %195 = arith.truncf %194 : vector<6x140xf32> to vector<6x140xbf16>
    %cst_155 = arith.constant dense<0.000000e+00> : vector<16x140xf32>
    %196 = tpu.matmul %43, %195, %cst_155 {dimension_numbers = #tpu.dot_dimension_numbers<[1], [0], [0], [1], [0, 0, 1, 1], [], []>} : vector<16x6xbf16>, vector<6x140xbf16>, vector<16x140xf32> -> vector<16x140xf32>
    %197 = arith.addf %193, %196 : vector<16x140xf32>
    %198 = vector.extract_strided_slice %134 {offsets = [0, 43], sizes = [6, 140], strides = [1, 1]} : vector<6x200xf32> to vector<6x140xf32>
    %199 = arith.truncf %198 : vector<6x140xf32> to vector<6x140xbf16>
    %cst_156 = arith.constant dense<0.000000e+00> : vector<16x140xf32>
    %200 = tpu.matmul %45, %199, %cst_156 {dimension_numbers = #tpu.dot_dimension_numbers<[1], [0], [0], [1], [0, 0, 1, 1], [], []>} : vector<16x6xbf16>, vector<6x140xbf16>, vector<16x140xf32> -> vector<16x140xf32>
    %201 = arith.addf %197, %200 : vector<16x140xf32>
    %202 = vector.extract_strided_slice %134 {offsets = [0, 44], sizes = [6, 140], strides = [1, 1]} : vector<6x200xf32> to vector<6x140xf32>
    %203 = arith.truncf %202 : vector<6x140xf32> to vector<6x140xbf16>
    %cst_157 = arith.constant dense<0.000000e+00> : vector<16x140xf32>
    %204 = tpu.matmul %47, %203, %cst_157 {dimension_numbers = #tpu.dot_dimension_numbers<[1], [0], [0], [1], [0, 0, 1, 1], [], []>} : vector<16x6xbf16>, vector<6x140xbf16>, vector<16x140xf32> -> vector<16x140xf32>
    %205 = arith.addf %201, %204 : vector<16x140xf32>
    %206 = vector.extract_strided_slice %134 {offsets = [0, 45], sizes = [6, 140], strides = [1, 1]} : vector<6x200xf32> to vector<6x140xf32>
    %207 = arith.truncf %206 : vector<6x140xf32> to vector<6x140xbf16>
    %cst_158 = arith.constant dense<0.000000e+00> : vector<16x140xf32>
    %208 = tpu.matmul %49, %207, %cst_158 {dimension_numbers = #tpu.dot_dimension_numbers<[1], [0], [0], [1], [0, 0, 1, 1], [], []>} : vector<16x6xbf16>, vector<6x140xbf16>, vector<16x140xf32> -> vector<16x140xf32>
    %209 = arith.addf %205, %208 : vector<16x140xf32>
    %210 = vector.extract_strided_slice %134 {offsets = [0, 46], sizes = [6, 140], strides = [1, 1]} : vector<6x200xf32> to vector<6x140xf32>
    %211 = arith.truncf %210 : vector<6x140xf32> to vector<6x140xbf16>
    %cst_159 = arith.constant dense<0.000000e+00> : vector<16x140xf32>
    %212 = tpu.matmul %51, %211, %cst_159 {dimension_numbers = #tpu.dot_dimension_numbers<[1], [0], [0], [1], [0, 0, 1, 1], [], []>} : vector<16x6xbf16>, vector<6x140xbf16>, vector<16x140xf32> -> vector<16x140xf32>
    %213 = arith.addf %209, %212 : vector<16x140xf32>
    %214 = vector.extract_strided_slice %134 {offsets = [0, 56], sizes = [6, 140], strides = [1, 1]} : vector<6x200xf32> to vector<6x140xf32>
    %215 = arith.truncf %214 : vector<6x140xf32> to vector<6x140xbf16>
    %cst_160 = arith.constant dense<0.000000e+00> : vector<16x140xf32>
    %216 = tpu.matmul %53, %215, %cst_160 {dimension_numbers = #tpu.dot_dimension_numbers<[1], [0], [0], [1], [0, 0, 1, 1], [], []>} : vector<16x6xbf16>, vector<6x140xbf16>, vector<16x140xf32> -> vector<16x140xf32>
    %217 = arith.addf %213, %216 : vector<16x140xf32>
    %218 = vector.extract_strided_slice %134 {offsets = [0, 57], sizes = [6, 140], strides = [1, 1]} : vector<6x200xf32> to vector<6x140xf32>
    %219 = arith.truncf %218 : vector<6x140xf32> to vector<6x140xbf16>
    %cst_161 = arith.constant dense<0.000000e+00> : vector<16x140xf32>
    %220 = tpu.matmul %55, %219, %cst_161 {dimension_numbers = #tpu.dot_dimension_numbers<[1], [0], [0], [1], [0, 0, 1, 1], [], []>} : vector<16x6xbf16>, vector<6x140xbf16>, vector<16x140xf32> -> vector<16x140xf32>
    %221 = arith.addf %217, %220 : vector<16x140xf32>
    %222 = vector.extract_strided_slice %134 {offsets = [0, 58], sizes = [6, 140], strides = [1, 1]} : vector<6x200xf32> to vector<6x140xf32>
    %223 = arith.truncf %222 : vector<6x140xf32> to vector<6x140xbf16>
    %cst_162 = arith.constant dense<0.000000e+00> : vector<16x140xf32>
    %224 = tpu.matmul %57, %223, %cst_162 {dimension_numbers = #tpu.dot_dimension_numbers<[1], [0], [0], [1], [0, 0, 1, 1], [], []>} : vector<16x6xbf16>, vector<6x140xbf16>, vector<16x140xf32> -> vector<16x140xf32>
    %225 = arith.addf %221, %224 : vector<16x140xf32>
    %226 = vector.extract_strided_slice %134 {offsets = [0, 59], sizes = [6, 140], strides = [1, 1]} : vector<6x200xf32> to vector<6x140xf32>
    %227 = arith.truncf %226 : vector<6x140xf32> to vector<6x140xbf16>
    %cst_163 = arith.constant dense<0.000000e+00> : vector<16x140xf32>
    %228 = tpu.matmul %59, %227, %cst_163 {dimension_numbers = #tpu.dot_dimension_numbers<[1], [0], [0], [1], [0, 0, 1, 1], [], []>} : vector<16x6xbf16>, vector<6x140xbf16>, vector<16x140xf32> -> vector<16x140xf32>
    %229 = arith.addf %225, %228 : vector<16x140xf32>
    %230 = vector.extract_strided_slice %134 {offsets = [0, 60], sizes = [6, 140], strides = [1, 1]} : vector<6x200xf32> to vector<6x140xf32>
    %231 = arith.truncf %230 : vector<6x140xf32> to vector<6x140xbf16>
    %cst_164 = arith.constant dense<0.000000e+00> : vector<16x140xf32>
    %232 = tpu.matmul %61, %231, %cst_164 {dimension_numbers = #tpu.dot_dimension_numbers<[1], [0], [0], [1], [0, 0, 1, 1], [], []>} : vector<16x6xbf16>, vector<6x140xbf16>, vector<16x140xf32> -> vector<16x140xf32>
    %233 = arith.addf %229, %232 : vector<16x140xf32>
    %234 = vector.broadcast %62 : vector<16x1xf32> to vector<16x140xf32>
    %235 = arith.addf %233, %234 : vector<16x140xf32>
    %cst_165 = arith.constant 0.000000e+00 : f32
    %236 = vector.broadcast %cst_165 : f32 to vector<16x140xf32>
    %237 = arith.maximumf %235, %236 : vector<16x140xf32>
    %238 = vector.extract_strided_slice %237 {offsets = [0, 0], sizes = [16, 121], strides = [1, 1]} : vector<16x140xf32> to vector<16x121xf32>
    %239 = vector.extract_strided_slice %237 {offsets = [0, 1], sizes = [16, 121], strides = [1, 1]} : vector<16x140xf32> to vector<16x121xf32>
    %240 = arith.maximumf %238, %239 : vector<16x121xf32>
    %241 = vector.extract_strided_slice %237 {offsets = [0, 14], sizes = [16, 121], strides = [1, 1]} : vector<16x140xf32> to vector<16x121xf32>
    %242 = vector.extract_strided_slice %237 {offsets = [0, 15], sizes = [16, 121], strides = [1, 1]} : vector<16x140xf32> to vector<16x121xf32>
    %243 = arith.maximumf %241, %242 : vector<16x121xf32>
    %244 = arith.maximumf %240, %243 : vector<16x121xf32>
    %245 = arith.truncf %244 : vector<16x121xf32> to vector<16x121xbf16>
    %cst_166 = arith.constant dense<0.000000e+00> : vector<16x25xf32>
    %246 = tpu.matmul %245, %63, %cst_166 {dimension_numbers = #tpu.dot_dimension_numbers<[1], [0], [0], [1], [0, 0, 1, 1], [], []>} : vector<16x121xbf16>, vector<121x25xbf16>, vector<16x25xf32> -> vector<16x25xf32>
    %247 = vector.extract_strided_slice %246 {offsets = [0, 0], sizes = [1, 25], strides = [1, 1]} : vector<16x25xf32> to vector<1x25xf32>
    %248 = arith.truncf %247 : vector<1x25xf32> to vector<1x25xbf16>
    %cst_167 = arith.constant dense<0.000000e+00> : vector<1x120xf32>
    %249 = tpu.matmul %248, %65, %cst_167 {dimension_numbers = #tpu.dot_dimension_numbers<[1], [0], [0], [1], [0, 0, 1, 1], [], []>} : vector<1x25xbf16>, vector<25x120xbf16>, vector<1x120xf32> -> vector<1x120xf32>
    %250 = vector.extract_strided_slice %246 {offsets = [1, 0], sizes = [1, 25], strides = [1, 1]} : vector<16x25xf32> to vector<1x25xf32>
    %251 = arith.truncf %250 : vector<1x25xf32> to vector<1x25xbf16>
    %cst_168 = arith.constant dense<0.000000e+00> : vector<1x120xf32>
    %252 = tpu.matmul %251, %67, %cst_168 {dimension_numbers = #tpu.dot_dimension_numbers<[1], [0], [0], [1], [0, 0, 1, 1], [], []>} : vector<1x25xbf16>, vector<25x120xbf16>, vector<1x120xf32> -> vector<1x120xf32>
    %253 = arith.addf %249, %252 : vector<1x120xf32>
    %254 = vector.extract_strided_slice %246 {offsets = [2, 0], sizes = [1, 25], strides = [1, 1]} : vector<16x25xf32> to vector<1x25xf32>
    %255 = arith.truncf %254 : vector<1x25xf32> to vector<1x25xbf16>
    %cst_169 = arith.constant dense<0.000000e+00> : vector<1x120xf32>
    %256 = tpu.matmul %255, %69, %cst_169 {dimension_numbers = #tpu.dot_dimension_numbers<[1], [0], [0], [1], [0, 0, 1, 1], [], []>} : vector<1x25xbf16>, vector<25x120xbf16>, vector<1x120xf32> -> vector<1x120xf32>
    %257 = arith.addf %253, %256 : vector<1x120xf32>
    %258 = vector.extract_strided_slice %246 {offsets = [3, 0], sizes = [1, 25], strides = [1, 1]} : vector<16x25xf32> to vector<1x25xf32>
    %259 = arith.truncf %258 : vector<1x25xf32> to vector<1x25xbf16>
    %cst_170 = arith.constant dense<0.000000e+00> : vector<1x120xf32>
    %260 = tpu.matmul %259, %71, %cst_170 {dimension_numbers = #tpu.dot_dimension_numbers<[1], [0], [0], [1], [0, 0, 1, 1], [], []>} : vector<1x25xbf16>, vector<25x120xbf16>, vector<1x120xf32> -> vector<1x120xf32>
    %261 = arith.addf %257, %260 : vector<1x120xf32>
    %262 = vector.extract_strided_slice %246 {offsets = [4, 0], sizes = [1, 25], strides = [1, 1]} : vector<16x25xf32> to vector<1x25xf32>
    %263 = arith.truncf %262 : vector<1x25xf32> to vector<1x25xbf16>
    %cst_171 = arith.constant dense<0.000000e+00> : vector<1x120xf32>
    %264 = tpu.matmul %263, %73, %cst_171 {dimension_numbers = #tpu.dot_dimension_numbers<[1], [0], [0], [1], [0, 0, 1, 1], [], []>} : vector<1x25xbf16>, vector<25x120xbf16>, vector<1x120xf32> -> vector<1x120xf32>
    %265 = arith.addf %261, %264 : vector<1x120xf32>
    %266 = vector.extract_strided_slice %246 {offsets = [5, 0], sizes = [1, 25], strides = [1, 1]} : vector<16x25xf32> to vector<1x25xf32>
    %267 = arith.truncf %266 : vector<1x25xf32> to vector<1x25xbf16>
    %cst_172 = arith.constant dense<0.000000e+00> : vector<1x120xf32>
    %268 = tpu.matmul %267, %75, %cst_172 {dimension_numbers = #tpu.dot_dimension_numbers<[1], [0], [0], [1], [0, 0, 1, 1], [], []>} : vector<1x25xbf16>, vector<25x120xbf16>, vector<1x120xf32> -> vector<1x120xf32>
    %269 = arith.addf %265, %268 : vector<1x120xf32>
    %270 = vector.extract_strided_slice %246 {offsets = [6, 0], sizes = [1, 25], strides = [1, 1]} : vector<16x25xf32> to vector<1x25xf32>
    %271 = arith.truncf %270 : vector<1x25xf32> to vector<1x25xbf16>
    %cst_173 = arith.constant dense<0.000000e+00> : vector<1x120xf32>
    %272 = tpu.matmul %271, %77, %cst_173 {dimension_numbers = #tpu.dot_dimension_numbers<[1], [0], [0], [1], [0, 0, 1, 1], [], []>} : vector<1x25xbf16>, vector<25x120xbf16>, vector<1x120xf32> -> vector<1x120xf32>
    %273 = arith.addf %269, %272 : vector<1x120xf32>
    %274 = vector.extract_strided_slice %246 {offsets = [7, 0], sizes = [1, 25], strides = [1, 1]} : vector<16x25xf32> to vector<1x25xf32>
    %275 = arith.truncf %274 : vector<1x25xf32> to vector<1x25xbf16>
    %cst_174 = arith.constant dense<0.000000e+00> : vector<1x120xf32>
    %276 = tpu.matmul %275, %79, %cst_174 {dimension_numbers = #tpu.dot_dimension_numbers<[1], [0], [0], [1], [0, 0, 1, 1], [], []>} : vector<1x25xbf16>, vector<25x120xbf16>, vector<1x120xf32> -> vector<1x120xf32>
    %277 = arith.addf %273, %276 : vector<1x120xf32>
    %278 = vector.extract_strided_slice %246 {offsets = [8, 0], sizes = [1, 25], strides = [1, 1]} : vector<16x25xf32> to vector<1x25xf32>
    %279 = arith.truncf %278 : vector<1x25xf32> to vector<1x25xbf16>
    %cst_175 = arith.constant dense<0.000000e+00> : vector<1x120xf32>
    %280 = tpu.matmul %279, %81, %cst_175 {dimension_numbers = #tpu.dot_dimension_numbers<[1], [0], [0], [1], [0, 0, 1, 1], [], []>} : vector<1x25xbf16>, vector<25x120xbf16>, vector<1x120xf32> -> vector<1x120xf32>
    %281 = arith.addf %277, %280 : vector<1x120xf32>
    %282 = vector.extract_strided_slice %246 {offsets = [9, 0], sizes = [1, 25], strides = [1, 1]} : vector<16x25xf32> to vector<1x25xf32>
    %283 = arith.truncf %282 : vector<1x25xf32> to vector<1x25xbf16>
    %cst_176 = arith.constant dense<0.000000e+00> : vector<1x120xf32>
    %284 = tpu.matmul %283, %83, %cst_176 {dimension_numbers = #tpu.dot_dimension_numbers<[1], [0], [0], [1], [0, 0, 1, 1], [], []>} : vector<1x25xbf16>, vector<25x120xbf16>, vector<1x120xf32> -> vector<1x120xf32>
    %285 = arith.addf %281, %284 : vector<1x120xf32>
    %286 = vector.extract_strided_slice %246 {offsets = [10, 0], sizes = [1, 25], strides = [1, 1]} : vector<16x25xf32> to vector<1x25xf32>
    %287 = arith.truncf %286 : vector<1x25xf32> to vector<1x25xbf16>
    %cst_177 = arith.constant dense<0.000000e+00> : vector<1x120xf32>
    %288 = tpu.matmul %287, %85, %cst_177 {dimension_numbers = #tpu.dot_dimension_numbers<[1], [0], [0], [1], [0, 0, 1, 1], [], []>} : vector<1x25xbf16>, vector<25x120xbf16>, vector<1x120xf32> -> vector<1x120xf32>
    %289 = arith.addf %285, %288 : vector<1x120xf32>
    %290 = vector.extract_strided_slice %246 {offsets = [11, 0], sizes = [1, 25], strides = [1, 1]} : vector<16x25xf32> to vector<1x25xf32>
    %291 = arith.truncf %290 : vector<1x25xf32> to vector<1x25xbf16>
    %cst_178 = arith.constant dense<0.000000e+00> : vector<1x120xf32>
    %292 = tpu.matmul %291, %87, %cst_178 {dimension_numbers = #tpu.dot_dimension_numbers<[1], [0], [0], [1], [0, 0, 1, 1], [], []>} : vector<1x25xbf16>, vector<25x120xbf16>, vector<1x120xf32> -> vector<1x120xf32>
    %293 = arith.addf %289, %292 : vector<1x120xf32>
    %294 = vector.extract_strided_slice %246 {offsets = [12, 0], sizes = [1, 25], strides = [1, 1]} : vector<16x25xf32> to vector<1x25xf32>
    %295 = arith.truncf %294 : vector<1x25xf32> to vector<1x25xbf16>
    %cst_179 = arith.constant dense<0.000000e+00> : vector<1x120xf32>
    %296 = tpu.matmul %295, %89, %cst_179 {dimension_numbers = #tpu.dot_dimension_numbers<[1], [0], [0], [1], [0, 0, 1, 1], [], []>} : vector<1x25xbf16>, vector<25x120xbf16>, vector<1x120xf32> -> vector<1x120xf32>
    %297 = arith.addf %293, %296 : vector<1x120xf32>
    %298 = vector.extract_strided_slice %246 {offsets = [13, 0], sizes = [1, 25], strides = [1, 1]} : vector<16x25xf32> to vector<1x25xf32>
    %299 = arith.truncf %298 : vector<1x25xf32> to vector<1x25xbf16>
    %cst_180 = arith.constant dense<0.000000e+00> : vector<1x120xf32>
    %300 = tpu.matmul %299, %91, %cst_180 {dimension_numbers = #tpu.dot_dimension_numbers<[1], [0], [0], [1], [0, 0, 1, 1], [], []>} : vector<1x25xbf16>, vector<25x120xbf16>, vector<1x120xf32> -> vector<1x120xf32>
    %301 = arith.addf %297, %300 : vector<1x120xf32>
    %302 = vector.extract_strided_slice %246 {offsets = [14, 0], sizes = [1, 25], strides = [1, 1]} : vector<16x25xf32> to vector<1x25xf32>
    %303 = arith.truncf %302 : vector<1x25xf32> to vector<1x25xbf16>
    %cst_181 = arith.constant dense<0.000000e+00> : vector<1x120xf32>
    %304 = tpu.matmul %303, %93, %cst_181 {dimension_numbers = #tpu.dot_dimension_numbers<[1], [0], [0], [1], [0, 0, 1, 1], [], []>} : vector<1x25xbf16>, vector<25x120xbf16>, vector<1x120xf32> -> vector<1x120xf32>
    %305 = arith.addf %301, %304 : vector<1x120xf32>
    %306 = vector.extract_strided_slice %246 {offsets = [15, 0], sizes = [1, 25], strides = [1, 1]} : vector<16x25xf32> to vector<1x25xf32>
    %307 = arith.truncf %306 : vector<1x25xf32> to vector<1x25xbf16>
    %cst_182 = arith.constant dense<0.000000e+00> : vector<1x120xf32>
    %308 = tpu.matmul %307, %95, %cst_182 {dimension_numbers = #tpu.dot_dimension_numbers<[1], [0], [0], [1], [0, 0, 1, 1], [], []>} : vector<1x25xbf16>, vector<25x120xbf16>, vector<1x120xf32> -> vector<1x120xf32>
    %309 = arith.addf %305, %308 : vector<1x120xf32>
    %310 = arith.addf %309, %96 : vector<1x120xf32>
    %cst_183 = arith.constant 0.000000e+00 : f32
    %311 = vector.broadcast %cst_183 : f32 to vector<1x120xf32>
    %312 = arith.maximumf %310, %311 : vector<1x120xf32>
    %313 = arith.truncf %312 : vector<1x120xf32> to vector<1x120xbf16>
    %cst_184 = arith.constant dense<0.000000e+00> : vector<1x84xf32>
    %314 = tpu.matmul %313, %97, %cst_184 {dimension_numbers = #tpu.dot_dimension_numbers<[1], [0], [0], [1], [0, 0, 1, 1], [], []>} : vector<1x120xbf16>, vector<120x84xbf16>, vector<1x84xf32> -> vector<1x84xf32>
    %315 = arith.addf %314, %98 : vector<1x84xf32>
    %cst_185 = arith.constant 0.000000e+00 : f32
    %316 = vector.broadcast %cst_185 : f32 to vector<1x84xf32>
    %317 = arith.maximumf %315, %316 : vector<1x84xf32>
    %318 = arith.truncf %317 : vector<1x84xf32> to vector<1x84xbf16>
    %cst_186 = arith.constant dense<0.000000e+00> : vector<1x10xf32>
    %319 = tpu.matmul %318, %99, %cst_186 {dimension_numbers = #tpu.dot_dimension_numbers<[1], [0], [0], [1], [0, 0, 1, 1], [], []>} : vector<1x84xbf16>, vector<84x10xbf16>, vector<1x10xf32> -> vector<1x10xf32>
    %320 = arith.addf %319, %100 : vector<1x10xf32>
    %cst_187 = arith.constant dense<0xFF800000> : vector<1xf32>
    %321 = vector.multi_reduction <maximumf>, %320, %cst_187 [1] : vector<1x10xf32> to vector<1xf32>
    %322 = vector.shape_cast %321 : vector<1xf32> to vector<1x1xf32>
    %323 = vector.broadcast %322 : vector<1x1xf32> to vector<1x10xf32>
    %324 = arith.subf %320, %323 : vector<1x10xf32>
    %325 = math.exp %324 : vector<1x10xf32>
    %cst_188 = arith.constant dense<0.000000e+00> : vector<1xf32>
    %326 = vector.multi_reduction <add>, %325, %cst_188 [1] : vector<1x10xf32> to vector<1xf32>
    %327 = vector.shape_cast %326 : vector<1xf32> to vector<1x1xf32>
    %328 = math.log %327 : vector<1x1xf32>
    %329 = vector.broadcast %328 : vector<1x1xf32> to vector<1x10xf32>
    %330 = arith.subf %324, %329 : vector<1x10xf32>
    %c0_189 = arith.constant 0 : index
    %c0_190 = arith.constant 0 : index
    %c0_191 = arith.constant 0 : index
    %331 = vector.load %arg14[%c0_189, %c0_190, %c0_191] : memref<2x1x10xf32, #tpu.memory_space<vmem>>, vector<1x1x10xf32>
    %332 = vector.shape_cast %331 : vector<1x1x10xf32> to vector<1x10xf32>
    %333 = vector.shape_cast %330 : vector<1x10xf32> to vector<1x1x10xf32>
    tpu.vector_store %arg14[%c0_189, %c0_190, %c0_191], %333 {strides = array<i32>} : memref<2x1x10xf32, #tpu.memory_space<vmem>>, vector<1x1x10xf32>,
    %c1_192 = arith.constant 1 : index
    %c0_193 = arith.constant 0 : index
    %c0_194 = arith.constant 0 : index
    %334 = vector.load %arg1[%c1_192, %c0_193, %c0_194] : memref<2x15x1024xf32, #tpu.memory_space<vmem>>, vector<1x15x1024xf32>
    %335 = vector.shape_cast %334 : vector<1x15x1024xf32> to vector<15x1024xf32>
    %336 = vector.extract_strided_slice %335 {offsets = [0, 0], sizes = [15, 896], strides = [1, 1]} : vector<15x1024xf32> to vector<15x896xf32>
    %337 = arith.truncf %336 : vector<15x896xf32> to vector<15x896xbf16>
    %cst_195 = arith.constant dense<0.000000e+00> : vector<6x896xf32>
    %338 = tpu.matmul %1, %337, %cst_195 {dimension_numbers = #tpu.dot_dimension_numbers<[1], [0], [0], [1], [0, 0, 1, 1], [], []>} : vector<6x15xbf16>, vector<15x896xbf16>, vector<6x896xf32> -> vector<6x896xf32>
    %339 = vector.extract_strided_slice %335 {offsets = [0, 1], sizes = [15, 896], strides = [1, 1]} : vector<15x1024xf32> to vector<15x896xf32>
    %340 = arith.truncf %339 : vector<15x896xf32> to vector<15x896xbf16>
    %cst_196 = arith.constant dense<0.000000e+00> : vector<6x896xf32>
    %341 = tpu.matmul %3, %340, %cst_196 {dimension_numbers = #tpu.dot_dimension_numbers<[1], [0], [0], [1], [0, 0, 1, 1], [], []>} : vector<6x15xbf16>, vector<15x896xbf16>, vector<6x896xf32> -> vector<6x896xf32>
    %342 = arith.addf %338, %341 : vector<6x896xf32>
    %343 = vector.extract_strided_slice %335 {offsets = [0, 2], sizes = [15, 896], strides = [1, 1]} : vector<15x1024xf32> to vector<15x896xf32>
    %344 = arith.truncf %343 : vector<15x896xf32> to vector<15x896xbf16>
    %cst_197 = arith.constant dense<0.000000e+00> : vector<6x896xf32>
    %345 = tpu.matmul %5, %344, %cst_197 {dimension_numbers = #tpu.dot_dimension_numbers<[1], [0], [0], [1], [0, 0, 1, 1], [], []>} : vector<6x15xbf16>, vector<15x896xbf16>, vector<6x896xf32> -> vector<6x896xf32>
    %346 = arith.addf %342, %345 : vector<6x896xf32>
    %347 = vector.extract_strided_slice %335 {offsets = [0, 3], sizes = [15, 896], strides = [1, 1]} : vector<15x1024xf32> to vector<15x896xf32>
    %348 = arith.truncf %347 : vector<15x896xf32> to vector<15x896xbf16>
    %cst_198 = arith.constant dense<0.000000e+00> : vector<6x896xf32>
    %349 = tpu.matmul %7, %348, %cst_198 {dimension_numbers = #tpu.dot_dimension_numbers<[1], [0], [0], [1], [0, 0, 1, 1], [], []>} : vector<6x15xbf16>, vector<15x896xbf16>, vector<6x896xf32> -> vector<6x896xf32>
    %350 = arith.addf %346, %349 : vector<6x896xf32>
    %351 = vector.extract_strided_slice %335 {offsets = [0, 4], sizes = [15, 896], strides = [1, 1]} : vector<15x1024xf32> to vector<15x896xf32>
    %352 = arith.truncf %351 : vector<15x896xf32> to vector<15x896xbf16>
    %cst_199 = arith.constant dense<0.000000e+00> : vector<6x896xf32>
    %353 = tpu.matmul %9, %352, %cst_199 {dimension_numbers = #tpu.dot_dimension_numbers<[1], [0], [0], [1], [0, 0, 1, 1], [], []>} : vector<6x15xbf16>, vector<15x896xbf16>, vector<6x896xf32> -> vector<6x896xf32>
    %354 = arith.addf %350, %353 : vector<6x896xf32>
    %355 = vector.broadcast %10 : vector<6x1xf32> to vector<6x896xf32>
    %356 = arith.addf %354, %355 : vector<6x896xf32>
    %cst_200 = arith.constant 0.000000e+00 : f32
    %357 = vector.broadcast %cst_200 : f32 to vector<6x896xf32>
    %358 = arith.maximumf %356, %357 : vector<6x896xf32>
    %359 = vector.extract_strided_slice %358 {offsets = [0, 0], sizes = [6, 859], strides = [1, 1]} : vector<6x896xf32> to vector<6x859xf32>
    %360 = vector.extract_strided_slice %358 {offsets = [0, 1], sizes = [6, 859], strides = [1, 1]} : vector<6x896xf32> to vector<6x859xf32>
    %361 = arith.maximumf %359, %360 : vector<6x859xf32>
    %362 = vector.extract_strided_slice %358 {offsets = [0, 32], sizes = [6, 859], strides = [1, 1]} : vector<6x896xf32> to vector<6x859xf32>
    %363 = vector.extract_strided_slice %358 {offsets = [0, 33], sizes = [6, 859], strides = [1, 1]} : vector<6x896xf32> to vector<6x859xf32>
    %364 = arith.maximumf %362, %363 : vector<6x859xf32>
    %365 = arith.maximumf %361, %364 : vector<6x859xf32>
    %366 = arith.truncf %365 : vector<6x859xf32> to vector<6x859xbf16>
    %cst_201 = arith.constant dense<0.000000e+00> : vector<6x200xf32>
    %367 = tpu.matmul %366, %11, %cst_201 {dimension_numbers = #tpu.dot_dimension_numbers<[1], [0], [0], [1], [0, 0, 1, 1], [], []>} : vector<6x859xbf16>, vector<859x200xbf16>, vector<6x200xf32> -> vector<6x200xf32>
    %368 = vector.extract_strided_slice %367 {offsets = [0, 0], sizes = [6, 140], strides = [1, 1]} : vector<6x200xf32> to vector<6x140xf32>
    %369 = arith.truncf %368 : vector<6x140xf32> to vector<6x140xbf16>
    %cst_202 = arith.constant dense<0.000000e+00> : vector<16x140xf32>
    %370 = tpu.matmul %13, %369, %cst_202 {dimension_numbers = #tpu.dot_dimension_numbers<[1], [0], [0], [1], [0, 0, 1, 1], [], []>} : vector<16x6xbf16>, vector<6x140xbf16>, vector<16x140xf32> -> vector<16x140xf32>
    %371 = vector.extract_strided_slice %367 {offsets = [0, 1], sizes = [6, 140], strides = [1, 1]} : vector<6x200xf32> to vector<6x140xf32>
    %372 = arith.truncf %371 : vector<6x140xf32> to vector<6x140xbf16>
    %cst_203 = arith.constant dense<0.000000e+00> : vector<16x140xf32>
    %373 = tpu.matmul %15, %372, %cst_203 {dimension_numbers = #tpu.dot_dimension_numbers<[1], [0], [0], [1], [0, 0, 1, 1], [], []>} : vector<16x6xbf16>, vector<6x140xbf16>, vector<16x140xf32> -> vector<16x140xf32>
    %374 = arith.addf %370, %373 : vector<16x140xf32>
    %375 = vector.extract_strided_slice %367 {offsets = [0, 2], sizes = [6, 140], strides = [1, 1]} : vector<6x200xf32> to vector<6x140xf32>
    %376 = arith.truncf %375 : vector<6x140xf32> to vector<6x140xbf16>
    %cst_204 = arith.constant dense<0.000000e+00> : vector<16x140xf32>
    %377 = tpu.matmul %17, %376, %cst_204 {dimension_numbers = #tpu.dot_dimension_numbers<[1], [0], [0], [1], [0, 0, 1, 1], [], []>} : vector<16x6xbf16>, vector<6x140xbf16>, vector<16x140xf32> -> vector<16x140xf32>
    %378 = arith.addf %374, %377 : vector<16x140xf32>
    %379 = vector.extract_strided_slice %367 {offsets = [0, 3], sizes = [6, 140], strides = [1, 1]} : vector<6x200xf32> to vector<6x140xf32>
    %380 = arith.truncf %379 : vector<6x140xf32> to vector<6x140xbf16>
    %cst_205 = arith.constant dense<0.000000e+00> : vector<16x140xf32>
    %381 = tpu.matmul %19, %380, %cst_205 {dimension_numbers = #tpu.dot_dimension_numbers<[1], [0], [0], [1], [0, 0, 1, 1], [], []>} : vector<16x6xbf16>, vector<6x140xbf16>, vector<16x140xf32> -> vector<16x140xf32>
    %382 = arith.addf %378, %381 : vector<16x140xf32>
    %383 = vector.extract_strided_slice %367 {offsets = [0, 4], sizes = [6, 140], strides = [1, 1]} : vector<6x200xf32> to vector<6x140xf32>
    %384 = arith.truncf %383 : vector<6x140xf32> to vector<6x140xbf16>
    %cst_206 = arith.constant dense<0.000000e+00> : vector<16x140xf32>
    %385 = tpu.matmul %21, %384, %cst_206 {dimension_numbers = #tpu.dot_dimension_numbers<[1], [0], [0], [1], [0, 0, 1, 1], [], []>} : vector<16x6xbf16>, vector<6x140xbf16>, vector<16x140xf32> -> vector<16x140xf32>
    %386 = arith.addf %382, %385 : vector<16x140xf32>
    %387 = vector.extract_strided_slice %367 {offsets = [0, 14], sizes = [6, 140], strides = [1, 1]} : vector<6x200xf32> to vector<6x140xf32>
    %388 = arith.truncf %387 : vector<6x140xf32> to vector<6x140xbf16>
    %cst_207 = arith.constant dense<0.000000e+00> : vector<16x140xf32>
    %389 = tpu.matmul %23, %388, %cst_207 {dimension_numbers = #tpu.dot_dimension_numbers<[1], [0], [0], [1], [0, 0, 1, 1], [], []>} : vector<16x6xbf16>, vector<6x140xbf16>, vector<16x140xf32> -> vector<16x140xf32>
    %390 = arith.addf %386, %389 : vector<16x140xf32>
    %391 = vector.extract_strided_slice %367 {offsets = [0, 15], sizes = [6, 140], strides = [1, 1]} : vector<6x200xf32> to vector<6x140xf32>
    %392 = arith.truncf %391 : vector<6x140xf32> to vector<6x140xbf16>
    %cst_208 = arith.constant dense<0.000000e+00> : vector<16x140xf32>
    %393 = tpu.matmul %25, %392, %cst_208 {dimension_numbers = #tpu.dot_dimension_numbers<[1], [0], [0], [1], [0, 0, 1, 1], [], []>} : vector<16x6xbf16>, vector<6x140xbf16>, vector<16x140xf32> -> vector<16x140xf32>
    %394 = arith.addf %390, %393 : vector<16x140xf32>
    %395 = vector.extract_strided_slice %367 {offsets = [0, 16], sizes = [6, 140], strides = [1, 1]} : vector<6x200xf32> to vector<6x140xf32>
    %396 = arith.truncf %395 : vector<6x140xf32> to vector<6x140xbf16>
    %cst_209 = arith.constant dense<0.000000e+00> : vector<16x140xf32>
    %397 = tpu.matmul %27, %396, %cst_209 {dimension_numbers = #tpu.dot_dimension_numbers<[1], [0], [0], [1], [0, 0, 1, 1], [], []>} : vector<16x6xbf16>, vector<6x140xbf16>, vector<16x140xf32> -> vector<16x140xf32>
    %398 = arith.addf %394, %397 : vector<16x140xf32>
    %399 = vector.extract_strided_slice %367 {offsets = [0, 17], sizes = [6, 140], strides = [1, 1]} : vector<6x200xf32> to vector<6x140xf32>
    %400 = arith.truncf %399 : vector<6x140xf32> to vector<6x140xbf16>
    %cst_210 = arith.constant dense<0.000000e+00> : vector<16x140xf32>
    %401 = tpu.matmul %29, %400, %cst_210 {dimension_numbers = #tpu.dot_dimension_numbers<[1], [0], [0], [1], [0, 0, 1, 1], [], []>} : vector<16x6xbf16>, vector<6x140xbf16>, vector<16x140xf32> -> vector<16x140xf32>
    %402 = arith.addf %398, %401 : vector<16x140xf32>
    %403 = vector.extract_strided_slice %367 {offsets = [0, 18], sizes = [6, 140], strides = [1, 1]} : vector<6x200xf32> to vector<6x140xf32>
    %404 = arith.truncf %403 : vector<6x140xf32> to vector<6x140xbf16>
    %cst_211 = arith.constant dense<0.000000e+00> : vector<16x140xf32>
    %405 = tpu.matmul %31, %404, %cst_211 {dimension_numbers = #tpu.dot_dimension_numbers<[1], [0], [0], [1], [0, 0, 1, 1], [], []>} : vector<16x6xbf16>, vector<6x140xbf16>, vector<16x140xf32> -> vector<16x140xf32>
    %406 = arith.addf %402, %405 : vector<16x140xf32>
    %407 = vector.extract_strided_slice %367 {offsets = [0, 28], sizes = [6, 140], strides = [1, 1]} : vector<6x200xf32> to vector<6x140xf32>
    %408 = arith.truncf %407 : vector<6x140xf32> to vector<6x140xbf16>
    %cst_212 = arith.constant dense<0.000000e+00> : vector<16x140xf32>
    %409 = tpu.matmul %33, %408, %cst_212 {dimension_numbers = #tpu.dot_dimension_numbers<[1], [0], [0], [1], [0, 0, 1, 1], [], []>} : vector<16x6xbf16>, vector<6x140xbf16>, vector<16x140xf32> -> vector<16x140xf32>
    %410 = arith.addf %406, %409 : vector<16x140xf32>
    %411 = vector.extract_strided_slice %367 {offsets = [0, 29], sizes = [6, 140], strides = [1, 1]} : vector<6x200xf32> to vector<6x140xf32>
    %412 = arith.truncf %411 : vector<6x140xf32> to vector<6x140xbf16>
    %cst_213 = arith.constant dense<0.000000e+00> : vector<16x140xf32>
    %413 = tpu.matmul %35, %412, %cst_213 {dimension_numbers = #tpu.dot_dimension_numbers<[1], [0], [0], [1], [0, 0, 1, 1], [], []>} : vector<16x6xbf16>, vector<6x140xbf16>, vector<16x140xf32> -> vector<16x140xf32>
    %414 = arith.addf %410, %413 : vector<16x140xf32>
    %415 = vector.extract_strided_slice %367 {offsets = [0, 30], sizes = [6, 140], strides = [1, 1]} : vector<6x200xf32> to vector<6x140xf32>
    %416 = arith.truncf %415 : vector<6x140xf32> to vector<6x140xbf16>
    %cst_214 = arith.constant dense<0.000000e+00> : vector<16x140xf32>
    %417 = tpu.matmul %37, %416, %cst_214 {dimension_numbers = #tpu.dot_dimension_numbers<[1], [0], [0], [1], [0, 0, 1, 1], [], []>} : vector<16x6xbf16>, vector<6x140xbf16>, vector<16x140xf32> -> vector<16x140xf32>
    %418 = arith.addf %414, %417 : vector<16x140xf32>
    %419 = vector.extract_strided_slice %367 {offsets = [0, 31], sizes = [6, 140], strides = [1, 1]} : vector<6x200xf32> to vector<6x140xf32>
    %420 = arith.truncf %419 : vector<6x140xf32> to vector<6x140xbf16>
    %cst_215 = arith.constant dense<0.000000e+00> : vector<16x140xf32>
    %421 = tpu.matmul %39, %420, %cst_215 {dimension_numbers = #tpu.dot_dimension_numbers<[1], [0], [0], [1], [0, 0, 1, 1], [], []>} : vector<16x6xbf16>, vector<6x140xbf16>, vector<16x140xf32> -> vector<16x140xf32>
    %422 = arith.addf %418, %421 : vector<16x140xf32>
    %423 = vector.extract_strided_slice %367 {offsets = [0, 32], sizes = [6, 140], strides = [1, 1]} : vector<6x200xf32> to vector<6x140xf32>
    %424 = arith.truncf %423 : vector<6x140xf32> to vector<6x140xbf16>
    %cst_216 = arith.constant dense<0.000000e+00> : vector<16x140xf32>
    %425 = tpu.matmul %41, %424, %cst_216 {dimension_numbers = #tpu.dot_dimension_numbers<[1], [0], [0], [1], [0, 0, 1, 1], [], []>} : vector<16x6xbf16>, vector<6x140xbf16>, vector<16x140xf32> -> vector<16x140xf32>
    %426 = arith.addf %422, %425 : vector<16x140xf32>
    %427 = vector.extract_strided_slice %367 {offsets = [0, 42], sizes = [6, 140], strides = [1, 1]} : vector<6x200xf32> to vector<6x140xf32>
    %428 = arith.truncf %427 : vector<6x140xf32> to vector<6x140xbf16>
    %cst_217 = arith.constant dense<0.000000e+00> : vector<16x140xf32>
    %429 = tpu.matmul %43, %428, %cst_217 {dimension_numbers = #tpu.dot_dimension_numbers<[1], [0], [0], [1], [0, 0, 1, 1], [], []>} : vector<16x6xbf16>, vector<6x140xbf16>, vector<16x140xf32> -> vector<16x140xf32>
    %430 = arith.addf %426, %429 : vector<16x140xf32>
    %431 = vector.extract_strided_slice %367 {offsets = [0, 43], sizes = [6, 140], strides = [1, 1]} : vector<6x200xf32> to vector<6x140xf32>
    %432 = arith.truncf %431 : vector<6x140xf32> to vector<6x140xbf16>
    %cst_218 = arith.constant dense<0.000000e+00> : vector<16x140xf32>
    %433 = tpu.matmul %45, %432, %cst_218 {dimension_numbers = #tpu.dot_dimension_numbers<[1], [0], [0], [1], [0, 0, 1, 1], [], []>} : vector<16x6xbf16>, vector<6x140xbf16>, vector<16x140xf32> -> vector<16x140xf32>
    %434 = arith.addf %430, %433 : vector<16x140xf32>
    %435 = vector.extract_strided_slice %367 {offsets = [0, 44], sizes = [6, 140], strides = [1, 1]} : vector<6x200xf32> to vector<6x140xf32>
    %436 = arith.truncf %435 : vector<6x140xf32> to vector<6x140xbf16>
    %cst_219 = arith.constant dense<0.000000e+00> : vector<16x140xf32>
    %437 = tpu.matmul %47, %436, %cst_219 {dimension_numbers = #tpu.dot_dimension_numbers<[1], [0], [0], [1], [0, 0, 1, 1], [], []>} : vector<16x6xbf16>, vector<6x140xbf16>, vector<16x140xf32> -> vector<16x140xf32>
    %438 = arith.addf %434, %437 : vector<16x140xf32>
    %439 = vector.extract_strided_slice %367 {offsets = [0, 45], sizes = [6, 140], strides = [1, 1]} : vector<6x200xf32> to vector<6x140xf32>
    %440 = arith.truncf %439 : vector<6x140xf32> to vector<6x140xbf16>
    %cst_220 = arith.constant dense<0.000000e+00> : vector<16x140xf32>
    %441 = tpu.matmul %49, %440, %cst_220 {dimension_numbers = #tpu.dot_dimension_numbers<[1], [0], [0], [1], [0, 0, 1, 1], [], []>} : vector<16x6xbf16>, vector<6x140xbf16>, vector<16x140xf32> -> vector<16x140xf32>
    %442 = arith.addf %438, %441 : vector<16x140xf32>
    %443 = vector.extract_strided_slice %367 {offsets = [0, 46], sizes = [6, 140], strides = [1, 1]} : vector<6x200xf32> to vector<6x140xf32>
    %444 = arith.truncf %443 : vector<6x140xf32> to vector<6x140xbf16>
    %cst_221 = arith.constant dense<0.000000e+00> : vector<16x140xf32>
    %445 = tpu.matmul %51, %444, %cst_221 {dimension_numbers = #tpu.dot_dimension_numbers<[1], [0], [0], [1], [0, 0, 1, 1], [], []>} : vector<16x6xbf16>, vector<6x140xbf16>, vector<16x140xf32> -> vector<16x140xf32>
    %446 = arith.addf %442, %445 : vector<16x140xf32>
    %447 = vector.extract_strided_slice %367 {offsets = [0, 56], sizes = [6, 140], strides = [1, 1]} : vector<6x200xf32> to vector<6x140xf32>
    %448 = arith.truncf %447 : vector<6x140xf32> to vector<6x140xbf16>
    %cst_222 = arith.constant dense<0.000000e+00> : vector<16x140xf32>
    %449 = tpu.matmul %53, %448, %cst_222 {dimension_numbers = #tpu.dot_dimension_numbers<[1], [0], [0], [1], [0, 0, 1, 1], [], []>} : vector<16x6xbf16>, vector<6x140xbf16>, vector<16x140xf32> -> vector<16x140xf32>
    %450 = arith.addf %446, %449 : vector<16x140xf32>
    %451 = vector.extract_strided_slice %367 {offsets = [0, 57], sizes = [6, 140], strides = [1, 1]} : vector<6x200xf32> to vector<6x140xf32>
    %452 = arith.truncf %451 : vector<6x140xf32> to vector<6x140xbf16>
    %cst_223 = arith.constant dense<0.000000e+00> : vector<16x140xf32>
    %453 = tpu.matmul %55, %452, %cst_223 {dimension_numbers = #tpu.dot_dimension_numbers<[1], [0], [0], [1], [0, 0, 1, 1], [], []>} : vector<16x6xbf16>, vector<6x140xbf16>, vector<16x140xf32> -> vector<16x140xf32>
    %454 = arith.addf %450, %453 : vector<16x140xf32>
    %455 = vector.extract_strided_slice %367 {offsets = [0, 58], sizes = [6, 140], strides = [1, 1]} : vector<6x200xf32> to vector<6x140xf32>
    %456 = arith.truncf %455 : vector<6x140xf32> to vector<6x140xbf16>
    %cst_224 = arith.constant dense<0.000000e+00> : vector<16x140xf32>
    %457 = tpu.matmul %57, %456, %cst_224 {dimension_numbers = #tpu.dot_dimension_numbers<[1], [0], [0], [1], [0, 0, 1, 1], [], []>} : vector<16x6xbf16>, vector<6x140xbf16>, vector<16x140xf32> -> vector<16x140xf32>
    %458 = arith.addf %454, %457 : vector<16x140xf32>
    %459 = vector.extract_strided_slice %367 {offsets = [0, 59], sizes = [6, 140], strides = [1, 1]} : vector<6x200xf32> to vector<6x140xf32>
    %460 = arith.truncf %459 : vector<6x140xf32> to vector<6x140xbf16>
    %cst_225 = arith.constant dense<0.000000e+00> : vector<16x140xf32>
    %461 = tpu.matmul %59, %460, %cst_225 {dimension_numbers = #tpu.dot_dimension_numbers<[1], [0], [0], [1], [0, 0, 1, 1], [], []>} : vector<16x6xbf16>, vector<6x140xbf16>, vector<16x140xf32> -> vector<16x140xf32>
    %462 = arith.addf %458, %461 : vector<16x140xf32>
    %463 = vector.extract_strided_slice %367 {offsets = [0, 60], sizes = [6, 140], strides = [1, 1]} : vector<6x200xf32> to vector<6x140xf32>
    %464 = arith.truncf %463 : vector<6x140xf32> to vector<6x140xbf16>
    %cst_226 = arith.constant dense<0.000000e+00> : vector<16x140xf32>
    %465 = tpu.matmul %61, %464, %cst_226 {dimension_numbers = #tpu.dot_dimension_numbers<[1], [0], [0], [1], [0, 0, 1, 1], [], []>} : vector<16x6xbf16>, vector<6x140xbf16>, vector<16x140xf32> -> vector<16x140xf32>
    %466 = arith.addf %462, %465 : vector<16x140xf32>
    %467 = vector.broadcast %62 : vector<16x1xf32> to vector<16x140xf32>
    %468 = arith.addf %466, %467 : vector<16x140xf32>
    %cst_227 = arith.constant 0.000000e+00 : f32
    %469 = vector.broadcast %cst_227 : f32 to vector<16x140xf32>
    %470 = arith.maximumf %468, %469 : vector<16x140xf32>
    %471 = vector.extract_strided_slice %470 {offsets = [0, 0], sizes = [16, 121], strides = [1, 1]} : vector<16x140xf32> to vector<16x121xf32>
    %472 = vector.extract_strided_slice %470 {offsets = [0, 1], sizes = [16, 121], strides = [1, 1]} : vector<16x140xf32> to vector<16x121xf32>
    %473 = arith.maximumf %471, %472 : vector<16x121xf32>
    %474 = vector.extract_strided_slice %470 {offsets = [0, 14], sizes = [16, 121], strides = [1, 1]} : vector<16x140xf32> to vector<16x121xf32>
    %475 = vector.extract_strided_slice %470 {offsets = [0, 15], sizes = [16, 121], strides = [1, 1]} : vector<16x140xf32> to vector<16x121xf32>
    %476 = arith.maximumf %474, %475 : vector<16x121xf32>
    %477 = arith.maximumf %473, %476 : vector<16x121xf32>
    %478 = arith.truncf %477 : vector<16x121xf32> to vector<16x121xbf16>
    %cst_228 = arith.constant dense<0.000000e+00> : vector<16x25xf32>
    %479 = tpu.matmul %478, %63, %cst_228 {dimension_numbers = #tpu.dot_dimension_numbers<[1], [0], [0], [1], [0, 0, 1, 1], [], []>} : vector<16x121xbf16>, vector<121x25xbf16>, vector<16x25xf32> -> vector<16x25xf32>
    %480 = vector.extract_strided_slice %479 {offsets = [0, 0], sizes = [1, 25], strides = [1, 1]} : vector<16x25xf32> to vector<1x25xf32>
    %481 = arith.truncf %480 : vector<1x25xf32> to vector<1x25xbf16>
    %cst_229 = arith.constant dense<0.000000e+00> : vector<1x120xf32>
    %482 = tpu.matmul %481, %65, %cst_229 {dimension_numbers = #tpu.dot_dimension_numbers<[1], [0], [0], [1], [0, 0, 1, 1], [], []>} : vector<1x25xbf16>, vector<25x120xbf16>, vector<1x120xf32> -> vector<1x120xf32>
    %483 = vector.extract_strided_slice %479 {offsets = [1, 0], sizes = [1, 25], strides = [1, 1]} : vector<16x25xf32> to vector<1x25xf32>
    %484 = arith.truncf %483 : vector<1x25xf32> to vector<1x25xbf16>
    %cst_230 = arith.constant dense<0.000000e+00> : vector<1x120xf32>
    %485 = tpu.matmul %484, %67, %cst_230 {dimension_numbers = #tpu.dot_dimension_numbers<[1], [0], [0], [1], [0, 0, 1, 1], [], []>} : vector<1x25xbf16>, vector<25x120xbf16>, vector<1x120xf32> -> vector<1x120xf32>
    %486 = arith.addf %482, %485 : vector<1x120xf32>
    %487 = vector.extract_strided_slice %479 {offsets = [2, 0], sizes = [1, 25], strides = [1, 1]} : vector<16x25xf32> to vector<1x25xf32>
    %488 = arith.truncf %487 : vector<1x25xf32> to vector<1x25xbf16>
    %cst_231 = arith.constant dense<0.000000e+00> : vector<1x120xf32>
    %489 = tpu.matmul %488, %69, %cst_231 {dimension_numbers = #tpu.dot_dimension_numbers<[1], [0], [0], [1], [0, 0, 1, 1], [], []>} : vector<1x25xbf16>, vector<25x120xbf16>, vector<1x120xf32> -> vector<1x120xf32>
    %490 = arith.addf %486, %489 : vector<1x120xf32>
    %491 = vector.extract_strided_slice %479 {offsets = [3, 0], sizes = [1, 25], strides = [1, 1]} : vector<16x25xf32> to vector<1x25xf32>
    %492 = arith.truncf %491 : vector<1x25xf32> to vector<1x25xbf16>
    %cst_232 = arith.constant dense<0.000000e+00> : vector<1x120xf32>
    %493 = tpu.matmul %492, %71, %cst_232 {dimension_numbers = #tpu.dot_dimension_numbers<[1], [0], [0], [1], [0, 0, 1, 1], [], []>} : vector<1x25xbf16>, vector<25x120xbf16>, vector<1x120xf32> -> vector<1x120xf32>
    %494 = arith.addf %490, %493 : vector<1x120xf32>
    %495 = vector.extract_strided_slice %479 {offsets = [4, 0], sizes = [1, 25], strides = [1, 1]} : vector<16x25xf32> to vector<1x25xf32>
    %496 = arith.truncf %495 : vector<1x25xf32> to vector<1x25xbf16>
    %cst_233 = arith.constant dense<0.000000e+00> : vector<1x120xf32>
    %497 = tpu.matmul %496, %73, %cst_233 {dimension_numbers = #tpu.dot_dimension_numbers<[1], [0], [0], [1], [0, 0, 1, 1], [], []>} : vector<1x25xbf16>, vector<25x120xbf16>, vector<1x120xf32> -> vector<1x120xf32>
    %498 = arith.addf %494, %497 : vector<1x120xf32>
    %499 = vector.extract_strided_slice %479 {offsets = [5, 0], sizes = [1, 25], strides = [1, 1]} : vector<16x25xf32> to vector<1x25xf32>
    %500 = arith.truncf %499 : vector<1x25xf32> to vector<1x25xbf16>
    %cst_234 = arith.constant dense<0.000000e+00> : vector<1x120xf32>
    %501 = tpu.matmul %500, %75, %cst_234 {dimension_numbers = #tpu.dot_dimension_numbers<[1], [0], [0], [1], [0, 0, 1, 1], [], []>} : vector<1x25xbf16>, vector<25x120xbf16>, vector<1x120xf32> -> vector<1x120xf32>
    %502 = arith.addf %498, %501 : vector<1x120xf32>
    %503 = vector.extract_strided_slice %479 {offsets = [6, 0], sizes = [1, 25], strides = [1, 1]} : vector<16x25xf32> to vector<1x25xf32>
    %504 = arith.truncf %503 : vector<1x25xf32> to vector<1x25xbf16>
    %cst_235 = arith.constant dense<0.000000e+00> : vector<1x120xf32>
    %505 = tpu.matmul %504, %77, %cst_235 {dimension_numbers = #tpu.dot_dimension_numbers<[1], [0], [0], [1], [0, 0, 1, 1], [], []>} : vector<1x25xbf16>, vector<25x120xbf16>, vector<1x120xf32> -> vector<1x120xf32>
    %506 = arith.addf %502, %505 : vector<1x120xf32>
    %507 = vector.extract_strided_slice %479 {offsets = [7, 0], sizes = [1, 25], strides = [1, 1]} : vector<16x25xf32> to vector<1x25xf32>
    %508 = arith.truncf %507 : vector<1x25xf32> to vector<1x25xbf16>
    %cst_236 = arith.constant dense<0.000000e+00> : vector<1x120xf32>
    %509 = tpu.matmul %508, %79, %cst_236 {dimension_numbers = #tpu.dot_dimension_numbers<[1], [0], [0], [1], [0, 0, 1, 1], [], []>} : vector<1x25xbf16>, vector<25x120xbf16>, vector<1x120xf32> -> vector<1x120xf32>
    %510 = arith.addf %506, %509 : vector<1x120xf32>
    %511 = vector.extract_strided_slice %479 {offsets = [8, 0], sizes = [1, 25], strides = [1, 1]} : vector<16x25xf32> to vector<1x25xf32>
    %512 = arith.truncf %511 : vector<1x25xf32> to vector<1x25xbf16>
    %cst_237 = arith.constant dense<0.000000e+00> : vector<1x120xf32>
    %513 = tpu.matmul %512, %81, %cst_237 {dimension_numbers = #tpu.dot_dimension_numbers<[1], [0], [0], [1], [0, 0, 1, 1], [], []>} : vector<1x25xbf16>, vector<25x120xbf16>, vector<1x120xf32> -> vector<1x120xf32>
    %514 = arith.addf %510, %513 : vector<1x120xf32>
    %515 = vector.extract_strided_slice %479 {offsets = [9, 0], sizes = [1, 25], strides = [1, 1]} : vector<16x25xf32> to vector<1x25xf32>
    %516 = arith.truncf %515 : vector<1x25xf32> to vector<1x25xbf16>
    %cst_238 = arith.constant dense<0.000000e+00> : vector<1x120xf32>
    %517 = tpu.matmul %516, %83, %cst_238 {dimension_numbers = #tpu.dot_dimension_numbers<[1], [0], [0], [1], [0, 0, 1, 1], [], []>} : vector<1x25xbf16>, vector<25x120xbf16>, vector<1x120xf32> -> vector<1x120xf32>
    %518 = arith.addf %514, %517 : vector<1x120xf32>
    %519 = vector.extract_strided_slice %479 {offsets = [10, 0], sizes = [1, 25], strides = [1, 1]} : vector<16x25xf32> to vector<1x25xf32>
    %520 = arith.truncf %519 : vector<1x25xf32> to vector<1x25xbf16>
    %cst_239 = arith.constant dense<0.000000e+00> : vector<1x120xf32>
    %521 = tpu.matmul %520, %85, %cst_239 {dimension_numbers = #tpu.dot_dimension_numbers<[1], [0], [0], [1], [0, 0, 1, 1], [], []>} : vector<1x25xbf16>, vector<25x120xbf16>, vector<1x120xf32> -> vector<1x120xf32>
    %522 = arith.addf %518, %521 : vector<1x120xf32>
    %523 = vector.extract_strided_slice %479 {offsets = [11, 0], sizes = [1, 25], strides = [1, 1]} : vector<16x25xf32> to vector<1x25xf32>
    %524 = arith.truncf %523 : vector<1x25xf32> to vector<1x25xbf16>
    %cst_240 = arith.constant dense<0.000000e+00> : vector<1x120xf32>
    %525 = tpu.matmul %524, %87, %cst_240 {dimension_numbers = #tpu.dot_dimension_numbers<[1], [0], [0], [1], [0, 0, 1, 1], [], []>} : vector<1x25xbf16>, vector<25x120xbf16>, vector<1x120xf32> -> vector<1x120xf32>
    %526 = arith.addf %522, %525 : vector<1x120xf32>
    %527 = vector.extract_strided_slice %479 {offsets = [12, 0], sizes = [1, 25], strides = [1, 1]} : vector<16x25xf32> to vector<1x25xf32>
    %528 = arith.truncf %527 : vector<1x25xf32> to vector<1x25xbf16>
    %cst_241 = arith.constant dense<0.000000e+00> : vector<1x120xf32>
    %529 = tpu.matmul %528, %89, %cst_241 {dimension_numbers = #tpu.dot_dimension_numbers<[1], [0], [0], [1], [0, 0, 1, 1], [], []>} : vector<1x25xbf16>, vector<25x120xbf16>, vector<1x120xf32> -> vector<1x120xf32>
    %530 = arith.addf %526, %529 : vector<1x120xf32>
    %531 = vector.extract_strided_slice %479 {offsets = [13, 0], sizes = [1, 25], strides = [1, 1]} : vector<16x25xf32> to vector<1x25xf32>
    %532 = arith.truncf %531 : vector<1x25xf32> to vector<1x25xbf16>
    %cst_242 = arith.constant dense<0.000000e+00> : vector<1x120xf32>
    %533 = tpu.matmul %532, %91, %cst_242 {dimension_numbers = #tpu.dot_dimension_numbers<[1], [0], [0], [1], [0, 0, 1, 1], [], []>} : vector<1x25xbf16>, vector<25x120xbf16>, vector<1x120xf32> -> vector<1x120xf32>
    %534 = arith.addf %530, %533 : vector<1x120xf32>
    %535 = vector.extract_strided_slice %479 {offsets = [14, 0], sizes = [1, 25], strides = [1, 1]} : vector<16x25xf32> to vector<1x25xf32>
    %536 = arith.truncf %535 : vector<1x25xf32> to vector<1x25xbf16>
    %cst_243 = arith.constant dense<0.000000e+00> : vector<1x120xf32>
    %537 = tpu.matmul %536, %93, %cst_243 {dimension_numbers = #tpu.dot_dimension_numbers<[1], [0], [0], [1], [0, 0, 1, 1], [], []>} : vector<1x25xbf16>, vector<25x120xbf16>, vector<1x120xf32> -> vector<1x120xf32>
    %538 = arith.addf %534, %537 : vector<1x120xf32>
    %539 = vector.extract_strided_slice %479 {offsets = [15, 0], sizes = [1, 25], strides = [1, 1]} : vector<16x25xf32> to vector<1x25xf32>
    %540 = arith.truncf %539 : vector<1x25xf32> to vector<1x25xbf16>
    %cst_244 = arith.constant dense<0.000000e+00> : vector<1x120xf32>
    %541 = tpu.matmul %540, %95, %cst_244 {dimension_numbers = #tpu.dot_dimension_numbers<[1], [0], [0], [1], [0, 0, 1, 1], [], []>} : vector<1x25xbf16>, vector<25x120xbf16>, vector<1x120xf32> -> vector<1x120xf32>
    %542 = arith.addf %538, %541 : vector<1x120xf32>
    %543 = arith.addf %542, %96 : vector<1x120xf32>
    %cst_245 = arith.constant 0.000000e+00 : f32
    %544 = vector.broadcast %cst_245 : f32 to vector<1x120xf32>
    %545 = arith.maximumf %543, %544 : vector<1x120xf32>
    %546 = arith.truncf %545 : vector<1x120xf32> to vector<1x120xbf16>
    %cst_246 = arith.constant dense<0.000000e+00> : vector<1x84xf32>
    %547 = tpu.matmul %546, %97, %cst_246 {dimension_numbers = #tpu.dot_dimension_numbers<[1], [0], [0], [1], [0, 0, 1, 1], [], []>} : vector<1x120xbf16>, vector<120x84xbf16>, vector<1x84xf32> -> vector<1x84xf32>
    %548 = arith.addf %547, %98 : vector<1x84xf32>
    %cst_247 = arith.constant 0.000000e+00 : f32
    %549 = vector.broadcast %cst_247 : f32 to vector<1x84xf32>
    %550 = arith.maximumf %548, %549 : vector<1x84xf32>
    %551 = arith.truncf %550 : vector<1x84xf32> to vector<1x84xbf16>
    %cst_248 = arith.constant dense<0.000000e+00> : vector<1x10xf32>
    %552 = tpu.matmul %551, %99, %cst_248 {dimension_numbers = #tpu.dot_dimension_numbers<[1], [0], [0], [1], [0, 0, 1, 1], [], []>} : vector<1x84xbf16>, vector<84x10xbf16>, vector<1x10xf32> -> vector<1x10xf32>
    %553 = arith.addf %552, %100 : vector<1x10xf32>
    %cst_249 = arith.constant dense<0xFF800000> : vector<1xf32>
    %554 = vector.multi_reduction <maximumf>, %553, %cst_249 [1] : vector<1x10xf32> to vector<1xf32>
    %555 = vector.shape_cast %554 : vector<1xf32> to vector<1x1xf32>
    %556 = vector.broadcast %555 : vector<1x1xf32> to vector<1x10xf32>
    %557 = arith.subf %553, %556 : vector<1x10xf32>
    %558 = math.exp %557 : vector<1x10xf32>
    %cst_250 = arith.constant dense<0.000000e+00> : vector<1xf32>
    %559 = vector.multi_reduction <add>, %558, %cst_250 [1] : vector<1x10xf32> to vector<1xf32>
    %560 = vector.shape_cast %559 : vector<1xf32> to vector<1x1xf32>
    %561 = math.log %560 : vector<1x1xf32>
    %562 = vector.broadcast %561 : vector<1x1xf32> to vector<1x10xf32>
    %563 = arith.subf %557, %562 : vector<1x10xf32>
    %c1_251 = arith.constant 1 : index
    %c0_252 = arith.constant 0 : index
    %c0_253 = arith.constant 0 : index
    %564 = vector.load %arg14[%c1_251, %c0_252, %c0_253] : memref<2x1x10xf32, #tpu.memory_space<vmem>>, vector<1x1x10xf32>
    %565 = vector.shape_cast %564 : vector<1x1x10xf32> to vector<1x10xf32>
    %566 = vector.shape_cast %563 : vector<1x10xf32> to vector<1x1x10xf32>
    tpu.vector_store %arg14[%c1_251, %c0_252, %c0_253], %566 {strides = array<i32>} : memref<2x1x10xf32, #tpu.memory_space<vmem>>, vector<1x1x10xf32>,
    return
  }
  func.func @transform_0(%arg0: i32) -> (i32, i32, i32) {
    %c0_i32 = arith.constant 0 : i32
    %c0_i32_0 = arith.constant 0 : i32
    %c0_i32_1 = arith.constant 0 : i32
    return %arg0, %c0_i32, %c0_i32_0 : i32, i32, i32
  }
  func.func @transform_1(%arg0: i32) -> (i32, i32, i32) {
    %c0_i32 = arith.constant 0 : i32
    %c0_i32_0 = arith.constant 0 : i32
    %c0_i32_1 = arith.constant 0 : i32
    %c0_i32_2 = arith.constant 0 : i32
    return %c0_i32, %c0_i32_0, %c0_i32_1 : i32, i32, i32
  }
  func.func @transform_2(%arg0: i32) -> (i32, i32) {
    %c0_i32 = arith.constant 0 : i32
    %c0_i32_0 = arith.constant 0 : i32
    %c0_i32_1 = arith.constant 0 : i32
    return %c0_i32, %c0_i32_0 : i32, i32
  }
  func.func @transform_3(%arg0: i32) -> (i32, i32) {
    %c0_i32 = arith.constant 0 : i32
    %c0_i32_0 = arith.constant 0 : i32
    %c0_i32_1 = arith.constant 0 : i32
    return %c0_i32, %c0_i32_0 : i32, i32
  }
  func.func @transform_4(%arg0: i32) -> (i32, i32, i32) {
    %c0_i32 = arith.constant 0 : i32
    %c0_i32_0 = arith.constant 0 : i32
    %c0_i32_1 = arith.constant 0 : i32
    %c0_i32_2 = arith.constant 0 : i32
    return %c0_i32, %c0_i32_0, %c0_i32_1 : i32, i32, i32
  }
  func.func @transform_5(%arg0: i32) -> (i32, i32) {
    %c0_i32 = arith.constant 0 : i32
    %c0_i32_0 = arith.constant 0 : i32
    %c0_i32_1 = arith.constant 0 : i32
    return %c0_i32, %c0_i32_0 : i32, i32
  }
  func.func @transform_6(%arg0: i32) -> (i32, i32) {
    %c0_i32 = arith.constant 0 : i32
    %c0_i32_0 = arith.constant 0 : i32
    %c0_i32_1 = arith.constant 0 : i32
    return %c0_i32, %c0_i32_0 : i32, i32
  }
  func.func @transform_7(%arg0: i32) -> (i32, i32, i32) {
    %c0_i32 = arith.constant 0 : i32
    %c0_i32_0 = arith.constant 0 : i32
    %c0_i32_1 = arith.constant 0 : i32
    %c0_i32_2 = arith.constant 0 : i32
    return %c0_i32, %c0_i32_0, %c0_i32_1 : i32, i32, i32
  }
  func.func @transform_8(%arg0: i32) -> (i32, i32) {
    %c0_i32 = arith.constant 0 : i32
    %c0_i32_0 = arith.constant 0 : i32
    %c0_i32_1 = arith.constant 0 : i32
    return %c0_i32, %c0_i32_0 : i32, i32
  }
  func.func @transform_9(%arg0: i32) -> (i32, i32) {
    %c0_i32 = arith.constant 0 : i32
    %c0_i32_0 = arith.constant 0 : i32
    %c0_i32_1 = arith.constant 0 : i32
    return %c0_i32, %c0_i32_0 : i32, i32
  }
  func.func @transform_10(%arg0: i32) -> (i32, i32) {
    %c0_i32 = arith.constant 0 : i32
    %c0_i32_0 = arith.constant 0 : i32
    %c0_i32_1 = arith.constant 0 : i32
    return %c0_i32, %c0_i32_0 : i32, i32
  }
  func.func @transform_11(%arg0: i32) -> (i32, i32) {
    %c0_i32 = arith.constant 0 : i32
    %c0_i32_0 = arith.constant 0 : i32
    %c0_i32_1 = arith.constant 0 : i32
    return %c0_i32, %c0_i32_0 : i32, i32
  }
  func.func @transform_12(%arg0: i32) -> (i32, i32) {
    %c0_i32 = arith.constant 0 : i32
    %c0_i32_0 = arith.constant 0 : i32
    %c0_i32_1 = arith.constant 0 : i32
    return %c0_i32, %c0_i32_0 : i32, i32
  }
  func.func @transform_13(%arg0: i32) -> (i32, i32, i32) {
    %c0_i32 = arith.constant 0 : i32
    %c0_i32_0 = arith.constant 0 : i32
    %c0_i32_1 = arith.constant 0 : i32
    return %arg0, %c0_i32, %c0_i32_0 : i32, i32, i32
  }
}

</mosaic_0001>

<llo_original>
// kernel: cifar10_net_simple_forward.1
$region0: #{cifar10_net_simple_forward.1}
  #allocation0 [shape = 'u32[]', space=smem, size = 0x4, offset = 0x4, fixed_abs, tag = 'smem constant byte address 0x4 - core index']
  #allocation1 [shape = 'u32[144,128]{1,0:T(1,128)}', space=vmem, size = 0x12000, scoped, tag = 'internal scratch']
  %s0 = inlined_call_operand.vmem [shape: f32[2,15,1024], index: 0, kind: input, shape index: {}]
  %s1 = inlined_call_operand.vmem [shape: bf16[5,6,15], index: 1, kind: input, shape index: {}]
  %s2 = inlined_call_operand.vmem [shape: f32[6,1], index: 2, kind: input, shape index: {}]
  %s3 = inlined_call_operand.vmem [shape: bf16[859,200], index: 3, kind: input, shape index: {}]
  %s4 = inlined_call_operand.vmem [shape: bf16[25,16,6], index: 4, kind: input, shape index: {}]
  %s5 = inlined_call_operand.vmem [shape: f32[16,1], index: 5, kind: input, shape index: {}]
  %s6 = inlined_call_operand.vmem [shape: bf16[121,25], index: 6, kind: input, shape index: {}]
  %s7 = inlined_call_operand.vmem [shape: bf16[16,25,120], index: 7, kind: input, shape index: {}]
  %s8 = inlined_call_operand.vmem [shape: f32[1,120], index: 8, kind: input, shape index: {}]
  %s9 = inlined_call_operand.vmem [shape: bf16[120,84], index: 9, kind: input, shape index: {}]
  %s10 = inlined_call_operand.vmem [shape: f32[1,84], index: 10, kind: input, shape index: {}]
  %s11 = inlined_call_operand.vmem [shape: bf16[84,10], index: 11, kind: input, shape index: {}]
  %s12 = inlined_call_operand.vmem [shape: f32[1,10], index: 12, kind: input, shape index: {}]
  %s13 = inlined_call_operand.hbm [shape: f32[2,1,10], index: 13, kind: output, shape index: {}]
  %s14 = sld [smem:[#allocation0]]
  $region62: #{cifar10_net_simple_forward.1} parent=0
    _
  %s16 = ssub.s32 1, %s14
  %s17 = scalar_select 0, %s16, %s14
  $region1: #{cifar10_net_simple_forward.1} parent=0
    #allocation2 [shape = 'u8[1024]{0}', space=vmem, size = 0x400, scoped, tag = 'output window, operand 0, single buffered']
    #allocation3 [shape = 's32[1]{0}', space=sflag, size = 0x4, scoped, tag = 'scoped memory for cifar10_net_simple_forward.1']
    %18 = vsyncpa [#allocation3], 0
    // Predicated region
    $region2: #{cifar10_net_simple_forward.1} parent=1 // pred_check
      _
    $region3: #{cifar10_net_simple_forward.1} parent=1 // pred_check_branch
      %20 = sbr.rel (0) target = $region5
    $region4: #{cifar10_net_simple_forward.1} parent=1 // pred_region
      _
    $region5: #{cifar10_net_simple_forward.1} parent=1 // pred_fallthru
      _
    // Predicated region
    $region6: #{cifar10_net_simple_forward.1} parent=1 // pred_check
      _
    $region7: #{cifar10_net_simple_forward.1} parent=1 // pred_check_branch
      %22 = sbr.rel (0) target = $region9
    $region8: #{cifar10_net_simple_forward.1} parent=1 // pred_region
      _
    $region9: #{cifar10_net_simple_forward.1} parent=1 // pred_fallthru
      _
    // Predicated region
    $region10: #{cifar10_net_simple_forward.1} parent=1 // pred_check
      _
    $region11: #{cifar10_net_simple_forward.1} parent=1 // pred_check_branch
      %24 = sbr.rel (0) target = $region13
    $region12: #{cifar10_net_simple_forward.1} parent=1 // pred_region
      _
    $region13: #{cifar10_net_simple_forward.1} parent=1 // pred_fallthru
      _
    // Predicated region
    $region14: #{cifar10_net_simple_forward.1} parent=1 // pred_check
      _
    $region15: #{cifar10_net_simple_forward.1} parent=1 // pred_check_branch
      %26 = sbr.rel (0) target = $region17
    $region16: #{cifar10_net_simple_forward.1} parent=1 // pred_region
      _
    $region17: #{cifar10_net_simple_forward.1} parent=1 // pred_fallthru
      _
    // Predicated region
    $region18: #{cifar10_net_simple_forward.1} parent=1 // pred_check
      _
    $region19: #{cifar10_net_simple_forward.1} parent=1 // pred_check_branch
      %28 = sbr.rel (0) target = $region21
    $region20: #{cifar10_net_simple_forward.1} parent=1 // pred_region
      _
    $region21: #{cifar10_net_simple_forward.1} parent=1 // pred_fallthru
      _
    // Predicated region
    $region22: #{cifar10_net_simple_forward.1} parent=1 // pred_check
      _
    $region23: #{cifar10_net_simple_forward.1} parent=1 // pred_check_branch
      %30 = sbr.rel (0) target = $region25
    $region24: #{cifar10_net_simple_forward.1} parent=1 // pred_region
      _
    $region25: #{cifar10_net_simple_forward.1} parent=1 // pred_fallthru
      _
    // Predicated region
    $region26: #{cifar10_net_simple_forward.1} parent=1 // pred_check
      _
    $region27: #{cifar10_net_simple_forward.1} parent=1 // pred_check_branch
      %32 = sbr.rel (0) target = $region29
    $region28: #{cifar10_net_simple_forward.1} parent=1 // pred_region
      _
    $region29: #{cifar10_net_simple_forward.1} parent=1 // pred_fallthru
      _
    // Predicated region
    $region30: #{cifar10_net_simple_forward.1} parent=1 // pred_check
      _
    $region31: #{cifar10_net_simple_forward.1} parent=1 // pred_check_branch
      %34 = sbr.rel (0) target = $region33
    $region32: #{cifar10_net_simple_forward.1} parent=1 // pred_region
      _
    $region33: #{cifar10_net_simple_forward.1} parent=1 // pred_fallthru
      _
    // Predicated region
    $region34: #{cifar10_net_simple_forward.1} parent=1 // pred_check
      _
    $region35: #{cifar10_net_simple_forward.1} parent=1 // pred_check_branch
      %36 = sbr.rel (0) target = $region37
    $region36: #{cifar10_net_simple_forward.1} parent=1 // pred_region
      _
    $region37: #{cifar10_net_simple_forward.1} parent=1 // pred_fallthru
      _
    // Predicated region
    $region38: #{cifar10_net_simple_forward.1} parent=1 // pred_check
      _
    $region39: #{cifar10_net_simple_forward.1} parent=1 // pred_check_branch
      %38 = sbr.rel (0) target = $region41
    $region40: #{cifar10_net_simple_forward.1} parent=1 // pred_region
      _
    $region41: #{cifar10_net_simple_forward.1} parent=1 // pred_fallthru
      _
    // Predicated region
    $region42: #{cifar10_net_simple_forward.1} parent=1 // pred_check
      _
    $region43: #{cifar10_net_simple_forward.1} parent=1 // pred_check_branch
      %40 = sbr.rel (0) target = $region45
    $region44: #{cifar10_net_simple_forward.1} parent=1 // pred_region
      _
    $region45: #{cifar10_net_simple_forward.1} parent=1 // pred_fallthru
      _
    // Predicated region
    $region46: #{cifar10_net_simple_forward.1} parent=1 // pred_check
      _
    $region47: #{cifar10_net_simple_forward.1} parent=1 // pred_check_branch
      %42 = sbr.rel (0) target = $region49
    $region48: #{cifar10_net_simple_forward.1} parent=1 // pred_region
      _
    $region49: #{cifar10_net_simple_forward.1} parent=1 // pred_fallthru
      _
    // Predicated region
    $region50: #{cifar10_net_simple_forward.1} parent=1 // pred_check
      _
    $region51: #{cifar10_net_simple_forward.1} parent=1 // pred_check_branch
      %44 = sbr.rel (0) target = $region53
    $region52: #{cifar10_net_simple_forward.1} parent=1 // pred_region
      _
    $region53: #{cifar10_net_simple_forward.1} parent=1 // pred_fallthru
      _
    %v46 = vld [vmem:[%s1] sm:$0x7]
    %s47 = scalar_lea.vmem %s1, 4
    %v48 = vld [vmem:[%s47] sm:$0x7]
    %s49 = scalar_lea.vmem %s1, 8
    %v50 = vld [vmem:[%s49] sm:$0x7]
    %s51 = scalar_lea.vmem %s1, 12
    %v52 = vld [vmem:[%s51] sm:$0x7]
    %s53 = scalar_lea.vmem %s1, 16
    %v54 = vld [vmem:[%s53] sm:$0x7]
    %v55 = vld [vmem:[%s2] sm:$0x3f]
    %v56 = vld [vmem:[%s3] sm:$0xff]
    %v57 = vld [vmem:[%s3 + $0x8] sm:$0xff]
    %v58 = vld [vmem:[%s3 + $0x10] sm:$0xff]
    %v59 = vld [vmem:[%s3 + $0x18] sm:$0xff]
    %v60 = vld [vmem:[%s3 + $0x20] sm:$0xff]
    %v61 = vld [vmem:[%s3 + $0x28] sm:$0xff]
    %v62 = vld [vmem:[%s3 + $0x30] sm:$0xff]
    %v63 = vld [vmem:[%s3 + $0x38] sm:$0xff]
    %v64 = vld [vmem:[%s3 + $0x40] sm:$0xff]
    %v65 = vld [vmem:[%s3 + $0x48] sm:$0xff]
    %v66 = vld [vmem:[%s3 + $0x50] sm:$0xff]
    %v67 = vld [vmem:[%s3 + $0x58] sm:$0xff]
    %v68 = vld [vmem:[%s3 + $0x60] sm:$0xff]
    %v69 = vld [vmem:[%s3 + $0x68] sm:$0xff]
    %v70 = vld [vmem:[%s3 + $0x70] sm:$0xff]
    %v71 = vld [vmem:[%s3 + $0x78] sm:$0xff]
    %v72 = vld [vmem:[%s3 + $0x80] sm:$0xff]
    %v73 = vld [vmem:[%s3 + $0x88] sm:$0xff]
    %v74 = vld [vmem:[%s3 + $0x90] sm:$0xff]
    %v75 = vld [vmem:[%s3 + $0x98] sm:$0xff]
    %v76 = vld [vmem:[%s3 + $0xa0] sm:$0xff]
    %v77 = vld [vmem:[%s3 + $0xa8] sm:$0xff]
    %v78 = vld [vmem:[%s3 + $0xb0] sm:$0xff]
    %v79 = vld [vmem:[%s3 + $0xb8] sm:$0xff]
    %v80 = vld [vmem:[%s3 + $0xc0] sm:$0xff]
    %v81 = vld [vmem:[%s3 + $0xc8] sm:$0xff]
    %v82 = vld [vmem:[%s3 + $0xd0] sm:$0xff]
    %v83 = vld [vmem:[%s3 + $0xd8] sm:$0xff]
    %v84 = vld [vmem:[%s3 + $0xe0] sm:$0xff]
    %v85 = vld [vmem:[%s3 + $0xe8] sm:$0xff]
    %v86 = vld [vmem:[%s3 + $0xf0] sm:$0xff]
    %v87 = vld [vmem:[%s3 + $0xf8] sm:$0xff]
    %v88 = vld [vmem:[%s3 + $0x100] sm:$0xff]
    %v89 = vld [vmem:[%s3 + $0x108] sm:$0xff]
    %v90 = vld [vmem:[%s3 + $0x110] sm:$0xff]
    %v91 = vld [vmem:[%s3 + $0x118] sm:$0xff]
    %v92 = vld [vmem:[%s3 + $0x120] sm:$0xff]
    %v93 = vld [vmem:[%s3 + $0x128] sm:$0xff]
    %v94 = vld [vmem:[%s3 + $0x130] sm:$0xff]
    %v95 = vld [vmem:[%s3 + $0x138] sm:$0xff]
    %v96 = vld [vmem:[%s3 + $0x140] sm:$0xff]
    %v97 = vld [vmem:[%s3 + $0x148] sm:$0xff]
    %v98 = vld [vmem:[%s3 + $0x150] sm:$0xff]
    %v99 = vld [vmem:[%s3 + $0x158] sm:$0xff]
    %v100 = vld [vmem:[%s3 + $0x160] sm:$0xff]
    %v101 = vld [vmem:[%s3 + $0x168] sm:$0xff]
    %v102 = vld [vmem:[%s3 + $0x170] sm:$0xff]
    %v103 = vld [vmem:[%s3 + $0x178] sm:$0xff]
    %v104 = vld [vmem:[%s3 + $0x180] sm:$0xff]
    %v105 = vld [vmem:[%s3 + $0x188] sm:$0xff]
    %v106 = vld [vmem:[%s3 + $0x190] sm:$0xff]
    %v107 = vld [vmem:[%s3 + $0x198] sm:$0xff]
    %v108 = vld [vmem:[%s3 + $0x1a0] sm:$0xff]
    %v109 = vld [vmem:[%s3 + $0x1a8] sm:$0xff]
    %v110 = vld [vmem:[%s3 + $0x1b0] sm:$0xff]
    %v111 = vld [vmem:[%s3 + $0x1b8] sm:$0xff]
    %v112 = vld [vmem:[%s3 + $0x1c0] sm:$0xff]
    %v113 = vld [vmem:[%s3 + $0x1c8] sm:$0xff]
    %v114 = vld [vmem:[%s3 + $0x1d0] sm:$0xff]
    %v115 = vld [vmem:[%s3 + $0x1d8] sm:$0xff]
    %v116 = vld [vmem:[%s3 + $0x1e0] sm:$0xff]
    %v117 = vld [vmem:[%s3 + $0x1e8] sm:$0xff]
    %v118 = vld [vmem:[%s3 + $0x1f0] sm:$0xff]
    %v119 = vld [vmem:[%s3 + $0x1f8] sm:$0xff]
    %v120 = vld [vmem:[%s3 + $0x200] sm:$0xff]
    %v121 = vld [vmem:[%s3 + $0x208] sm:$0xff]
    %v122 = vld [vmem:[%s3 + $0x210] sm:$0xff]
    %v123 = vld [vmem:[%s3 + $0x218] sm:$0xff]
    %v124 = vld [vmem:[%s3 + $0x220] sm:$0xff]
    %v125 = vld [vmem:[%s3 + $0x228] sm:$0xff]
    %v126 = vld [vmem:[%s3 + $0x230] sm:$0xff]
    %v127 = vld [vmem:[%s3 + $0x238] sm:$0xff]
    %v128 = vld [vmem:[%s3 + $0x240] sm:$0xff]
    %v129 = vld [vmem:[%s3 + $0x248] sm:$0xff]
    %v130 = vld [vmem:[%s3 + $0x250] sm:$0xff]
    %v131 = vld [vmem:[%s3 + $0x258] sm:$0xff]
    %v132 = vld [vmem:[%s3 + $0x260] sm:$0xff]
    %v133 = vld [vmem:[%s3 + $0x268] sm:$0xff]
    %v134 = vld [vmem:[%s3 + $0x270] sm:$0xff]
    %v135 = vld [vmem:[%s3 + $0x278] sm:$0xff]
    %v136 = vld [vmem:[%s3 + $0x280] sm:$0xff]
    %v137 = vld [vmem:[%s3 + $0x288] sm:$0xff]
    %v138 = vld [vmem:[%s3 + $0x290] sm:$0xff]
    %v139 = vld [vmem:[%s3 + $0x298] sm:$0xff]
    %v140 = vld [vmem:[%s3 + $0x2a0] sm:$0xff]
    %v141 = vld [vmem:[%s3 + $0x2a8] sm:$0xff]
    %v142 = vld [vmem:[%s3 + $0x2b0] sm:$0xff]
    %v143 = vld [vmem:[%s3 + $0x2b8] sm:$0xff]
    %v144 = vld [vmem:[%s3 + $0x2c0] sm:$0xff]
    %v145 = vld [vmem:[%s3 + $0x2c8] sm:$0xff]
    %v146 = vld [vmem:[%s3 + $0x2d0] sm:$0xff]
    %v147 = vld [vmem:[%s3 + $0x2d8] sm:$0xff]
    %v148 = vld [vmem:[%s3 + $0x2e0] sm:$0xff]
    %v149 = vld [vmem:[%s3 + $0x2e8] sm:$0xff]
    %v150 = vld [vmem:[%s3 + $0x2f0] sm:$0xff]
    %v151 = vld [vmem:[%s3 + $0x2f8] sm:$0xff]
    %v152 = vld [vmem:[%s3 + $0x300] sm:$0xff]
    %v153 = vld [vmem:[%s3 + $0x308] sm:$0xff]
    %v154 = vld [vmem:[%s3 + $0x310] sm:$0xff]
    %v155 = vld [vmem:[%s3 + $0x318] sm:$0xff]
    %v156 = vld [vmem:[%s3 + $0x320] sm:$0xff]
    %v157 = vld [vmem:[%s3 + $0x328] sm:$0xff]
    %v158 = vld [vmem:[%s3 + $0x330] sm:$0xff]
    %v159 = vld [vmem:[%s3 + $0x338] sm:$0xff]
    %v160 = vld [vmem:[%s3 + $0x340] sm:$0xff]
    %v161 = vld [vmem:[%s3 + $0x348] sm:$0xff]
    %v162 = vld [vmem:[%s3 + $0x350] sm:$0xff]
    %v163 = vld [vmem:[%s3 + $0x358] sm:$0x33]
    %v164 = vld [vmem:[%s4] sm:$0xf]
    %v165 = vld [vmem:[%s4 + $0x4] sm:$0xf]
    %s166 = scalar_lea.vmem %s4, 8
    %v167 = vld [vmem:[%s166] sm:$0xf]
    %v168 = vld [vmem:[%s166 + $0x4] sm:$0xf]
    %s169 = scalar_lea.vmem %s4, 16
    %v170 = vld [vmem:[%s169] sm:$0xf]
    %v171 = vld [vmem:[%s169 + $0x4] sm:$0xf]
    %s172 = scalar_lea.vmem %s4, 24
    %v173 = vld [vmem:[%s172] sm:$0xf]
    %v174 = vld [vmem:[%s172 + $0x4] sm:$0xf]
    %s175 = scalar_lea.vmem %s4, 32
    %v176 = vld [vmem:[%s175] sm:$0xf]
    %v177 = vld [vmem:[%s175 + $0x4] sm:$0xf]
    %s178 = scalar_lea.vmem %s4, 40
    %v179 = vld [vmem:[%s178] sm:$0xf]
    %v180 = vld [vmem:[%s178 + $0x4] sm:$0xf]
    %s181 = scalar_lea.vmem %s4, 48
    %v182 = vld [vmem:[%s181] sm:$0xf]
    %v183 = vld [vmem:[%s181 + $0x4] sm:$0xf]
    %s184 = scalar_lea.vmem %s4, 56
    %v185 = vld [vmem:[%s184] sm:$0xf]
    %v186 = vld [vmem:[%s184 + $0x4] sm:$0xf]
    %s187 = scalar_lea.vmem %s4, 64
    %v188 = vld [vmem:[%s187] sm:$0xf]
    %v189 = vld [vmem:[%s187 + $0x4] sm:$0xf]
    %s190 = scalar_lea.vmem %s4, 72
    %v191 = vld [vmem:[%s190] sm:$0xf]
    %v192 = vld [vmem:[%s190 + $0x4] sm:$0xf]
    %s193 = scalar_lea.vmem %s4, 80
    %v194 = vld [vmem:[%s193] sm:$0xf]
    %v195 = vld [vmem:[%s193 + $0x4] sm:$0xf]
    %s196 = scalar_lea.vmem %s4, 88
    %v197 = vld [vmem:[%s196] sm:$0xf]
    %v198 = vld [vmem:[%s196 + $0x4] sm:$0xf]
    %s199 = scalar_lea.vmem %s4, 96
    %v200 = vld [vmem:[%s199] sm:$0xf]
    %v201 = vld [vmem:[%s199 + $0x4] sm:$0xf]
    %s202 = scalar_lea.vmem %s4, 104
    %v203 = vld [vmem:[%s202] sm:$0xf]
    %v204 = vld [vmem:[%s202 + $0x4] sm:$0xf]
    %s205 = scalar_lea.vmem %s4, 112
    %v206 = vld [vmem:[%s205] sm:$0xf]
    %v207 = vld [vmem:[%s205 + $0x4] sm:$0xf]
    %s208 = scalar_lea.vmem %s4, 120
    %v209 = vld [vmem:[%s208] sm:$0xf]
    %v210 = vld [vmem:[%s208 + $0x4] sm:$0xf]
    %s211 = scalar_lea.vmem %s4, 128
    %v212 = vld [vmem:[%s211] sm:$0xf]
    %v213 = vld [vmem:[%s211 + $0x4] sm:$0xf]
    %s214 = scalar_lea.vmem %s4, 136
    %v215 = vld [vmem:[%s214] sm:$0xf]
    %v216 = vld [vmem:[%s214 + $0x4] sm:$0xf]
    %s217 = scalar_lea.vmem %s4, 144
    %v218 = vld [vmem:[%s217] sm:$0xf]
    %v219 = vld [vmem:[%s217 + $0x4] sm:$0xf]
    %s220 = scalar_lea.vmem %s4, 152
    %v221 = vld [vmem:[%s220] sm:$0xf]
    %v222 = vld [vmem:[%s220 + $0x4] sm:$0xf]
    %s223 = scalar_lea.vmem %s4, 160
    %v224 = vld [vmem:[%s223] sm:$0xf]
    %v225 = vld [vmem:[%s223 + $0x4] sm:$0xf]
    %s226 = scalar_lea.vmem %s4, 168
    %v227 = vld [vmem:[%s226] sm:$0xf]
    %v228 = vld [vmem:[%s226 + $0x4] sm:$0xf]
    %s229 = scalar_lea.vmem %s4, 176
    %v230 = vld [vmem:[%s229] sm:$0xf]
    %v231 = vld [vmem:[%s229 + $0x4] sm:$0xf]
    %s232 = scalar_lea.vmem %s4, 184
    %v233 = vld [vmem:[%s232] sm:$0xf]
    %v234 = vld [vmem:[%s232 + $0x4] sm:$0xf]
    %s235 = scalar_lea.vmem %s4, 192
    %v236 = vld [vmem:[%s235] sm:$0xf]
    %v237 = vld [vmem:[%s235 + $0x4] sm:$0xf]
    %v238 = vld [vmem:[%s5] sm:$0xff]
    %v239 = vld [vmem:[%s5 + $0x8] sm:$0xff]
    %v240 = vld [vmem:[%s6] sm:$0xf]
    %v241 = vld [vmem:[%s6 + $0x4] sm:$0xf]
    %v242 = vld [vmem:[%s6 + $0x8] sm:$0xf]
    %v243 = vld [vmem:[%s6 + $0xc] sm:$0xf]
    %v244 = vld [vmem:[%s6 + $0x10] sm:$0xf]
    %v245 = vld [vmem:[%s6 + $0x14] sm:$0xf]
    %v246 = vld [vmem:[%s6 + $0x18] sm:$0xf]
    %v247 = vld [vmem:[%s6 + $0x1c] sm:$0xf]
    %v248 = vld [vmem:[%s6 + $0x20] sm:$0xf]
    %v249 = vld [vmem:[%s6 + $0x24] sm:$0xf]
    %v250 = vld [vmem:[%s6 + $0x28] sm:$0xf]
    %v251 = vld [vmem:[%s6 + $0x2c] sm:$0xf]
    %v252 = vld [vmem:[%s6 + $0x30] sm:$0xf]
    %v253 = vld [vmem:[%s6 + $0x34] sm:$0xf]
    %v254 = vld [vmem:[%s6 + $0x38] sm:$0xf]
    %v255 = vld [vmem:[%s6 + $0x3c] sm:$0x1]
    %v256 = vld [vmem:[%s7] sm:$0xf]
    %v257 = vld [vmem:[%s7 + $0x4] sm:$0xf]
    %v258 = vld [vmem:[%s7 + $0x8] sm:$0xf]
    %v259 = vld [vmem:[%s7 + $0xc] sm:$0x1]
    %s260 = scalar_lea.vmem %s7, 16
    %v261 = vld [vmem:[%s260] sm:$0xf]
    %v262 = vld [vmem:[%s260 + $0x4] sm:$0xf]
    %v263 = vld [vmem:[%s260 + $0x8] sm:$0xf]
    %v264 = vld [vmem:[%s260 + $0xc] sm:$0x1]
    %s265 = scalar_lea.vmem %s7, 32
    %v266 = vld [vmem:[%s265] sm:$0xf]
    %v267 = vld [vmem:[%s265 + $0x4] sm:$0xf]
    %v268 = vld [vmem:[%s265 + $0x8] sm:$0xf]
    %v269 = vld [vmem:[%s265 + $0xc] sm:$0x1]
    %s270 = scalar_lea.vmem %s7, 48
    %v271 = vld [vmem:[%s270] sm:$0xf]
    %v272 = vld [vmem:[%s270 + $0x4] sm:$0xf]
    %v273 = vld [vmem:[%s270 + $0x8] sm:$0xf]
    %v274 = vld [vmem:[%s270 + $0xc] sm:$0x1]
    %s275 = scalar_lea.vmem %s7, 64
    %v276 = vld [vmem:[%s275] sm:$0xf]
    %v277 = vld [vmem:[%s275 + $0x4] sm:$0xf]
    %v278 = vld [vmem:[%s275 + $0x8] sm:$0xf]
    %v279 = vld [vmem:[%s275 + $0xc] sm:$0x1]
    %s280 = scalar_lea.vmem %s7, 80
    %v281 = vld [vmem:[%s280] sm:$0xf]
    %v282 = vld [vmem:[%s280 + $0x4] sm:$0xf]
    %v283 = vld [vmem:[%s280 + $0x8] sm:$0xf]
    %v284 = vld [vmem:[%s280 + $0xc] sm:$0x1]
    %s285 = scalar_lea.vmem %s7, 96
    %v286 = vld [vmem:[%s285] sm:$0xf]
    %v287 = vld [vmem:[%s285 + $0x4] sm:$0xf]
    %v288 = vld [vmem:[%s285 + $0x8] sm:$0xf]
    %v289 = vld [vmem:[%s285 + $0xc] sm:$0x1]
    %s290 = scalar_lea.vmem %s7, 112
    %v291 = vld [vmem:[%s290] sm:$0xf]
    %v292 = vld [vmem:[%s290 + $0x4] sm:$0xf]
    %v293 = vld [vmem:[%s290 + $0x8] sm:$0xf]
    %v294 = vld [vmem:[%s290 + $0xc] sm:$0x1]
    %s295 = scalar_lea.vmem %s7, 128
    %v296 = vld [vmem:[%s295] sm:$0xf]
    %v297 = vld [vmem:[%s295 + $0x4] sm:$0xf]
    %v298 = vld [vmem:[%s295 + $0x8] sm:$0xf]
    %v299 = vld [vmem:[%s295 + $0xc] sm:$0x1]
    %s300 = scalar_lea.vmem %s7, 144
    %v301 = vld [vmem:[%s300] sm:$0xf]
    %v302 = vld [vmem:[%s300 + $0x4] sm:$0xf]
    %v303 = vld [vmem:[%s300 + $0x8] sm:$0xf]
    %v304 = vld [vmem:[%s300 + $0xc] sm:$0x1]
    %s305 = scalar_lea.vmem %s7, 160
    %v306 = vld [vmem:[%s305] sm:$0xf]
    %v307 = vld [vmem:[%s305 + $0x4] sm:$0xf]
    %v308 = vld [vmem:[%s305 + $0x8] sm:$0xf]
    %v309 = vld [vmem:[%s305 + $0xc] sm:$0x1]
    %s310 = scalar_lea.vmem %s7, 176
    %v311 = vld [vmem:[%s310] sm:$0xf]
    %v312 = vld [vmem:[%s310 + $0x4] sm:$0xf]
    %v313 = vld [vmem:[%s310 + $0x8] sm:$0xf]
    %v314 = vld [vmem:[%s310 + $0xc] sm:$0x1]
    %s315 = scalar_lea.vmem %s7, 192
    %v316 = vld [vmem:[%s315] sm:$0xf]
    %v317 = vld [vmem:[%s315 + $0x4] sm:$0xf]
    %v318 = vld [vmem:[%s315 + $0x8] sm:$0xf]
    %v319 = vld [vmem:[%s315 + $0xc] sm:$0x1]
    %s320 = scalar_lea.vmem %s7, 208
    %v321 = vld [vmem:[%s320] sm:$0xf]
    %v322 = vld [vmem:[%s320 + $0x4] sm:$0xf]
    %v323 = vld [vmem:[%s320 + $0x8] sm:$0xf]
    %v324 = vld [vmem:[%s320 + $0xc] sm:$0x1]
    %s325 = scalar_lea.vmem %s7, 224
    %v326 = vld [vmem:[%s325] sm:$0xf]
    %v327 = vld [vmem:[%s325 + $0x4] sm:$0xf]
    %v328 = vld [vmem:[%s325 + $0x8] sm:$0xf]
    %v329 = vld [vmem:[%s325 + $0xc] sm:$0x1]
    %s330 = scalar_lea.vmem %s7, 240
    %v331 = vld [vmem:[%s330] sm:$0xf]
    %v332 = vld [vmem:[%s330 + $0x4] sm:$0xf]
    %v333 = vld [vmem:[%s330 + $0x8] sm:$0xf]
    %v334 = vld [vmem:[%s330 + $0xc] sm:$0x1]
    %v335 = vld [vmem:[%s8] sm:$0x1]
    %v336 = vld [vmem:[%s9] sm:$0xf]
    %v337 = vld [vmem:[%s9 + $0x4] sm:$0xf]
    %v338 = vld [vmem:[%s9 + $0x8] sm:$0xf]
    %v339 = vld [vmem:[%s9 + $0xc] sm:$0xf]
    %v340 = vld [vmem:[%s9 + $0x10] sm:$0xf]
    %v341 = vld [vmem:[%s9 + $0x14] sm:$0xf]
    %v342 = vld [vmem:[%s9 + $0x18] sm:$0xf]
    %v343 = vld [vmem:[%s9 + $0x1c] sm:$0xf]
    %v344 = vld [vmem:[%s9 + $0x20] sm:$0xf]
    %v345 = vld [vmem:[%s9 + $0x24] sm:$0xf]
    %v346 = vld [vmem:[%s9 + $0x28] sm:$0xf]
    %v347 = vld [vmem:[%s9 + $0x2c] sm:$0xf]
    %v348 = vld [vmem:[%s9 + $0x30] sm:$0xf]
    %v349 = vld [vmem:[%s9 + $0x34] sm:$0xf]
    %v350 = vld [vmem:[%s9 + $0x38] sm:$0xf]
    %v351 = vld [vmem:[%s10] sm:$0x1]
    %v352 = vld [vmem:[%s11] sm:$0xf]
    %v353 = vld [vmem:[%s11 + $0x4] sm:$0xf]
    %v354 = vld [vmem:[%s11 + $0x8] sm:$0xf]
    %v355 = vld [vmem:[%s11 + $0xc] sm:$0xf]
    %v356 = vld [vmem:[%s11 + $0x10] sm:$0xf]
    %v357 = vld [vmem:[%s11 + $0x14] sm:$0xf]
    %v358 = vld [vmem:[%s11 + $0x18] sm:$0xf]
    %v359 = vld [vmem:[%s11 + $0x1c] sm:$0xf]
    %v360 = vld [vmem:[%s11 + $0x20] sm:$0xf]
    %v361 = vld [vmem:[%s11 + $0x24] sm:$0xf]
    %v362 = vld [vmem:[%s11 + $0x28] sm:$0x3]
    %v363 = vld [vmem:[%s12] sm:$0x1]
    %v364 = vld [vmem:[%s0] sm:$0xff]
    %v365 = vld [vmem:[%s0 + $0x8] sm:$0xff]
    %v366 = vld [vmem:[%s0 + $0x10] sm:$0xff]
    %v367 = vld [vmem:[%s0 + $0x18] sm:$0xff]
    %v368 = vld [vmem:[%s0 + $0x20] sm:$0xff]
    %v369 = vld [vmem:[%s0 + $0x28] sm:$0xff]
    %v370 = vld [vmem:[%s0 + $0x30] sm:$0xff]
    %v371 = vld [vmem:[%s0 + $0x38] sm:$0xff]
    %v372 = vld [vmem:[%s0 + $0x40] sm:$0x7f]
    %v373 = vld [vmem:[%s0 + $0x48] sm:$0x7f]
    %v374 = vld [vmem:[%s0 + $0x50] sm:$0x7f]
    %v375 = vld [vmem:[%s0 + $0x58] sm:$0x7f]
    %v376 = vld [vmem:[%s0 + $0x60] sm:$0x7f]
    %v377 = vld [vmem:[%s0 + $0x68] sm:$0x7f]
    %v378 = vld [vmem:[%s0 + $0x70] sm:$0x7f]
    %v379 = vld [vmem:[%s0 + $0x78] sm:$0x7f]
    %v380 = vpack.c.bf16 %v372, %v364
    %v381 = vpack.c.bf16 %v373, %v365
    %v382 = vpack.c.bf16 %v374, %v366
    %v383 = vpack.c.bf16 %v375, %v367
    %v384 = vpack.c.bf16 %v376, %v368
    %v385 = vpack.c.bf16 %v377, %v369
    %v386 = vpack.c.bf16 %v378, %v370
    %v387 = vpack.c.bf16 %v379, %v371
    %396 = vrot.lane.b32.xlu0 %v380, 127
    %v397 = vpop.permute.xlu0 %396
    %398 = vrot.lane.b32.xlu0 %v381, 127
    %v399 = vpop.permute.xlu0 %398
    %400 = vrot.lane.b32.xlu0 %v382, 127
    %v401 = vpop.permute.xlu0 %400
    %402 = vrot.lane.b32.xlu0 %v383, 127
    %v403 = vpop.permute.xlu0 %402
    %404 = vrot.lane.b32.xlu0 %v384, 127
    %v405 = vpop.permute.xlu0 %404
    %406 = vrot.lane.b32.xlu0 %v385, 127
    %v407 = vpop.permute.xlu0 %406
    %408 = vrot.lane.b32.xlu0 %v386, 127
    %v409 = vpop.permute.xlu0 %408
    %410 = vrot.lane.b32.xlu0 %v387, 127
    %v411 = vpop.permute.xlu0 %410
    %vm412 = vcmask 1039360
    %v413 = vsel %vm412, %v397, %v399
    %v414 = vsel %vm412, %v399, %v401
    %v415 = vsel %vm412, %v401, %v403
    %v416 = vsel %vm412, %v403, %v405
    %v417 = vsel %vm412, %v405, %v407
    %v418 = vsel %vm412, %v407, %v409
    %v419 = vsel %vm412, %v409, %v411
    %vm420 = vcmask 121856
    %v422 = vsel %vm420, %v48, 0
    %vm424 = vcmask 1046528
    %vm425 = vcmask 1047552
    %v426 = vsel %vm424, 4294967295, 65535
    %v427 = vsel %vm425, %v426, 0
    %v429 = vand.u32 %v413, %v427
    %v432 = vand.u32 %v414, %v427
    %v435 = vand.u32 %v415, %v427
    %v438 = vand.u32 %v416, %v427
    %v441 = vand.u32 %v417, %v427
    %v444 = vand.u32 %v418, %v427
    %v447 = vand.u32 %v419, %v427
    %449 = vmatprep.subr.bf16.mxu0 0
    %450 = vmatpush1.bf16.msra.mxu0 0
    %451 = vmatprep.subr.bf16.mxu0 0
    %452 = vmatpush1.bf16.msra.mxu0 0
    %453 = vmatprep.subr.bf16.mxu0 0
    %454 = vmatpush1.bf16.msra.mxu0 0
    %455 = vmatprep.subr.bf16.mxu0 0
    %456 = vmatpush1.bf16.msra.mxu0 0
    %457 = vmatprep.subr.bf16.mxu0 0
    %458 = vmatpush1.bf16.msra.mxu0 0
    %459 = vmatprep.subr.bf16.mxu0 0
    %460 = vmatpush1.bf16.msra.mxu0 0
    %461 = vmatprep.subr.bf16.mxu0 0
    %462 = vmatpush1.bf16.msra.mxu0 0
    %463 = vmatprep.subr.bf16.mxu0 %v432
    %464 = vmatpush1.bf16.msra.mxu0 %v429
    %465 = vmatprep.subr.bf16.mxu0 0
    %466 = vmatpush2.bf16.msra.mxu0 0
    %467 = vmatprep.subr.bf16.mxu0 0
    %468 = vmatpush2.bf16.msra.mxu0 0
    %469 = vmatprep.subr.bf16.mxu0 0
    %470 = vmatpush2.bf16.msra.mxu0 0
    %471 = vmatprep.subr.bf16.mxu0 0
    %472 = vmatpush2.bf16.msra.mxu0 0
    %473 = vmatprep.subr.bf16.mxu0 0
    %474 = vmatpush2.bf16.msra.mxu0 0
    %475 = vmatprep.subr.bf16.mxu0 0
    %476 = vmatpush2.bf16.msra.mxu0 0
    %477 = vmatprep.subr.bf16.mxu0 0
    %478 = vmatpush2.bf16.msra.mxu0 0
    %479 = vmatprep.subr.bf16.mxu0 0
    %480 = vmatpush2.bf16.msra.mxu0 0
    %481 = vmatprep.mubr.bf16.mxu0 0
    %482 = vmatmul.mubr.bf16.gmra.mxu0 %v422
    %v483 = vpop.f32.mrf.mxu0
    %v484 = vadd.f32 0.0, %v483
    %v485 = vpop.f32.mrf.mxu0
    %v486 = vadd.f32 0.0, %v485
    %v487 = vpop.f32.mrf.mxu0
    %v488 = vpop.f32.mrf.mxu0
    %489 = vdwg.mxu0
    %490 = vmatprep.subr.bf16.mxu0 0
    %491 = vmatpush1.bf16.msra.mxu0 0
    %492 = vmatprep.subr.bf16.mxu0 0
    %493 = vmatpush1.bf16.msra.mxu0 0
    %494 = vmatprep.subr.bf16.mxu0 0
    %495 = vmatpush1.bf16.msra.mxu0 0
    %496 = vmatprep.subr.bf16.mxu0 0
    %497 = vmatpush1.bf16.msra.mxu0 0
    %498 = vmatprep.subr.bf16.mxu0 0
    %499 = vmatpush1.bf16.msra.mxu0 0
    %500 = vmatprep.subr.bf16.mxu0 0
    %501 = vmatpush1.bf16.msra.mxu0 0
    %502 = vmatprep.subr.bf16.mxu0 0
    %503 = vmatpush1.bf16.msra.mxu0 0
    %504 = vmatprep.subr.bf16.mxu0 %v438
    %505 = vmatpush1.bf16.msra.mxu0 %v435
    %506 = vmatprep.subr.bf16.mxu0 0
    %507 = vmatpush2.bf16.msra.mxu0 0
    %508 = vmatprep.subr.bf16.mxu0 0
    %509 = vmatpush2.bf16.msra.mxu0 0
    %510 = vmatprep.subr.bf16.mxu0 0
    %511 = vmatpush2.bf16.msra.mxu0 0
    %512 = vmatprep.subr.bf16.mxu0 0
    %513 = vmatpush2.bf16.msra.mxu0 0
    %514 = vmatprep.subr.bf16.mxu0 0
    %515 = vmatpush2.bf16.msra.mxu0 0
    %516 = vmatprep.subr.bf16.mxu0 0
    %517 = vmatpush2.bf16.msra.mxu0 0
    %518 = vmatprep.subr.bf16.mxu0 0
    %519 = vmatpush2.bf16.msra.mxu0 0
    %520 = vmatprep.subr.bf16.mxu0 0
    %521 = vmatpush2.bf16.msra.mxu0 0
    %522 = vmatprep.mubr.bf16.mxu0 0
    %523 = vmatmul.mubr.bf16.gmra.mxu0 %v422
    %v524 = vpop.f32.mrf.mxu0
    %v525 = vadd.f32 0.0, %v524
    %v526 = vpop.f32.mrf.mxu0
    %v527 = vadd.f32 0.0, %v526
    %v528 = vpop.f32.mrf.mxu0
    %v529 = vpop.f32.mrf.mxu0
    %530 = vdwg.mxu0
    %531 = vmatprep.subr.bf16.mxu0 0
    %532 = vmatpush1.bf16.msra.mxu0 0
    %533 = vmatprep.subr.bf16.mxu0 0
    %534 = vmatpush1.bf16.msra.mxu0 0
    %535 = vmatprep.subr.bf16.mxu0 0
    %536 = vmatpush1.bf16.msra.mxu0 0
    %537 = vmatprep.subr.bf16.mxu0 0
    %538 = vmatpush1.bf16.msra.mxu0 0
    %539 = vmatprep.subr.bf16.mxu0 0
    %540 = vmatpush1.bf16.msra.mxu0 0
    %541 = vmatprep.subr.bf16.mxu0 0
    %542 = vmatpush1.bf16.msra.mxu0 0
    %543 = vmatprep.subr.bf16.mxu0 0
    %544 = vmatpush1.bf16.msra.mxu0 0
    %545 = vmatprep.subr.bf16.mxu0 %v444
    %546 = vmatpush1.bf16.msra.mxu0 %v441
    %547 = vmatprep.subr.bf16.mxu0 0
    %548 = vmatpush2.bf16.msra.mxu0 0
    %549 = vmatprep.subr.bf16.mxu0 0
    %550 = vmatpush2.bf16.msra.mxu0 0
    %551 = vmatprep.subr.bf16.mxu0 0
    %552 = vmatpush2.bf16.msra.mxu0 0
    %553 = vmatprep.subr.bf16.mxu0 0
    %554 = vmatpush2.bf16.msra.mxu0 0
    %555 = vmatprep.subr.bf16.mxu0 0
    %556 = vmatpush2.bf16.msra.mxu0 0
    %557 = vmatprep.subr.bf16.mxu0 0
    %558 = vmatpush2.bf16.msra.mxu0 0
    %559 = vmatprep.subr.bf16.mxu0 0
    %560 = vmatpush2.bf16.msra.mxu0 0
    %561 = vmatprep.subr.bf16.mxu0 0
    %562 = vmatpush2.bf16.msra.mxu0 0
    %563 = vmatprep.mubr.bf16.mxu0 0
    %564 = vmatmul.mubr.bf16.gmra.mxu0 %v422
    %v565 = vpop.f32.mrf.mxu0
    %v566 = vadd.f32 0.0, %v565
    %v567 = vpop.f32.mrf.mxu0
    %v568 = vadd.f32 0.0, %v567
    %v569 = vpop.f32.mrf.mxu0
    %v570 = vpop.f32.mrf.mxu0
    %571 = vdwg.mxu0
    %572 = vmatprep.subr.bf16.mxu0 0
    %573 = vmatpush1.bf16.msra.mxu0 0
    %574 = vmatprep.subr.bf16.mxu0 0
    %575 = vmatpush1.bf16.msra.mxu0 0
    %576 = vmatprep.subr.bf16.mxu0 0
    %577 = vmatpush1.bf16.msra.mxu0 0
    %578 = vmatprep.subr.bf16.mxu0 0
    %579 = vmatpush1.bf16.msra.mxu0 0
    %580 = vmatprep.subr.bf16.mxu0 0
    %581 = vmatpush1.bf16.msra.mxu0 0
    %582 = vmatprep.subr.bf16.mxu0 0
    %583 = vmatpush1.bf16.msra.mxu0 0
    %584 = vmatprep.subr.bf16.mxu0 0
    %585 = vmatpush1.bf16.msra.mxu0 0
    %586 = vmatprep.subr.bf16.mxu0 0
    %587 = vmatpush1.bf16.msra.mxu0 %v447
    %588 = vmatprep.subr.bf16.mxu0 0
    %589 = vmatpush2.bf16.msra.mxu0 0
    %590 = vmatprep.subr.bf16.mxu0 0
    %591 = vmatpush2.bf16.msra.mxu0 0
    %592 = vmatprep.subr.bf16.mxu0 0
    %593 = vmatpush2.bf16.msra.mxu0 0
    %594 = vmatprep.subr.bf16.mxu0 0
    %595 = vmatpush2.bf16.msra.mxu0 0
    %596 = vmatprep.subr.bf16.mxu0 0
    %597 = vmatpush2.bf16.msra.mxu0 0
    %598 = vmatprep.subr.bf16.mxu0 0
    %599 = vmatpush2.bf16.msra.mxu0 0
    %600 = vmatprep.subr.bf16.mxu0 0
    %601 = vmatpush2.bf16.msra.mxu0 0
    %602 = vmatprep.subr.bf16.mxu0 0
    %603 = vmatpush2.bf16.msra.mxu0 0
    %604 = vmatprep.mubr.bf16.mxu0 0
    %605 = vmatmul.mubr.bf16.gmra.mxu0 %v422
    %v606 = vpop.f32.mrf.mxu0
    %v607 = vadd.f32 0.0, %v606
    %v608 = vpop.f32.mrf.mxu0
    %v609 = vpop.f32.mrf.mxu0
    %v610 = vpop.f32.mrf.mxu0
    %611 = vdwg.mxu0
    %v613 = vsel %vm420, %v46, 0
    %v616 = vand.u32 %v380, %v427
    %v619 = vand.u32 %v381, %v427
    %v622 = vand.u32 %v382, %v427
    %v625 = vand.u32 %v383, %v427
    %v628 = vand.u32 %v384, %v427
    %v631 = vand.u32 %v385, %v427
    %v634 = vand.u32 %v386, %v427
    %636 = vmatprep.subr.bf16.mxu0 0
    %637 = vmatpush1.bf16.msra.mxu0 0
    %638 = vmatprep.subr.bf16.mxu0 0
    %639 = vmatpush1.bf16.msra.mxu0 0
    %640 = vmatprep.subr.bf16.mxu0 0
    %641 = vmatpush1.bf16.msra.mxu0 0
    %642 = vmatprep.subr.bf16.mxu0 0
    %643 = vmatpush1.bf16.msra.mxu0 0
    %644 = vmatprep.subr.bf16.mxu0 0
    %645 = vmatpush1.bf16.msra.mxu0 0
    %646 = vmatprep.subr.bf16.mxu0 0
    %647 = vmatpush1.bf16.msra.mxu0 0
    %648 = vmatprep.subr.bf16.mxu0 0
    %649 = vmatpush1.bf16.msra.mxu0 0
    %650 = vmatprep.subr.bf16.mxu0 %v619
    %651 = vmatpush1.bf16.msra.mxu0 %v616
    %652 = vmatprep.subr.bf16.mxu0 0
    %653 = vmatpush2.bf16.msra.mxu0 0
    %654 = vmatprep.subr.bf16.mxu0 0
    %655 = vmatpush2.bf16.msra.mxu0 0
    %656 = vmatprep.subr.bf16.mxu0 0
    %657 = vmatpush2.bf16.msra.mxu0 0
    %658 = vmatprep.subr.bf16.mxu0 0
    %659 = vmatpush2.bf16.msra.mxu0 0
    %660 = vmatprep.subr.bf16.mxu0 0
    %661 = vmatpush2.bf16.msra.mxu0 0
    %662 = vmatprep.subr.bf16.mxu0 0
    %663 = vmatpush2.bf16.msra.mxu0 0
    %664 = vmatprep.subr.bf16.mxu0 0
    %665 = vmatpush2.bf16.msra.mxu0 0
    %666 = vmatprep.subr.bf16.mxu0 0
    %667 = vmatpush2.bf16.msra.mxu0 0
    %668 = vmatprep.mubr.bf16.mxu0 0
    %669 = vmatmul.mubr.bf16.gmra.mxu0 %v613
    %v670 = vpop.f32.mrf.mxu0
    %v671 = vadd.f32 %v484, %v670
    %v672 = vpop.f32.mrf.mxu0
    %v673 = vadd.f32 %v486, %v672
    %v674 = vpop.f32.mrf.mxu0
    %v675 = vpop.f32.mrf.mxu0
    %676 = vdwg.mxu0
    %677 = vmatprep.subr.bf16.mxu0 0
    %678 = vmatpush1.bf16.msra.mxu0 0
    %679 = vmatprep.subr.bf16.mxu0 0
    %680 = vmatpush1.bf16.msra.mxu0 0
    %681 = vmatprep.subr.bf16.mxu0 0
    %682 = vmatpush1.bf16.msra.mxu0 0
    %683 = vmatprep.subr.bf16.mxu0 0
    %684 = vmatpush1.bf16.msra.mxu0 0
    %685 = vmatprep.subr.bf16.mxu0 0
    %686 = vmatpush1.bf16.msra.mxu0 0
    %687 = vmatprep.subr.bf16.mxu0 0
    %688 = vmatpush1.bf16.msra.mxu0 0
    %689 = vmatprep.subr.bf16.mxu0 0
    %690 = vmatpush1.bf16.msra.mxu0 0
    %691 = vmatprep.subr.bf16.mxu0 %v625
    %692 = vmatpush1.bf16.msra.mxu0 %v622
    %693 = vmatprep.subr.bf16.mxu0 0
    %694 = vmatpush2.bf16.msra.mxu0 0
    %695 = vmatprep.subr.bf16.mxu0 0
    %696 = vmatpush2.bf16.msra.mxu0 0
    %697 = vmatprep.subr.bf16.mxu0 0
    %698 = vmatpush2.bf16.msra.mxu0 0
    %699 = vmatprep.subr.bf16.mxu0 0
    %700 = vmatpush2.bf16.msra.mxu0 0
    %701 = vmatprep.subr.bf16.mxu0 0
    %702 = vmatpush2.bf16.msra.mxu0 0
    %703 = vmatprep.subr.bf16.mxu0 0
    %704 = vmatpush2.bf16.msra.mxu0 0
    %705 = vmatprep.subr.bf16.mxu0 0
    %706 = vmatpush2.bf16.msra.mxu0 0
    %707 = vmatprep.subr.bf16.mxu0 0
    %708 = vmatpush2.bf16.msra.mxu0 0
    %709 = vmatprep.mubr.bf16.mxu0 0
    %710 = vmatmul.mubr.bf16.gmra.mxu0 %v613
    %v711 = vpop.f32.mrf.mxu0
    %v712 = vadd.f32 %v525, %v711
    %v713 = vpop.f32.mrf.mxu0
    %v714 = vadd.f32 %v527, %v713
    %v715 = vpop.f32.mrf.mxu0
    %v716 = vpop.f32.mrf.mxu0
    %717 = vdwg.mxu0
    %718 = vmatprep.subr.bf16.mxu0 0
    %719 = vmatpush1.bf16.msra.mxu0 0
    %720 = vmatprep.subr.bf16.mxu0 0
    %721 = vmatpush1.bf16.msra.mxu0 0
    %722 = vmatprep.subr.bf16.mxu0 0
    %723 = vmatpush1.bf16.msra.mxu0 0
    %724 = vmatprep.subr.bf16.mxu0 0
    %725 = vmatpush1.bf16.msra.mxu0 0
    %726 = vmatprep.subr.bf16.mxu0 0
    %727 = vmatpush1.bf16.msra.mxu0 0
    %728 = vmatprep.subr.bf16.mxu0 0
    %729 = vmatpush1.bf16.msra.mxu0 0
    %730 = vmatprep.subr.bf16.mxu0 0
    %731 = vmatpush1.bf16.msra.mxu0 0
    %732 = vmatprep.subr.bf16.mxu0 %v631
    %733 = vmatpush1.bf16.msra.mxu0 %v628
    %734 = vmatprep.subr.bf16.mxu0 0
    %735 = vmatpush2.bf16.msra.mxu0 0
    %736 = vmatprep.subr.bf16.mxu0 0
    %737 = vmatpush2.bf16.msra.mxu0 0
    %738 = vmatprep.subr.bf16.mxu0 0
    %739 = vmatpush2.bf16.msra.mxu0 0
    %740 = vmatprep.subr.bf16.mxu0 0
    %741 = vmatpush2.bf16.msra.mxu0 0
    %742 = vmatprep.subr.bf16.mxu0 0
    %743 = vmatpush2.bf16.msra.mxu0 0
    %744 = vmatprep.subr.bf16.mxu0 0
    %745 = vmatpush2.bf16.msra.mxu0 0
    %746 = vmatprep.subr.bf16.mxu0 0
    %747 = vmatpush2.bf16.msra.mxu0 0
    %748 = vmatprep.subr.bf16.mxu0 0
    %749 = vmatpush2.bf16.msra.mxu0 0
    %750 = vmatprep.mubr.bf16.mxu0 0
    %751 = vmatmul.mubr.bf16.gmra.mxu0 %v613
    %v752 = vpop.f32.mrf.mxu0
    %v753 = vadd.f32 %v566, %v752
    %v754 = vpop.f32.mrf.mxu0
    %v755 = vadd.f32 %v568, %v754
    %v756 = vpop.f32.mrf.mxu0
    %v757 = vpop.f32.mrf.mxu0
    %758 = vdwg.mxu0
    %759 = vmatprep.subr.bf16.mxu0 0
    %760 = vmatpush1.bf16.msra.mxu0 0
    %761 = vmatprep.subr.bf16.mxu0 0
    %762 = vmatpush1.bf16.msra.mxu0 0
    %763 = vmatprep.subr.bf16.mxu0 0
    %764 = vmatpush1.bf16.msra.mxu0 0
    %765 = vmatprep.subr.bf16.mxu0 0
    %766 = vmatpush1.bf16.msra.mxu0 0
    %767 = vmatprep.subr.bf16.mxu0 0
    %768 = vmatpush1.bf16.msra.mxu0 0
    %769 = vmatprep.subr.bf16.mxu0 0
    %770 = vmatpush1.bf16.msra.mxu0 0
    %771 = vmatprep.subr.bf16.mxu0 0
    %772 = vmatpush1.bf16.msra.mxu0 0
    %773 = vmatprep.subr.bf16.mxu0 0
    %774 = vmatpush1.bf16.msra.mxu0 %v634
    %775 = vmatprep.subr.bf16.mxu0 0
    %776 = vmatpush2.bf16.msra.mxu0 0
    %777 = vmatprep.subr.bf16.mxu0 0
    %778 = vmatpush2.bf16.msra.mxu0 0
    %779 = vmatprep.subr.bf16.mxu0 0
    %780 = vmatpush2.bf16.msra.mxu0 0
    %781 = vmatprep.subr.bf16.mxu0 0
    %782 = vmatpush2.bf16.msra.mxu0 0
    %783 = vmatprep.subr.bf16.mxu0 0
    %784 = vmatpush2.bf16.msra.mxu0 0
    %785 = vmatprep.subr.bf16.mxu0 0
    %786 = vmatpush2.bf16.msra.mxu0 0
    %787 = vmatprep.subr.bf16.mxu0 0
    %788 = vmatpush2.bf16.msra.mxu0 0
    %789 = vmatprep.subr.bf16.mxu0 0
    %790 = vmatpush2.bf16.msra.mxu0 0
    %791 = vmatprep.mubr.bf16.mxu0 0
    %792 = vmatmul.mubr.bf16.gmra.mxu0 %v613
    %v793 = vpop.f32.mrf.mxu0
    %v794 = vadd.f32 %v607, %v793
    %v795 = vpop.f32.mrf.mxu0
    %v796 = vpop.f32.mrf.mxu0
    %v797 = vpop.f32.mrf.mxu0
    %798 = vdwg.mxu0
    %799 = vrot.lane.b32.xlu0 %v380, 126
    %v800 = vpop.permute.xlu0 %799
    %801 = vrot.lane.b32.xlu0 %v381, 126
    %v802 = vpop.permute.xlu0 %801
    %803 = vrot.lane.b32.xlu0 %v382, 126
    %v804 = vpop.permute.xlu0 %803
    %805 = vrot.lane.b32.xlu0 %v383, 126
    %v806 = vpop.permute.xlu0 %805
    %807 = vrot.lane.b32.xlu0 %v384, 126
    %v808 = vpop.permute.xlu0 %807
    %809 = vrot.lane.b32.xlu0 %v385, 126
    %v810 = vpop.permute.xlu0 %809
    %811 = vrot.lane.b32.xlu0 %v386, 126
    %v812 = vpop.permute.xlu0 %811
    %813 = vrot.lane.b32.xlu0 %v387, 126
    %v814 = vpop.permute.xlu0 %813
    %vm815 = vcmask 1031168
    %v816 = vsel %vm815, %v800, %v802
    %v817 = vsel %vm815, %v802, %v804
    %v818 = vsel %vm815, %v804, %v806
    %v819 = vsel %vm815, %v806, %v808
    %v820 = vsel %vm815, %v808, %v810
    %v821 = vsel %vm815, %v810, %v812
    %v822 = vsel %vm815, %v812, %v814
    %v824 = vsel %vm420, %v50, 0
    %v827 = vand.u32 %v816, %v427
    %v830 = vand.u32 %v817, %v427
    %v833 = vand.u32 %v818, %v427
    %v836 = vand.u32 %v819, %v427
    %v839 = vand.u32 %v820, %v427
    %v842 = vand.u32 %v821, %v427
    %v845 = vand.u32 %v822, %v427
    %847 = vmatprep.subr.bf16.mxu0 0
    %848 = vmatpush1.bf16.msra.mxu0 0
    %849 = vmatprep.subr.bf16.mxu0 0
    %850 = vmatpush1.bf16.msra.mxu0 0
    %851 = vmatprep.subr.bf16.mxu0 0
    %852 = vmatpush1.bf16.msra.mxu0 0
    %853 = vmatprep.subr.bf16.mxu0 0
    %854 = vmatpush1.bf16.msra.mxu0 0
    %855 = vmatprep.subr.bf16.mxu0 0
    %856 = vmatpush1.bf16.msra.mxu0 0
    %857 = vmatprep.subr.bf16.mxu0 0
    %858 = vmatpush1.bf16.msra.mxu0 0
    %859 = vmatprep.subr.bf16.mxu0 0
    %860 = vmatpush1.bf16.msra.mxu0 0
    %861 = vmatprep.subr.bf16.mxu0 %v830
    %862 = vmatpush1.bf16.msra.mxu0 %v827
    %863 = vmatprep.subr.bf16.mxu0 0
    %864 = vmatpush2.bf16.msra.mxu0 0
    %865 = vmatprep.subr.bf16.mxu0 0
    %866 = vmatpush2.bf16.msra.mxu0 0
    %867 = vmatprep.subr.bf16.mxu0 0
    %868 = vmatpush2.bf16.msra.mxu0 0
    %869 = vmatprep.subr.bf16.mxu0 0
    %870 = vmatpush2.bf16.msra.mxu0 0
    %871 = vmatprep.subr.bf16.mxu0 0
    %872 = vmatpush2.bf16.msra.mxu0 0
    %873 = vmatprep.subr.bf16.mxu0 0
    %874 = vmatpush2.bf16.msra.mxu0 0
    %875 = vmatprep.subr.bf16.mxu0 0
    %876 = vmatpush2.bf16.msra.mxu0 0
    %877 = vmatprep.subr.bf16.mxu0 0
    %878 = vmatpush2.bf16.msra.mxu0 0
    %879 = vmatprep.mubr.bf16.mxu0 0
    %880 = vmatmul.mubr.bf16.gmra.mxu0 %v824
    %v881 = vpop.f32.mrf.mxu0
    %v882 = vadd.f32 0.0, %v881
    %v883 = vpop.f32.mrf.mxu0
    %v884 = vadd.f32 0.0, %v883
    %v885 = vpop.f32.mrf.mxu0
    %v886 = vpop.f32.mrf.mxu0
    %887 = vdwg.mxu0
    %888 = vmatprep.subr.bf16.mxu0 0
    %889 = vmatpush1.bf16.msra.mxu0 0
    %890 = vmatprep.subr.bf16.mxu0 0
    %891 = vmatpush1.bf16.msra.mxu0 0
    %892 = vmatprep.subr.bf16.mxu0 0
    %893 = vmatpush1.bf16.msra.mxu0 0
    %894 = vmatprep.subr.bf16.mxu0 0
    %895 = vmatpush1.bf16.msra.mxu0 0
    %896 = vmatprep.subr.bf16.mxu0 0
    %897 = vmatpush1.bf16.msra.mxu0 0
    %898 = vmatprep.subr.bf16.mxu0 0
    %899 = vmatpush1.bf16.msra.mxu0 0
    %900 = vmatprep.subr.bf16.mxu0 0
    %901 = vmatpush1.bf16.msra.mxu0 0
    %902 = vmatprep.subr.bf16.mxu0 %v836
    %903 = vmatpush1.bf16.msra.mxu0 %v833
    %904 = vmatprep.subr.bf16.mxu0 0
    %905 = vmatpush2.bf16.msra.mxu0 0
    %906 = vmatprep.subr.bf16.mxu0 0
    %907 = vmatpush2.bf16.msra.mxu0 0
    %908 = vmatprep.subr.bf16.mxu0 0
    %909 = vmatpush2.bf16.msra.mxu0 0
    %910 = vmatprep.subr.bf16.mxu0 0
    %911 = vmatpush2.bf16.msra.mxu0 0
    %912 = vmatprep.subr.bf16.mxu0 0
    %913 = vmatpush2.bf16.msra.mxu0 0
    %914 = vmatprep.subr.bf16.mxu0 0
    %915 = vmatpush2.bf16.msra.mxu0 0
    %916 = vmatprep.subr.bf16.mxu0 0
    %917 = vmatpush2.bf16.msra.mxu0 0
    %918 = vmatprep.subr.bf16.mxu0 0
    %919 = vmatpush2.bf16.msra.mxu0 0
    %920 = vmatprep.mubr.bf16.mxu0 0
    %921 = vmatmul.mubr.bf16.gmra.mxu0 %v824
    %v922 = vpop.f32.mrf.mxu0
    %v923 = vadd.f32 0.0, %v922
    %v924 = vpop.f32.mrf.mxu0
    %v925 = vadd.f32 0.0, %v924
    %v926 = vpop.f32.mrf.mxu0
    %v927 = vpop.f32.mrf.mxu0
    %928 = vdwg.mxu0
    %929 = vmatprep.subr.bf16.mxu0 0
    %930 = vmatpush1.bf16.msra.mxu0 0
    %931 = vmatprep.subr.bf16.mxu0 0
    %932 = vmatpush1.bf16.msra.mxu0 0
    %933 = vmatprep.subr.bf16.mxu0 0
    %934 = vmatpush1.bf16.msra.mxu0 0
    %935 = vmatprep.subr.bf16.mxu0 0
    %936 = vmatpush1.bf16.msra.mxu0 0
    %937 = vmatprep.subr.bf16.mxu0 0
    %938 = vmatpush1.bf16.msra.mxu0 0
    %939 = vmatprep.subr.bf16.mxu0 0
    %940 = vmatpush1.bf16.msra.mxu0 0
    %941 = vmatprep.subr.bf16.mxu0 0
    %942 = vmatpush1.bf16.msra.mxu0 0
    %943 = vmatprep.subr.bf16.mxu0 %v842
    %944 = vmatpush1.bf16.msra.mxu0 %v839
    %945 = vmatprep.subr.bf16.mxu0 0
    %946 = vmatpush2.bf16.msra.mxu0 0
    %947 = vmatprep.subr.bf16.mxu0 0
    %948 = vmatpush2.bf16.msra.mxu0 0
    %949 = vmatprep.subr.bf16.mxu0 0
    %950 = vmatpush2.bf16.msra.mxu0 0
    %951 = vmatprep.subr.bf16.mxu0 0
    %952 = vmatpush2.bf16.msra.mxu0 0
    %953 = vmatprep.subr.bf16.mxu0 0
    %954 = vmatpush2.bf16.msra.mxu0 0
    %955 = vmatprep.subr.bf16.mxu0 0
    %956 = vmatpush2.bf16.msra.mxu0 0
    %957 = vmatprep.subr.bf16.mxu0 0
    %958 = vmatpush2.bf16.msra.mxu0 0
    %959 = vmatprep.subr.bf16.mxu0 0
    %960 = vmatpush2.bf16.msra.mxu0 0
    %961 = vmatprep.mubr.bf16.mxu0 0
    %962 = vmatmul.mubr.bf16.gmra.mxu0 %v824
    %v963 = vpop.f32.mrf.mxu0
    %v964 = vadd.f32 0.0, %v963
    %v965 = vpop.f32.mrf.mxu0
    %v966 = vadd.f32 0.0, %v965
    %v967 = vpop.f32.mrf.mxu0
    %v968 = vpop.f32.mrf.mxu0
    %969 = vdwg.mxu0
    %970 = vmatprep.subr.bf16.mxu0 0
    %971 = vmatpush1.bf16.msra.mxu0 0
    %972 = vmatprep.subr.bf16.mxu0 0
    %973 = vmatpush1.bf16.msra.mxu0 0
    %974 = vmatprep.subr.bf16.mxu0 0
    %975 = vmatpush1.bf16.msra.mxu0 0
    %976 = vmatprep.subr.bf16.mxu0 0
    %977 = vmatpush1.bf16.msra.mxu0 0
    %978 = vmatprep.subr.bf16.mxu0 0
    %979 = vmatpush1.bf16.msra.mxu0 0
    %980 = vmatprep.subr.bf16.mxu0 0
    %981 = vmatpush1.bf16.msra.mxu0 0
    %982 = vmatprep.subr.bf16.mxu0 0
    %983 = vmatpush1.bf16.msra.mxu0 0
    %984 = vmatprep.subr.bf16.mxu0 0
    %985 = vmatpush1.bf16.msra.mxu0 %v845
    %986 = vmatprep.subr.bf16.mxu0 0
    %987 = vmatpush2.bf16.msra.mxu0 0
    %988 = vmatprep.subr.bf16.mxu0 0
    %989 = vmatpush2.bf16.msra.mxu0 0
    %990 = vmatprep.subr.bf16.mxu0 0
    %991 = vmatpush2.bf16.msra.mxu0 0
    %992 = vmatprep.subr.bf16.mxu0 0
    %993 = vmatpush2.bf16.msra.mxu0 0
    %994 = vmatprep.subr.bf16.mxu0 0
    %995 = vmatpush2.bf16.msra.mxu0 0
    %996 = vmatprep.subr.bf16.mxu0 0
    %997 = vmatpush2.bf16.msra.mxu0 0
    %998 = vmatprep.subr.bf16.mxu0 0
    %999 = vmatpush2.bf16.msra.mxu0 0
    %1000 = vmatprep.subr.bf16.mxu0 0
    %1001 = vmatpush2.bf16.msra.mxu0 0
    %1002 = vmatprep.mubr.bf16.mxu0 0
    %1003 = vmatmul.mubr.bf16.gmra.mxu0 %v824
    %v1004 = vpop.f32.mrf.mxu0
    %v1005 = vadd.f32 0.0, %v1004
    %v1006 = vpop.f32.mrf.mxu0
    %v1007 = vpop.f32.mrf.mxu0
    %v1008 = vpop.f32.mrf.mxu0
    %1009 = vdwg.mxu0
    %v1010 = vadd.f32 %v671, %v882
    %v1011 = vadd.f32 %v673, %v884
    %v1012 = vadd.f32 %v712, %v923
    %v1013 = vadd.f32 %v714, %v925
    %v1014 = vadd.f32 %v753, %v964
    %v1015 = vadd.f32 %v755, %v966
    %v1016 = vadd.f32 %v794, %v1005
    %1017 = vrot.lane.b32.xlu0 %v380, 125
    %v1018 = vpop.permute.xlu0 %1017
    %1019 = vrot.lane.b32.xlu0 %v381, 125
    %v1020 = vpop.permute.xlu0 %1019
    %1021 = vrot.lane.b32.xlu0 %v382, 125
    %v1022 = vpop.permute.xlu0 %1021
    %1023 = vrot.lane.b32.xlu0 %v383, 125
    %v1024 = vpop.permute.xlu0 %1023
    %1025 = vrot.lane.b32.xlu0 %v384, 125
    %v1026 = vpop.permute.xlu0 %1025
    %1027 = vrot.lane.b32.xlu0 %v385, 125
    %v1028 = vpop.permute.xlu0 %1027
    %1029 = vrot.lane.b32.xlu0 %v386, 125
    %v1030 = vpop.permute.xlu0 %1029
    %1031 = vrot.lane.b32.xlu0 %v387, 125
    %v1032 = vpop.permute.xlu0 %1031
    %vm1033 = vcmask 1022976
    %v1034 = vsel %vm1033, %v1018, %v1020
    %v1035 = vsel %vm1033, %v1020, %v1022
    %v1036 = vsel %vm1033, %v1022, %v1024
    %v1037 = vsel %vm1033, %v1024, %v1026
    %v1038 = vsel %vm1033, %v1026, %v1028
    %v1039 = vsel %vm1033, %v1028, %v1030
    %v1040 = vsel %vm1033, %v1030, %v1032
    %v1042 = vsel %vm420, %v52, 0
    %v1045 = vand.u32 %v1034, %v427
    %v1048 = vand.u32 %v1035, %v427
    %v1051 = vand.u32 %v1036, %v427
    %v1054 = vand.u32 %v1037, %v427
    %v1057 = vand.u32 %v1038, %v427
    %v1060 = vand.u32 %v1039, %v427
    %v1063 = vand.u32 %v1040, %v427
    %1065 = vmatprep.subr.bf16.mxu0 0
    %1066 = vmatpush1.bf16.msra.mxu0 0
    %1067 = vmatprep.subr.bf16.mxu0 0
    %1068 = vmatpush1.bf16.msra.mxu0 0
    %1069 = vmatprep.subr.bf16.mxu0 0
    %1070 = vmatpush1.bf16.msra.mxu0 0
    %1071 = vmatprep.subr.bf16.mxu0 0
    %1072 = vmatpush1.bf16.msra.mxu0 0
    %1073 = vmatprep.subr.bf16.mxu0 0
    %1074 = vmatpush1.bf16.msra.mxu0 0
    %1075 = vmatprep.subr.bf16.mxu0 0
    %1076 = vmatpush1.bf16.msra.mxu0 0
    %1077 = vmatprep.subr.bf16.mxu0 0
    %1078 = vmatpush1.bf16.msra.mxu0 0
    %1079 = vmatprep.subr.bf16.mxu0 %v1048
    %1080 = vmatpush1.bf16.msra.mxu0 %v1045
    %1081 = vmatprep.subr.bf16.mxu0 0
    %1082 = vmatpush2.bf16.msra.mxu0 0
    %1083 = vmatprep.subr.bf16.mxu0 0
    %1084 = vmatpush2.bf16.msra.mxu0 0
    %1085 = vmatprep.subr.bf16.mxu0 0
    %1086 = vmatpush2.bf16.msra.mxu0 0
    %1087 = vmatprep.subr.bf16.mxu0 0
    %1088 = vmatpush2.bf16.msra.mxu0 0
    %1089 = vmatprep.subr.bf16.mxu0 0
    %1090 = vmatpush2.bf16.msra.mxu0 0
    %1091 = vmatprep.subr.bf16.mxu0 0
    %1092 = vmatpush2.bf16.msra.mxu0 0
    %1093 = vmatprep.subr.bf16.mxu0 0
    %1094 = vmatpush2.bf16.msra.mxu0 0
    %1095 = vmatprep.subr.bf16.mxu0 0
    %1096 = vmatpush2.bf16.msra.mxu0 0
    %1097 = vmatprep.mubr.bf16.mxu0 0
    %1098 = vmatmul.mubr.bf16.gmra.mxu0 %v1042
    %v1099 = vpop.f32.mrf.mxu0
    %v1100 = vadd.f32 0.0, %v1099
    %v1101 = vpop.f32.mrf.mxu0
    %v1102 = vadd.f32 0.0, %v1101
    %v1103 = vpop.f32.mrf.mxu0
    %v1104 = vpop.f32.mrf.mxu0
    %1105 = vdwg.mxu0
    %1106 = vmatprep.subr.bf16.mxu0 0
    %1107 = vmatpush1.bf16.msra.mxu0 0
    %1108 = vmatprep.subr.bf16.mxu0 0
    %1109 = vmatpush1.bf16.msra.mxu0 0
    %1110 = vmatprep.subr.bf16.mxu0 0
    %1111 = vmatpush1.bf16.msra.mxu0 0
    %1112 = vmatprep.subr.bf16.mxu0 0
    %1113 = vmatpush1.bf16.msra.mxu0 0
    %1114 = vmatprep.subr.bf16.mxu0 0
    %1115 = vmatpush1.bf16.msra.mxu0 0
    %1116 = vmatprep.subr.bf16.mxu0 0
    %1117 = vmatpush1.bf16.msra.mxu0 0
    %1118 = vmatprep.subr.bf16.mxu0 0
    %1119 = vmatpush1.bf16.msra.mxu0 0
    %1120 = vmatprep.subr.bf16.mxu0 %v1054
    %1121 = vmatpush1.bf16.msra.mxu0 %v1051
    %1122 = vmatprep.subr.bf16.mxu0 0
    %1123 = vmatpush2.bf16.msra.mxu0 0
    %1124 = vmatprep.subr.bf16.mxu0 0
    %1125 = vmatpush2.bf16.msra.mxu0 0
    %1126 = vmatprep.subr.bf16.mxu0 0
    %1127 = vmatpush2.bf16.msra.mxu0 0
    %1128 = vmatprep.subr.bf16.mxu0 0
    %1129 = vmatpush2.bf16.msra.mxu0 0
    %1130 = vmatprep.subr.bf16.mxu0 0
    %1131 = vmatpush2.bf16.msra.mxu0 0
    %1132 = vmatprep.subr.bf16.mxu0 0
    %1133 = vmatpush2.bf16.msra.mxu0 0
    %1134 = vmatprep.subr.bf16.mxu0 0
    %1135 = vmatpush2.bf16.msra.mxu0 0
    %1136 = vmatprep.subr.bf16.mxu0 0
    %1137 = vmatpush2.bf16.msra.mxu0 0
    %1138 = vmatprep.mubr.bf16.mxu0 0
    %1139 = vmatmul.mubr.bf16.gmra.mxu0 %v1042
    %v1140 = vpop.f32.mrf.mxu0
    %v1141 = vadd.f32 0.0, %v1140
    %v1142 = vpop.f32.mrf.mxu0
    %v1143 = vadd.f32 0.0, %v1142
    %v1144 = vpop.f32.mrf.mxu0
    %v1145 = vpop.f32.mrf.mxu0
    %1146 = vdwg.mxu0
    %1147 = vmatprep.subr.bf16.mxu0 0
    %1148 = vmatpush1.bf16.msra.mxu0 0
    %1149 = vmatprep.subr.bf16.mxu0 0
    %1150 = vmatpush1.bf16.msra.mxu0 0
    %1151 = vmatprep.subr.bf16.mxu0 0
    %1152 = vmatpush1.bf16.msra.mxu0 0
    %1153 = vmatprep.subr.bf16.mxu0 0
    %1154 = vmatpush1.bf16.msra.mxu0 0
    %1155 = vmatprep.subr.bf16.mxu0 0
    %1156 = vmatpush1.bf16.msra.mxu0 0
    %1157 = vmatprep.subr.bf16.mxu0 0
    %1158 = vmatpush1.bf16.msra.mxu0 0
    %1159 = vmatprep.subr.bf16.mxu0 0
    %1160 = vmatpush1.bf16.msra.mxu0 0
    %1161 = vmatprep.subr.bf16.mxu0 %v1060
    %1162 = vmatpush1.bf16.msra.mxu0 %v1057
    %1163 = vmatprep.subr.bf16.mxu0 0
    %1164 = vmatpush2.bf16.msra.mxu0 0
    %1165 = vmatprep.subr.bf16.mxu0 0
    %1166 = vmatpush2.bf16.msra.mxu0 0
    %1167 = vmatprep.subr.bf16.mxu0 0
    %1168 = vmatpush2.bf16.msra.mxu0 0
    %1169 = vmatprep.subr.bf16.mxu0 0
    %1170 = vmatpush2.bf16.msra.mxu0 0
    %1171 = vmatprep.subr.bf16.mxu0 0
    %1172 = vmatpush2.bf16.msra.mxu0 0
    %1173 = vmatprep.subr.bf16.mxu0 0
    %1174 = vmatpush2.bf16.msra.mxu0 0
    %1175 = vmatprep.subr.bf16.mxu0 0
    %1176 = vmatpush2.bf16.msra.mxu0 0
    %1177 = vmatprep.subr.bf16.mxu0 0
    %1178 = vmatpush2.bf16.msra.mxu0 0
    %1179 = vmatprep.mubr.bf16.mxu0 0
    %1180 = vmatmul.mubr.bf16.gmra.mxu0 %v1042
    %v1181 = vpop.f32.mrf.mxu0
    %v1182 = vadd.f32 0.0, %v1181
    %v1183 = vpop.f32.mrf.mxu0
    %v1184 = vadd.f32 0.0, %v1183
    %v1185 = vpop.f32.mrf.mxu0
    %v1186 = vpop.f32.mrf.mxu0
    %1187 = vdwg.mxu0
    %1188 = vmatprep.subr.bf16.mxu0 0
    %1189 = vmatpush1.bf16.msra.mxu0 0
    %1190 = vmatprep.subr.bf16.mxu0 0
    %1191 = vmatpush1.bf16.msra.mxu0 0
    %1192 = vmatprep.subr.bf16.mxu0 0
    %1193 = vmatpush1.bf16.msra.mxu0 0
    %1194 = vmatprep.subr.bf16.mxu0 0
    %1195 = vmatpush1.bf16.msra.mxu0 0
    %1196 = vmatprep.subr.bf16.mxu0 0
    %1197 = vmatpush1.bf16.msra.mxu0 0
    %1198 = vmatprep.subr.bf16.mxu0 0
    %1199 = vmatpush1.bf16.msra.mxu0 0
    %1200 = vmatprep.subr.bf16.mxu0 0
    %1201 = vmatpush1.bf16.msra.mxu0 0
    %1202 = vmatprep.subr.bf16.mxu0 0
    %1203 = vmatpush1.bf16.msra.mxu0 %v1063
    %1204 = vmatprep.subr.bf16.mxu0 0
    %1205 = vmatpush2.bf16.msra.mxu0 0
    %1206 = vmatprep.subr.bf16.mxu0 0
    %1207 = vmatpush2.bf16.msra.mxu0 0
    %1208 = vmatprep.subr.bf16.mxu0 0
    %1209 = vmatpush2.bf16.msra.mxu0 0
    %1210 = vmatprep.subr.bf16.mxu0 0
    %1211 = vmatpush2.bf16.msra.mxu0 0
    %1212 = vmatprep.subr.bf16.mxu0 0
    %1213 = vmatpush2.bf16.msra.mxu0 0
    %1214 = vmatprep.subr.bf16.mxu0 0
    %1215 = vmatpush2.bf16.msra.mxu0 0
    %1216 = vmatprep.subr.bf16.mxu0 0
    %1217 = vmatpush2.bf16.msra.mxu0 0
    %1218 = vmatprep.subr.bf16.mxu0 0
    %1219 = vmatpush2.bf16.msra.mxu0 0
    %1220 = vmatprep.mubr.bf16.mxu0 0
    %1221 = vmatmul.mubr.bf16.gmra.mxu0 %v1042
    %v1222 = vpop.f32.mrf.mxu0
    %v1223 = vadd.f32 0.0, %v1222
    %v1224 = vpop.f32.mrf.mxu0
    %v1225 = vpop.f32.mrf.mxu0
    %v1226 = vpop.f32.mrf.mxu0
    %1227 = vdwg.mxu0
    %v1228 = vadd.f32 %v1010, %v1100
    %v1229 = vadd.f32 %v1011, %v1102
    %v1230 = vadd.f32 %v1012, %v1141
    %v1231 = vadd.f32 %v1013, %v1143
    %v1232 = vadd.f32 %v1014, %v1182
    %v1233 = vadd.f32 %v1015, %v1184
    %v1234 = vadd.f32 %v1016, %v1223
    %1235 = vrot.lane.b32.xlu0 %v380, 124
    %v1236 = vpop.permute.xlu0 %1235
    %1237 = vrot.lane.b32.xlu0 %v381, 124
    %v1238 = vpop.permute.xlu0 %1237
    %1239 = vrot.lane.b32.xlu0 %v382, 124
    %v1240 = vpop.permute.xlu0 %1239
    %1241 = vrot.lane.b32.xlu0 %v383, 124
    %v1242 = vpop.permute.xlu0 %1241
    %1243 = vrot.lane.b32.xlu0 %v384, 124
    %v1244 = vpop.permute.xlu0 %1243
    %1245 = vrot.lane.b32.xlu0 %v385, 124
    %v1246 = vpop.permute.xlu0 %1245
    %1247 = vrot.lane.b32.xlu0 %v386, 124
    %v1248 = vpop.permute.xlu0 %1247
    %1249 = vrot.lane.b32.xlu0 %v387, 124
    %v1250 = vpop.permute.xlu0 %1249
    %vm1251 = vcmask 1014784
    %v1252 = vsel %vm1251, %v1236, %v1238
    %v1253 = vsel %vm1251, %v1238, %v1240
    %v1254 = vsel %vm1251, %v1240, %v1242
    %v1255 = vsel %vm1251, %v1242, %v1244
    %v1256 = vsel %vm1251, %v1244, %v1246
    %v1257 = vsel %vm1251, %v1246, %v1248
    %v1258 = vsel %vm1251, %v1248, %v1250
    %v1260 = vsel %vm420, %v54, 0
    %v1263 = vand.u32 %v1252, %v427
    %v1266 = vand.u32 %v1253, %v427
    %v1269 = vand.u32 %v1254, %v427
    %v1272 = vand.u32 %v1255, %v427
    %v1275 = vand.u32 %v1256, %v427
    %v1278 = vand.u32 %v1257, %v427
    %v1281 = vand.u32 %v1258, %v427
    %1283 = vmatprep.subr.bf16.mxu0 0
    %1284 = vmatpush1.bf16.msra.mxu0 0
    %1285 = vmatprep.subr.bf16.mxu0 0
    %1286 = vmatpush1.bf16.msra.mxu0 0
    %1287 = vmatprep.subr.bf16.mxu0 0
    %1288 = vmatpush1.bf16.msra.mxu0 0
    %1289 = vmatprep.subr.bf16.mxu0 0
    %1290 = vmatpush1.bf16.msra.mxu0 0
    %1291 = vmatprep.subr.bf16.mxu0 0
    %1292 = vmatpush1.bf16.msra.mxu0 0
    %1293 = vmatprep.subr.bf16.mxu0 0
    %1294 = vmatpush1.bf16.msra.mxu0 0
    %1295 = vmatprep.subr.bf16.mxu0 0
    %1296 = vmatpush1.bf16.msra.mxu0 0
    %1297 = vmatprep.subr.bf16.mxu0 %v1266
    %1298 = vmatpush1.bf16.msra.mxu0 %v1263
    %1299 = vmatprep.subr.bf16.mxu0 0
    %1300 = vmatpush2.bf16.msra.mxu0 0
    %1301 = vmatprep.subr.bf16.mxu0 0
    %1302 = vmatpush2.bf16.msra.mxu0 0
    %1303 = vmatprep.subr.bf16.mxu0 0
    %1304 = vmatpush2.bf16.msra.mxu0 0
    %1305 = vmatprep.subr.bf16.mxu0 0
    %1306 = vmatpush2.bf16.msra.mxu0 0
    %1307 = vmatprep.subr.bf16.mxu0 0
    %1308 = vmatpush2.bf16.msra.mxu0 0
    %1309 = vmatprep.subr.bf16.mxu0 0
    %1310 = vmatpush2.bf16.msra.mxu0 0
    %1311 = vmatprep.subr.bf16.mxu0 0
    %1312 = vmatpush2.bf16.msra.mxu0 0
    %1313 = vmatprep.subr.bf16.mxu0 0
    %1314 = vmatpush2.bf16.msra.mxu0 0
    %1315 = vmatprep.mubr.bf16.mxu0 0
    %1316 = vmatmul.mubr.bf16.gmra.mxu0 %v1260
    %v1317 = vpop.f32.mrf.mxu0
    %v1318 = vadd.f32 0.0, %v1317
    %v1319 = vpop.f32.mrf.mxu0
    %v1320 = vadd.f32 0.0, %v1319
    %v1321 = vpop.f32.mrf.mxu0
    %v1322 = vpop.f32.mrf.mxu0
    %1323 = vdwg.mxu0
    %1324 = vmatprep.subr.bf16.mxu0 0
    %1325 = vmatpush1.bf16.msra.mxu0 0
    %1326 = vmatprep.subr.bf16.mxu0 0
    %1327 = vmatpush1.bf16.msra.mxu0 0
    %1328 = vmatprep.subr.bf16.mxu0 0
    %1329 = vmatpush1.bf16.msra.mxu0 0
    %1330 = vmatprep.subr.bf16.mxu0 0
    %1331 = vmatpush1.bf16.msra.mxu0 0
    %1332 = vmatprep.subr.bf16.mxu0 0
    %1333 = vmatpush1.bf16.msra.mxu0 0
    %1334 = vmatprep.subr.bf16.mxu0 0
    %1335 = vmatpush1.bf16.msra.mxu0 0
    %1336 = vmatprep.subr.bf16.mxu0 0
    %1337 = vmatpush1.bf16.msra.mxu0 0
    %1338 = vmatprep.subr.bf16.mxu0 %v1272
    %1339 = vmatpush1.bf16.msra.mxu0 %v1269
    %1340 = vmatprep.subr.bf16.mxu0 0
    %1341 = vmatpush2.bf16.msra.mxu0 0
    %1342 = vmatprep.subr.bf16.mxu0 0
    %1343 = vmatpush2.bf16.msra.mxu0 0
    %1344 = vmatprep.subr.bf16.mxu0 0
    %1345 = vmatpush2.bf16.msra.mxu0 0
    %1346 = vmatprep.subr.bf16.mxu0 0
    %1347 = vmatpush2.bf16.msra.mxu0 0
    %1348 = vmatprep.subr.bf16.mxu0 0
    %1349 = vmatpush2.bf16.msra.mxu0 0
    %1350 = vmatprep.subr.bf16.mxu0 0
    %1351 = vmatpush2.bf16.msra.mxu0 0
    %1352 = vmatprep.subr.bf16.mxu0 0
    %1353 = vmatpush2.bf16.msra.mxu0 0
    %1354 = vmatprep.subr.bf16.mxu0 0
    %1355 = vmatpush2.bf16.msra.mxu0 0
    %1356 = vmatprep.mubr.bf16.mxu0 0
    %1357 = vmatmul.mubr.bf16.gmra.mxu0 %v1260
    %v1358 = vpop.f32.mrf.mxu0
    %v1359 = vadd.f32 0.0, %v1358
    %v1360 = vpop.f32.mrf.mxu0
    %v1361 = vadd.f32 0.0, %v1360
    %v1362 = vpop.f32.mrf.mxu0
    %v1363 = vpop.f32.mrf.mxu0
    %1364 = vdwg.mxu0
    %1365 = vmatprep.subr.bf16.mxu0 0
    %1366 = vmatpush1.bf16.msra.mxu0 0
    %1367 = vmatprep.subr.bf16.mxu0 0
    %1368 = vmatpush1.bf16.msra.mxu0 0
    %1369 = vmatprep.subr.bf16.mxu0 0
    %1370 = vmatpush1.bf16.msra.mxu0 0
    %1371 = vmatprep.subr.bf16.mxu0 0
    %1372 = vmatpush1.bf16.msra.mxu0 0
    %1373 = vmatprep.subr.bf16.mxu0 0
    %1374 = vmatpush1.bf16.msra.mxu0 0
    %1375 = vmatprep.subr.bf16.mxu0 0
    %1376 = vmatpush1.bf16.msra.mxu0 0
    %1377 = vmatprep.subr.bf16.mxu0 0
    %1378 = vmatpush1.bf16.msra.mxu0 0
    %1379 = vmatprep.subr.bf16.mxu0 %v1278
    %1380 = vmatpush1.bf16.msra.mxu0 %v1275
    %1381 = vmatprep.subr.bf16.mxu0 0
    %1382 = vmatpush2.bf16.msra.mxu0 0
    %1383 = vmatprep.subr.bf16.mxu0 0
    %1384 = vmatpush2.bf16.msra.mxu0 0
    %1385 = vmatprep.subr.bf16.mxu0 0
    %1386 = vmatpush2.bf16.msra.mxu0 0
    %1387 = vmatprep.subr.bf16.mxu0 0
    %1388 = vmatpush2.bf16.msra.mxu0 0
    %1389 = vmatprep.subr.bf16.mxu0 0
    %1390 = vmatpush2.bf16.msra.mxu0 0
    %1391 = vmatprep.subr.bf16.mxu0 0
    %1392 = vmatpush2.bf16.msra.mxu0 0
    %1393 = vmatprep.subr.bf16.mxu0 0
    %1394 = vmatpush2.bf16.msra.mxu0 0
    %1395 = vmatprep.subr.bf16.mxu0 0
    %1396 = vmatpush2.bf16.msra.mxu0 0
    %1397 = vmatprep.mubr.bf16.mxu0 0
    %1398 = vmatmul.mubr.bf16.gmra.mxu0 %v1260
    %v1399 = vpop.f32.mrf.mxu0
    %v1400 = vadd.f32 0.0, %v1399
    %v1401 = vpop.f32.mrf.mxu0
    %v1402 = vadd.f32 0.0, %v1401
    %v1403 = vpop.f32.mrf.mxu0
    %v1404 = vpop.f32.mrf.mxu0
    %1405 = vdwg.mxu0
    %1406 = vmatprep.subr.bf16.mxu0 0
    %1407 = vmatpush1.bf16.msra.mxu0 0
    %1408 = vmatprep.subr.bf16.mxu0 0
    %1409 = vmatpush1.bf16.msra.mxu0 0
    %1410 = vmatprep.subr.bf16.mxu0 0
    %1411 = vmatpush1.bf16.msra.mxu0 0
    %1412 = vmatprep.subr.bf16.mxu0 0
    %1413 = vmatpush1.bf16.msra.mxu0 0
    %1414 = vmatprep.subr.bf16.mxu0 0
    %1415 = vmatpush1.bf16.msra.mxu0 0
    %1416 = vmatprep.subr.bf16.mxu0 0
    %1417 = vmatpush1.bf16.msra.mxu0 0
    %1418 = vmatprep.subr.bf16.mxu0 0
    %1419 = vmatpush1.bf16.msra.mxu0 0
    %1420 = vmatprep.subr.bf16.mxu0 0
    %1421 = vmatpush1.bf16.msra.mxu0 %v1281
    %1422 = vmatprep.subr.bf16.mxu0 0
    %1423 = vmatpush2.bf16.msra.mxu0 0
    %1424 = vmatprep.subr.bf16.mxu0 0
    %1425 = vmatpush2.bf16.msra.mxu0 0
    %1426 = vmatprep.subr.bf16.mxu0 0
    %1427 = vmatpush2.bf16.msra.mxu0 0
    %1428 = vmatprep.subr.bf16.mxu0 0
    %1429 = vmatpush2.bf16.msra.mxu0 0
    %1430 = vmatprep.subr.bf16.mxu0 0
    %1431 = vmatpush2.bf16.msra.mxu0 0
    %1432 = vmatprep.subr.bf16.mxu0 0
    %1433 = vmatpush2.bf16.msra.mxu0 0
    %1434 = vmatprep.subr.bf16.mxu0 0
    %1435 = vmatpush2.bf16.msra.mxu0 0
    %1436 = vmatprep.subr.bf16.mxu0 0
    %1437 = vmatpush2.bf16.msra.mxu0 0
    %1438 = vmatprep.mubr.bf16.mxu0 0
    %1439 = vmatmul.mubr.bf16.gmra.mxu0 %v1260
    %v1440 = vpop.f32.mrf.mxu0
    %v1441 = vadd.f32 0.0, %v1440
    %v1442 = vpop.f32.mrf.mxu0
    %v1443 = vpop.f32.mrf.mxu0
    %v1444 = vpop.f32.mrf.mxu0
    %1445 = vdwg.mxu0
    %v1446 = vadd.f32 %v1228, %v1318
    %v1447 = vadd.f32 %v1229, %v1320
    %v1448 = vadd.f32 %v1230, %v1359
    %v1449 = vadd.f32 %v1231, %v1361
    %v1450 = vadd.f32 %v1232, %v1400
    %v1451 = vadd.f32 %v1233, %v1402
    %v1452 = vadd.f32 %v1234, %v1441
    %1454 = vset.pattern.permute.xlu0 0
    %1455 = vperm.xlu0 %1454, %v55
    %v1456 = vpop.permute.xlu0 %1455
    %v1458 = vadd.f32 %v1446, %v1456
    %v1459 = vadd.f32 %v1447, %v1456
    %v1460 = vadd.f32 %v1448, %v1456
    %v1461 = vadd.f32 %v1449, %v1456
    %v1462 = vadd.f32 %v1450, %v1456
    %v1463 = vadd.f32 %v1451, %v1456
    %v1464 = vadd.f32 %v1452, %v1456
    %v1465 = vmax.f32 %v1458, 0.0
    %v1466 = vmax.f32 %v1459, 0.0
    %v1467 = vmax.f32 %v1460, 0.0
    %v1468 = vmax.f32 %v1461, 0.0
    %v1469 = vmax.f32 %v1462, 0.0
    %v1470 = vmax.f32 %v1463, 0.0
    %v1471 = vmax.f32 %v1464, 0.0
    %1479 = vrot.lane.b32.xlu0 %v1465, 127
    %v1480 = vpop.permute.xlu0 %1479
    %1481 = vrot.lane.b32.xlu0 %v1466, 127
    %v1482 = vpop.permute.xlu0 %1481
    %1483 = vrot.lane.b32.xlu0 %v1467, 127
    %v1484 = vpop.permute.xlu0 %1483
    %1485 = vrot.lane.b32.xlu0 %v1468, 127
    %v1486 = vpop.permute.xlu0 %1485
    %1487 = vrot.lane.b32.xlu0 %v1469, 127
    %v1488 = vpop.permute.xlu0 %1487
    %1489 = vrot.lane.b32.xlu0 %v1470, 127
    %v1490 = vpop.permute.xlu0 %1489
    %1491 = vrot.lane.b32.xlu0 %v1471, 127
    %v1492 = vpop.permute.xlu0 %1491
    %vm1493 = vcmask 1039360
    %v1494 = vsel %vm1493, %v1480, %v1482
    %v1495 = vsel %vm1493, %v1482, %v1484
    %v1496 = vsel %vm1493, %v1484, %v1486
    %v1497 = vsel %vm1493, %v1486, %v1488
    %v1498 = vsel %vm1493, %v1488, %v1490
    %v1499 = vsel %vm1493, %v1490, %v1492
    %v1507 = vmax.f32 %v1465, %v1494
    %v1508 = vmax.f32 %v1466, %v1495
    %v1509 = vmax.f32 %v1467, %v1496
    %v1510 = vmax.f32 %v1468, %v1497
    %v1511 = vmax.f32 %v1469, %v1498
    %v1512 = vmax.f32 %v1470, %v1499
    %v1513 = vmax.f32 %v1471, %v1492
    %1521 = vrot.lane.b32.xlu0 %v1507, 96
    %v1522 = vpop.permute.xlu0 %1521
    %1523 = vrot.lane.b32.xlu0 %v1508, 96
    %v1524 = vpop.permute.xlu0 %1523
    %1525 = vrot.lane.b32.xlu0 %v1509, 96
    %v1526 = vpop.permute.xlu0 %1525
    %1527 = vrot.lane.b32.xlu0 %v1510, 96
    %v1528 = vpop.permute.xlu0 %1527
    %1529 = vrot.lane.b32.xlu0 %v1511, 96
    %v1530 = vpop.permute.xlu0 %1529
    %1531 = vrot.lane.b32.xlu0 %v1512, 96
    %v1532 = vpop.permute.xlu0 %1531
    %1533 = vrot.lane.b32.xlu0 %v1513, 96
    %v1534 = vpop.permute.xlu0 %1533
    %vm1535 = vcmask 785408
    %v1536 = vsel %vm1535, %v1522, %v1524
    %v1537 = vsel %vm1535, %v1524, %v1526
    %v1538 = vsel %vm1535, %v1526, %v1528
    %v1539 = vsel %vm1535, %v1528, %v1530
    %v1540 = vsel %vm1535, %v1530, %v1532
    %v1541 = vsel %vm1535, %v1532, %v1534
    %v1549 = vmax.f32 %v1507, %v1536
    %v1550 = vmax.f32 %v1508, %v1537
    %v1551 = vmax.f32 %v1509, %v1538
    %v1552 = vmax.f32 %v1510, %v1539
    %v1553 = vmax.f32 %v1511, %v1540
    %v1554 = vmax.f32 %v1512, %v1541
    %v1555 = vmax.f32 %v1513, %v1534
    %v1556 = vpack.c.bf16 %v1549, %v1549
    %v1557 = vpack.c.bf16 %v1550, %v1550
    %v1558 = vpack.c.bf16 %v1551, %v1551
    %v1559 = vpack.c.bf16 %v1552, %v1552
    %v1560 = vpack.c.bf16 %v1553, %v1553
    %v1561 = vpack.c.bf16 %v1554, %v1554
    %v1562 = vpack.c.bf16 %v1555, %v1555
    %v1671 = vunpack.c.l.b16 %v56
    %v1672 = vunpack.c.h.b16 %v56
    %v1673 = vunpack.c.l.b16 %v57
    %v1674 = vunpack.c.h.b16 %v57
    %v1675 = vunpack.c.l.b16 %v58
    %v1676 = vunpack.c.h.b16 %v58
    %v1677 = vunpack.c.l.b16 %v59
    %v1678 = vunpack.c.h.b16 %v59
    %v1679 = vunpack.c.l.b16 %v60
    %v1680 = vunpack.c.h.b16 %v60
    %v1681 = vunpack.c.l.b16 %v61
    %v1682 = vunpack.c.h.b16 %v61
    %v1683 = vunpack.c.l.b16 %v62
    %v1684 = vunpack.c.h.b16 %v62
    %v1685 = vunpack.c.l.b16 %v63
    %v1686 = vunpack.c.h.b16 %v63
    %v1687 = vunpack.c.l.b16 %v64
    %v1688 = vunpack.c.h.b16 %v64
    %v1689 = vunpack.c.l.b16 %v65
    %v1690 = vunpack.c.h.b16 %v65
    %v1691 = vunpack.c.l.b16 %v66
    %v1692 = vunpack.c.h.b16 %v66
    %v1693 = vunpack.c.l.b16 %v67
    %v1694 = vunpack.c.h.b16 %v67
    %v1695 = vunpack.c.l.b16 %v68
    %v1696 = vunpack.c.h.b16 %v68
    %v1697 = vunpack.c.l.b16 %v69
    %v1698 = vunpack.c.h.b16 %v69
    %v1699 = vunpack.c.l.b16 %v70
    %v1700 = vunpack.c.h.b16 %v70
    %v1701 = vunpack.c.l.b16 %v71
    %v1702 = vunpack.c.h.b16 %v71
    %v1703 = vunpack.c.l.b16 %v72
    %v1704 = vunpack.c.h.b16 %v72
    %v1705 = vunpack.c.l.b16 %v73
    %v1706 = vunpack.c.h.b16 %v73
    %v1707 = vunpack.c.l.b16 %v74
    %v1708 = vunpack.c.h.b16 %v74
    %v1709 = vunpack.c.l.b16 %v75
    %v1710 = vunpack.c.h.b16 %v75
    %v1711 = vunpack.c.l.b16 %v76
    %v1712 = vunpack.c.h.b16 %v76
    %v1713 = vunpack.c.l.b16 %v77
    %v1714 = vunpack.c.h.b16 %v77
    %v1715 = vunpack.c.l.b16 %v78
    %v1716 = vunpack.c.h.b16 %v78
    %v1717 = vunpack.c.l.b16 %v79
    %v1718 = vunpack.c.h.b16 %v79
    %v1719 = vunpack.c.l.b16 %v80
    %v1720 = vunpack.c.h.b16 %v80
    %v1721 = vunpack.c.l.b16 %v81
    %v1722 = vunpack.c.h.b16 %v81
    %v1723 = vunpack.c.l.b16 %v82
    %v1724 = vunpack.c.h.b16 %v82
    %v1725 = vunpack.c.l.b16 %v83
    %v1726 = vunpack.c.h.b16 %v83
    %v1727 = vunpack.c.l.b16 %v84
    %v1728 = vunpack.c.h.b16 %v84
    %v1729 = vunpack.c.l.b16 %v85
    %v1730 = vunpack.c.h.b16 %v85
    %v1731 = vunpack.c.l.b16 %v86
    %v1732 = vunpack.c.h.b16 %v86
    %v1733 = vunpack.c.l.b16 %v87
    %v1734 = vunpack.c.h.b16 %v87
    %v1735 = vunpack.c.l.b16 %v88
    %v1736 = vunpack.c.h.b16 %v88
    %v1737 = vunpack.c.l.b16 %v89
    %v1738 = vunpack.c.h.b16 %v89
    %v1739 = vunpack.c.l.b16 %v90
    %v1740 = vunpack.c.h.b16 %v90
    %v1741 = vunpack.c.l.b16 %v91
    %v1742 = vunpack.c.h.b16 %v91
    %v1743 = vunpack.c.l.b16 %v92
    %v1744 = vunpack.c.h.b16 %v92
    %v1745 = vunpack.c.l.b16 %v93
    %v1746 = vunpack.c.h.b16 %v93
    %v1747 = vunpack.c.l.b16 %v94
    %v1748 = vunpack.c.h.b16 %v94
    %v1749 = vunpack.c.l.b16 %v95
    %v1750 = vunpack.c.h.b16 %v95
    %v1751 = vunpack.c.l.b16 %v96
    %v1752 = vunpack.c.h.b16 %v96
    %v1753 = vunpack.c.l.b16 %v97
    %v1754 = vunpack.c.h.b16 %v97
    %v1755 = vunpack.c.l.b16 %v98
    %v1756 = vunpack.c.h.b16 %v98
    %v1757 = vunpack.c.l.b16 %v99
    %v1758 = vunpack.c.h.b16 %v99
    %v1759 = vunpack.c.l.b16 %v100
    %v1760 = vunpack.c.h.b16 %v100
    %v1761 = vunpack.c.l.b16 %v101
    %v1762 = vunpack.c.h.b16 %v101
    %v1763 = vunpack.c.l.b16 %v102
    %v1764 = vunpack.c.h.b16 %v102
    %v1765 = vunpack.c.l.b16 %v103
    %v1766 = vunpack.c.h.b16 %v103
    %v1767 = vunpack.c.l.b16 %v104
    %v1768 = vunpack.c.h.b16 %v104
    %v1769 = vunpack.c.l.b16 %v105
    %v1770 = vunpack.c.h.b16 %v105
    %v1771 = vunpack.c.l.b16 %v106
    %v1772 = vunpack.c.h.b16 %v106
    %v1773 = vunpack.c.l.b16 %v107
    %v1774 = vunpack.c.h.b16 %v107
    %v1775 = vunpack.c.l.b16 %v108
    %v1776 = vunpack.c.h.b16 %v108
    %v1777 = vunpack.c.l.b16 %v109
    %v1778 = vunpack.c.h.b16 %v109
    %v1779 = vunpack.c.l.b16 %v110
    %v1780 = vunpack.c.h.b16 %v110
    %v1781 = vunpack.c.l.b16 %v111
    %v1782 = vunpack.c.h.b16 %v111
    %v1783 = vunpack.c.l.b16 %v112
    %v1784 = vunpack.c.h.b16 %v112
    %v1785 = vunpack.c.l.b16 %v113
    %v1786 = vunpack.c.h.b16 %v113
    %v1787 = vunpack.c.l.b16 %v114
    %v1788 = vunpack.c.h.b16 %v114
    %v1789 = vunpack.c.l.b16 %v115
    %v1790 = vunpack.c.h.b16 %v115
    %v1791 = vunpack.c.l.b16 %v116
    %v1792 = vunpack.c.h.b16 %v116
    %v1793 = vunpack.c.l.b16 %v117
    %v1794 = vunpack.c.h.b16 %v117
    %v1795 = vunpack.c.l.b16 %v118
    %v1796 = vunpack.c.h.b16 %v118
    %v1797 = vunpack.c.l.b16 %v119
    %v1798 = vunpack.c.h.b16 %v119
    %v1799 = vunpack.c.l.b16 %v120
    %v1800 = vunpack.c.h.b16 %v120
    %v1801 = vunpack.c.l.b16 %v121
    %v1802 = vunpack.c.h.b16 %v121
    %v1803 = vunpack.c.l.b16 %v122
    %v1804 = vunpack.c.h.b16 %v122
    %v1805 = vunpack.c.l.b16 %v123
    %v1806 = vunpack.c.h.b16 %v123
    %v1807 = vunpack.c.l.b16 %v124
    %v1808 = vunpack.c.h.b16 %v124
    %v1809 = vunpack.c.l.b16 %v125
    %v1810 = vunpack.c.h.b16 %v125
    %v1811 = vunpack.c.l.b16 %v126
    %v1812 = vunpack.c.h.b16 %v126
    %v1813 = vunpack.c.l.b16 %v127
    %v1814 = vunpack.c.h.b16 %v127
    %v1815 = vunpack.c.l.b16 %v128
    %v1816 = vunpack.c.h.b16 %v128
    %v1817 = vunpack.c.l.b16 %v129
    %v1818 = vunpack.c.h.b16 %v129
    %v1819 = vunpack.c.l.b16 %v130
    %v1820 = vunpack.c.h.b16 %v130
    %v1821 = vunpack.c.l.b16 %v131
    %v1822 = vunpack.c.h.b16 %v131
    %v1823 = vunpack.c.l.b16 %v132
    %v1824 = vunpack.c.h.b16 %v132
    %v1825 = vunpack.c.l.b16 %v133
    %v1826 = vunpack.c.h.b16 %v133
    %v1827 = vunpack.c.l.b16 %v134
    %v1828 = vunpack.c.h.b16 %v134
    %v1829 = vunpack.c.l.b16 %v135
    %v1830 = vunpack.c.h.b16 %v135
    %v1831 = vunpack.c.l.b16 %v136
    %v1832 = vunpack.c.h.b16 %v136
    %v1833 = vunpack.c.l.b16 %v137
    %v1834 = vunpack.c.h.b16 %v137
    %v1835 = vunpack.c.l.b16 %v138
    %v1836 = vunpack.c.h.b16 %v138
    %v1837 = vunpack.c.l.b16 %v139
    %v1838 = vunpack.c.h.b16 %v139
    %v1839 = vunpack.c.l.b16 %v140
    %v1840 = vunpack.c.h.b16 %v140
    %v1841 = vunpack.c.l.b16 %v141
    %v1842 = vunpack.c.h.b16 %v141
    %v1843 = vunpack.c.l.b16 %v142
    %v1844 = vunpack.c.h.b16 %v142
    %v1845 = vunpack.c.l.b16 %v143
    %v1846 = vunpack.c.h.b16 %v143
    %v1847 = vunpack.c.l.b16 %v144
    %v1848 = vunpack.c.h.b16 %v144
    %v1849 = vunpack.c.l.b16 %v145
    %v1850 = vunpack.c.h.b16 %v145
    %v1851 = vunpack.c.l.b16 %v146
    %v1852 = vunpack.c.h.b16 %v146
    %v1853 = vunpack.c.l.b16 %v147
    %v1854 = vunpack.c.h.b16 %v147
    %v1855 = vunpack.c.l.b16 %v148
    %v1856 = vunpack.c.h.b16 %v148
    %v1857 = vunpack.c.l.b16 %v149
    %v1858 = vunpack.c.h.b16 %v149
    %v1859 = vunpack.c.l.b16 %v150
    %v1860 = vunpack.c.h.b16 %v150
    %v1861 = vunpack.c.l.b16 %v151
    %v1862 = vunpack.c.h.b16 %v151
    %v1863 = vunpack.c.l.b16 %v152
    %v1864 = vunpack.c.h.b16 %v152
    %v1865 = vunpack.c.l.b16 %v153
    %v1866 = vunpack.c.h.b16 %v153
    %v1867 = vunpack.c.l.b16 %v154
    %v1868 = vunpack.c.h.b16 %v154
    %v1869 = vunpack.c.l.b16 %v155
    %v1870 = vunpack.c.h.b16 %v155
    %v1871 = vunpack.c.l.b16 %v156
    %v1872 = vunpack.c.h.b16 %v156
    %v1873 = vunpack.c.l.b16 %v157
    %v1874 = vunpack.c.h.b16 %v157
    %v1875 = vunpack.c.l.b16 %v158
    %v1876 = vunpack.c.h.b16 %v158
    %v1877 = vunpack.c.l.b16 %v159
    %v1878 = vunpack.c.h.b16 %v159
    %v1879 = vunpack.c.l.b16 %v160
    %v1880 = vunpack.c.h.b16 %v160
    %v1881 = vunpack.c.l.b16 %v161
    %v1882 = vunpack.c.h.b16 %v161
    %v1883 = vunpack.c.l.b16 %v162
    %v1884 = vunpack.c.h.b16 %v162
    %v1885 = vunpack.c.l.b16 %v163
    %v1886 = vunpack.c.h.b16 %v163
    %v1887 = vpack.c.b16 %v1673, %v1671
    %v1888 = vpack.c.b16 %v1674, %v1672
    %v1889 = vpack.c.b16 %v1677, %v1675
    %v1890 = vpack.c.b16 %v1678, %v1676
    %v1891 = vpack.c.b16 %v1681, %v1679
    %v1892 = vpack.c.b16 %v1682, %v1680
    %v1893 = vpack.c.b16 %v1685, %v1683
    %v1894 = vpack.c.b16 %v1686, %v1684
    %v1895 = vpack.c.b16 %v1689, %v1687
    %v1896 = vpack.c.b16 %v1690, %v1688
    %v1897 = vpack.c.b16 %v1693, %v1691
    %v1898 = vpack.c.b16 %v1694, %v1692
    %v1899 = vpack.c.b16 %v1697, %v1695
    %v1900 = vpack.c.b16 %v1698, %v1696
    %v1901 = vpack.c.b16 %v1701, %v1699
    %v1902 = vpack.c.b16 %v1702, %v1700
    %v1903 = vpack.c.b16 %v1705, %v1703
    %v1904 = vpack.c.b16 %v1706, %v1704
    %v1905 = vpack.c.b16 %v1709, %v1707
    %v1906 = vpack.c.b16 %v1710, %v1708
    %v1907 = vpack.c.b16 %v1713, %v1711
    %v1908 = vpack.c.b16 %v1714, %v1712
    %v1909 = vpack.c.b16 %v1717, %v1715
    %v1910 = vpack.c.b16 %v1718, %v1716
    %v1911 = vpack.c.b16 %v1721, %v1719
    %v1912 = vpack.c.b16 %v1722, %v1720
    %v1913 = vpack.c.b16 %v1725, %v1723
    %v1914 = vpack.c.b16 %v1726, %v1724
    %v1915 = vpack.c.b16 %v1729, %v1727
    %v1916 = vpack.c.b16 %v1730, %v1728
    %v1917 = vpack.c.b16 %v1733, %v1731
    %v1918 = vpack.c.b16 %v1734, %v1732
    %v1919 = vpack.c.b16 %v1737, %v1735
    %v1920 = vpack.c.b16 %v1738, %v1736
    %v1921 = vpack.c.b16 %v1741, %v1739
    %v1922 = vpack.c.b16 %v1742, %v1740
    %v1923 = vpack.c.b16 %v1745, %v1743
    %v1924 = vpack.c.b16 %v1746, %v1744
    %v1925 = vpack.c.b16 %v1749, %v1747
    %v1926 = vpack.c.b16 %v1750, %v1748
    %v1927 = vpack.c.b16 %v1753, %v1751
    %v1928 = vpack.c.b16 %v1754, %v1752
    %v1929 = vpack.c.b16 %v1757, %v1755
    %v1930 = vpack.c.b16 %v1758, %v1756
    %v1931 = vpack.c.b16 %v1761, %v1759
    %v1932 = vpack.c.b16 %v1762, %v1760
    %v1933 = vpack.c.b16 %v1765, %v1763
    %v1934 = vpack.c.b16 %v1766, %v1764
    %v1935 = vpack.c.b16 %v1769, %v1767
    %v1936 = vpack.c.b16 %v1770, %v1768
    %v1937 = vpack.c.b16 %v1773, %v1771
    %v1938 = vpack.c.b16 %v1774, %v1772
    %v1939 = vpack.c.b16 %v1777, %v1775
    %v1940 = vpack.c.b16 %v1778, %v1776
    %v1941 = vpack.c.b16 %v1781, %v1779
    %v1942 = vpack.c.b16 %v1782, %v1780
    %v1943 = vpack.c.b16 %v1785, %v1783
    %v1944 = vpack.c.b16 %v1786, %v1784
    %v1945 = vpack.c.b16 %v1789, %v1787
    %v1946 = vpack.c.b16 %v1790, %v1788
    %v1947 = vpack.c.b16 %v1793, %v1791
    %v1948 = vpack.c.b16 %v1794, %v1792
    %v1949 = vpack.c.b16 %v1797, %v1795
    %v1950 = vpack.c.b16 %v1798, %v1796
    %v1951 = vpack.c.b16 %v1801, %v1799
    %v1952 = vpack.c.b16 %v1802, %v1800
    %v1953 = vpack.c.b16 %v1805, %v1803
    %v1954 = vpack.c.b16 %v1806, %v1804
    %v1955 = vpack.c.b16 %v1809, %v1807
    %v1956 = vpack.c.b16 %v1810, %v1808
    %v1957 = vpack.c.b16 %v1813, %v1811
    %v1958 = vpack.c.b16 %v1814, %v1812
    %v1959 = vpack.c.b16 %v1817, %v1815
    %v1960 = vpack.c.b16 %v1818, %v1816
    %v1961 = vpack.c.b16 %v1821, %v1819
    %v1962 = vpack.c.b16 %v1822, %v1820
    %v1963 = vpack.c.b16 %v1825, %v1823
    %v1964 = vpack.c.b16 %v1826, %v1824
    %v1965 = vpack.c.b16 %v1829, %v1827
    %v1966 = vpack.c.b16 %v1830, %v1828
    %v1967 = vpack.c.b16 %v1833, %v1831
    %v1968 = vpack.c.b16 %v1834, %v1832
    %v1969 = vpack.c.b16 %v1837, %v1835
    %v1970 = vpack.c.b16 %v1838, %v1836
    %v1971 = vpack.c.b16 %v1841, %v1839
    %v1972 = vpack.c.b16 %v1842, %v1840
    %v1973 = vpack.c.b16 %v1845, %v1843
    %v1974 = vpack.c.b16 %v1846, %v1844
    %v1975 = vpack.c.b16 %v1849, %v1847
    %v1976 = vpack.c.b16 %v1850, %v1848
    %v1977 = vpack.c.b16 %v1853, %v1851
    %v1978 = vpack.c.b16 %v1854, %v1852
    %v1979 = vpack.c.b16 %v1857, %v1855
    %v1980 = vpack.c.b16 %v1858, %v1856
    %v1981 = vpack.c.b16 %v1861, %v1859
    %v1982 = vpack.c.b16 %v1862, %v1860
    %v1983 = vpack.c.b16 %v1865, %v1863
    %v1984 = vpack.c.b16 %v1866, %v1864
    %v1985 = vpack.c.b16 %v1869, %v1867
    %v1986 = vpack.c.b16 %v1870, %v1868
    %v1987 = vpack.c.b16 %v1873, %v1871
    %v1988 = vpack.c.b16 %v1874, %v1872
    %v1989 = vpack.c.b16 %v1877, %v1875
    %v1990 = vpack.c.b16 %v1878, %v1876
    %v1991 = vpack.c.b16 %v1881, %v1879
    %v1992 = vpack.c.b16 %v1882, %v1880
    %v1993 = vpack.c.b16 %v1885, %v1883
    %v1994 = vpack.c.b16 %v1886, %v1884
    %vm2101 = vcmask 744448
    %v2103 = vsel %vm2101, %v1562, 0
    %vm2105 = vcmask 1044480
    %vm2106 = vcmask 1045504
    %v2107 = vsel %vm2105, 4294967295, 65535
    %v2108 = vsel %vm2106, %v2107, 0
    %v2110 = vand.u32 %v1993, %v2108
    %v2113 = vand.u32 %v1994, %v2108
    %2115 = vmatprep.subr.bf16.mxu0 %v1902
    %2116 = vmatpush1.bf16.msra.mxu0 %v1901
    %2117 = vmatprep.subr.bf16.mxu0 %v1900
    %2118 = vmatpush1.bf16.msra.mxu0 %v1899
    %2119 = vmatprep.subr.bf16.mxu0 %v1898
    %2120 = vmatpush1.bf16.msra.mxu0 %v1897
    %2121 = vmatprep.subr.bf16.mxu0 %v1896
    %2122 = vmatpush1.bf16.msra.mxu0 %v1895
    %2123 = vmatprep.subr.bf16.mxu0 %v1894
    %2124 = vmatpush1.bf16.msra.mxu0 %v1893
    %2125 = vmatprep.subr.bf16.mxu0 %v1892
    %2126 = vmatpush1.bf16.msra.mxu0 %v1891
    %2127 = vmatprep.subr.bf16.mxu0 %v1890
    %2128 = vmatpush1.bf16.msra.mxu0 %v1889
    %2129 = vmatprep.subr.bf16.mxu0 %v1888
    %2130 = vmatpush1.bf16.msra.mxu0 %v1887
    %2131 = vmatprep.subr.bf16.mxu0 %v1918
    %2132 = vmatpush2.bf16.msra.mxu0 %v1917
    %2133 = vmatprep.subr.bf16.mxu0 %v1916
    %2134 = vmatpush2.bf16.msra.mxu0 %v1915
    %2135 = vmatprep.subr.bf16.mxu0 %v1914
    %2136 = vmatpush2.bf16.msra.mxu0 %v1913
    %2137 = vmatprep.subr.bf16.mxu0 %v1912
    %2138 = vmatpush2.bf16.msra.mxu0 %v1911
    %2139 = vmatprep.subr.bf16.mxu0 %v1910
    %2140 = vmatpush2.bf16.msra.mxu0 %v1909
    %2141 = vmatprep.subr.bf16.mxu0 %v1908
    %2142 = vmatpush2.bf16.msra.mxu0 %v1907
    %2143 = vmatprep.subr.bf16.mxu0 %v1906
    %2144 = vmatpush2.bf16.msra.mxu0 %v1905
    %2145 = vmatprep.subr.bf16.mxu0 %v1904
    %2146 = vmatpush2.bf16.msra.mxu0 %v1903
    %2147 = vmatprep.mubr.bf16.mxu0 %v1557
    %2148 = vmatmul.mubr.bf16.gmra.mxu0 %v1556
    %v2149 = vpop.f32.mrf.mxu0
    %v2150 = vadd.f32 0.0, %v2149
    %v2151 = vpop.f32.mrf.mxu0
    %v2152 = vadd.f32 0.0, %v2151
    %v2153 = vpop.f32.mrf.mxu0
    %v2154 = vpop.f32.mrf.mxu0
    %2155 = vdwg.mxu0
    %2156 = vmatprep.subr.bf16.mxu0 %v1934
    %2157 = vmatpush1.bf16.msra.mxu0 %v1933
    %2158 = vmatprep.subr.bf16.mxu0 %v1932
    %2159 = vmatpush1.bf16.msra.mxu0 %v1931
    %2160 = vmatprep.subr.bf16.mxu0 %v1930
    %2161 = vmatpush1.bf16.msra.mxu0 %v1929
    %2162 = vmatprep.subr.bf16.mxu0 %v1928
    %2163 = vmatpush1.bf16.msra.mxu0 %v1927
    %2164 = vmatprep.subr.bf16.mxu0 %v1926
    %2165 = vmatpush1.bf16.msra.mxu0 %v1925
    %2166 = vmatprep.subr.bf16.mxu0 %v1924
    %2167 = vmatpush1.bf16.msra.mxu0 %v1923
    %2168 = vmatprep.subr.bf16.mxu0 %v1922
    %2169 = vmatpush1.bf16.msra.mxu0 %v1921
    %2170 = vmatprep.subr.bf16.mxu0 %v1920
    %2171 = vmatpush1.bf16.msra.mxu0 %v1919
    %2172 = vmatprep.subr.bf16.mxu0 %v1950
    %2173 = vmatpush2.bf16.msra.mxu0 %v1949
    %2174 = vmatprep.subr.bf16.mxu0 %v1948
    %2175 = vmatpush2.bf16.msra.mxu0 %v1947
    %2176 = vmatprep.subr.bf16.mxu0 %v1946
    %2177 = vmatpush2.bf16.msra.mxu0 %v1945
    %2178 = vmatprep.subr.bf16.mxu0 %v1944
    %2179 = vmatpush2.bf16.msra.mxu0 %v1943
    %2180 = vmatprep.subr.bf16.mxu0 %v1942
    %2181 = vmatpush2.bf16.msra.mxu0 %v1941
    %2182 = vmatprep.subr.bf16.mxu0 %v1940
    %2183 = vmatpush2.bf16.msra.mxu0 %v1939
    %2184 = vmatprep.subr.bf16.mxu0 %v1938
    %2185 = vmatpush2.bf16.msra.mxu0 %v1937
    %2186 = vmatprep.subr.bf16.mxu0 %v1936
    %2187 = vmatpush2.bf16.msra.mxu0 %v1935
    %2188 = vmatprep.mubr.bf16.mxu0 %v1559
    %2189 = vmatmul.mubr.bf16.gmra.mxu0 %v1558
    %v2190 = vpop.f32.mrf.mxu0
    %v2191 = vadd.f32 %v2150, %v2190
    %v2192 = vpop.f32.mrf.mxu0
    %v2193 = vadd.f32 %v2152, %v2192
    %v2194 = vpop.f32.mrf.mxu0
    %v2195 = vpop.f32.mrf.mxu0
    %2196 = vdwg.mxu0
    %2197 = vmatprep.subr.bf16.mxu0 %v1966
    %2198 = vmatpush1.bf16.msra.mxu0 %v1965
    %2199 = vmatprep.subr.bf16.mxu0 %v1964
    %2200 = vmatpush1.bf16.msra.mxu0 %v1963
    %2201 = vmatprep.subr.bf16.mxu0 %v1962
    %2202 = vmatpush1.bf16.msra.mxu0 %v1961
    %2203 = vmatprep.subr.bf16.mxu0 %v1960
    %2204 = vmatpush1.bf16.msra.mxu0 %v1959
    %2205 = vmatprep.subr.bf16.mxu0 %v1958
    %2206 = vmatpush1.bf16.msra.mxu0 %v1957
    %2207 = vmatprep.subr.bf16.mxu0 %v1956
    %2208 = vmatpush1.bf16.msra.mxu0 %v1955
    %2209 = vmatprep.subr.bf16.mxu0 %v1954
    %2210 = vmatpush1.bf16.msra.mxu0 %v1953
    %2211 = vmatprep.subr.bf16.mxu0 %v1952
    %2212 = vmatpush1.bf16.msra.mxu0 %v1951
    %2213 = vmatprep.subr.bf16.mxu0 %v1982
    %2214 = vmatpush2.bf16.msra.mxu0 %v1981
    %2215 = vmatprep.subr.bf16.mxu0 %v1980
    %2216 = vmatpush2.bf16.msra.mxu0 %v1979
    %2217 = vmatprep.subr.bf16.mxu0 %v1978
    %2218 = vmatpush2.bf16.msra.mxu0 %v1977
    %2219 = vmatprep.subr.bf16.mxu0 %v1976
    %2220 = vmatpush2.bf16.msra.mxu0 %v1975
    %2221 = vmatprep.subr.bf16.mxu0 %v1974
    %2222 = vmatpush2.bf16.msra.mxu0 %v1973
    %2223 = vmatprep.subr.bf16.mxu0 %v1972
    %2224 = vmatpush2.bf16.msra.mxu0 %v1971
    %2225 = vmatprep.subr.bf16.mxu0 %v1970
    %2226 = vmatpush2.bf16.msra.mxu0 %v1969
    %2227 = vmatprep.subr.bf16.mxu0 %v1968
    %2228 = vmatpush2.bf16.msra.mxu0 %v1967
    %2229 = vmatprep.mubr.bf16.mxu0 %v1561
    %2230 = vmatmul.mubr.bf16.gmra.mxu0 %v1560
    %v2231 = vpop.f32.mrf.mxu0
    %v2232 = vadd.f32 %v2191, %v2231
    %v2233 = vpop.f32.mrf.mxu0
    %v2234 = vadd.f32 %v2193, %v2233
    %v2235 = vpop.f32.mrf.mxu0
    %v2236 = vpop.f32.mrf.mxu0
    %2237 = vdwg.mxu0
    %2238 = vmatprep.subr.bf16.mxu0 0
    %2239 = vmatpush1.bf16.msra.mxu0 0
    %2240 = vmatprep.subr.bf16.mxu0 0
    %2241 = vmatpush1.bf16.msra.mxu0 0
    %2242 = vmatprep.subr.bf16.mxu0 %v2113
    %2243 = vmatpush1.bf16.msra.mxu0 %v2110
    %2244 = vmatprep.subr.bf16.mxu0 %v1992
    %2245 = vmatpush1.bf16.msra.mxu0 %v1991
    %2246 = vmatprep.subr.bf16.mxu0 %v1990
    %2247 = vmatpush1.bf16.msra.mxu0 %v1989
    %2248 = vmatprep.subr.bf16.mxu0 %v1988
    %2249 = vmatpush1.bf16.msra.mxu0 %v1987
    %2250 = vmatprep.subr.bf16.mxu0 %v1986
    %2251 = vmatpush1.bf16.msra.mxu0 %v1985
    %2252 = vmatprep.subr.bf16.mxu0 %v1984
    %2253 = vmatpush1.bf16.msra.mxu0 %v1983
    %2254 = vmatprep.subr.bf16.mxu0 0
    %2255 = vmatpush2.bf16.msra.mxu0 0
    %2256 = vmatprep.subr.bf16.mxu0 0
    %2257 = vmatpush2.bf16.msra.mxu0 0
    %2258 = vmatprep.subr.bf16.mxu0 0
    %2259 = vmatpush2.bf16.msra.mxu0 0
    %2260 = vmatprep.subr.bf16.mxu0 0
    %2261 = vmatpush2.bf16.msra.mxu0 0
    %2262 = vmatprep.subr.bf16.mxu0 0
    %2263 = vmatpush2.bf16.msra.mxu0 0
    %2264 = vmatprep.subr.bf16.mxu0 0
    %2265 = vmatpush2.bf16.msra.mxu0 0
    %2266 = vmatprep.subr.bf16.mxu0 0
    %2267 = vmatpush2.bf16.msra.mxu0 0
    %2268 = vmatprep.subr.bf16.mxu0 0
    %2269 = vmatpush2.bf16.msra.mxu0 0
    %2270 = vmatprep.mubr.bf16.mxu0 0
    %2271 = vmatmul.mubr.bf16.gmra.mxu0 %v2103
    %v2272 = vpop.f32.mrf.mxu0
    %v2273 = vadd.f32 %v2232, %v2272
    %v2274 = vpop.f32.mrf.mxu0
    %v2275 = vadd.f32 %v2234, %v2274
    %v2276 = vpop.f32.mrf.mxu0
    %v2277 = vpop.f32.mrf.mxu0
    %2278 = vdwg.mxu0
    %v2279 = vpack.c.bf16 %v2273, %v2273
    %v2280 = vpack.c.bf16 %v2275, %v2275
    %v2283 = vunpack.c.l.b16 %v167
    %v2284 = vunpack.c.l.b16 %v168
    %v2285 = vpack.c.b16 %v2284, %v2283
    %2288 = vrot.lane.b32.xlu0 %v2279, 127
    %v2289 = vpop.permute.xlu0 %2288
    %2290 = vrot.lane.b32.xlu0 %v2280, 127
    %v2291 = vpop.permute.xlu0 %2290
    %v2292 = vsel %vm412, %v2289, %v2291
    %vm2293 = vcmask 48128
    %v2295 = vsel %vm2293, %v2285, 0
    %vm2297 = vcmask 1042432
    %v2299 = vsel %vm2297, %v2292, 0
    %v2302 = vsel %vm2297, %v2291, 0
    %2304 = vmatprep.subr.bf16.mxu0 0
    %2305 = vmatpush1.bf16.msra.mxu0 0
    %2306 = vmatprep.subr.bf16.mxu0 0
    %2307 = vmatpush1.bf16.msra.mxu0 0
    %2308 = vmatprep.subr.bf16.mxu0 0
    %2309 = vmatpush1.bf16.msra.mxu0 0
    %2310 = vmatprep.subr.bf16.mxu0 0
    %2311 = vmatpush1.bf16.msra.mxu0 0
    %2312 = vmatprep.subr.bf16.mxu0 0
    %2313 = vmatpush1.bf16.msra.mxu0 0
    %2314 = vmatprep.subr.bf16.mxu0 0
    %2315 = vmatpush1.bf16.msra.mxu0 0
    %2316 = vmatprep.subr.bf16.mxu0 0
    %2317 = vmatpush1.bf16.msra.mxu0 0
    %2318 = vmatprep.subr.bf16.mxu0 %v2302
    %2319 = vmatpush1.bf16.msra.mxu0 %v2299
    %2320 = vmatprep.subr.bf16.mxu0 0
    %2321 = vmatpush2.bf16.msra.mxu0 0
    %2322 = vmatprep.subr.bf16.mxu0 0
    %2323 = vmatpush2.bf16.msra.mxu0 0
    %2324 = vmatprep.subr.bf16.mxu0 0
    %2325 = vmatpush2.bf16.msra.mxu0 0
    %2326 = vmatprep.subr.bf16.mxu0 0
    %2327 = vmatpush2.bf16.msra.mxu0 0
    %2328 = vmatprep.subr.bf16.mxu0 0
    %2329 = vmatpush2.bf16.msra.mxu0 0
    %2330 = vmatprep.subr.bf16.mxu0 0
    %2331 = vmatpush2.bf16.msra.mxu0 0
    %2332 = vmatprep.subr.bf16.mxu0 0
    %2333 = vmatpush2.bf16.msra.mxu0 0
    %2334 = vmatprep.subr.bf16.mxu0 0
    %2335 = vmatpush2.bf16.msra.mxu0 0
    %2336 = vmatprep.mubr.bf16.mxu0 0
    %2337 = vmatmul.mubr.bf16.gmra.mxu0 %v2295
    %v2338 = vpop.f32.mrf.mxu0
    %v2339 = vadd.f32 0.0, %v2338
    %v2340 = vpop.f32.mrf.mxu0
    %v2341 = vadd.f32 0.0, %v2340
    %v2342 = vpop.f32.mrf.mxu0
    %v2343 = vadd.f32 0.0, %v2342
    %v2344 = vpop.f32.mrf.mxu0
    %v2345 = vadd.f32 0.0, %v2344
    %2346 = vdwg.mxu0
    %v2349 = vunpack.c.l.b16 %v164
    %v2350 = vunpack.c.l.b16 %v165
    %v2351 = vpack.c.b16 %v2350, %v2349
    %v2353 = vsel %vm2293, %v2351, 0
    %v2356 = vsel %vm2297, %v2279, 0
    %v2359 = vsel %vm2297, %v2280, 0
    %2361 = vmatprep.subr.bf16.mxu0 0
    %2362 = vmatpush1.bf16.msra.mxu0 0
    %2363 = vmatprep.subr.bf16.mxu0 0
    %2364 = vmatpush1.bf16.msra.mxu0 0
    %2365 = vmatprep.subr.bf16.mxu0 0
    %2366 = vmatpush1.bf16.msra.mxu0 0
    %2367 = vmatprep.subr.bf16.mxu0 0
    %2368 = vmatpush1.bf16.msra.mxu0 0
    %2369 = vmatprep.subr.bf16.mxu0 0
    %2370 = vmatpush1.bf16.msra.mxu0 0
    %2371 = vmatprep.subr.bf16.mxu0 0
    %2372 = vmatpush1.bf16.msra.mxu0 0
    %2373 = vmatprep.subr.bf16.mxu0 0
    %2374 = vmatpush1.bf16.msra.mxu0 0
    %2375 = vmatprep.subr.bf16.mxu0 %v2359
    %2376 = vmatpush1.bf16.msra.mxu0 %v2356
    %2377 = vmatprep.subr.bf16.mxu0 0
    %2378 = vmatpush2.bf16.msra.mxu0 0
    %2379 = vmatprep.subr.bf16.mxu0 0
    %2380 = vmatpush2.bf16.msra.mxu0 0
    %2381 = vmatprep.subr.bf16.mxu0 0
    %2382 = vmatpush2.bf16.msra.mxu0 0
    %2383 = vmatprep.subr.bf16.mxu0 0
    %2384 = vmatpush2.bf16.msra.mxu0 0
    %2385 = vmatprep.subr.bf16.mxu0 0
    %2386 = vmatpush2.bf16.msra.mxu0 0
    %2387 = vmatprep.subr.bf16.mxu0 0
    %2388 = vmatpush2.bf16.msra.mxu0 0
    %2389 = vmatprep.subr.bf16.mxu0 0
    %2390 = vmatpush2.bf16.msra.mxu0 0
    %2391 = vmatprep.subr.bf16.mxu0 0
    %2392 = vmatpush2.bf16.msra.mxu0 0
    %2393 = vmatprep.mubr.bf16.mxu0 0
    %2394 = vmatmul.mubr.bf16.gmra.mxu0 %v2353
    %v2395 = vpop.f32.mrf.mxu0
    %v2396 = vadd.f32 %v2339, %v2395
    %v2397 = vpop.f32.mrf.mxu0
    %v2398 = vadd.f32 %v2341, %v2397
    %v2399 = vpop.f32.mrf.mxu0
    %v2400 = vadd.f32 %v2343, %v2399
    %v2401 = vpop.f32.mrf.mxu0
    %v2402 = vadd.f32 %v2345, %v2401
    %2403 = vdwg.mxu0
    %v2406 = vunpack.c.l.b16 %v170
    %v2407 = vunpack.c.l.b16 %v171
    %v2408 = vpack.c.b16 %v2407, %v2406
    %2409 = vrot.lane.b32.xlu0 %v2279, 126
    %v2410 = vpop.permute.xlu0 %2409
    %2411 = vrot.lane.b32.xlu0 %v2280, 126
    %v2412 = vpop.permute.xlu0 %2411
    %v2413 = vsel %vm815, %v2410, %v2412
    %v2415 = vsel %vm2293, %v2408, 0
    %v2418 = vsel %vm2297, %v2413, 0
    %v2421 = vsel %vm2297, %v2412, 0
    %2423 = vmatprep.subr.bf16.mxu0 0
    %2424 = vmatpush1.bf16.msra.mxu0 0
    %2425 = vmatprep.subr.bf16.mxu0 0
    %2426 = vmatpush1.bf16.msra.mxu0 0
    %2427 = vmatprep.subr.bf16.mxu0 0
    %2428 = vmatpush1.bf16.msra.mxu0 0
    %2429 = vmatprep.subr.bf16.mxu0 0
    %2430 = vmatpush1.bf16.msra.mxu0 0
    %2431 = vmatprep.subr.bf16.mxu0 0
    %2432 = vmatpush1.bf16.msra.mxu0 0
    %2433 = vmatprep.subr.bf16.mxu0 0
    %2434 = vmatpush1.bf16.msra.mxu0 0
    %2435 = vmatprep.subr.bf16.mxu0 0
    %2436 = vmatpush1.bf16.msra.mxu0 0
    %2437 = vmatprep.subr.bf16.mxu0 %v2421
    %2438 = vmatpush1.bf16.msra.mxu0 %v2418
    %2439 = vmatprep.subr.bf16.mxu0 0
    %2440 = vmatpush2.bf16.msra.mxu0 0
    %2441 = vmatprep.subr.bf16.mxu0 0
    %2442 = vmatpush2.bf16.msra.mxu0 0
    %2443 = vmatprep.subr.bf16.mxu0 0
    %2444 = vmatpush2.bf16.msra.mxu0 0
    %2445 = vmatprep.subr.bf16.mxu0 0
    %2446 = vmatpush2.bf16.msra.mxu0 0
    %2447 = vmatprep.subr.bf16.mxu0 0
    %2448 = vmatpush2.bf16.msra.mxu0 0
    %2449 = vmatprep.subr.bf16.mxu0 0
    %2450 = vmatpush2.bf16.msra.mxu0 0
    %2451 = vmatprep.subr.bf16.mxu0 0
    %2452 = vmatpush2.bf16.msra.mxu0 0
    %2453 = vmatprep.subr.bf16.mxu0 0
    %2454 = vmatpush2.bf16.msra.mxu0 0
    %2455 = vmatprep.mubr.bf16.mxu0 0
    %2456 = vmatmul.mubr.bf16.gmra.mxu0 %v2415
    %v2457 = vpop.f32.mrf.mxu0
    %v2458 = vadd.f32 0.0, %v2457
    %v2459 = vpop.f32.mrf.mxu0
    %v2460 = vadd.f32 0.0, %v2459
    %v2461 = vpop.f32.mrf.mxu0
    %v2462 = vadd.f32 0.0, %v2461
    %v2463 = vpop.f32.mrf.mxu0
    %v2464 = vadd.f32 0.0, %v2463
    %2465 = vdwg.mxu0
    %v2466 = vadd.f32 %v2396, %v2458
    %v2467 = vadd.f32 %v2398, %v2460
    %v2468 = vadd.f32 %v2400, %v2462
    %v2469 = vadd.f32 %v2402, %v2464
    %v2472 = vunpack.c.l.b16 %v173
    %v2473 = vunpack.c.l.b16 %v174
    %v2474 = vpack.c.b16 %v2473, %v2472
    %2475 = vrot.lane.b32.xlu0 %v2279, 125
    %v2476 = vpop.permute.xlu0 %2475
    %2477 = vrot.lane.b32.xlu0 %v2280, 125
    %v2478 = vpop.permute.xlu0 %2477
    %v2479 = vsel %vm1033, %v2476, %v2478
    %v2481 = vsel %vm2293, %v2474, 0
    %v2484 = vsel %vm2297, %v2479, 0
    %v2487 = vsel %vm2297, %v2478, 0
    %2489 = vmatprep.subr.bf16.mxu0 0
    %2490 = vmatpush1.bf16.msra.mxu0 0
    %2491 = vmatprep.subr.bf16.mxu0 0
    %2492 = vmatpush1.bf16.msra.mxu0 0
    %2493 = vmatprep.subr.bf16.mxu0 0
    %2494 = vmatpush1.bf16.msra.mxu0 0
    %2495 = vmatprep.subr.bf16.mxu0 0
    %2496 = vmatpush1.bf16.msra.mxu0 0
    %2497 = vmatprep.subr.bf16.mxu0 0
    %2498 = vmatpush1.bf16.msra.mxu0 0
    %2499 = vmatprep.subr.bf16.mxu0 0
    %2500 = vmatpush1.bf16.msra.mxu0 0
    %2501 = vmatprep.subr.bf16.mxu0 0
    %2502 = vmatpush1.bf16.msra.mxu0 0
    %2503 = vmatprep.subr.bf16.mxu0 %v2487
    %2504 = vmatpush1.bf16.msra.mxu0 %v2484
    %2505 = vmatprep.subr.bf16.mxu0 0
    %2506 = vmatpush2.bf16.msra.mxu0 0
    %2507 = vmatprep.subr.bf16.mxu0 0
    %2508 = vmatpush2.bf16.msra.mxu0 0
    %2509 = vmatprep.subr.bf16.mxu0 0
    %2510 = vmatpush2.bf16.msra.mxu0 0
    %2511 = vmatprep.subr.bf16.mxu0 0
    %2512 = vmatpush2.bf16.msra.mxu0 0
    %2513 = vmatprep.subr.bf16.mxu0 0
    %2514 = vmatpush2.bf16.msra.mxu0 0
    %2515 = vmatprep.subr.bf16.mxu0 0
    %2516 = vmatpush2.bf16.msra.mxu0 0
    %2517 = vmatprep.subr.bf16.mxu0 0
    %2518 = vmatpush2.bf16.msra.mxu0 0
    %2519 = vmatprep.subr.bf16.mxu0 0
    %2520 = vmatpush2.bf16.msra.mxu0 0
    %2521 = vmatprep.mubr.bf16.mxu0 0
    %2522 = vmatmul.mubr.bf16.gmra.mxu0 %v2481
    %v2523 = vpop.f32.mrf.mxu0
    %v2524 = vadd.f32 0.0, %v2523
    %v2525 = vpop.f32.mrf.mxu0
    %v2526 = vadd.f32 0.0, %v2525
    %v2527 = vpop.f32.mrf.mxu0
    %v2528 = vadd.f32 0.0, %v2527
    %v2529 = vpop.f32.mrf.mxu0
    %v2530 = vadd.f32 0.0, %v2529
    %2531 = vdwg.mxu0
    %v2532 = vadd.f32 %v2466, %v2524
    %v2533 = vadd.f32 %v2467, %v2526
    %v2534 = vadd.f32 %v2468, %v2528
    %v2535 = vadd.f32 %v2469, %v2530
    %v2538 = vunpack.c.l.b16 %v176
    %v2539 = vunpack.c.l.b16 %v177
    %v2540 = vpack.c.b16 %v2539, %v2538
    %2541 = vrot.lane.b32.xlu0 %v2279, 124
    %v2542 = vpop.permute.xlu0 %2541
    %2543 = vrot.lane.b32.xlu0 %v2280, 124
    %v2544 = vpop.permute.xlu0 %2543
    %v2545 = vsel %vm1251, %v2542, %v2544
    %v2547 = vsel %vm2293, %v2540, 0
    %v2550 = vsel %vm2297, %v2545, 0
    %v2553 = vsel %vm2297, %v2544, 0
    %2555 = vmatprep.subr.bf16.mxu0 0
    %2556 = vmatpush1.bf16.msra.mxu0 0
    %2557 = vmatprep.subr.bf16.mxu0 0
    %2558 = vmatpush1.bf16.msra.mxu0 0
    %2559 = vmatprep.subr.bf16.mxu0 0
    %2560 = vmatpush1.bf16.msra.mxu0 0
    %2561 = vmatprep.subr.bf16.mxu0 0
    %2562 = vmatpush1.bf16.msra.mxu0 0
    %2563 = vmatprep.subr.bf16.mxu0 0
    %2564 = vmatpush1.bf16.msra.mxu0 0
    %2565 = vmatprep.subr.bf16.mxu0 0
    %2566 = vmatpush1.bf16.msra.mxu0 0
    %2567 = vmatprep.subr.bf16.mxu0 0
    %2568 = vmatpush1.bf16.msra.mxu0 0
    %2569 = vmatprep.subr.bf16.mxu0 %v2553
    %2570 = vmatpush1.bf16.msra.mxu0 %v2550
    %2571 = vmatprep.subr.bf16.mxu0 0
    %2572 = vmatpush2.bf16.msra.mxu0 0
    %2573 = vmatprep.subr.bf16.mxu0 0
    %2574 = vmatpush2.bf16.msra.mxu0 0
    %2575 = vmatprep.subr.bf16.mxu0 0
    %2576 = vmatpush2.bf16.msra.mxu0 0
    %2577 = vmatprep.subr.bf16.mxu0 0
    %2578 = vmatpush2.bf16.msra.mxu0 0
    %2579 = vmatprep.subr.bf16.mxu0 0
    %2580 = vmatpush2.bf16.msra.mxu0 0
    %2581 = vmatprep.subr.bf16.mxu0 0
    %2582 = vmatpush2.bf16.msra.mxu0 0
    %2583 = vmatprep.subr.bf16.mxu0 0
    %2584 = vmatpush2.bf16.msra.mxu0 0
    %2585 = vmatprep.subr.bf16.mxu0 0
    %2586 = vmatpush2.bf16.msra.mxu0 0
    %2587 = vmatprep.mubr.bf16.mxu0 0
    %2588 = vmatmul.mubr.bf16.gmra.mxu0 %v2547
    %v2589 = vpop.f32.mrf.mxu0
    %v2590 = vadd.f32 0.0, %v2589
    %v2591 = vpop.f32.mrf.mxu0
    %v2592 = vadd.f32 0.0, %v2591
    %v2593 = vpop.f32.mrf.mxu0
    %v2594 = vadd.f32 0.0, %v2593
    %v2595 = vpop.f32.mrf.mxu0
    %v2596 = vadd.f32 0.0, %v2595
    %2597 = vdwg.mxu0
    %v2598 = vadd.f32 %v2532, %v2590
    %v2599 = vadd.f32 %v2533, %v2592
    %v2600 = vadd.f32 %v2534, %v2594
    %v2601 = vadd.f32 %v2535, %v2596
    %v2604 = vunpack.c.l.b16 %v179
    %v2605 = vunpack.c.l.b16 %v180
    %v2606 = vpack.c.b16 %v2605, %v2604
    %2607 = vrot.lane.b32.xlu0 %v2279, 114
    %v2608 = vpop.permute.xlu0 %2607
    %2609 = vrot.lane.b32.xlu0 %v2280, 114
    %v2610 = vpop.permute.xlu0 %2609
    %vm2611 = vcmask 932864
    %v2612 = vsel %vm2611, %v2608, %v2610
    %v2614 = vsel %vm2293, %v2606, 0
    %v2617 = vsel %vm2297, %v2612, 0
    %v2620 = vsel %vm2297, %v2610, 0
    %2622 = vmatprep.subr.bf16.mxu0 0
    %2623 = vmatpush1.bf16.msra.mxu0 0
    %2624 = vmatprep.subr.bf16.mxu0 0
    %2625 = vmatpush1.bf16.msra.mxu0 0
    %2626 = vmatprep.subr.bf16.mxu0 0
    %2627 = vmatpush1.bf16.msra.mxu0 0
    %2628 = vmatprep.subr.bf16.mxu0 0
    %2629 = vmatpush1.bf16.msra.mxu0 0
    %2630 = vmatprep.subr.bf16.mxu0 0
    %2631 = vmatpush1.bf16.msra.mxu0 0
    %2632 = vmatprep.subr.bf16.mxu0 0
    %2633 = vmatpush1.bf16.msra.mxu0 0
    %2634 = vmatprep.subr.bf16.mxu0 0
    %2635 = vmatpush1.bf16.msra.mxu0 0
    %2636 = vmatprep.subr.bf16.mxu0 %v2620
    %2637 = vmatpush1.bf16.msra.mxu0 %v2617
    %2638 = vmatprep.subr.bf16.mxu0 0
    %2639 = vmatpush2.bf16.msra.mxu0 0
    %2640 = vmatprep.subr.bf16.mxu0 0
    %2641 = vmatpush2.bf16.msra.mxu0 0
    %2642 = vmatprep.subr.bf16.mxu0 0
    %2643 = vmatpush2.bf16.msra.mxu0 0
    %2644 = vmatprep.subr.bf16.mxu0 0
    %2645 = vmatpush2.bf16.msra.mxu0 0
    %2646 = vmatprep.subr.bf16.mxu0 0
    %2647 = vmatpush2.bf16.msra.mxu0 0
    %2648 = vmatprep.subr.bf16.mxu0 0
    %2649 = vmatpush2.bf16.msra.mxu0 0
    %2650 = vmatprep.subr.bf16.mxu0 0
    %2651 = vmatpush2.bf16.msra.mxu0 0
    %2652 = vmatprep.subr.bf16.mxu0 0
    %2653 = vmatpush2.bf16.msra.mxu0 0
    %2654 = vmatprep.mubr.bf16.mxu0 0
    %2655 = vmatmul.mubr.bf16.gmra.mxu0 %v2614
    %v2656 = vpop.f32.mrf.mxu0
    %v2657 = vadd.f32 0.0, %v2656
    %v2658 = vpop.f32.mrf.mxu0
    %v2659 = vadd.f32 0.0, %v2658
    %v2660 = vpop.f32.mrf.mxu0
    %v2661 = vadd.f32 0.0, %v2660
    %v2662 = vpop.f32.mrf.mxu0
    %v2663 = vadd.f32 0.0, %v2662
    %2664 = vdwg.mxu0
    %v2665 = vadd.f32 %v2598, %v2657
    %v2666 = vadd.f32 %v2599, %v2659
    %v2667 = vadd.f32 %v2600, %v2661
    %v2668 = vadd.f32 %v2601, %v2663
    %v2671 = vunpack.c.l.b16 %v182
    %v2672 = vunpack.c.l.b16 %v183
    %v2673 = vpack.c.b16 %v2672, %v2671
    %2674 = vrot.lane.b32.xlu0 %v2279, 113
    %v2675 = vpop.permute.xlu0 %2674
    %2676 = vrot.lane.b32.xlu0 %v2280, 113
    %v2677 = vpop.permute.xlu0 %2676
    %vm2678 = vcmask 924672
    %v2679 = vsel %vm2678, %v2675, %v2677
    %v2681 = vsel %vm2293, %v2673, 0
    %v2684 = vsel %vm2297, %v2679, 0
    %v2687 = vsel %vm2297, %v2677, 0
    %2689 = vmatprep.subr.bf16.mxu0 0
    %2690 = vmatpush1.bf16.msra.mxu0 0
    %2691 = vmatprep.subr.bf16.mxu0 0
    %2692 = vmatpush1.bf16.msra.mxu0 0
    %2693 = vmatprep.subr.bf16.mxu0 0
    %2694 = vmatpush1.bf16.msra.mxu0 0
    %2695 = vmatprep.subr.bf16.mxu0 0
    %2696 = vmatpush1.bf16.msra.mxu0 0
    %2697 = vmatprep.subr.bf16.mxu0 0
    %2698 = vmatpush1.bf16.msra.mxu0 0
    %2699 = vmatprep.subr.bf16.mxu0 0
    %2700 = vmatpush1.bf16.msra.mxu0 0
    %2701 = vmatprep.subr.bf16.mxu0 0
    %2702 = vmatpush1.bf16.msra.mxu0 0
    %2703 = vmatprep.subr.bf16.mxu0 %v2687
    %2704 = vmatpush1.bf16.msra.mxu0 %v2684
    %2705 = vmatprep.subr.bf16.mxu0 0
    %2706 = vmatpush2.bf16.msra.mxu0 0
    %2707 = vmatprep.subr.bf16.mxu0 0
    %2708 = vmatpush2.bf16.msra.mxu0 0
    %2709 = vmatprep.subr.bf16.mxu0 0
    %2710 = vmatpush2.bf16.msra.mxu0 0
    %2711 = vmatprep.subr.bf16.mxu0 0
    %2712 = vmatpush2.bf16.msra.mxu0 0
    %2713 = vmatprep.subr.bf16.mxu0 0
    %2714 = vmatpush2.bf16.msra.mxu0 0
    %2715 = vmatprep.subr.bf16.mxu0 0
    %2716 = vmatpush2.bf16.msra.mxu0 0
    %2717 = vmatprep.subr.bf16.mxu0 0
    %2718 = vmatpush2.bf16.msra.mxu0 0
    %2719 = vmatprep.subr.bf16.mxu0 0
    %2720 = vmatpush2.bf16.msra.mxu0 0
    %2721 = vmatprep.mubr.bf16.mxu0 0
    %2722 = vmatmul.mubr.bf16.gmra.mxu0 %v2681
    %v2723 = vpop.f32.mrf.mxu0
    %v2724 = vadd.f32 0.0, %v2723
    %v2725 = vpop.f32.mrf.mxu0
    %v2726 = vadd.f32 0.0, %v2725
    %v2727 = vpop.f32.mrf.mxu0
    %v2728 = vadd.f32 0.0, %v2727
    %v2729 = vpop.f32.mrf.mxu0
    %v2730 = vadd.f32 0.0, %v2729
    %2731 = vdwg.mxu0
    %v2732 = vadd.f32 %v2665, %v2724
    %v2733 = vadd.f32 %v2666, %v2726
    %v2734 = vadd.f32 %v2667, %v2728
    %v2735 = vadd.f32 %v2668, %v2730
    %v2738 = vunpack.c.l.b16 %v185
    %v2739 = vunpack.c.l.b16 %v186
    %v2740 = vpack.c.b16 %v2739, %v2738
    %2741 = vrot.lane.b32.xlu0 %v2279, 112
    %v2742 = vpop.permute.xlu0 %2741
    %2743 = vrot.lane.b32.xlu0 %v2280, 112
    %v2744 = vpop.permute.xlu0 %2743
    %vm2745 = vcmask 916480
    %v2746 = vsel %vm2745, %v2742, %v2744
    %v2748 = vsel %vm2293, %v2740, 0
    %v2751 = vsel %vm2297, %v2746, 0
    %v2754 = vsel %vm2297, %v2744, 0
    %2756 = vmatprep.subr.bf16.mxu0 0
    %2757 = vmatpush1.bf16.msra.mxu0 0
    %2758 = vmatprep.subr.bf16.mxu0 0
    %2759 = vmatpush1.bf16.msra.mxu0 0
    %2760 = vmatprep.subr.bf16.mxu0 0
    %2761 = vmatpush1.bf16.msra.mxu0 0
    %2762 = vmatprep.subr.bf16.mxu0 0
    %2763 = vmatpush1.bf16.msra.mxu0 0
    %2764 = vmatprep.subr.bf16.mxu0 0
    %2765 = vmatpush1.bf16.msra.mxu0 0
    %2766 = vmatprep.subr.bf16.mxu0 0
    %2767 = vmatpush1.bf16.msra.mxu0 0
    %2768 = vmatprep.subr.bf16.mxu0 0
    %2769 = vmatpush1.bf16.msra.mxu0 0
    %2770 = vmatprep.subr.bf16.mxu0 %v2754
    %2771 = vmatpush1.bf16.msra.mxu0 %v2751
    %2772 = vmatprep.subr.bf16.mxu0 0
    %2773 = vmatpush2.bf16.msra.mxu0 0
    %2774 = vmatprep.subr.bf16.mxu0 0
    %2775 = vmatpush2.bf16.msra.mxu0 0
    %2776 = vmatprep.subr.bf16.mxu0 0
    %2777 = vmatpush2.bf16.msra.mxu0 0
    %2778 = vmatprep.subr.bf16.mxu0 0
    %2779 = vmatpush2.bf16.msra.mxu0 0
    %2780 = vmatprep.subr.bf16.mxu0 0
    %2781 = vmatpush2.bf16.msra.mxu0 0
    %2782 = vmatprep.subr.bf16.mxu0 0
    %2783 = vmatpush2.bf16.msra.mxu0 0
    %2784 = vmatprep.subr.bf16.mxu0 0
    %2785 = vmatpush2.bf16.msra.mxu0 0
    %2786 = vmatprep.subr.bf16.mxu0 0
    %2787 = vmatpush2.bf16.msra.mxu0 0
    %2788 = vmatprep.mubr.bf16.mxu0 0
    %2789 = vmatmul.mubr.bf16.gmra.mxu0 %v2748
    %v2790 = vpop.f32.mrf.mxu0
    %v2791 = vadd.f32 0.0, %v2790
    %v2792 = vpop.f32.mrf.mxu0
    %v2793 = vadd.f32 0.0, %v2792
    %v2794 = vpop.f32.mrf.mxu0
    %v2795 = vadd.f32 0.0, %v2794
    %v2796 = vpop.f32.mrf.mxu0
    %v2797 = vadd.f32 0.0, %v2796
    %2798 = vdwg.mxu0
    %v2799 = vadd.f32 %v2732, %v2791
    %v2800 = vadd.f32 %v2733, %v2793
    %v2801 = vadd.f32 %v2734, %v2795
    %v2802 = vadd.f32 %v2735, %v2797
    %v2805 = vunpack.c.l.b16 %v188
    %v2806 = vunpack.c.l.b16 %v189
    %v2807 = vpack.c.b16 %v2806, %v2805
    %2808 = vrot.lane.b32.xlu0 %v2279, 111
    %v2809 = vpop.permute.xlu0 %2808
    %2810 = vrot.lane.b32.xlu0 %v2280, 111
    %v2811 = vpop.permute.xlu0 %2810
    %vm2812 = vcmask 908288
    %v2813 = vsel %vm2812, %v2809, %v2811
    %v2815 = vsel %vm2293, %v2807, 0
    %v2818 = vsel %vm2297, %v2813, 0
    %v2821 = vsel %vm2297, %v2811, 0
    %2823 = vmatprep.subr.bf16.mxu0 0
    %2824 = vmatpush1.bf16.msra.mxu0 0
    %2825 = vmatprep.subr.bf16.mxu0 0
    %2826 = vmatpush1.bf16.msra.mxu0 0
    %2827 = vmatprep.subr.bf16.mxu0 0
    %2828 = vmatpush1.bf16.msra.mxu0 0
    %2829 = vmatprep.subr.bf16.mxu0 0
    %2830 = vmatpush1.bf16.msra.mxu0 0
    %2831 = vmatprep.subr.bf16.mxu0 0
    %2832 = vmatpush1.bf16.msra.mxu0 0
    %2833 = vmatprep.subr.bf16.mxu0 0
    %2834 = vmatpush1.bf16.msra.mxu0 0
    %2835 = vmatprep.subr.bf16.mxu0 0
    %2836 = vmatpush1.bf16.msra.mxu0 0
    %2837 = vmatprep.subr.bf16.mxu0 %v2821
    %2838 = vmatpush1.bf16.msra.mxu0 %v2818
    %2839 = vmatprep.subr.bf16.mxu0 0
    %2840 = vmatpush2.bf16.msra.mxu0 0
    %2841 = vmatprep.subr.bf16.mxu0 0
    %2842 = vmatpush2.bf16.msra.mxu0 0
    %2843 = vmatprep.subr.bf16.mxu0 0
    %2844 = vmatpush2.bf16.msra.mxu0 0
    %2845 = vmatprep.subr.bf16.mxu0 0
    %2846 = vmatpush2.bf16.msra.mxu0 0
    %2847 = vmatprep.subr.bf16.mxu0 0
    %2848 = vmatpush2.bf16.msra.mxu0 0
    %2849 = vmatprep.subr.bf16.mxu0 0
    %2850 = vmatpush2.bf16.msra.mxu0 0
    %2851 = vmatprep.subr.bf16.mxu0 0
    %2852 = vmatpush2.bf16.msra.mxu0 0
    %2853 = vmatprep.subr.bf16.mxu0 0
    %2854 = vmatpush2.bf16.msra.mxu0 0
    %2855 = vmatprep.mubr.bf16.mxu0 0
    %2856 = vmatmul.mubr.bf16.gmra.mxu0 %v2815
    %v2857 = vpop.f32.mrf.mxu0
    %v2858 = vadd.f32 0.0, %v2857
    %v2859 = vpop.f32.mrf.mxu0
    %v2860 = vadd.f32 0.0, %v2859
    %v2861 = vpop.f32.mrf.mxu0
    %v2862 = vadd.f32 0.0, %v2861
    %v2863 = vpop.f32.mrf.mxu0
    %v2864 = vadd.f32 0.0, %v2863
    %2865 = vdwg.mxu0
    %v2866 = vadd.f32 %v2799, %v2858
    %v2867 = vadd.f32 %v2800, %v2860
    %v2868 = vadd.f32 %v2801, %v2862
    %v2869 = vadd.f32 %v2802, %v2864
    %v2872 = vunpack.c.l.b16 %v191
    %v2873 = vunpack.c.l.b16 %v192
    %v2874 = vpack.c.b16 %v2873, %v2872
    %2875 = vrot.lane.b32.xlu0 %v2279, 110
    %v2876 = vpop.permute.xlu0 %2875
    %2877 = vrot.lane.b32.xlu0 %v2280, 110
    %v2878 = vpop.permute.xlu0 %2877
    %vm2879 = vcmask 900096
    %v2880 = vsel %vm2879, %v2876, %v2878
    %v2882 = vsel %vm2293, %v2874, 0
    %v2885 = vsel %vm2297, %v2880, 0
    %v2888 = vsel %vm2297, %v2878, 0
    %2890 = vmatprep.subr.bf16.mxu0 0
    %2891 = vmatpush1.bf16.msra.mxu0 0
    %2892 = vmatprep.subr.bf16.mxu0 0
    %2893 = vmatpush1.bf16.msra.mxu0 0
    %2894 = vmatprep.subr.bf16.mxu0 0
    %2895 = vmatpush1.bf16.msra.mxu0 0
    %2896 = vmatprep.subr.bf16.mxu0 0
    %2897 = vmatpush1.bf16.msra.mxu0 0
    %2898 = vmatprep.subr.bf16.mxu0 0
    %2899 = vmatpush1.bf16.msra.mxu0 0
    %2900 = vmatprep.subr.bf16.mxu0 0
    %2901 = vmatpush1.bf16.msra.mxu0 0
    %2902 = vmatprep.subr.bf16.mxu0 0
    %2903 = vmatpush1.bf16.msra.mxu0 0
    %2904 = vmatprep.subr.bf16.mxu0 %v2888
    %2905 = vmatpush1.bf16.msra.mxu0 %v2885
    %2906 = vmatprep.subr.bf16.mxu0 0
    %2907 = vmatpush2.bf16.msra.mxu0 0
    %2908 = vmatprep.subr.bf16.mxu0 0
    %2909 = vmatpush2.bf16.msra.mxu0 0
    %2910 = vmatprep.subr.bf16.mxu0 0
    %2911 = vmatpush2.bf16.msra.mxu0 0
    %2912 = vmatprep.subr.bf16.mxu0 0
    %2913 = vmatpush2.bf16.msra.mxu0 0
    %2914 = vmatprep.subr.bf16.mxu0 0
    %2915 = vmatpush2.bf16.msra.mxu0 0
    %2916 = vmatprep.subr.bf16.mxu0 0
    %2917 = vmatpush2.bf16.msra.mxu0 0
    %2918 = vmatprep.subr.bf16.mxu0 0
    %2919 = vmatpush2.bf16.msra.mxu0 0
    %2920 = vmatprep.subr.bf16.mxu0 0
    %2921 = vmatpush2.bf16.msra.mxu0 0
    %2922 = vmatprep.mubr.bf16.mxu0 0
    %2923 = vmatmul.mubr.bf16.gmra.mxu0 %v2882
    %v2924 = vpop.f32.mrf.mxu0
    %v2925 = vadd.f32 0.0, %v2924
    %v2926 = vpop.f32.mrf.mxu0
    %v2927 = vadd.f32 0.0, %v2926
    %v2928 = vpop.f32.mrf.mxu0
    %v2929 = vadd.f32 0.0, %v2928
    %v2930 = vpop.f32.mrf.mxu0
    %v2931 = vadd.f32 0.0, %v2930
    %2932 = vdwg.mxu0
    %v2933 = vadd.f32 %v2866, %v2925
    %v2934 = vadd.f32 %v2867, %v2927
    %v2935 = vadd.f32 %v2868, %v2929
    %v2936 = vadd.f32 %v2869, %v2931
    %v2939 = vunpack.c.l.b16 %v194
    %v2940 = vunpack.c.l.b16 %v195
    %v2941 = vpack.c.b16 %v2940, %v2939
    %2942 = vrot.lane.b32.xlu0 %v2279, 100
    %v2943 = vpop.permute.xlu0 %2942
    %2944 = vrot.lane.b32.xlu0 %v2280, 100
    %v2945 = vpop.permute.xlu0 %2944
    %vm2946 = vcmask 818176
    %v2947 = vsel %vm2946, %v2943, %v2945
    %v2949 = vsel %vm2293, %v2941, 0
    %v2952 = vsel %vm2297, %v2947, 0
    %v2955 = vsel %vm2297, %v2945, 0
    %2957 = vmatprep.subr.bf16.mxu0 0
    %2958 = vmatpush1.bf16.msra.mxu0 0
    %2959 = vmatprep.subr.bf16.mxu0 0
    %2960 = vmatpush1.bf16.msra.mxu0 0
    %2961 = vmatprep.subr.bf16.mxu0 0
    %2962 = vmatpush1.bf16.msra.mxu0 0
    %2963 = vmatprep.subr.bf16.mxu0 0
    %2964 = vmatpush1.bf16.msra.mxu0 0
    %2965 = vmatprep.subr.bf16.mxu0 0
    %2966 = vmatpush1.bf16.msra.mxu0 0
    %2967 = vmatprep.subr.bf16.mxu0 0
    %2968 = vmatpush1.bf16.msra.mxu0 0
    %2969 = vmatprep.subr.bf16.mxu0 0
    %2970 = vmatpush1.bf16.msra.mxu0 0
    %2971 = vmatprep.subr.bf16.mxu0 %v2955
    %2972 = vmatpush1.bf16.msra.mxu0 %v2952
    %2973 = vmatprep.subr.bf16.mxu0 0
    %2974 = vmatpush2.bf16.msra.mxu0 0
    %2975 = vmatprep.subr.bf16.mxu0 0
    %2976 = vmatpush2.bf16.msra.mxu0 0
    %2977 = vmatprep.subr.bf16.mxu0 0
    %2978 = vmatpush2.bf16.msra.mxu0 0
    %2979 = vmatprep.subr.bf16.mxu0 0
    %2980 = vmatpush2.bf16.msra.mxu0 0
    %2981 = vmatprep.subr.bf16.mxu0 0
    %2982 = vmatpush2.bf16.msra.mxu0 0
    %2983 = vmatprep.subr.bf16.mxu0 0
    %2984 = vmatpush2.bf16.msra.mxu0 0
    %2985 = vmatprep.subr.bf16.mxu0 0
    %2986 = vmatpush2.bf16.msra.mxu0 0
    %2987 = vmatprep.subr.bf16.mxu0 0
    %2988 = vmatpush2.bf16.msra.mxu0 0
    %2989 = vmatprep.mubr.bf16.mxu0 0
    %2990 = vmatmul.mubr.bf16.gmra.mxu0 %v2949
    %v2991 = vpop.f32.mrf.mxu0
    %v2992 = vadd.f32 0.0, %v2991
    %v2993 = vpop.f32.mrf.mxu0
    %v2994 = vadd.f32 0.0, %v2993
    %v2995 = vpop.f32.mrf.mxu0
    %v2996 = vadd.f32 0.0, %v2995
    %v2997 = vpop.f32.mrf.mxu0
    %v2998 = vadd.f32 0.0, %v2997
    %2999 = vdwg.mxu0
    %v3000 = vadd.f32 %v2933, %v2992
    %v3001 = vadd.f32 %v2934, %v2994
    %v3002 = vadd.f32 %v2935, %v2996
    %v3003 = vadd.f32 %v2936, %v2998
    %v3006 = vunpack.c.l.b16 %v197
    %v3007 = vunpack.c.l.b16 %v198
    %v3008 = vpack.c.b16 %v3007, %v3006
    %3009 = vrot.lane.b32.xlu0 %v2279, 99
    %v3010 = vpop.permute.xlu0 %3009
    %3011 = vrot.lane.b32.xlu0 %v2280, 99
    %v3012 = vpop.permute.xlu0 %3011
    %vm3013 = vcmask 809984
    %v3014 = vsel %vm3013, %v3010, %v3012
    %v3016 = vsel %vm2293, %v3008, 0
    %v3019 = vsel %vm2297, %v3014, 0
    %v3022 = vsel %vm2297, %v3012, 0
    %3024 = vmatprep.subr.bf16.mxu0 0
    %3025 = vmatpush1.bf16.msra.mxu0 0
    %3026 = vmatprep.subr.bf16.mxu0 0
    %3027 = vmatpush1.bf16.msra.mxu0 0
    %3028 = vmatprep.subr.bf16.mxu0 0
    %3029 = vmatpush1.bf16.msra.mxu0 0
    %3030 = vmatprep.subr.bf16.mxu0 0
    %3031 = vmatpush1.bf16.msra.mxu0 0
    %3032 = vmatprep.subr.bf16.mxu0 0
    %3033 = vmatpush1.bf16.msra.mxu0 0
    %3034 = vmatprep.subr.bf16.mxu0 0
    %3035 = vmatpush1.bf16.msra.mxu0 0
    %3036 = vmatprep.subr.bf16.mxu0 0
    %3037 = vmatpush1.bf16.msra.mxu0 0
    %3038 = vmatprep.subr.bf16.mxu0 %v3022
    %3039 = vmatpush1.bf16.msra.mxu0 %v3019
    %3040 = vmatprep.subr.bf16.mxu0 0
    %3041 = vmatpush2.bf16.msra.mxu0 0
    %3042 = vmatprep.subr.bf16.mxu0 0
    %3043 = vmatpush2.bf16.msra.mxu0 0
    %3044 = vmatprep.subr.bf16.mxu0 0
    %3045 = vmatpush2.bf16.msra.mxu0 0
    %3046 = vmatprep.subr.bf16.mxu0 0
    %3047 = vmatpush2.bf16.msra.mxu0 0
    %3048 = vmatprep.subr.bf16.mxu0 0
    %3049 = vmatpush2.bf16.msra.mxu0 0
    %3050 = vmatprep.subr.bf16.mxu0 0
    %3051 = vmatpush2.bf16.msra.mxu0 0
    %3052 = vmatprep.subr.bf16.mxu0 0
    %3053 = vmatpush2.bf16.msra.mxu0 0
    %3054 = vmatprep.subr.bf16.mxu0 0
    %3055 = vmatpush2.bf16.msra.mxu0 0
    %3056 = vmatprep.mubr.bf16.mxu0 0
    %3057 = vmatmul.mubr.bf16.gmra.mxu0 %v3016
    %v3058 = vpop.f32.mrf.mxu0
    %v3059 = vadd.f32 0.0, %v3058
    %v3060 = vpop.f32.mrf.mxu0
    %v3061 = vadd.f32 0.0, %v3060
    %v3062 = vpop.f32.mrf.mxu0
    %v3063 = vadd.f32 0.0, %v3062
    %v3064 = vpop.f32.mrf.mxu0
    %v3065 = vadd.f32 0.0, %v3064
    %3066 = vdwg.mxu0
    %v3067 = vadd.f32 %v3000, %v3059
    %v3068 = vadd.f32 %v3001, %v3061
    %v3069 = vadd.f32 %v3002, %v3063
    %v3070 = vadd.f32 %v3003, %v3065
    %v3073 = vunpack.c.l.b16 %v200
    %v3074 = vunpack.c.l.b16 %v201
    %v3075 = vpack.c.b16 %v3074, %v3073
    %3076 = vrot.lane.b32.xlu0 %v2279, 98
    %v3077 = vpop.permute.xlu0 %3076
    %3078 = vrot.lane.b32.xlu0 %v2280, 98
    %v3079 = vpop.permute.xlu0 %3078
    %vm3080 = vcmask 801792
    %v3081 = vsel %vm3080, %v3077, %v3079
    %v3083 = vsel %vm2293, %v3075, 0
    %v3086 = vsel %vm2297, %v3081, 0
    %v3089 = vsel %vm2297, %v3079, 0
    %3091 = vmatprep.subr.bf16.mxu0 0
    %3092 = vmatpush1.bf16.msra.mxu0 0
    %3093 = vmatprep.subr.bf16.mxu0 0
    %3094 = vmatpush1.bf16.msra.mxu0 0
    %3095 = vmatprep.subr.bf16.mxu0 0
    %3096 = vmatpush1.bf16.msra.mxu0 0
    %3097 = vmatprep.subr.bf16.mxu0 0
    %3098 = vmatpush1.bf16.msra.mxu0 0
    %3099 = vmatprep.subr.bf16.mxu0 0
    %3100 = vmatpush1.bf16.msra.mxu0 0
    %3101 = vmatprep.subr.bf16.mxu0 0
    %3102 = vmatpush1.bf16.msra.mxu0 0
    %3103 = vmatprep.subr.bf16.mxu0 0
    %3104 = vmatpush1.bf16.msra.mxu0 0
    %3105 = vmatprep.subr.bf16.mxu0 %v3089
    %3106 = vmatpush1.bf16.msra.mxu0 %v3086
    %3107 = vmatprep.subr.bf16.mxu0 0
    %3108 = vmatpush2.bf16.msra.mxu0 0
    %3109 = vmatprep.subr.bf16.mxu0 0
    %3110 = vmatpush2.bf16.msra.mxu0 0
    %3111 = vmatprep.subr.bf16.mxu0 0
    %3112 = vmatpush2.bf16.msra.mxu0 0
    %3113 = vmatprep.subr.bf16.mxu0 0
    %3114 = vmatpush2.bf16.msra.mxu0 0
    %3115 = vmatprep.subr.bf16.mxu0 0
    %3116 = vmatpush2.bf16.msra.mxu0 0
    %3117 = vmatprep.subr.bf16.mxu0 0
    %3118 = vmatpush2.bf16.msra.mxu0 0
    %3119 = vmatprep.subr.bf16.mxu0 0
    %3120 = vmatpush2.bf16.msra.mxu0 0
    %3121 = vmatprep.subr.bf16.mxu0 0
    %3122 = vmatpush2.bf16.msra.mxu0 0
    %3123 = vmatprep.mubr.bf16.mxu0 0
    %3124 = vmatmul.mubr.bf16.gmra.mxu0 %v3083
    %v3125 = vpop.f32.mrf.mxu0
    %v3126 = vadd.f32 0.0, %v3125
    %v3127 = vpop.f32.mrf.mxu0
    %v3128 = vadd.f32 0.0, %v3127
    %v3129 = vpop.f32.mrf.mxu0
    %v3130 = vadd.f32 0.0, %v3129
    %v3131 = vpop.f32.mrf.mxu0
    %v3132 = vadd.f32 0.0, %v3131
    %3133 = vdwg.mxu0
    %v3134 = vadd.f32 %v3067, %v3126
    %v3135 = vadd.f32 %v3068, %v3128
    %v3136 = vadd.f32 %v3069, %v3130
    %v3137 = vadd.f32 %v3070, %v3132
    %v3140 = vunpack.c.l.b16 %v203
    %v3141 = vunpack.c.l.b16 %v204
    %v3142 = vpack.c.b16 %v3141, %v3140
    %3143 = vrot.lane.b32.xlu0 %v2279, 97
    %v3144 = vpop.permute.xlu0 %3143
    %3145 = vrot.lane.b32.xlu0 %v2280, 97
    %v3146 = vpop.permute.xlu0 %3145
    %vm3147 = vcmask 793600
    %v3148 = vsel %vm3147, %v3144, %v3146
    %v3150 = vsel %vm2293, %v3142, 0
    %v3153 = vsel %vm2297, %v3148, 0
    %v3156 = vsel %vm2297, %v3146, 0
    %3158 = vmatprep.subr.bf16.mxu0 0
    %3159 = vmatpush1.bf16.msra.mxu0 0
    %3160 = vmatprep.subr.bf16.mxu0 0
    %3161 = vmatpush1.bf16.msra.mxu0 0
    %3162 = vmatprep.subr.bf16.mxu0 0
    %3163 = vmatpush1.bf16.msra.mxu0 0
    %3164 = vmatprep.subr.bf16.mxu0 0
    %3165 = vmatpush1.bf16.msra.mxu0 0
    %3166 = vmatprep.subr.bf16.mxu0 0
    %3167 = vmatpush1.bf16.msra.mxu0 0
    %3168 = vmatprep.subr.bf16.mxu0 0
    %3169 = vmatpush1.bf16.msra.mxu0 0
    %3170 = vmatprep.subr.bf16.mxu0 0
    %3171 = vmatpush1.bf16.msra.mxu0 0
    %3172 = vmatprep.subr.bf16.mxu0 %v3156
    %3173 = vmatpush1.bf16.msra.mxu0 %v3153
    %3174 = vmatprep.subr.bf16.mxu0 0
    %3175 = vmatpush2.bf16.msra.mxu0 0
    %3176 = vmatprep.subr.bf16.mxu0 0
    %3177 = vmatpush2.bf16.msra.mxu0 0
    %3178 = vmatprep.subr.bf16.mxu0 0
    %3179 = vmatpush2.bf16.msra.mxu0 0
    %3180 = vmatprep.subr.bf16.mxu0 0
    %3181 = vmatpush2.bf16.msra.mxu0 0
    %3182 = vmatprep.subr.bf16.mxu0 0
    %3183 = vmatpush2.bf16.msra.mxu0 0
    %3184 = vmatprep.subr.bf16.mxu0 0
    %3185 = vmatpush2.bf16.msra.mxu0 0
    %3186 = vmatprep.subr.bf16.mxu0 0
    %3187 = vmatpush2.bf16.msra.mxu0 0
    %3188 = vmatprep.subr.bf16.mxu0 0
    %3189 = vmatpush2.bf16.msra.mxu0 0
    %3190 = vmatprep.mubr.bf16.mxu0 0
    %3191 = vmatmul.mubr.bf16.gmra.mxu0 %v3150
    %v3192 = vpop.f32.mrf.mxu0
    %v3193 = vadd.f32 0.0, %v3192
    %v3194 = vpop.f32.mrf.mxu0
    %v3195 = vadd.f32 0.0, %v3194
    %v3196 = vpop.f32.mrf.mxu0
    %v3197 = vadd.f32 0.0, %v3196
    %v3198 = vpop.f32.mrf.mxu0
    %v3199 = vadd.f32 0.0, %v3198
    %3200 = vdwg.mxu0
    %v3201 = vadd.f32 %v3134, %v3193
    %v3202 = vadd.f32 %v3135, %v3195
    %v3203 = vadd.f32 %v3136, %v3197
    %v3204 = vadd.f32 %v3137, %v3199
    %v3207 = vunpack.c.l.b16 %v206
    %v3208 = vunpack.c.l.b16 %v207
    %v3209 = vpack.c.b16 %v3208, %v3207
    %3210 = vrot.lane.b32.xlu0 %v2279, 96
    %v3211 = vpop.permute.xlu0 %3210
    %3212 = vrot.lane.b32.xlu0 %v2280, 96
    %v3213 = vpop.permute.xlu0 %3212
    %vm3214 = vcmask 785408
    %v3215 = vsel %vm3214, %v3211, %v3213
    %v3217 = vsel %vm2293, %v3209, 0
    %v3220 = vsel %vm2297, %v3215, 0
    %v3223 = vsel %vm2297, %v3213, 0
    %3225 = vmatprep.subr.bf16.mxu0 0
    %3226 = vmatpush1.bf16.msra.mxu0 0
    %3227 = vmatprep.subr.bf16.mxu0 0
    %3228 = vmatpush1.bf16.msra.mxu0 0
    %3229 = vmatprep.subr.bf16.mxu0 0
    %3230 = vmatpush1.bf16.msra.mxu0 0
    %3231 = vmatprep.subr.bf16.mxu0 0
    %3232 = vmatpush1.bf16.msra.mxu0 0
    %3233 = vmatprep.subr.bf16.mxu0 0
    %3234 = vmatpush1.bf16.msra.mxu0 0
    %3235 = vmatprep.subr.bf16.mxu0 0
    %3236 = vmatpush1.bf16.msra.mxu0 0
    %3237 = vmatprep.subr.bf16.mxu0 0
    %3238 = vmatpush1.bf16.msra.mxu0 0
    %3239 = vmatprep.subr.bf16.mxu0 %v3223
    %3240 = vmatpush1.bf16.msra.mxu0 %v3220
    %3241 = vmatprep.subr.bf16.mxu0 0
    %3242 = vmatpush2.bf16.msra.mxu0 0
    %3243 = vmatprep.subr.bf16.mxu0 0
    %3244 = vmatpush2.bf16.msra.mxu0 0
    %3245 = vmatprep.subr.bf16.mxu0 0
    %3246 = vmatpush2.bf16.msra.mxu0 0
    %3247 = vmatprep.subr.bf16.mxu0 0
    %3248 = vmatpush2.bf16.msra.mxu0 0
    %3249 = vmatprep.subr.bf16.mxu0 0
    %3250 = vmatpush2.bf16.msra.mxu0 0
    %3251 = vmatprep.subr.bf16.mxu0 0
    %3252 = vmatpush2.bf16.msra.mxu0 0
    %3253 = vmatprep.subr.bf16.mxu0 0
    %3254 = vmatpush2.bf16.msra.mxu0 0
    %3255 = vmatprep.subr.bf16.mxu0 0
    %3256 = vmatpush2.bf16.msra.mxu0 0
    %3257 = vmatprep.mubr.bf16.mxu0 0
    %3258 = vmatmul.mubr.bf16.gmra.mxu0 %v3217
    %v3259 = vpop.f32.mrf.mxu0
    %v3260 = vadd.f32 0.0, %v3259
    %v3261 = vpop.f32.mrf.mxu0
    %v3262 = vadd.f32 0.0, %v3261
    %v3263 = vpop.f32.mrf.mxu0
    %v3264 = vadd.f32 0.0, %v3263
    %v3265 = vpop.f32.mrf.mxu0
    %v3266 = vadd.f32 0.0, %v3265
    %3267 = vdwg.mxu0
    %v3268 = vadd.f32 %v3201, %v3260
    %v3269 = vadd.f32 %v3202, %v3262
    %v3270 = vadd.f32 %v3203, %v3264
    %v3271 = vadd.f32 %v3204, %v3266
    %v3274 = vunpack.c.l.b16 %v209
    %v3275 = vunpack.c.l.b16 %v210
    %v3276 = vpack.c.b16 %v3275, %v3274
    %3277 = vrot.lane.b32.xlu0 %v2279, 86
    %v3278 = vpop.permute.xlu0 %3277
    %3279 = vrot.lane.b32.xlu0 %v2280, 86
    %v3280 = vpop.permute.xlu0 %3279
    %vm3281 = vcmask 703488
    %v3282 = vsel %vm3281, %v3278, %v3280
    %v3284 = vsel %vm2293, %v3276, 0
    %v3287 = vsel %vm2297, %v3282, 0
    %v3290 = vsel %vm2297, %v3280, 0
    %3292 = vmatprep.subr.bf16.mxu0 0
    %3293 = vmatpush1.bf16.msra.mxu0 0
    %3294 = vmatprep.subr.bf16.mxu0 0
    %3295 = vmatpush1.bf16.msra.mxu0 0
    %3296 = vmatprep.subr.bf16.mxu0 0
    %3297 = vmatpush1.bf16.msra.mxu0 0
    %3298 = vmatprep.subr.bf16.mxu0 0
    %3299 = vmatpush1.bf16.msra.mxu0 0
    %3300 = vmatprep.subr.bf16.mxu0 0
    %3301 = vmatpush1.bf16.msra.mxu0 0
    %3302 = vmatprep.subr.bf16.mxu0 0
    %3303 = vmatpush1.bf16.msra.mxu0 0
    %3304 = vmatprep.subr.bf16.mxu0 0
    %3305 = vmatpush1.bf16.msra.mxu0 0
    %3306 = vmatprep.subr.bf16.mxu0 %v3290
    %3307 = vmatpush1.bf16.msra.mxu0 %v3287
    %3308 = vmatprep.subr.bf16.mxu0 0
    %3309 = vmatpush2.bf16.msra.mxu0 0
    %3310 = vmatprep.subr.bf16.mxu0 0
    %3311 = vmatpush2.bf16.msra.mxu0 0
    %3312 = vmatprep.subr.bf16.mxu0 0
    %3313 = vmatpush2.bf16.msra.mxu0 0
    %3314 = vmatprep.subr.bf16.mxu0 0
    %3315 = vmatpush2.bf16.msra.mxu0 0
    %3316 = vmatprep.subr.bf16.mxu0 0
    %3317 = vmatpush2.bf16.msra.mxu0 0
    %3318 = vmatprep.subr.bf16.mxu0 0
    %3319 = vmatpush2.bf16.msra.mxu0 0
    %3320 = vmatprep.subr.bf16.mxu0 0
    %3321 = vmatpush2.bf16.msra.mxu0 0
    %3322 = vmatprep.subr.bf16.mxu0 0
    %3323 = vmatpush2.bf16.msra.mxu0 0
    %3324 = vmatprep.mubr.bf16.mxu0 0
    %3325 = vmatmul.mubr.bf16.gmra.mxu0 %v3284
    %v3326 = vpop.f32.mrf.mxu0
    %v3327 = vadd.f32 0.0, %v3326
    %v3328 = vpop.f32.mrf.mxu0
    %v3329 = vadd.f32 0.0, %v3328
    %v3330 = vpop.f32.mrf.mxu0
    %v3331 = vadd.f32 0.0, %v3330
    %v3332 = vpop.f32.mrf.mxu0
    %v3333 = vadd.f32 0.0, %v3332
    %3334 = vdwg.mxu0
    %v3335 = vadd.f32 %v3268, %v3327
    %v3336 = vadd.f32 %v3269, %v3329
    %v3337 = vadd.f32 %v3270, %v3331
    %v3338 = vadd.f32 %v3271, %v3333
    %v3341 = vunpack.c.l.b16 %v212
    %v3342 = vunpack.c.l.b16 %v213
    %v3343 = vpack.c.b16 %v3342, %v3341
    %3344 = vrot.lane.b32.xlu0 %v2279, 85
    %v3345 = vpop.permute.xlu0 %3344
    %3346 = vrot.lane.b32.xlu0 %v2280, 85
    %v3347 = vpop.permute.xlu0 %3346
    %vm3348 = vcmask 695296
    %v3349 = vsel %vm3348, %v3345, %v3347
    %v3351 = vsel %vm2293, %v3343, 0
    %v3354 = vsel %vm2297, %v3349, 0
    %v3357 = vsel %vm2297, %v3347, 0
    %3359 = vmatprep.subr.bf16.mxu0 0
    %3360 = vmatpush1.bf16.msra.mxu0 0
    %3361 = vmatprep.subr.bf16.mxu0 0
    %3362 = vmatpush1.bf16.msra.mxu0 0
    %3363 = vmatprep.subr.bf16.mxu0 0
    %3364 = vmatpush1.bf16.msra.mxu0 0
    %3365 = vmatprep.subr.bf16.mxu0 0
    %3366 = vmatpush1.bf16.msra.mxu0 0
    %3367 = vmatprep.subr.bf16.mxu0 0
    %3368 = vmatpush1.bf16.msra.mxu0 0
    %3369 = vmatprep.subr.bf16.mxu0 0
    %3370 = vmatpush1.bf16.msra.mxu0 0
    %3371 = vmatprep.subr.bf16.mxu0 0
    %3372 = vmatpush1.bf16.msra.mxu0 0
    %3373 = vmatprep.subr.bf16.mxu0 %v3357
    %3374 = vmatpush1.bf16.msra.mxu0 %v3354
    %3375 = vmatprep.subr.bf16.mxu0 0
    %3376 = vmatpush2.bf16.msra.mxu0 0
    %3377 = vmatprep.subr.bf16.mxu0 0
    %3378 = vmatpush2.bf16.msra.mxu0 0
    %3379 = vmatprep.subr.bf16.mxu0 0
    %3380 = vmatpush2.bf16.msra.mxu0 0
    %3381 = vmatprep.subr.bf16.mxu0 0
    %3382 = vmatpush2.bf16.msra.mxu0 0
    %3383 = vmatprep.subr.bf16.mxu0 0
    %3384 = vmatpush2.bf16.msra.mxu0 0
    %3385 = vmatprep.subr.bf16.mxu0 0
    %3386 = vmatpush2.bf16.msra.mxu0 0
    %3387 = vmatprep.subr.bf16.mxu0 0
    %3388 = vmatpush2.bf16.msra.mxu0 0
    %3389 = vmatprep.subr.bf16.mxu0 0
    %3390 = vmatpush2.bf16.msra.mxu0 0
    %3391 = vmatprep.mubr.bf16.mxu0 0
    %3392 = vmatmul.mubr.bf16.gmra.mxu0 %v3351
    %v3393 = vpop.f32.mrf.mxu0
    %v3394 = vadd.f32 0.0, %v3393
    %v3395 = vpop.f32.mrf.mxu0
    %v3396 = vadd.f32 0.0, %v3395
    %v3397 = vpop.f32.mrf.mxu0
    %v3398 = vadd.f32 0.0, %v3397
    %v3399 = vpop.f32.mrf.mxu0
    %v3400 = vadd.f32 0.0, %v3399
    %3401 = vdwg.mxu0
    %v3402 = vadd.f32 %v3335, %v3394
    %v3403 = vadd.f32 %v3336, %v3396
    %v3404 = vadd.f32 %v3337, %v3398
    %v3405 = vadd.f32 %v3338, %v3400
    %v3408 = vunpack.c.l.b16 %v215
    %v3409 = vunpack.c.l.b16 %v216
    %v3410 = vpack.c.b16 %v3409, %v3408
    %3411 = vrot.lane.b32.xlu0 %v2279, 84
    %v3412 = vpop.permute.xlu0 %3411
    %3413 = vrot.lane.b32.xlu0 %v2280, 84
    %v3414 = vpop.permute.xlu0 %3413
    %vm3415 = vcmask 687104
    %v3416 = vsel %vm3415, %v3412, %v3414
    %v3418 = vsel %vm2293, %v3410, 0
    %v3421 = vsel %vm2297, %v3416, 0
    %v3424 = vsel %vm2297, %v3414, 0
    %3426 = vmatprep.subr.bf16.mxu0 0
    %3427 = vmatpush1.bf16.msra.mxu0 0
    %3428 = vmatprep.subr.bf16.mxu0 0
    %3429 = vmatpush1.bf16.msra.mxu0 0
    %3430 = vmatprep.subr.bf16.mxu0 0
    %3431 = vmatpush1.bf16.msra.mxu0 0
    %3432 = vmatprep.subr.bf16.mxu0 0
    %3433 = vmatpush1.bf16.msra.mxu0 0
    %3434 = vmatprep.subr.bf16.mxu0 0
    %3435 = vmatpush1.bf16.msra.mxu0 0
    %3436 = vmatprep.subr.bf16.mxu0 0
    %3437 = vmatpush1.bf16.msra.mxu0 0
    %3438 = vmatprep.subr.bf16.mxu0 0
    %3439 = vmatpush1.bf16.msra.mxu0 0
    %3440 = vmatprep.subr.bf16.mxu0 %v3424
    %3441 = vmatpush1.bf16.msra.mxu0 %v3421
    %3442 = vmatprep.subr.bf16.mxu0 0
    %3443 = vmatpush2.bf16.msra.mxu0 0
    %3444 = vmatprep.subr.bf16.mxu0 0
    %3445 = vmatpush2.bf16.msra.mxu0 0
    %3446 = vmatprep.subr.bf16.mxu0 0
    %3447 = vmatpush2.bf16.msra.mxu0 0
    %3448 = vmatprep.subr.bf16.mxu0 0
    %3449 = vmatpush2.bf16.msra.mxu0 0
    %3450 = vmatprep.subr.bf16.mxu0 0
    %3451 = vmatpush2.bf16.msra.mxu0 0
    %3452 = vmatprep.subr.bf16.mxu0 0
    %3453 = vmatpush2.bf16.msra.mxu0 0
    %3454 = vmatprep.subr.bf16.mxu0 0
    %3455 = vmatpush2.bf16.msra.mxu0 0
    %3456 = vmatprep.subr.bf16.mxu0 0
    %3457 = vmatpush2.bf16.msra.mxu0 0
    %3458 = vmatprep.mubr.bf16.mxu0 0
    %3459 = vmatmul.mubr.bf16.gmra.mxu0 %v3418
    %v3460 = vpop.f32.mrf.mxu0
    %v3461 = vadd.f32 0.0, %v3460
    %v3462 = vpop.f32.mrf.mxu0
    %v3463 = vadd.f32 0.0, %v3462
    %v3464 = vpop.f32.mrf.mxu0
    %v3465 = vadd.f32 0.0, %v3464
    %v3466 = vpop.f32.mrf.mxu0
    %v3467 = vadd.f32 0.0, %v3466
    %3468 = vdwg.mxu0
    %v3469 = vadd.f32 %v3402, %v3461
    %v3470 = vadd.f32 %v3403, %v3463
    %v3471 = vadd.f32 %v3404, %v3465
    %v3472 = vadd.f32 %v3405, %v3467
    %v3475 = vunpack.c.l.b16 %v218
    %v3476 = vunpack.c.l.b16 %v219
    %v3477 = vpack.c.b16 %v3476, %v3475
    %3478 = vrot.lane.b32.xlu0 %v2279, 83
    %v3479 = vpop.permute.xlu0 %3478
    %3480 = vrot.lane.b32.xlu0 %v2280, 83
    %v3481 = vpop.permute.xlu0 %3480
    %vm3482 = vcmask 678912
    %v3483 = vsel %vm3482, %v3479, %v3481
    %v3485 = vsel %vm2293, %v3477, 0
    %v3488 = vsel %vm2297, %v3483, 0
    %v3491 = vsel %vm2297, %v3481, 0
    %3493 = vmatprep.subr.bf16.mxu0 0
    %3494 = vmatpush1.bf16.msra.mxu0 0
    %3495 = vmatprep.subr.bf16.mxu0 0
    %3496 = vmatpush1.bf16.msra.mxu0 0
    %3497 = vmatprep.subr.bf16.mxu0 0
    %3498 = vmatpush1.bf16.msra.mxu0 0
    %3499 = vmatprep.subr.bf16.mxu0 0
    %3500 = vmatpush1.bf16.msra.mxu0 0
    %3501 = vmatprep.subr.bf16.mxu0 0
    %3502 = vmatpush1.bf16.msra.mxu0 0
    %3503 = vmatprep.subr.bf16.mxu0 0
    %3504 = vmatpush1.bf16.msra.mxu0 0
    %3505 = vmatprep.subr.bf16.mxu0 0
    %3506 = vmatpush1.bf16.msra.mxu0 0
    %3507 = vmatprep.subr.bf16.mxu0 %v3491
    %3508 = vmatpush1.bf16.msra.mxu0 %v3488
    %3509 = vmatprep.subr.bf16.mxu0 0
    %3510 = vmatpush2.bf16.msra.mxu0 0
    %3511 = vmatprep.subr.bf16.mxu0 0
    %3512 = vmatpush2.bf16.msra.mxu0 0
    %3513 = vmatprep.subr.bf16.mxu0 0
    %3514 = vmatpush2.bf16.msra.mxu0 0
    %3515 = vmatprep.subr.bf16.mxu0 0
    %3516 = vmatpush2.bf16.msra.mxu0 0
    %3517 = vmatprep.subr.bf16.mxu0 0
    %3518 = vmatpush2.bf16.msra.mxu0 0
    %3519 = vmatprep.subr.bf16.mxu0 0
    %3520 = vmatpush2.bf16.msra.mxu0 0
    %3521 = vmatprep.subr.bf16.mxu0 0
    %3522 = vmatpush2.bf16.msra.mxu0 0
    %3523 = vmatprep.subr.bf16.mxu0 0
    %3524 = vmatpush2.bf16.msra.mxu0 0
    %3525 = vmatprep.mubr.bf16.mxu0 0
    %3526 = vmatmul.mubr.bf16.gmra.mxu0 %v3485
    %v3527 = vpop.f32.mrf.mxu0
    %v3528 = vadd.f32 0.0, %v3527
    %v3529 = vpop.f32.mrf.mxu0
    %v3530 = vadd.f32 0.0, %v3529
    %v3531 = vpop.f32.mrf.mxu0
    %v3532 = vadd.f32 0.0, %v3531
    %v3533 = vpop.f32.mrf.mxu0
    %v3534 = vadd.f32 0.0, %v3533
    %3535 = vdwg.mxu0
    %v3536 = vadd.f32 %v3469, %v3528
    %v3537 = vadd.f32 %v3470, %v3530
    %v3538 = vadd.f32 %v3471, %v3532
    %v3539 = vadd.f32 %v3472, %v3534
    %v3542 = vunpack.c.l.b16 %v221
    %v3543 = vunpack.c.l.b16 %v222
    %v3544 = vpack.c.b16 %v3543, %v3542
    %3545 = vrot.lane.b32.xlu0 %v2279, 82
    %v3546 = vpop.permute.xlu0 %3545
    %3547 = vrot.lane.b32.xlu0 %v2280, 82
    %v3548 = vpop.permute.xlu0 %3547
    %vm3549 = vcmask 670720
    %v3550 = vsel %vm3549, %v3546, %v3548
    %v3552 = vsel %vm2293, %v3544, 0
    %v3555 = vsel %vm2297, %v3550, 0
    %v3558 = vsel %vm2297, %v3548, 0
    %3560 = vmatprep.subr.bf16.mxu0 0
    %3561 = vmatpush1.bf16.msra.mxu0 0
    %3562 = vmatprep.subr.bf16.mxu0 0
    %3563 = vmatpush1.bf16.msra.mxu0 0
    %3564 = vmatprep.subr.bf16.mxu0 0
    %3565 = vmatpush1.bf16.msra.mxu0 0
    %3566 = vmatprep.subr.bf16.mxu0 0
    %3567 = vmatpush1.bf16.msra.mxu0 0
    %3568 = vmatprep.subr.bf16.mxu0 0
    %3569 = vmatpush1.bf16.msra.mxu0 0
    %3570 = vmatprep.subr.bf16.mxu0 0
    %3571 = vmatpush1.bf16.msra.mxu0 0
    %3572 = vmatprep.subr.bf16.mxu0 0
    %3573 = vmatpush1.bf16.msra.mxu0 0
    %3574 = vmatprep.subr.bf16.mxu0 %v3558
    %3575 = vmatpush1.bf16.msra.mxu0 %v3555
    %3576 = vmatprep.subr.bf16.mxu0 0
    %3577 = vmatpush2.bf16.msra.mxu0 0
    %3578 = vmatprep.subr.bf16.mxu0 0
    %3579 = vmatpush2.bf16.msra.mxu0 0
    %3580 = vmatprep.subr.bf16.mxu0 0
    %3581 = vmatpush2.bf16.msra.mxu0 0
    %3582 = vmatprep.subr.bf16.mxu0 0
    %3583 = vmatpush2.bf16.msra.mxu0 0
    %3584 = vmatprep.subr.bf16.mxu0 0
    %3585 = vmatpush2.bf16.msra.mxu0 0
    %3586 = vmatprep.subr.bf16.mxu0 0
    %3587 = vmatpush2.bf16.msra.mxu0 0
    %3588 = vmatprep.subr.bf16.mxu0 0
    %3589 = vmatpush2.bf16.msra.mxu0 0
    %3590 = vmatprep.subr.bf16.mxu0 0
    %3591 = vmatpush2.bf16.msra.mxu0 0
    %3592 = vmatprep.mubr.bf16.mxu0 0
    %3593 = vmatmul.mubr.bf16.gmra.mxu0 %v3552
    %v3594 = vpop.f32.mrf.mxu0
    %v3595 = vadd.f32 0.0, %v3594
    %v3596 = vpop.f32.mrf.mxu0
    %v3597 = vadd.f32 0.0, %v3596
    %v3598 = vpop.f32.mrf.mxu0
    %v3599 = vadd.f32 0.0, %v3598
    %v3600 = vpop.f32.mrf.mxu0
    %v3601 = vadd.f32 0.0, %v3600
    %3602 = vdwg.mxu0
    %v3603 = vadd.f32 %v3536, %v3595
    %v3604 = vadd.f32 %v3537, %v3597
    %v3605 = vadd.f32 %v3538, %v3599
    %v3606 = vadd.f32 %v3539, %v3601
    %v3609 = vunpack.c.l.b16 %v224
    %v3610 = vunpack.c.l.b16 %v225
    %v3611 = vpack.c.b16 %v3610, %v3609
    %3612 = vrot.lane.b32.xlu0 %v2279, 72
    %v3613 = vpop.permute.xlu0 %3612
    %3614 = vrot.lane.b32.xlu0 %v2280, 72
    %v3615 = vpop.permute.xlu0 %3614
    %vm3616 = vcmask 588800
    %v3617 = vsel %vm3616, %v3613, %v3615
    %v3619 = vsel %vm2293, %v3611, 0
    %v3622 = vsel %vm2297, %v3617, 0
    %v3625 = vsel %vm2297, %v3615, 0
    %3627 = vmatprep.subr.bf16.mxu0 0
    %3628 = vmatpush1.bf16.msra.mxu0 0
    %3629 = vmatprep.subr.bf16.mxu0 0
    %3630 = vmatpush1.bf16.msra.mxu0 0
    %3631 = vmatprep.subr.bf16.mxu0 0
    %3632 = vmatpush1.bf16.msra.mxu0 0
    %3633 = vmatprep.subr.bf16.mxu0 0
    %3634 = vmatpush1.bf16.msra.mxu0 0
    %3635 = vmatprep.subr.bf16.mxu0 0
    %3636 = vmatpush1.bf16.msra.mxu0 0
    %3637 = vmatprep.subr.bf16.mxu0 0
    %3638 = vmatpush1.bf16.msra.mxu0 0
    %3639 = vmatprep.subr.bf16.mxu0 0
    %3640 = vmatpush1.bf16.msra.mxu0 0
    %3641 = vmatprep.subr.bf16.mxu0 %v3625
    %3642 = vmatpush1.bf16.msra.mxu0 %v3622
    %3643 = vmatprep.subr.bf16.mxu0 0
    %3644 = vmatpush2.bf16.msra.mxu0 0
    %3645 = vmatprep.subr.bf16.mxu0 0
    %3646 = vmatpush2.bf16.msra.mxu0 0
    %3647 = vmatprep.subr.bf16.mxu0 0
    %3648 = vmatpush2.bf16.msra.mxu0 0
    %3649 = vmatprep.subr.bf16.mxu0 0
    %3650 = vmatpush2.bf16.msra.mxu0 0
    %3651 = vmatprep.subr.bf16.mxu0 0
    %3652 = vmatpush2.bf16.msra.mxu0 0
    %3653 = vmatprep.subr.bf16.mxu0 0
    %3654 = vmatpush2.bf16.msra.mxu0 0
    %3655 = vmatprep.subr.bf16.mxu0 0
    %3656 = vmatpush2.bf16.msra.mxu0 0
    %3657 = vmatprep.subr.bf16.mxu0 0
    %3658 = vmatpush2.bf16.msra.mxu0 0
    %3659 = vmatprep.mubr.bf16.mxu0 0
    %3660 = vmatmul.mubr.bf16.gmra.mxu0 %v3619
    %v3661 = vpop.f32.mrf.mxu0
    %v3662 = vadd.f32 0.0, %v3661
    %v3663 = vpop.f32.mrf.mxu0
    %v3664 = vadd.f32 0.0, %v3663
    %v3665 = vpop.f32.mrf.mxu0
    %v3666 = vadd.f32 0.0, %v3665
    %v3667 = vpop.f32.mrf.mxu0
    %v3668 = vadd.f32 0.0, %v3667
    %3669 = vdwg.mxu0
    %v3670 = vadd.f32 %v3603, %v3662
    %v3671 = vadd.f32 %v3604, %v3664
    %v3672 = vadd.f32 %v3605, %v3666
    %v3673 = vadd.f32 %v3606, %v3668
    %v3676 = vunpack.c.l.b16 %v227
    %v3677 = vunpack.c.l.b16 %v228
    %v3678 = vpack.c.b16 %v3677, %v3676
    %3679 = vrot.lane.b32.xlu0 %v2279, 71
    %v3680 = vpop.permute.xlu0 %3679
    %3681 = vrot.lane.b32.xlu0 %v2280, 71
    %v3682 = vpop.permute.xlu0 %3681
    %vm3683 = vcmask 580608
    %v3684 = vsel %vm3683, %v3680, %v3682
    %v3686 = vsel %vm2293, %v3678, 0
    %v3689 = vsel %vm2297, %v3684, 0
    %v3692 = vsel %vm2297, %v3682, 0
    %3694 = vmatprep.subr.bf16.mxu0 0
    %3695 = vmatpush1.bf16.msra.mxu0 0
    %3696 = vmatprep.subr.bf16.mxu0 0
    %3697 = vmatpush1.bf16.msra.mxu0 0
    %3698 = vmatprep.subr.bf16.mxu0 0
    %3699 = vmatpush1.bf16.msra.mxu0 0
    %3700 = vmatprep.subr.bf16.mxu0 0
    %3701 = vmatpush1.bf16.msra.mxu0 0
    %3702 = vmatprep.subr.bf16.mxu0 0
    %3703 = vmatpush1.bf16.msra.mxu0 0
    %3704 = vmatprep.subr.bf16.mxu0 0
    %3705 = vmatpush1.bf16.msra.mxu0 0
    %3706 = vmatprep.subr.bf16.mxu0 0
    %3707 = vmatpush1.bf16.msra.mxu0 0
    %3708 = vmatprep.subr.bf16.mxu0 %v3692
    %3709 = vmatpush1.bf16.msra.mxu0 %v3689
    %3710 = vmatprep.subr.bf16.mxu0 0
    %3711 = vmatpush2.bf16.msra.mxu0 0
    %3712 = vmatprep.subr.bf16.mxu0 0
    %3713 = vmatpush2.bf16.msra.mxu0 0
    %3714 = vmatprep.subr.bf16.mxu0 0
    %3715 = vmatpush2.bf16.msra.mxu0 0
    %3716 = vmatprep.subr.bf16.mxu0 0
    %3717 = vmatpush2.bf16.msra.mxu0 0
    %3718 = vmatprep.subr.bf16.mxu0 0
    %3719 = vmatpush2.bf16.msra.mxu0 0
    %3720 = vmatprep.subr.bf16.mxu0 0
    %3721 = vmatpush2.bf16.msra.mxu0 0
    %3722 = vmatprep.subr.bf16.mxu0 0
    %3723 = vmatpush2.bf16.msra.mxu0 0
    %3724 = vmatprep.subr.bf16.mxu0 0
    %3725 = vmatpush2.bf16.msra.mxu0 0
    %3726 = vmatprep.mubr.bf16.mxu0 0
    %3727 = vmatmul.mubr.bf16.gmra.mxu0 %v3686
    %v3728 = vpop.f32.mrf.mxu0
    %v3729 = vadd.f32 0.0, %v3728
    %v3730 = vpop.f32.mrf.mxu0
    %v3731 = vadd.f32 0.0, %v3730
    %v3732 = vpop.f32.mrf.mxu0
    %v3733 = vadd.f32 0.0, %v3732
    %v3734 = vpop.f32.mrf.mxu0
    %v3735 = vadd.f32 0.0, %v3734
    %3736 = vdwg.mxu0
    %v3737 = vadd.f32 %v3670, %v3729
    %v3738 = vadd.f32 %v3671, %v3731
    %v3739 = vadd.f32 %v3672, %v3733
    %v3740 = vadd.f32 %v3673, %v3735
    %v3743 = vunpack.c.l.b16 %v230
    %v3744 = vunpack.c.l.b16 %v231
    %v3745 = vpack.c.b16 %v3744, %v3743
    %3746 = vrot.lane.b32.xlu0 %v2279, 70
    %v3747 = vpop.permute.xlu0 %3746
    %3748 = vrot.lane.b32.xlu0 %v2280, 70
    %v3749 = vpop.permute.xlu0 %3748
    %vm3750 = vcmask 572416
    %v3751 = vsel %vm3750, %v3747, %v3749
    %v3753 = vsel %vm2293, %v3745, 0
    %v3756 = vsel %vm2297, %v3751, 0
    %v3759 = vsel %vm2297, %v3749, 0
    %3761 = vmatprep.subr.bf16.mxu0 0
    %3762 = vmatpush1.bf16.msra.mxu0 0
    %3763 = vmatprep.subr.bf16.mxu0 0
    %3764 = vmatpush1.bf16.msra.mxu0 0
    %3765 = vmatprep.subr.bf16.mxu0 0
    %3766 = vmatpush1.bf16.msra.mxu0 0
    %3767 = vmatprep.subr.bf16.mxu0 0
    %3768 = vmatpush1.bf16.msra.mxu0 0
    %3769 = vmatprep.subr.bf16.mxu0 0
    %3770 = vmatpush1.bf16.msra.mxu0 0
    %3771 = vmatprep.subr.bf16.mxu0 0
    %3772 = vmatpush1.bf16.msra.mxu0 0
    %3773 = vmatprep.subr.bf16.mxu0 0
    %3774 = vmatpush1.bf16.msra.mxu0 0
    %3775 = vmatprep.subr.bf16.mxu0 %v3759
    %3776 = vmatpush1.bf16.msra.mxu0 %v3756
    %3777 = vmatprep.subr.bf16.mxu0 0
    %3778 = vmatpush2.bf16.msra.mxu0 0
    %3779 = vmatprep.subr.bf16.mxu0 0
    %3780 = vmatpush2.bf16.msra.mxu0 0
    %3781 = vmatprep.subr.bf16.mxu0 0
    %3782 = vmatpush2.bf16.msra.mxu0 0
    %3783 = vmatprep.subr.bf16.mxu0 0
    %3784 = vmatpush2.bf16.msra.mxu0 0
    %3785 = vmatprep.subr.bf16.mxu0 0
    %3786 = vmatpush2.bf16.msra.mxu0 0
    %3787 = vmatprep.subr.bf16.mxu0 0
    %3788 = vmatpush2.bf16.msra.mxu0 0
    %3789 = vmatprep.subr.bf16.mxu0 0
    %3790 = vmatpush2.bf16.msra.mxu0 0
    %3791 = vmatprep.subr.bf16.mxu0 0
    %3792 = vmatpush2.bf16.msra.mxu0 0
    %3793 = vmatprep.mubr.bf16.mxu0 0
    %3794 = vmatmul.mubr.bf16.gmra.mxu0 %v3753
    %v3795 = vpop.f32.mrf.mxu0
    %v3796 = vadd.f32 0.0, %v3795
    %v3797 = vpop.f32.mrf.mxu0
    %v3798 = vadd.f32 0.0, %v3797
    %v3799 = vpop.f32.mrf.mxu0
    %v3800 = vadd.f32 0.0, %v3799
    %v3801 = vpop.f32.mrf.mxu0
    %v3802 = vadd.f32 0.0, %v3801
    %3803 = vdwg.mxu0
    %v3804 = vadd.f32 %v3737, %v3796
    %v3805 = vadd.f32 %v3738, %v3798
    %v3806 = vadd.f32 %v3739, %v3800
    %v3807 = vadd.f32 %v3740, %v3802
    %v3810 = vunpack.c.l.b16 %v233
    %v3811 = vunpack.c.l.b16 %v234
    %v3812 = vpack.c.b16 %v3811, %v3810
    %3813 = vrot.lane.b32.xlu0 %v2279, 69
    %v3814 = vpop.permute.xlu0 %3813
    %3815 = vrot.lane.b32.xlu0 %v2280, 69
    %v3816 = vpop.permute.xlu0 %3815
    %vm3817 = vcmask 564224
    %v3818 = vsel %vm3817, %v3814, %v3816
    %v3820 = vsel %vm2293, %v3812, 0
    %v3823 = vsel %vm2297, %v3818, 0
    %v3826 = vsel %vm2297, %v3816, 0
    %3828 = vmatprep.subr.bf16.mxu0 0
    %3829 = vmatpush1.bf16.msra.mxu0 0
    %3830 = vmatprep.subr.bf16.mxu0 0
    %3831 = vmatpush1.bf16.msra.mxu0 0
    %3832 = vmatprep.subr.bf16.mxu0 0
    %3833 = vmatpush1.bf16.msra.mxu0 0
    %3834 = vmatprep.subr.bf16.mxu0 0
    %3835 = vmatpush1.bf16.msra.mxu0 0
    %3836 = vmatprep.subr.bf16.mxu0 0
    %3837 = vmatpush1.bf16.msra.mxu0 0
    %3838 = vmatprep.subr.bf16.mxu0 0
    %3839 = vmatpush1.bf16.msra.mxu0 0
    %3840 = vmatprep.subr.bf16.mxu0 0
    %3841 = vmatpush1.bf16.msra.mxu0 0
    %3842 = vmatprep.subr.bf16.mxu0 %v3826
    %3843 = vmatpush1.bf16.msra.mxu0 %v3823
    %3844 = vmatprep.subr.bf16.mxu0 0
    %3845 = vmatpush2.bf16.msra.mxu0 0
    %3846 = vmatprep.subr.bf16.mxu0 0
    %3847 = vmatpush2.bf16.msra.mxu0 0
    %3848 = vmatprep.subr.bf16.mxu0 0
    %3849 = vmatpush2.bf16.msra.mxu0 0
    %3850 = vmatprep.subr.bf16.mxu0 0
    %3851 = vmatpush2.bf16.msra.mxu0 0
    %3852 = vmatprep.subr.bf16.mxu0 0
    %3853 = vmatpush2.bf16.msra.mxu0 0
    %3854 = vmatprep.subr.bf16.mxu0 0
    %3855 = vmatpush2.bf16.msra.mxu0 0
    %3856 = vmatprep.subr.bf16.mxu0 0
    %3857 = vmatpush2.bf16.msra.mxu0 0
    %3858 = vmatprep.subr.bf16.mxu0 0
    %3859 = vmatpush2.bf16.msra.mxu0 0
    %3860 = vmatprep.mubr.bf16.mxu0 0
    %3861 = vmatmul.mubr.bf16.gmra.mxu0 %v3820
    %v3862 = vpop.f32.mrf.mxu0
    %v3863 = vadd.f32 0.0, %v3862
    %v3864 = vpop.f32.mrf.mxu0
    %v3865 = vadd.f32 0.0, %v3864
    %v3866 = vpop.f32.mrf.mxu0
    %v3867 = vadd.f32 0.0, %v3866
    %v3868 = vpop.f32.mrf.mxu0
    %v3869 = vadd.f32 0.0, %v3868
    %3870 = vdwg.mxu0
    %v3871 = vadd.f32 %v3804, %v3863
    %v3872 = vadd.f32 %v3805, %v3865
    %v3873 = vadd.f32 %v3806, %v3867
    %v3874 = vadd.f32 %v3807, %v3869
    %v3877 = vunpack.c.l.b16 %v236
    %v3878 = vunpack.c.l.b16 %v237
    %v3879 = vpack.c.b16 %v3878, %v3877
    %3880 = vrot.lane.b32.xlu0 %v2279, 68
    %v3881 = vpop.permute.xlu0 %3880
    %3882 = vrot.lane.b32.xlu0 %v2280, 68
    %v3883 = vpop.permute.xlu0 %3882
    %vm3884 = vcmask 556032
    %v3885 = vsel %vm3884, %v3881, %v3883
    %v3887 = vsel %vm2293, %v3879, 0
    %v3890 = vsel %vm2297, %v3885, 0
    %v3893 = vsel %vm2297, %v3883, 0
    %3895 = vmatprep.subr.bf16.mxu0 0
    %3896 = vmatpush1.bf16.msra.mxu0 0
    %3897 = vmatprep.subr.bf16.mxu0 0
    %3898 = vmatpush1.bf16.msra.mxu0 0
    %3899 = vmatprep.subr.bf16.mxu0 0
    %3900 = vmatpush1.bf16.msra.mxu0 0
    %3901 = vmatprep.subr.bf16.mxu0 0
    %3902 = vmatpush1.bf16.msra.mxu0 0
    %3903 = vmatprep.subr.bf16.mxu0 0
    %3904 = vmatpush1.bf16.msra.mxu0 0
    %3905 = vmatprep.subr.bf16.mxu0 0
    %3906 = vmatpush1.bf16.msra.mxu0 0
    %3907 = vmatprep.subr.bf16.mxu0 0
    %3908 = vmatpush1.bf16.msra.mxu0 0
    %3909 = vmatprep.subr.bf16.mxu0 %v3893
    %3910 = vmatpush1.bf16.msra.mxu0 %v3890
    %3911 = vmatprep.subr.bf16.mxu0 0
    %3912 = vmatpush2.bf16.msra.mxu0 0
    %3913 = vmatprep.subr.bf16.mxu0 0
    %3914 = vmatpush2.bf16.msra.mxu0 0
    %3915 = vmatprep.subr.bf16.mxu0 0
    %3916 = vmatpush2.bf16.msra.mxu0 0
    %3917 = vmatprep.subr.bf16.mxu0 0
    %3918 = vmatpush2.bf16.msra.mxu0 0
    %3919 = vmatprep.subr.bf16.mxu0 0
    %3920 = vmatpush2.bf16.msra.mxu0 0
    %3921 = vmatprep.subr.bf16.mxu0 0
    %3922 = vmatpush2.bf16.msra.mxu0 0
    %3923 = vmatprep.subr.bf16.mxu0 0
    %3924 = vmatpush2.bf16.msra.mxu0 0
    %3925 = vmatprep.subr.bf16.mxu0 0
    %3926 = vmatpush2.bf16.msra.mxu0 0
    %3927 = vmatprep.mubr.bf16.mxu0 0
    %3928 = vmatmul.mubr.bf16.gmra.mxu0 %v3887
    %v3929 = vpop.f32.mrf.mxu0
    %v3930 = vadd.f32 0.0, %v3929
    %v3931 = vpop.f32.mrf.mxu0
    %v3932 = vadd.f32 0.0, %v3931
    %v3933 = vpop.f32.mrf.mxu0
    %v3934 = vadd.f32 0.0, %v3933
    %v3935 = vpop.f32.mrf.mxu0
    %v3936 = vadd.f32 0.0, %v3935
    %3937 = vdwg.mxu0
    %v3938 = vadd.f32 %v3871, %v3930
    %v3939 = vadd.f32 %v3872, %v3932
    %v3940 = vadd.f32 %v3873, %v3934
    %v3941 = vadd.f32 %v3874, %v3936
    %3943 = vset.pattern.permute.xlu0 0
    %3944 = vperm.xlu0 %3943, %v238
    %v3945 = vpop.permute.xlu0 %3944
    %3948 = vset.pattern.permute.xlu0 0
    %3949 = vperm.xlu0 %3948, %v239
    %v3950 = vpop.permute.xlu0 %3949
    %v3952 = vadd.f32 %v3938, %v3945
    %v3953 = vadd.f32 %v3939, %v3945
    %v3954 = vadd.f32 %v3940, %v3950
    %v3955 = vadd.f32 %v3941, %v3950
    %v3956 = vmax.f32 %v3952, 0.0
    %v3957 = vmax.f32 %v3953, 0.0
    %v3958 = vmax.f32 %v3954, 0.0
    %v3959 = vmax.f32 %v3955, 0.0
    %3962 = vrot.lane.b32.xlu0 %v3956, 127
    %v3963 = vpop.permute.xlu0 %3962
    %3964 = vrot.lane.b32.xlu0 %v3958, 127
    %v3965 = vpop.permute.xlu0 %3964
    %v3968 = vmax.f32 %v3956, %v3963
    %v3969 = vmax.f32 %v3958, %v3965
    %3972 = vrot.lane.b32.xlu0 %v3957, 127
    %v3973 = vpop.permute.xlu0 %3972
    %3974 = vrot.lane.b32.xlu0 %v3959, 127
    %v3975 = vpop.permute.xlu0 %3974
    %v3976 = vsel %vm1493, %v3963, %v3973
    %v3977 = vsel %vm1493, %v3965, %v3975
    %v3982 = vmax.f32 %v3956, %v3976
    %v3983 = vmax.f32 %v3957, %v3973
    %v3984 = vmax.f32 %v3958, %v3977
    %v3985 = vmax.f32 %v3959, %v3975
    %3990 = vrot.lane.b32.xlu0 %v3982, 114
    %v3991 = vpop.permute.xlu0 %3990
    %3992 = vrot.lane.b32.xlu0 %v3983, 114
    %v3993 = vpop.permute.xlu0 %3992
    %3994 = vrot.lane.b32.xlu0 %v3984, 114
    %v3995 = vpop.permute.xlu0 %3994
    %3996 = vrot.lane.b32.xlu0 %v3985, 114
    %v3997 = vpop.permute.xlu0 %3996
    %vm3998 = vcmask 932864
    %v3999 = vsel %vm3998, %v3991, %v3993
    %v4000 = vsel %vm3998, %v3995, %v3997
    %v4003 = vmax.f32 %v3968, %v3999
    %v4004 = vmax.f32 %v3969, %v4000
    %v4005 = vpack.c.bf16 %v4004, %v4003
    %v4022 = vunpack.c.l.b16 %v240
    %v4023 = vunpack.c.l.b16 %v241
    %v4024 = vunpack.c.l.b16 %v242
    %v4025 = vunpack.c.l.b16 %v243
    %v4026 = vunpack.c.l.b16 %v244
    %v4027 = vunpack.c.l.b16 %v245
    %v4028 = vunpack.c.l.b16 %v246
    %v4029 = vunpack.c.l.b16 %v247
    %v4030 = vunpack.c.l.b16 %v248
    %v4031 = vunpack.c.l.b16 %v249
    %v4032 = vunpack.c.l.b16 %v250
    %v4033 = vunpack.c.l.b16 %v251
    %v4034 = vunpack.c.l.b16 %v252
    %v4035 = vunpack.c.l.b16 %v253
    %v4036 = vunpack.c.l.b16 %v254
    %v4037 = vunpack.c.l.b16 %v255
    %v4038 = vpack.c.b16 %v4023, %v4022
    %v4039 = vpack.c.b16 %v4025, %v4024
    %v4040 = vpack.c.b16 %v4027, %v4026
    %v4041 = vpack.c.b16 %v4029, %v4028
    %v4042 = vpack.c.b16 %v4031, %v4030
    %v4043 = vpack.c.b16 %v4033, %v4032
    %v4044 = vpack.c.b16 %v4035, %v4034
    %v4045 = vpack.c.b16 %v4037, %v4036
    %vm4053 = vcmask 990208
    %v4055 = vsel %vm4053, %v4005, 0
    %vm4057 = vcmask 1043456
    %v4058 = vsel %vm4057, 4294967295, 65535
    %v4059 = vsel %vm2105, %v4058, 0
    %v4061 = vand.u32 %v4045, %v4059
    %4063 = vmatprep.subr.bf16.mxu0 0
    %4064 = vmatpush1.bf16.msra.mxu0 %v4061
    %4065 = vmatprep.subr.bf16.mxu0 0
    %4066 = vmatpush1.bf16.msra.mxu0 %v4044
    %4067 = vmatprep.subr.bf16.mxu0 0
    %4068 = vmatpush1.bf16.msra.mxu0 %v4043
    %4069 = vmatprep.subr.bf16.mxu0 0
    %4070 = vmatpush1.bf16.msra.mxu0 %v4042
    %4071 = vmatprep.subr.bf16.mxu0 0
    %4072 = vmatpush1.bf16.msra.mxu0 %v4041
    %4073 = vmatprep.subr.bf16.mxu0 0
    %4074 = vmatpush1.bf16.msra.mxu0 %v4040
    %4075 = vmatprep.subr.bf16.mxu0 0
    %4076 = vmatpush1.bf16.msra.mxu0 %v4039
    %4077 = vmatprep.subr.bf16.mxu0 0
    %4078 = vmatpush1.bf16.msra.mxu0 %v4038
    %4079 = vmatprep.subr.bf16.mxu0 0
    %4080 = vmatpush2.bf16.msra.mxu0 0
    %4081 = vmatprep.subr.bf16.mxu0 0
    %4082 = vmatpush2.bf16.msra.mxu0 0
    %4083 = vmatprep.subr.bf16.mxu0 0
    %4084 = vmatpush2.bf16.msra.mxu0 0
    %4085 = vmatprep.subr.bf16.mxu0 0
    %4086 = vmatpush2.bf16.msra.mxu0 0
    %4087 = vmatprep.subr.bf16.mxu0 0
    %4088 = vmatpush2.bf16.msra.mxu0 0
    %4089 = vmatprep.subr.bf16.mxu0 0
    %4090 = vmatpush2.bf16.msra.mxu0 0
    %4091 = vmatprep.subr.bf16.mxu0 0
    %4092 = vmatpush2.bf16.msra.mxu0 0
    %4093 = vmatprep.subr.bf16.mxu0 0
    %4094 = vmatpush2.bf16.msra.mxu0 0
    %4095 = vmatprep.mubr.bf16.mxu0 0
    %4096 = vmatmul.mubr.bf16.gmra.mxu0 %v4055
    %v4097 = vpop.f32.mrf.mxu0
    %v4098 = vadd.f32 0.0, %v4097
    %v4099 = vpop.f32.mrf.mxu0
    %v4100 = vpop.f32.mrf.mxu0
    %v4101 = vadd.f32 0.0, %v4100
    %v4102 = vpop.f32.mrf.mxu0
    %4103 = vdwg.mxu0
    %v4104 = vpack.c.bf16 %v4098, %v4098
    %v4106 = vshrl.u32 %v4104, 16
    %v4112 = vunpack.c.l.b16 %v261
    %v4113 = vunpack.c.l.b16 %v262
    %v4114 = vunpack.c.l.b16 %v263
    %v4115 = vunpack.c.l.b16 %v264
    %v4116 = vpack.c.b16 %v4113, %v4112
    %v4117 = vpack.c.b16 %v4115, %v4114
    %vm4119 = vcmask 203776
    %v4121 = vsel %vm4119, %v4106, 0
    %v4124 = vand.u32 %v4117, %v4059
    %4126 = vmatprep.subr.bf16.mxu0 0
    %4127 = vmatpush1.bf16.msra.mxu0 0
    %4128 = vmatprep.subr.bf16.mxu0 0
    %4129 = vmatpush1.bf16.msra.mxu0 0
    %4130 = vmatprep.subr.bf16.mxu0 0
    %4131 = vmatpush1.bf16.msra.mxu0 0
    %4132 = vmatprep.subr.bf16.mxu0 0
    %4133 = vmatpush1.bf16.msra.mxu0 0
    %4134 = vmatprep.subr.bf16.mxu0 0
    %4135 = vmatpush1.bf16.msra.mxu0 0
    %4136 = vmatprep.subr.bf16.mxu0 0
    %4137 = vmatpush1.bf16.msra.mxu0 0
    %4138 = vmatprep.subr.bf16.mxu0 0
    %4139 = vmatpush1.bf16.msra.mxu0 %v4124
    %4140 = vmatprep.subr.bf16.mxu0 0
    %4141 = vmatpush1.bf16.msra.mxu0 %v4116
    %4142 = vmatprep.subr.bf16.mxu0 0
    %4143 = vmatpush2.bf16.msra.mxu0 0
    %4144 = vmatprep.subr.bf16.mxu0 0
    %4145 = vmatpush2.bf16.msra.mxu0 0
    %4146 = vmatprep.subr.bf16.mxu0 0
    %4147 = vmatpush2.bf16.msra.mxu0 0
    %4148 = vmatprep.subr.bf16.mxu0 0
    %4149 = vmatpush2.bf16.msra.mxu0 0
    %4150 = vmatprep.subr.bf16.mxu0 0
    %4151 = vmatpush2.bf16.msra.mxu0 0
    %4152 = vmatprep.subr.bf16.mxu0 0
    %4153 = vmatpush2.bf16.msra.mxu0 0
    %4154 = vmatprep.subr.bf16.mxu0 0
    %4155 = vmatpush2.bf16.msra.mxu0 0
    %4156 = vmatprep.subr.bf16.mxu0 0
    %4157 = vmatpush2.bf16.msra.mxu0 0
    %4158 = vmatprep.mubr.bf16.mxu0 0
    %4159 = vmatmul.mubr.bf16.gmra.mxu0 %v4121
    %v4160 = vpop.f32.mrf.mxu0
    %v4161 = vadd.f32 0.0, %v4160
    %v4162 = vpop.f32.mrf.mxu0
    %v4163 = vpop.f32.mrf.mxu0
    %v4164 = vpop.f32.mrf.mxu0
    %4165 = vdwg.mxu0
    %v4170 = vunpack.c.l.b16 %v256
    %v4171 = vunpack.c.l.b16 %v257
    %v4172 = vunpack.c.l.b16 %v258
    %v4173 = vunpack.c.l.b16 %v259
    %v4174 = vpack.c.b16 %v4171, %v4170
    %v4175 = vpack.c.b16 %v4173, %v4172
    %v4177 = vsel %vm4119, %v4104, 0
    %v4180 = vand.u32 %v4175, %v4059
    %4182 = vmatprep.subr.bf16.mxu0 0
    %4183 = vmatpush1.bf16.msra.mxu0 0
    %4184 = vmatprep.subr.bf16.mxu0 0
    %4185 = vmatpush1.bf16.msra.mxu0 0
    %4186 = vmatprep.subr.bf16.mxu0 0
    %4187 = vmatpush1.bf16.msra.mxu0 0
    %4188 = vmatprep.subr.bf16.mxu0 0
    %4189 = vmatpush1.bf16.msra.mxu0 0
    %4190 = vmatprep.subr.bf16.mxu0 0
    %4191 = vmatpush1.bf16.msra.mxu0 0
    %4192 = vmatprep.subr.bf16.mxu0 0
    %4193 = vmatpush1.bf16.msra.mxu0 0
    %4194 = vmatprep.subr.bf16.mxu0 0
    %4195 = vmatpush1.bf16.msra.mxu0 %v4180
    %4196 = vmatprep.subr.bf16.mxu0 0
    %4197 = vmatpush1.bf16.msra.mxu0 %v4174
    %4198 = vmatprep.subr.bf16.mxu0 0
    %4199 = vmatpush2.bf16.msra.mxu0 0
    %4200 = vmatprep.subr.bf16.mxu0 0
    %4201 = vmatpush2.bf16.msra.mxu0 0
    %4202 = vmatprep.subr.bf16.mxu0 0
    %4203 = vmatpush2.bf16.msra.mxu0 0
    %4204 = vmatprep.subr.bf16.mxu0 0
    %4205 = vmatpush2.bf16.msra.mxu0 0
    %4206 = vmatprep.subr.bf16.mxu0 0
    %4207 = vmatpush2.bf16.msra.mxu0 0
    %4208 = vmatprep.subr.bf16.mxu0 0
    %4209 = vmatpush2.bf16.msra.mxu0 0
    %4210 = vmatprep.subr.bf16.mxu0 0
    %4211 = vmatpush2.bf16.msra.mxu0 0
    %4212 = vmatprep.subr.bf16.mxu0 0
    %4213 = vmatpush2.bf16.msra.mxu0 0
    %4214 = vmatprep.mubr.bf16.mxu0 0
    %4215 = vmatmul.mubr.bf16.gmra.mxu0 %v4177
    %v4216 = vpop.f32.mrf.mxu0
    %v4217 = vadd.f32 %v4161, %v4216
    %v4218 = vpop.f32.mrf.mxu0
    %v4219 = vpop.f32.mrf.mxu0
    %v4220 = vpop.f32.mrf.mxu0
    %4221 = vdwg.mxu0
    %v4223 = vrot.slane %v4104, 1
    %v4228 = vunpack.c.l.b16 %v266
    %v4229 = vunpack.c.l.b16 %v267
    %v4230 = vunpack.c.l.b16 %v268
    %v4231 = vunpack.c.l.b16 %v269
    %v4232 = vpack.c.b16 %v4229, %v4228
    %v4233 = vpack.c.b16 %v4231, %v4230
    %v4236 = vsel %vm4119, %v4223, 0
    %v4239 = vand.u32 %v4233, %v4059
    %4241 = vmatprep.subr.bf16.mxu0 0
    %4242 = vmatpush1.bf16.msra.mxu0 0
    %4243 = vmatprep.subr.bf16.mxu0 0
    %4244 = vmatpush1.bf16.msra.mxu0 0
    %4245 = vmatprep.subr.bf16.mxu0 0
    %4246 = vmatpush1.bf16.msra.mxu0 0
    %4247 = vmatprep.subr.bf16.mxu0 0
    %4248 = vmatpush1.bf16.msra.mxu0 0
    %4249 = vmatprep.subr.bf16.mxu0 0
    %4250 = vmatpush1.bf16.msra.mxu0 0
    %4251 = vmatprep.subr.bf16.mxu0 0
    %4252 = vmatpush1.bf16.msra.mxu0 0
    %4253 = vmatprep.subr.bf16.mxu0 0
    %4254 = vmatpush1.bf16.msra.mxu0 %v4239
    %4255 = vmatprep.subr.bf16.mxu0 0
    %4256 = vmatpush1.bf16.msra.mxu0 %v4232
    %4257 = vmatprep.subr.bf16.mxu0 0
    %4258 = vmatpush2.bf16.msra.mxu0 0
    %4259 = vmatprep.subr.bf16.mxu0 0
    %4260 = vmatpush2.bf16.msra.mxu0 0
    %4261 = vmatprep.subr.bf16.mxu0 0
    %4262 = vmatpush2.bf16.msra.mxu0 0
    %4263 = vmatprep.subr.bf16.mxu0 0
    %4264 = vmatpush2.bf16.msra.mxu0 0
    %4265 = vmatprep.subr.bf16.mxu0 0
    %4266 = vmatpush2.bf16.msra.mxu0 0
    %4267 = vmatprep.subr.bf16.mxu0 0
    %4268 = vmatpush2.bf16.msra.mxu0 0
    %4269 = vmatprep.subr.bf16.mxu0 0
    %4270 = vmatpush2.bf16.msra.mxu0 0
    %4271 = vmatprep.subr.bf16.mxu0 0
    %4272 = vmatpush2.bf16.msra.mxu0 0
    %4273 = vmatprep.mubr.bf16.mxu0 0
    %4274 = vmatmul.mubr.bf16.gmra.mxu0 %v4236
    %v4275 = vpop.f32.mrf.mxu0
    %v4276 = vadd.f32 0.0, %v4275
    %v4277 = vpop.f32.mrf.mxu0
    %v4278 = vpop.f32.mrf.mxu0
    %v4279 = vpop.f32.mrf.mxu0
    %4280 = vdwg.mxu0
    %v4281 = vadd.f32 %v4217, %v4276
    %v4282 = vrot.slane %v4106, 1
    %v4287 = vunpack.c.l.b16 %v271
    %v4288 = vunpack.c.l.b16 %v272
    %v4289 = vunpack.c.l.b16 %v273
    %v4290 = vunpack.c.l.b16 %v274
    %v4291 = vpack.c.b16 %v4288, %v4287
    %v4292 = vpack.c.b16 %v4290, %v4289
    %v4295 = vsel %vm4119, %v4282, 0
    %v4298 = vand.u32 %v4292, %v4059
    %4300 = vmatprep.subr.bf16.mxu0 0
    %4301 = vmatpush1.bf16.msra.mxu0 0
    %4302 = vmatprep.subr.bf16.mxu0 0
    %4303 = vmatpush1.bf16.msra.mxu0 0
    %4304 = vmatprep.subr.bf16.mxu0 0
    %4305 = vmatpush1.bf16.msra.mxu0 0
    %4306 = vmatprep.subr.bf16.mxu0 0
    %4307 = vmatpush1.bf16.msra.mxu0 0
    %4308 = vmatprep.subr.bf16.mxu0 0
    %4309 = vmatpush1.bf16.msra.mxu0 0
    %4310 = vmatprep.subr.bf16.mxu0 0
    %4311 = vmatpush1.bf16.msra.mxu0 0
    %4312 = vmatprep.subr.bf16.mxu0 0
    %4313 = vmatpush1.bf16.msra.mxu0 %v4298
    %4314 = vmatprep.subr.bf16.mxu0 0
    %4315 = vmatpush1.bf16.msra.mxu0 %v4291
    %4316 = vmatprep.subr.bf16.mxu0 0
    %4317 = vmatpush2.bf16.msra.mxu0 0
    %4318 = vmatprep.subr.bf16.mxu0 0
    %4319 = vmatpush2.bf16.msra.mxu0 0
    %4320 = vmatprep.subr.bf16.mxu0 0
    %4321 = vmatpush2.bf16.msra.mxu0 0
    %4322 = vmatprep.subr.bf16.mxu0 0
    %4323 = vmatpush2.bf16.msra.mxu0 0
    %4324 = vmatprep.subr.bf16.mxu0 0
    %4325 = vmatpush2.bf16.msra.mxu0 0
    %4326 = vmatprep.subr.bf16.mxu0 0
    %4327 = vmatpush2.bf16.msra.mxu0 0
    %4328 = vmatprep.subr.bf16.mxu0 0
    %4329 = vmatpush2.bf16.msra.mxu0 0
    %4330 = vmatprep.subr.bf16.mxu0 0
    %4331 = vmatpush2.bf16.msra.mxu0 0
    %4332 = vmatprep.mubr.bf16.mxu0 0
    %4333 = vmatmul.mubr.bf16.gmra.mxu0 %v4295
    %v4334 = vpop.f32.mrf.mxu0
    %v4335 = vadd.f32 0.0, %v4334
    %v4336 = vpop.f32.mrf.mxu0
    %v4337 = vpop.f32.mrf.mxu0
    %v4338 = vpop.f32.mrf.mxu0
    %4339 = vdwg.mxu0
    %v4340 = vadd.f32 %v4281, %v4335
    %v4341 = vrot.slane %v4104, 2
    %v4346 = vunpack.c.l.b16 %v276
    %v4347 = vunpack.c.l.b16 %v277
    %v4348 = vunpack.c.l.b16 %v278
    %v4349 = vunpack.c.l.b16 %v279
    %v4350 = vpack.c.b16 %v4347, %v4346
    %v4351 = vpack.c.b16 %v4349, %v4348
    %v4354 = vsel %vm4119, %v4341, 0
    %v4357 = vand.u32 %v4351, %v4059
    %4359 = vmatprep.subr.bf16.mxu0 0
    %4360 = vmatpush1.bf16.msra.mxu0 0
    %4361 = vmatprep.subr.bf16.mxu0 0
    %4362 = vmatpush1.bf16.msra.mxu0 0
    %4363 = vmatprep.subr.bf16.mxu0 0
    %4364 = vmatpush1.bf16.msra.mxu0 0
    %4365 = vmatprep.subr.bf16.mxu0 0
    %4366 = vmatpush1.bf16.msra.mxu0 0
    %4367 = vmatprep.subr.bf16.mxu0 0
    %4368 = vmatpush1.bf16.msra.mxu0 0
    %4369 = vmatprep.subr.bf16.mxu0 0
    %4370 = vmatpush1.bf16.msra.mxu0 0
    %4371 = vmatprep.subr.bf16.mxu0 0
    %4372 = vmatpush1.bf16.msra.mxu0 %v4357
    %4373 = vmatprep.subr.bf16.mxu0 0
    %4374 = vmatpush1.bf16.msra.mxu0 %v4350
    %4375 = vmatprep.subr.bf16.mxu0 0
    %4376 = vmatpush2.bf16.msra.mxu0 0
    %4377 = vmatprep.subr.bf16.mxu0 0
    %4378 = vmatpush2.bf16.msra.mxu0 0
    %4379 = vmatprep.subr.bf16.mxu0 0
    %4380 = vmatpush2.bf16.msra.mxu0 0
    %4381 = vmatprep.subr.bf16.mxu0 0
    %4382 = vmatpush2.bf16.msra.mxu0 0
    %4383 = vmatprep.subr.bf16.mxu0 0
    %4384 = vmatpush2.bf16.msra.mxu0 0
    %4385 = vmatprep.subr.bf16.mxu0 0
    %4386 = vmatpush2.bf16.msra.mxu0 0
    %4387 = vmatprep.subr.bf16.mxu0 0
    %4388 = vmatpush2.bf16.msra.mxu0 0
    %4389 = vmatprep.subr.bf16.mxu0 0
    %4390 = vmatpush2.bf16.msra.mxu0 0
    %4391 = vmatprep.mubr.bf16.mxu0 0
    %4392 = vmatmul.mubr.bf16.gmra.mxu0 %v4354
    %v4393 = vpop.f32.mrf.mxu0
    %v4394 = vadd.f32 0.0, %v4393
    %v4395 = vpop.f32.mrf.mxu0
    %v4396 = vpop.f32.mrf.mxu0
    %v4397 = vpop.f32.mrf.mxu0
    %4398 = vdwg.mxu0
    %v4399 = vadd.f32 %v4340, %v4394
    %v4400 = vrot.slane %v4106, 2
    %v4405 = vunpack.c.l.b16 %v281
    %v4406 = vunpack.c.l.b16 %v282
    %v4407 = vunpack.c.l.b16 %v283
    %v4408 = vunpack.c.l.b16 %v284
    %v4409 = vpack.c.b16 %v4406, %v4405
    %v4410 = vpack.c.b16 %v4408, %v4407
    %v4413 = vsel %vm4119, %v4400, 0
    %v4416 = vand.u32 %v4410, %v4059
    %4418 = vmatprep.subr.bf16.mxu0 0
    %4419 = vmatpush1.bf16.msra.mxu0 0
    %4420 = vmatprep.subr.bf16.mxu0 0
    %4421 = vmatpush1.bf16.msra.mxu0 0
    %4422 = vmatprep.subr.bf16.mxu0 0
    %4423 = vmatpush1.bf16.msra.mxu0 0
    %4424 = vmatprep.subr.bf16.mxu0 0
    %4425 = vmatpush1.bf16.msra.mxu0 0
    %4426 = vmatprep.subr.bf16.mxu0 0
    %4427 = vmatpush1.bf16.msra.mxu0 0
    %4428 = vmatprep.subr.bf16.mxu0 0
    %4429 = vmatpush1.bf16.msra.mxu0 0
    %4430 = vmatprep.subr.bf16.mxu0 0
    %4431 = vmatpush1.bf16.msra.mxu0 %v4416
    %4432 = vmatprep.subr.bf16.mxu0 0
    %4433 = vmatpush1.bf16.msra.mxu0 %v4409
    %4434 = vmatprep.subr.bf16.mxu0 0
    %4435 = vmatpush2.bf16.msra.mxu0 0
    %4436 = vmatprep.subr.bf16.mxu0 0
    %4437 = vmatpush2.bf16.msra.mxu0 0
    %4438 = vmatprep.subr.bf16.mxu0 0
    %4439 = vmatpush2.bf16.msra.mxu0 0
    %4440 = vmatprep.subr.bf16.mxu0 0
    %4441 = vmatpush2.bf16.msra.mxu0 0
    %4442 = vmatprep.subr.bf16.mxu0 0
    %4443 = vmatpush2.bf16.msra.mxu0 0
    %4444 = vmatprep.subr.bf16.mxu0 0
    %4445 = vmatpush2.bf16.msra.mxu0 0
    %4446 = vmatprep.subr.bf16.mxu0 0
    %4447 = vmatpush2.bf16.msra.mxu0 0
    %4448 = vmatprep.subr.bf16.mxu0 0
    %4449 = vmatpush2.bf16.msra.mxu0 0
    %4450 = vmatprep.mubr.bf16.mxu0 0
    %4451 = vmatmul.mubr.bf16.gmra.mxu0 %v4413
    %v4452 = vpop.f32.mrf.mxu0
    %v4453 = vadd.f32 0.0, %v4452
    %v4454 = vpop.f32.mrf.mxu0
    %v4455 = vpop.f32.mrf.mxu0
    %v4456 = vpop.f32.mrf.mxu0
    %4457 = vdwg.mxu0
    %v4458 = vadd.f32 %v4399, %v4453
    %v4459 = vrot.slane %v4104, 3
    %v4464 = vunpack.c.l.b16 %v286
    %v4465 = vunpack.c.l.b16 %v287
    %v4466 = vunpack.c.l.b16 %v288
    %v4467 = vunpack.c.l.b16 %v289
    %v4468 = vpack.c.b16 %v4465, %v4464
    %v4469 = vpack.c.b16 %v4467, %v4466
    %v4472 = vsel %vm4119, %v4459, 0
    %v4475 = vand.u32 %v4469, %v4059
    %4477 = vmatprep.subr.bf16.mxu0 0
    %4478 = vmatpush1.bf16.msra.mxu0 0
    %4479 = vmatprep.subr.bf16.mxu0 0
    %4480 = vmatpush1.bf16.msra.mxu0 0
    %4481 = vmatprep.subr.bf16.mxu0 0
    %4482 = vmatpush1.bf16.msra.mxu0 0
    %4483 = vmatprep.subr.bf16.mxu0 0
    %4484 = vmatpush1.bf16.msra.mxu0 0
    %4485 = vmatprep.subr.bf16.mxu0 0
    %4486 = vmatpush1.bf16.msra.mxu0 0
    %4487 = vmatprep.subr.bf16.mxu0 0
    %4488 = vmatpush1.bf16.msra.mxu0 0
    %4489 = vmatprep.subr.bf16.mxu0 0
    %4490 = vmatpush1.bf16.msra.mxu0 %v4475
    %4491 = vmatprep.subr.bf16.mxu0 0
    %4492 = vmatpush1.bf16.msra.mxu0 %v4468
    %4493 = vmatprep.subr.bf16.mxu0 0
    %4494 = vmatpush2.bf16.msra.mxu0 0
    %4495 = vmatprep.subr.bf16.mxu0 0
    %4496 = vmatpush2.bf16.msra.mxu0 0
    %4497 = vmatprep.subr.bf16.mxu0 0
    %4498 = vmatpush2.bf16.msra.mxu0 0
    %4499 = vmatprep.subr.bf16.mxu0 0
    %4500 = vmatpush2.bf16.msra.mxu0 0
    %4501 = vmatprep.subr.bf16.mxu0 0
    %4502 = vmatpush2.bf16.msra.mxu0 0
    %4503 = vmatprep.subr.bf16.mxu0 0
    %4504 = vmatpush2.bf16.msra.mxu0 0
    %4505 = vmatprep.subr.bf16.mxu0 0
    %4506 = vmatpush2.bf16.msra.mxu0 0
    %4507 = vmatprep.subr.bf16.mxu0 0
    %4508 = vmatpush2.bf16.msra.mxu0 0
    %4509 = vmatprep.mubr.bf16.mxu0 0
    %4510 = vmatmul.mubr.bf16.gmra.mxu0 %v4472
    %v4511 = vpop.f32.mrf.mxu0
    %v4512 = vadd.f32 0.0, %v4511
    %v4513 = vpop.f32.mrf.mxu0
    %v4514 = vpop.f32.mrf.mxu0
    %v4515 = vpop.f32.mrf.mxu0
    %4516 = vdwg.mxu0
    %v4517 = vadd.f32 %v4458, %v4512
    %v4518 = vrot.slane %v4106, 3
    %v4523 = vunpack.c.l.b16 %v291
    %v4524 = vunpack.c.l.b16 %v292
    %v4525 = vunpack.c.l.b16 %v293
    %v4526 = vunpack.c.l.b16 %v294
    %v4527 = vpack.c.b16 %v4524, %v4523
    %v4528 = vpack.c.b16 %v4526, %v4525
    %v4531 = vsel %vm4119, %v4518, 0
    %v4534 = vand.u32 %v4528, %v4059
    %4536 = vmatprep.subr.bf16.mxu0 0
    %4537 = vmatpush1.bf16.msra.mxu0 0
    %4538 = vmatprep.subr.bf16.mxu0 0
    %4539 = vmatpush1.bf16.msra.mxu0 0
    %4540 = vmatprep.subr.bf16.mxu0 0
    %4541 = vmatpush1.bf16.msra.mxu0 0
    %4542 = vmatprep.subr.bf16.mxu0 0
    %4543 = vmatpush1.bf16.msra.mxu0 0
    %4544 = vmatprep.subr.bf16.mxu0 0
    %4545 = vmatpush1.bf16.msra.mxu0 0
    %4546 = vmatprep.subr.bf16.mxu0 0
    %4547 = vmatpush1.bf16.msra.mxu0 0
    %4548 = vmatprep.subr.bf16.mxu0 0
    %4549 = vmatpush1.bf16.msra.mxu0 %v4534
    %4550 = vmatprep.subr.bf16.mxu0 0
    %4551 = vmatpush1.bf16.msra.mxu0 %v4527
    %4552 = vmatprep.subr.bf16.mxu0 0
    %4553 = vmatpush2.bf16.msra.mxu0 0
    %4554 = vmatprep.subr.bf16.mxu0 0
    %4555 = vmatpush2.bf16.msra.mxu0 0
    %4556 = vmatprep.subr.bf16.mxu0 0
    %4557 = vmatpush2.bf16.msra.mxu0 0
    %4558 = vmatprep.subr.bf16.mxu0 0
    %4559 = vmatpush2.bf16.msra.mxu0 0
    %4560 = vmatprep.subr.bf16.mxu0 0
    %4561 = vmatpush2.bf16.msra.mxu0 0
    %4562 = vmatprep.subr.bf16.mxu0 0
    %4563 = vmatpush2.bf16.msra.mxu0 0
    %4564 = vmatprep.subr.bf16.mxu0 0
    %4565 = vmatpush2.bf16.msra.mxu0 0
    %4566 = vmatprep.subr.bf16.mxu0 0
    %4567 = vmatpush2.bf16.msra.mxu0 0
    %4568 = vmatprep.mubr.bf16.mxu0 0
    %4569 = vmatmul.mubr.bf16.gmra.mxu0 %v4531
    %v4570 = vpop.f32.mrf.mxu0
    %v4571 = vadd.f32 0.0, %v4570
    %v4572 = vpop.f32.mrf.mxu0
    %v4573 = vpop.f32.mrf.mxu0
    %v4574 = vpop.f32.mrf.mxu0
    %4575 = vdwg.mxu0
    %v4576 = vadd.f32 %v4517, %v4571
    %v4577 = vpack.c.bf16 %v4101, %v4101
    %v4582 = vunpack.c.l.b16 %v296
    %v4583 = vunpack.c.l.b16 %v297
    %v4584 = vunpack.c.l.b16 %v298
    %v4585 = vunpack.c.l.b16 %v299
    %v4586 = vpack.c.b16 %v4583, %v4582
    %v4587 = vpack.c.b16 %v4585, %v4584
    %v4590 = vsel %vm4119, %v4577, 0
    %v4593 = vand.u32 %v4587, %v4059
    %4595 = vmatprep.subr.bf16.mxu0 0
    %4596 = vmatpush1.bf16.msra.mxu0 0
    %4597 = vmatprep.subr.bf16.mxu0 0
    %4598 = vmatpush1.bf16.msra.mxu0 0
    %4599 = vmatprep.subr.bf16.mxu0 0
    %4600 = vmatpush1.bf16.msra.mxu0 0
    %4601 = vmatprep.subr.bf16.mxu0 0
    %4602 = vmatpush1.bf16.msra.mxu0 0
    %4603 = vmatprep.subr.bf16.mxu0 0
    %4604 = vmatpush1.bf16.msra.mxu0 0
    %4605 = vmatprep.subr.bf16.mxu0 0
    %4606 = vmatpush1.bf16.msra.mxu0 0
    %4607 = vmatprep.subr.bf16.mxu0 0
    %4608 = vmatpush1.bf16.msra.mxu0 %v4593
    %4609 = vmatprep.subr.bf16.mxu0 0
    %4610 = vmatpush1.bf16.msra.mxu0 %v4586
    %4611 = vmatprep.subr.bf16.mxu0 0
    %4612 = vmatpush2.bf16.msra.mxu0 0
    %4613 = vmatprep.subr.bf16.mxu0 0
    %4614 = vmatpush2.bf16.msra.mxu0 0
    %4615 = vmatprep.subr.bf16.mxu0 0
    %4616 = vmatpush2.bf16.msra.mxu0 0
    %4617 = vmatprep.subr.bf16.mxu0 0
    %4618 = vmatpush2.bf16.msra.mxu0 0
    %4619 = vmatprep.subr.bf16.mxu0 0
    %4620 = vmatpush2.bf16.msra.mxu0 0
    %4621 = vmatprep.subr.bf16.mxu0 0
    %4622 = vmatpush2.bf16.msra.mxu0 0
    %4623 = vmatprep.subr.bf16.mxu0 0
    %4624 = vmatpush2.bf16.msra.mxu0 0
    %4625 = vmatprep.subr.bf16.mxu0 0
    %4626 = vmatpush2.bf16.msra.mxu0 0
    %4627 = vmatprep.mubr.bf16.mxu0 0
    %4628 = vmatmul.mubr.bf16.gmra.mxu0 %v4590
    %v4629 = vpop.f32.mrf.mxu0
    %v4630 = vadd.f32 0.0, %v4629
    %v4631 = vpop.f32.mrf.mxu0
    %v4632 = vpop.f32.mrf.mxu0
    %v4633 = vpop.f32.mrf.mxu0
    %4634 = vdwg.mxu0
    %v4635 = vadd.f32 %v4576, %v4630
    %v4636 = vshrl.u32 %v4577, 16
    %v4642 = vunpack.c.l.b16 %v301
    %v4643 = vunpack.c.l.b16 %v302
    %v4644 = vunpack.c.l.b16 %v303
    %v4645 = vunpack.c.l.b16 %v304
    %v4646 = vpack.c.b16 %v4643, %v4642
    %v4647 = vpack.c.b16 %v4645, %v4644
    %v4650 = vsel %vm4119, %v4636, 0
    %v4653 = vand.u32 %v4647, %v4059
    %4655 = vmatprep.subr.bf16.mxu0 0
    %4656 = vmatpush1.bf16.msra.mxu0 0
    %4657 = vmatprep.subr.bf16.mxu0 0
    %4658 = vmatpush1.bf16.msra.mxu0 0
    %4659 = vmatprep.subr.bf16.mxu0 0
    %4660 = vmatpush1.bf16.msra.mxu0 0
    %4661 = vmatprep.subr.bf16.mxu0 0
    %4662 = vmatpush1.bf16.msra.mxu0 0
    %4663 = vmatprep.subr.bf16.mxu0 0
    %4664 = vmatpush1.bf16.msra.mxu0 0
    %4665 = vmatprep.subr.bf16.mxu0 0
    %4666 = vmatpush1.bf16.msra.mxu0 0
    %4667 = vmatprep.subr.bf16.mxu0 0
    %4668 = vmatpush1.bf16.msra.mxu0 %v4653
    %4669 = vmatprep.subr.bf16.mxu0 0
    %4670 = vmatpush1.bf16.msra.mxu0 %v4646
    %4671 = vmatprep.subr.bf16.mxu0 0
    %4672 = vmatpush2.bf16.msra.mxu0 0
    %4673 = vmatprep.subr.bf16.mxu0 0
    %4674 = vmatpush2.bf16.msra.mxu0 0
    %4675 = vmatprep.subr.bf16.mxu0 0
    %4676 = vmatpush2.bf16.msra.mxu0 0
    %4677 = vmatprep.subr.bf16.mxu0 0
    %4678 = vmatpush2.bf16.msra.mxu0 0
    %4679 = vmatprep.subr.bf16.mxu0 0
    %4680 = vmatpush2.bf16.msra.mxu0 0
    %4681 = vmatprep.subr.bf16.mxu0 0
    %4682 = vmatpush2.bf16.msra.mxu0 0
    %4683 = vmatprep.subr.bf16.mxu0 0
    %4684 = vmatpush2.bf16.msra.mxu0 0
    %4685 = vmatprep.subr.bf16.mxu0 0
    %4686 = vmatpush2.bf16.msra.mxu0 0
    %4687 = vmatprep.mubr.bf16.mxu0 0
    %4688 = vmatmul.mubr.bf16.gmra.mxu0 %v4650
    %v4689 = vpop.f32.mrf.mxu0
    %v4690 = vadd.f32 0.0, %v4689
    %v4691 = vpop.f32.mrf.mxu0
    %v4692 = vpop.f32.mrf.mxu0
    %v4693 = vpop.f32.mrf.mxu0
    %4694 = vdwg.mxu0
    %v4695 = vadd.f32 %v4635, %v4690
    %v4697 = vrot.slane %v4577, 1
    %v4702 = vunpack.c.l.b16 %v306
    %v4703 = vunpack.c.l.b16 %v307
    %v4704 = vunpack.c.l.b16 %v308
    %v4705 = vunpack.c.l.b16 %v309
    %v4706 = vpack.c.b16 %v4703, %v4702
    %v4707 = vpack.c.b16 %v4705, %v4704
    %v4710 = vsel %vm4119, %v4697, 0
    %v4713 = vand.u32 %v4707, %v4059
    %4715 = vmatprep.subr.bf16.mxu0 0
    %4716 = vmatpush1.bf16.msra.mxu0 0
    %4717 = vmatprep.subr.bf16.mxu0 0
    %4718 = vmatpush1.bf16.msra.mxu0 0
    %4719 = vmatprep.subr.bf16.mxu0 0
    %4720 = vmatpush1.bf16.msra.mxu0 0
    %4721 = vmatprep.subr.bf16.mxu0 0
    %4722 = vmatpush1.bf16.msra.mxu0 0
    %4723 = vmatprep.subr.bf16.mxu0 0
    %4724 = vmatpush1.bf16.msra.mxu0 0
    %4725 = vmatprep.subr.bf16.mxu0 0
    %4726 = vmatpush1.bf16.msra.mxu0 0
    %4727 = vmatprep.subr.bf16.mxu0 0
    %4728 = vmatpush1.bf16.msra.mxu0 %v4713
    %4729 = vmatprep.subr.bf16.mxu0 0
    %4730 = vmatpush1.bf16.msra.mxu0 %v4706
    %4731 = vmatprep.subr.bf16.mxu0 0
    %4732 = vmatpush2.bf16.msra.mxu0 0
    %4733 = vmatprep.subr.bf16.mxu0 0
    %4734 = vmatpush2.bf16.msra.mxu0 0
    %4735 = vmatprep.subr.bf16.mxu0 0
    %4736 = vmatpush2.bf16.msra.mxu0 0
    %4737 = vmatprep.subr.bf16.mxu0 0
    %4738 = vmatpush2.bf16.msra.mxu0 0
    %4739 = vmatprep.subr.bf16.mxu0 0
    %4740 = vmatpush2.bf16.msra.mxu0 0
    %4741 = vmatprep.subr.bf16.mxu0 0
    %4742 = vmatpush2.bf16.msra.mxu0 0
    %4743 = vmatprep.subr.bf16.mxu0 0
    %4744 = vmatpush2.bf16.msra.mxu0 0
    %4745 = vmatprep.subr.bf16.mxu0 0
    %4746 = vmatpush2.bf16.msra.mxu0 0
    %4747 = vmatprep.mubr.bf16.mxu0 0
    %4748 = vmatmul.mubr.bf16.gmra.mxu0 %v4710
    %v4749 = vpop.f32.mrf.mxu0
    %v4750 = vadd.f32 0.0, %v4749
    %v4751 = vpop.f32.mrf.mxu0
    %v4752 = vpop.f32.mrf.mxu0
    %v4753 = vpop.f32.mrf.mxu0
    %4754 = vdwg.mxu0
    %v4755 = vadd.f32 %v4695, %v4750
    %v4756 = vrot.slane %v4636, 1
    %v4761 = vunpack.c.l.b16 %v311
    %v4762 = vunpack.c.l.b16 %v312
    %v4763 = vunpack.c.l.b16 %v313
    %v4764 = vunpack.c.l.b16 %v314
    %v4765 = vpack.c.b16 %v4762, %v4761
    %v4766 = vpack.c.b16 %v4764, %v4763
    %v4769 = vsel %vm4119, %v4756, 0
    %v4772 = vand.u32 %v4766, %v4059
    %4774 = vmatprep.subr.bf16.mxu0 0
    %4775 = vmatpush1.bf16.msra.mxu0 0
    %4776 = vmatprep.subr.bf16.mxu0 0
    %4777 = vmatpush1.bf16.msra.mxu0 0
    %4778 = vmatprep.subr.bf16.mxu0 0
    %4779 = vmatpush1.bf16.msra.mxu0 0
    %4780 = vmatprep.subr.bf16.mxu0 0
    %4781 = vmatpush1.bf16.msra.mxu0 0
    %4782 = vmatprep.subr.bf16.mxu0 0
    %4783 = vmatpush1.bf16.msra.mxu0 0
    %4784 = vmatprep.subr.bf16.mxu0 0
    %4785 = vmatpush1.bf16.msra.mxu0 0
    %4786 = vmatprep.subr.bf16.mxu0 0
    %4787 = vmatpush1.bf16.msra.mxu0 %v4772
    %4788 = vmatprep.subr.bf16.mxu0 0
    %4789 = vmatpush1.bf16.msra.mxu0 %v4765
    %4790 = vmatprep.subr.bf16.mxu0 0
    %4791 = vmatpush2.bf16.msra.mxu0 0
    %4792 = vmatprep.subr.bf16.mxu0 0
    %4793 = vmatpush2.bf16.msra.mxu0 0
    %4794 = vmatprep.subr.bf16.mxu0 0
    %4795 = vmatpush2.bf16.msra.mxu0 0
    %4796 = vmatprep.subr.bf16.mxu0 0
    %4797 = vmatpush2.bf16.msra.mxu0 0
    %4798 = vmatprep.subr.bf16.mxu0 0
    %4799 = vmatpush2.bf16.msra.mxu0 0
    %4800 = vmatprep.subr.bf16.mxu0 0
    %4801 = vmatpush2.bf16.msra.mxu0 0
    %4802 = vmatprep.subr.bf16.mxu0 0
    %4803 = vmatpush2.bf16.msra.mxu0 0
    %4804 = vmatprep.subr.bf16.mxu0 0
    %4805 = vmatpush2.bf16.msra.mxu0 0
    %4806 = vmatprep.mubr.bf16.mxu0 0
    %4807 = vmatmul.mubr.bf16.gmra.mxu0 %v4769
    %v4808 = vpop.f32.mrf.mxu0
    %v4809 = vadd.f32 0.0, %v4808
    %v4810 = vpop.f32.mrf.mxu0
    %v4811 = vpop.f32.mrf.mxu0
    %v4812 = vpop.f32.mrf.mxu0
    %4813 = vdwg.mxu0
    %v4814 = vadd.f32 %v4755, %v4809
    %v4815 = vrot.slane %v4577, 2
    %v4820 = vunpack.c.l.b16 %v316
    %v4821 = vunpack.c.l.b16 %v317
    %v4822 = vunpack.c.l.b16 %v318
    %v4823 = vunpack.c.l.b16 %v319
    %v4824 = vpack.c.b16 %v4821, %v4820
    %v4825 = vpack.c.b16 %v4823, %v4822
    %v4828 = vsel %vm4119, %v4815, 0
    %v4831 = vand.u32 %v4825, %v4059
    %4833 = vmatprep.subr.bf16.mxu0 0
    %4834 = vmatpush1.bf16.msra.mxu0 0
    %4835 = vmatprep.subr.bf16.mxu0 0
    %4836 = vmatpush1.bf16.msra.mxu0 0
    %4837 = vmatprep.subr.bf16.mxu0 0
    %4838 = vmatpush1.bf16.msra.mxu0 0
    %4839 = vmatprep.subr.bf16.mxu0 0
    %4840 = vmatpush1.bf16.msra.mxu0 0
    %4841 = vmatprep.subr.bf16.mxu0 0
    %4842 = vmatpush1.bf16.msra.mxu0 0
    %4843 = vmatprep.subr.bf16.mxu0 0
    %4844 = vmatpush1.bf16.msra.mxu0 0
    %4845 = vmatprep.subr.bf16.mxu0 0
    %4846 = vmatpush1.bf16.msra.mxu0 %v4831
    %4847 = vmatprep.subr.bf16.mxu0 0
    %4848 = vmatpush1.bf16.msra.mxu0 %v4824
    %4849 = vmatprep.subr.bf16.mxu0 0
    %4850 = vmatpush2.bf16.msra.mxu0 0
    %4851 = vmatprep.subr.bf16.mxu0 0
    %4852 = vmatpush2.bf16.msra.mxu0 0
    %4853 = vmatprep.subr.bf16.mxu0 0
    %4854 = vmatpush2.bf16.msra.mxu0 0
    %4855 = vmatprep.subr.bf16.mxu0 0
    %4856 = vmatpush2.bf16.msra.mxu0 0
    %4857 = vmatprep.subr.bf16.mxu0 0
    %4858 = vmatpush2.bf16.msra.mxu0 0
    %4859 = vmatprep.subr.bf16.mxu0 0
    %4860 = vmatpush2.bf16.msra.mxu0 0
    %4861 = vmatprep.subr.bf16.mxu0 0
    %4862 = vmatpush2.bf16.msra.mxu0 0
    %4863 = vmatprep.subr.bf16.mxu0 0
    %4864 = vmatpush2.bf16.msra.mxu0 0
    %4865 = vmatprep.mubr.bf16.mxu0 0
    %4866 = vmatmul.mubr.bf16.gmra.mxu0 %v4828
    %v4867 = vpop.f32.mrf.mxu0
    %v4868 = vadd.f32 0.0, %v4867
    %v4869 = vpop.f32.mrf.mxu0
    %v4870 = vpop.f32.mrf.mxu0
    %v4871 = vpop.f32.mrf.mxu0
    %4872 = vdwg.mxu0
    %v4873 = vadd.f32 %v4814, %v4868
    %v4874 = vrot.slane %v4636, 2
    %v4879 = vunpack.c.l.b16 %v321
    %v4880 = vunpack.c.l.b16 %v322
    %v4881 = vunpack.c.l.b16 %v323
    %v4882 = vunpack.c.l.b16 %v324
    %v4883 = vpack.c.b16 %v4880, %v4879
    %v4884 = vpack.c.b16 %v4882, %v4881
    %v4887 = vsel %vm4119, %v4874, 0
    %v4890 = vand.u32 %v4884, %v4059
    %4892 = vmatprep.subr.bf16.mxu0 0
    %4893 = vmatpush1.bf16.msra.mxu0 0
    %4894 = vmatprep.subr.bf16.mxu0 0
    %4895 = vmatpush1.bf16.msra.mxu0 0
    %4896 = vmatprep.subr.bf16.mxu0 0
    %4897 = vmatpush1.bf16.msra.mxu0 0
    %4898 = vmatprep.subr.bf16.mxu0 0
    %4899 = vmatpush1.bf16.msra.mxu0 0
    %4900 = vmatprep.subr.bf16.mxu0 0
    %4901 = vmatpush1.bf16.msra.mxu0 0
    %4902 = vmatprep.subr.bf16.mxu0 0
    %4903 = vmatpush1.bf16.msra.mxu0 0
    %4904 = vmatprep.subr.bf16.mxu0 0
    %4905 = vmatpush1.bf16.msra.mxu0 %v4890
    %4906 = vmatprep.subr.bf16.mxu0 0
    %4907 = vmatpush1.bf16.msra.mxu0 %v4883
    %4908 = vmatprep.subr.bf16.mxu0 0
    %4909 = vmatpush2.bf16.msra.mxu0 0
    %4910 = vmatprep.subr.bf16.mxu0 0
    %4911 = vmatpush2.bf16.msra.mxu0 0
    %4912 = vmatprep.subr.bf16.mxu0 0
    %4913 = vmatpush2.bf16.msra.mxu0 0
    %4914 = vmatprep.subr.bf16.mxu0 0
    %4915 = vmatpush2.bf16.msra.mxu0 0
    %4916 = vmatprep.subr.bf16.mxu0 0
    %4917 = vmatpush2.bf16.msra.mxu0 0
    %4918 = vmatprep.subr.bf16.mxu0 0
    %4919 = vmatpush2.bf16.msra.mxu0 0
    %4920 = vmatprep.subr.bf16.mxu0 0
    %4921 = vmatpush2.bf16.msra.mxu0 0
    %4922 = vmatprep.subr.bf16.mxu0 0
    %4923 = vmatpush2.bf16.msra.mxu0 0
    %4924 = vmatprep.mubr.bf16.mxu0 0
    %4925 = vmatmul.mubr.bf16.gmra.mxu0 %v4887
    %v4926 = vpop.f32.mrf.mxu0
    %v4927 = vadd.f32 0.0, %v4926
    %v4928 = vpop.f32.mrf.mxu0
    %v4929 = vpop.f32.mrf.mxu0
    %v4930 = vpop.f32.mrf.mxu0
    %4931 = vdwg.mxu0
    %v4932 = vadd.f32 %v4873, %v4927
    %v4933 = vrot.slane %v4577, 3
    %v4938 = vunpack.c.l.b16 %v326
    %v4939 = vunpack.c.l.b16 %v327
    %v4940 = vunpack.c.l.b16 %v328
    %v4941 = vunpack.c.l.b16 %v329
    %v4942 = vpack.c.b16 %v4939, %v4938
    %v4943 = vpack.c.b16 %v4941, %v4940
    %v4946 = vsel %vm4119, %v4933, 0
    %v4949 = vand.u32 %v4943, %v4059
    %4951 = vmatprep.subr.bf16.mxu0 0
    %4952 = vmatpush1.bf16.msra.mxu0 0
    %4953 = vmatprep.subr.bf16.mxu0 0
    %4954 = vmatpush1.bf16.msra.mxu0 0
    %4955 = vmatprep.subr.bf16.mxu0 0
    %4956 = vmatpush1.bf16.msra.mxu0 0
    %4957 = vmatprep.subr.bf16.mxu0 0
    %4958 = vmatpush1.bf16.msra.mxu0 0
    %4959 = vmatprep.subr.bf16.mxu0 0
    %4960 = vmatpush1.bf16.msra.mxu0 0
    %4961 = vmatprep.subr.bf16.mxu0 0
    %4962 = vmatpush1.bf16.msra.mxu0 0
    %4963 = vmatprep.subr.bf16.mxu0 0
    %4964 = vmatpush1.bf16.msra.mxu0 %v4949
    %4965 = vmatprep.subr.bf16.mxu0 0
    %4966 = vmatpush1.bf16.msra.mxu0 %v4942
    %4967 = vmatprep.subr.bf16.mxu0 0
    %4968 = vmatpush2.bf16.msra.mxu0 0
    %4969 = vmatprep.subr.bf16.mxu0 0
    %4970 = vmatpush2.bf16.msra.mxu0 0
    %4971 = vmatprep.subr.bf16.mxu0 0
    %4972 = vmatpush2.bf16.msra.mxu0 0
    %4973 = vmatprep.subr.bf16.mxu0 0
    %4974 = vmatpush2.bf16.msra.mxu0 0
    %4975 = vmatprep.subr.bf16.mxu0 0
    %4976 = vmatpush2.bf16.msra.mxu0 0
    %4977 = vmatprep.subr.bf16.mxu0 0
    %4978 = vmatpush2.bf16.msra.mxu0 0
    %4979 = vmatprep.subr.bf16.mxu0 0
    %4980 = vmatpush2.bf16.msra.mxu0 0
    %4981 = vmatprep.subr.bf16.mxu0 0
    %4982 = vmatpush2.bf16.msra.mxu0 0
    %4983 = vmatprep.mubr.bf16.mxu0 0
    %4984 = vmatmul.mubr.bf16.gmra.mxu0 %v4946
    %v4985 = vpop.f32.mrf.mxu0
    %v4986 = vadd.f32 0.0, %v4985
    %v4987 = vpop.f32.mrf.mxu0
    %v4988 = vpop.f32.mrf.mxu0
    %v4989 = vpop.f32.mrf.mxu0
    %4990 = vdwg.mxu0
    %v4991 = vadd.f32 %v4932, %v4986
    %v4992 = vrot.slane %v4636, 3
    %v4997 = vunpack.c.l.b16 %v331
    %v4998 = vunpack.c.l.b16 %v332
    %v4999 = vunpack.c.l.b16 %v333
    %v5000 = vunpack.c.l.b16 %v334
    %v5001 = vpack.c.b16 %v4998, %v4997
    %v5002 = vpack.c.b16 %v5000, %v4999
    %v5005 = vsel %vm4119, %v4992, 0
    %v5008 = vand.u32 %v5002, %v4059
    %5010 = vmatprep.subr.bf16.mxu0 0
    %5011 = vmatpush1.bf16.msra.mxu0 0
    %5012 = vmatprep.subr.bf16.mxu0 0
    %5013 = vmatpush1.bf16.msra.mxu0 0
    %5014 = vmatprep.subr.bf16.mxu0 0
    %5015 = vmatpush1.bf16.msra.mxu0 0
    %5016 = vmatprep.subr.bf16.mxu0 0
    %5017 = vmatpush1.bf16.msra.mxu0 0
    %5018 = vmatprep.subr.bf16.mxu0 0
    %5019 = vmatpush1.bf16.msra.mxu0 0
    %5020 = vmatprep.subr.bf16.mxu0 0
    %5021 = vmatpush1.bf16.msra.mxu0 0
    %5022 = vmatprep.subr.bf16.mxu0 0
    %5023 = vmatpush1.bf16.msra.mxu0 %v5008
    %5024 = vmatprep.subr.bf16.mxu0 0
    %5025 = vmatpush1.bf16.msra.mxu0 %v5001
    %5026 = vmatprep.subr.bf16.mxu0 0
    %5027 = vmatpush2.bf16.msra.mxu0 0
    %5028 = vmatprep.subr.bf16.mxu0 0
    %5029 = vmatpush2.bf16.msra.mxu0 0
    %5030 = vmatprep.subr.bf16.mxu0 0
    %5031 = vmatpush2.bf16.msra.mxu0 0
    %5032 = vmatprep.subr.bf16.mxu0 0
    %5033 = vmatpush2.bf16.msra.mxu0 0
    %5034 = vmatprep.subr.bf16.mxu0 0
    %5035 = vmatpush2.bf16.msra.mxu0 0
    %5036 = vmatprep.subr.bf16.mxu0 0
    %5037 = vmatpush2.bf16.msra.mxu0 0
    %5038 = vmatprep.subr.bf16.mxu0 0
    %5039 = vmatpush2.bf16.msra.mxu0 0
    %5040 = vmatprep.subr.bf16.mxu0 0
    %5041 = vmatpush2.bf16.msra.mxu0 0
    %5042 = vmatprep.mubr.bf16.mxu0 0
    %5043 = vmatmul.mubr.bf16.gmra.mxu0 %v5005
    %v5044 = vpop.f32.mrf.mxu0
    %v5045 = vadd.f32 0.0, %v5044
    %v5046 = vpop.f32.mrf.mxu0
    %v5047 = vpop.f32.mrf.mxu0
    %v5048 = vpop.f32.mrf.mxu0
    %5049 = vdwg.mxu0
    %v5050 = vadd.f32 %v4991, %v5045
    %v5051 = vadd.f32 %v5050, %v335
    %v5052 = vmax.f32 %v5051, 0.0
    %v5053 = vpack.c.bf16 %v5052, %v5052
    %v5069 = vunpack.c.l.b16 %v336
    %v5070 = vunpack.c.l.b16 %v337
    %v5071 = vunpack.c.l.b16 %v338
    %v5072 = vunpack.c.l.b16 %v339
    %v5073 = vunpack.c.l.b16 %v340
    %v5074 = vunpack.c.l.b16 %v341
    %v5075 = vunpack.c.l.b16 %v342
    %v5076 = vunpack.c.l.b16 %v343
    %v5077 = vunpack.c.l.b16 %v344
    %v5078 = vunpack.c.l.b16 %v345
    %v5079 = vunpack.c.l.b16 %v346
    %v5080 = vunpack.c.l.b16 %v347
    %v5081 = vunpack.c.l.b16 %v348
    %v5082 = vunpack.c.l.b16 %v349
    %v5083 = vunpack.c.l.b16 %v350
    %v5084 = vpack.c.b16 %v5070, %v5069
    %v5085 = vpack.c.b16 %v5072, %v5071
    %v5086 = vpack.c.b16 %v5074, %v5073
    %v5087 = vpack.c.b16 %v5076, %v5075
    %v5088 = vpack.c.b16 %v5078, %v5077
    %v5089 = vpack.c.b16 %v5080, %v5079
    %v5090 = vpack.c.b16 %v5082, %v5081
    %v5091 = vpack.c.b16 %v5083, %v5083
    %vm5099 = vcmask 982016
    %v5101 = vsel %vm5099, %v5053, 0
    %v5104 = vsel %vm4057, %v5091, 0
    %5106 = vmatprep.subr.bf16.mxu0 0
    %5107 = vmatpush1.bf16.msra.mxu0 %v5104
    %5108 = vmatprep.subr.bf16.mxu0 0
    %5109 = vmatpush1.bf16.msra.mxu0 %v5090
    %5110 = vmatprep.subr.bf16.mxu0 0
    %5111 = vmatpush1.bf16.msra.mxu0 %v5089
    %5112 = vmatprep.subr.bf16.mxu0 0
    %5113 = vmatpush1.bf16.msra.mxu0 %v5088
    %5114 = vmatprep.subr.bf16.mxu0 0
    %5115 = vmatpush1.bf16.msra.mxu0 %v5087
    %5116 = vmatprep.subr.bf16.mxu0 0
    %5117 = vmatpush1.bf16.msra.mxu0 %v5086
    %5118 = vmatprep.subr.bf16.mxu0 0
    %5119 = vmatpush1.bf16.msra.mxu0 %v5085
    %5120 = vmatprep.subr.bf16.mxu0 0
    %5121 = vmatpush1.bf16.msra.mxu0 %v5084
    %5122 = vmatprep.subr.bf16.mxu0 0
    %5123 = vmatpush2.bf16.msra.mxu0 0
    %5124 = vmatprep.subr.bf16.mxu0 0
    %5125 = vmatpush2.bf16.msra.mxu0 0
    %5126 = vmatprep.subr.bf16.mxu0 0
    %5127 = vmatpush2.bf16.msra.mxu0 0
    %5128 = vmatprep.subr.bf16.mxu0 0
    %5129 = vmatpush2.bf16.msra.mxu0 0
    %5130 = vmatprep.subr.bf16.mxu0 0
    %5131 = vmatpush2.bf16.msra.mxu0 0
    %5132 = vmatprep.subr.bf16.mxu0 0
    %5133 = vmatpush2.bf16.msra.mxu0 0
    %5134 = vmatprep.subr.bf16.mxu0 0
    %5135 = vmatpush2.bf16.msra.mxu0 0
    %5136 = vmatprep.subr.bf16.mxu0 0
    %5137 = vmatpush2.bf16.msra.mxu0 0
    %5138 = vmatprep.mubr.bf16.mxu0 0
    %5139 = vmatmul.mubr.bf16.gmra.mxu0 %v5101
    %v5140 = vpop.f32.mrf.mxu0
    %v5141 = vadd.f32 %v351, %v5140
    %v5142 = vpop.f32.mrf.mxu0
    %v5143 = vpop.f32.mrf.mxu0
    %v5144 = vpop.f32.mrf.mxu0
    %5145 = vdwg.mxu0
    %v5146 = vmax.f32 %v5141, 0.0
    %v5147 = vpack.c.bf16 %v5146, %v5146
    %v5159 = vunpack.c.l.b16 %v352
    %v5160 = vunpack.c.l.b16 %v353
    %v5161 = vunpack.c.l.b16 %v354
    %v5162 = vunpack.c.l.b16 %v355
    %v5163 = vunpack.c.l.b16 %v356
    %v5164 = vunpack.c.l.b16 %v357
    %v5165 = vunpack.c.l.b16 %v358
    %v5166 = vunpack.c.l.b16 %v359
    %v5167 = vunpack.c.l.b16 %v360
    %v5168 = vunpack.c.l.b16 %v361
    %v5169 = vunpack.c.l.b16 %v362
    %v5170 = vpack.c.b16 %v5160, %v5159
    %v5171 = vpack.c.b16 %v5162, %v5161
    %v5172 = vpack.c.b16 %v5164, %v5163
    %v5173 = vpack.c.b16 %v5166, %v5165
    %v5174 = vpack.c.b16 %v5168, %v5167
    %v5175 = vpack.c.b16 %v5169, %v5169
    %vm5181 = vcmask 687104
    %v5183 = vsel %vm5181, %v5147, 0
    %vm5185 = vcmask 1041408
    %v5187 = vsel %vm5185, %v5175, 0
    %5189 = vmatprep.subr.bf16.mxu0 0
    %5190 = vmatpush1.bf16.msra.mxu0 0
    %5191 = vmatprep.subr.bf16.mxu0 0
    %5192 = vmatpush1.bf16.msra.mxu0 0
    %5193 = vmatprep.subr.bf16.mxu0 0
    %5194 = vmatpush1.bf16.msra.mxu0 %v5187
    %5195 = vmatprep.subr.bf16.mxu0 0
    %5196 = vmatpush1.bf16.msra.mxu0 %v5174
    %5197 = vmatprep.subr.bf16.mxu0 0
    %5198 = vmatpush1.bf16.msra.mxu0 %v5173
    %5199 = vmatprep.subr.bf16.mxu0 0
    %5200 = vmatpush1.bf16.msra.mxu0 %v5172
    %5201 = vmatprep.subr.bf16.mxu0 0
    %5202 = vmatpush1.bf16.msra.mxu0 %v5171
    %5203 = vmatprep.subr.bf16.mxu0 0
    %5204 = vmatpush1.bf16.msra.mxu0 %v5170
    %5205 = vmatprep.subr.bf16.mxu0 0
    %5206 = vmatpush2.bf16.msra.mxu0 0
    %5207 = vmatprep.subr.bf16.mxu0 0
    %5208 = vmatpush2.bf16.msra.mxu0 0
    %5209 = vmatprep.subr.bf16.mxu0 0
    %5210 = vmatpush2.bf16.msra.mxu0 0
    %5211 = vmatprep.subr.bf16.mxu0 0
    %5212 = vmatpush2.bf16.msra.mxu0 0
    %5213 = vmatprep.subr.bf16.mxu0 0
    %5214 = vmatpush2.bf16.msra.mxu0 0
    %5215 = vmatprep.subr.bf16.mxu0 0
    %5216 = vmatpush2.bf16.msra.mxu0 0
    %5217 = vmatprep.subr.bf16.mxu0 0
    %5218 = vmatpush2.bf16.msra.mxu0 0
    %5219 = vmatprep.subr.bf16.mxu0 0
    %5220 = vmatpush2.bf16.msra.mxu0 0
    %5221 = vmatprep.mubr.bf16.mxu0 0
    %5222 = vmatmul.mubr.bf16.gmra.mxu0 %v5183
    %v5223 = vpop.f32.mrf.mxu0
    %v5224 = vadd.f32 %v363, %v5223
    %v5225 = vpop.f32.mrf.mxu0
    %v5226 = vpop.f32.mrf.mxu0
    %v5227 = vpop.f32.mrf.mxu0
    %5228 = vdwg.mxu0
    %vm5229 = vcmask 73728
    %v5230 = vsel %vm5229, %v5224, -inf
    %5231 = vmax.xlane.f32.xlu0 %v5230
    %v5232 = vpop.xlane.xlu0 %5231
    %v5233 = vsub.f32 %v5224, %v5232
    %v5234 = vmul.f32 %v5233, 1.442695
    %v5235 = vpow.pop %v5234
    %v5236 = vsel %vm5229, %v5235, 0.0
    %5237 = vadd.xlane.f32.xlu0 %v5236
    %v5238 = vpop.xlane.xlu0 %5237
    %v5239 = vlog2.pop %v5238
    %v5240 = vmul.f32 %v5239, 0.6931472
    %v5241 = vsub.f32 %v5233, %v5240
    %5242 = vst.msk [vmem:[#allocation2] sm:$0x1] %vm5229, %v5241
    %s5243 = scalar_lea.vmem %s0, 128
    %v5244 = vld [vmem:[%s5243] sm:$0xff]
    %v5245 = vld [vmem:[%s5243 + $0x8] sm:$0xff]
    %v5246 = vld [vmem:[%s5243 + $0x10] sm:$0xff]
    %v5247 = vld [vmem:[%s5243 + $0x18] sm:$0xff]
    %v5248 = vld [vmem:[%s5243 + $0x20] sm:$0xff]
    %v5249 = vld [vmem:[%s5243 + $0x28] sm:$0xff]
    %v5250 = vld [vmem:[%s5243 + $0x30] sm:$0xff]
    %v5251 = vld [vmem:[%s5243 + $0x38] sm:$0xff]
    %v5252 = vld [vmem:[%s5243 + $0x40] sm:$0x7f]
    %v5253 = vld [vmem:[%s5243 + $0x48] sm:$0x7f]
    %v5254 = vld [vmem:[%s5243 + $0x50] sm:$0x7f]
    %v5255 = vld [vmem:[%s5243 + $0x58] sm:$0x7f]
    %v5256 = vld [vmem:[%s5243 + $0x60] sm:$0x7f]
    %v5257 = vld [vmem:[%s5243 + $0x68] sm:$0x7f]
    %v5258 = vld [vmem:[%s5243 + $0x70] sm:$0x7f]
    %v5259 = vld [vmem:[%s5243 + $0x78] sm:$0x7f]
    %v5260 = vpack.c.bf16 %v5252, %v5244
    %v5261 = vpack.c.bf16 %v5253, %v5245
    %v5262 = vpack.c.bf16 %v5254, %v5246
    %v5263 = vpack.c.bf16 %v5255, %v5247
    %v5264 = vpack.c.bf16 %v5256, %v5248
    %v5265 = vpack.c.bf16 %v5257, %v5249
    %v5266 = vpack.c.bf16 %v5258, %v5250
    %v5267 = vpack.c.bf16 %v5259, %v5251
    %5276 = vrot.lane.b32.xlu0 %v5260, 127
    %v5277 = vpop.permute.xlu0 %5276
    %5278 = vrot.lane.b32.xlu0 %v5261, 127
    %v5279 = vpop.permute.xlu0 %5278
    %5280 = vrot.lane.b32.xlu0 %v5262, 127
    %v5281 = vpop.permute.xlu0 %5280
    %5282 = vrot.lane.b32.xlu0 %v5263, 127
    %v5283 = vpop.permute.xlu0 %5282
    %5284 = vrot.lane.b32.xlu0 %v5264, 127
    %v5285 = vpop.permute.xlu0 %5284
    %5286 = vrot.lane.b32.xlu0 %v5265, 127
    %v5287 = vpop.permute.xlu0 %5286
    %5288 = vrot.lane.b32.xlu0 %v5266, 127
    %v5289 = vpop.permute.xlu0 %5288
    %5290 = vrot.lane.b32.xlu0 %v5267, 127
    %v5291 = vpop.permute.xlu0 %5290
    %v5292 = vsel %vm412, %v5277, %v5279
    %v5293 = vsel %vm412, %v5279, %v5281
    %v5294 = vsel %vm412, %v5281, %v5283
    %v5295 = vsel %vm412, %v5283, %v5285
    %v5296 = vsel %vm412, %v5285, %v5287
    %v5297 = vsel %vm412, %v5287, %v5289
    %v5298 = vsel %vm412, %v5289, %v5291
    %v5300 = vand.u32 %v5292, %v427
    %v5303 = vand.u32 %v5293, %v427
    %v5306 = vand.u32 %v5294, %v427
    %v5309 = vand.u32 %v5295, %v427
    %v5312 = vand.u32 %v5296, %v427
    %v5315 = vand.u32 %v5297, %v427
    %v5318 = vand.u32 %v5298, %v427
    %5320 = vmatprep.subr.bf16.mxu0 0
    %5321 = vmatpush1.bf16.msra.mxu0 0
    %5322 = vmatprep.subr.bf16.mxu0 0
    %5323 = vmatpush1.bf16.msra.mxu0 0
    %5324 = vmatprep.subr.bf16.mxu0 0
    %5325 = vmatpush1.bf16.msra.mxu0 0
    %5326 = vmatprep.subr.bf16.mxu0 0
    %5327 = vmatpush1.bf16.msra.mxu0 0
    %5328 = vmatprep.subr.bf16.mxu0 0
    %5329 = vmatpush1.bf16.msra.mxu0 0
    %5330 = vmatprep.subr.bf16.mxu0 0
    %5331 = vmatpush1.bf16.msra.mxu0 0
    %5332 = vmatprep.subr.bf16.mxu0 0
    %5333 = vmatpush1.bf16.msra.mxu0 0
    %5334 = vmatprep.subr.bf16.mxu0 %v5303
    %5335 = vmatpush1.bf16.msra.mxu0 %v5300
    %5336 = vmatprep.subr.bf16.mxu0 0
    %5337 = vmatpush2.bf16.msra.mxu0 0
    %5338 = vmatprep.subr.bf16.mxu0 0
    %5339 = vmatpush2.bf16.msra.mxu0 0
    %5340 = vmatprep.subr.bf16.mxu0 0
    %5341 = vmatpush2.bf16.msra.mxu0 0
    %5342 = vmatprep.subr.bf16.mxu0 0
    %5343 = vmatpush2.bf16.msra.mxu0 0
    %5344 = vmatprep.subr.bf16.mxu0 0
    %5345 = vmatpush2.bf16.msra.mxu0 0
    %5346 = vmatprep.subr.bf16.mxu0 0
    %5347 = vmatpush2.bf16.msra.mxu0 0
    %5348 = vmatprep.subr.bf16.mxu0 0
    %5349 = vmatpush2.bf16.msra.mxu0 0
    %5350 = vmatprep.subr.bf16.mxu0 0
    %5351 = vmatpush2.bf16.msra.mxu0 0
    %5352 = vmatprep.mubr.bf16.mxu0 0
    %5353 = vmatmul.mubr.bf16.gmra.mxu0 %v422
    %v5354 = vpop.f32.mrf.mxu0
    %v5355 = vadd.f32 0.0, %v5354
    %v5356 = vpop.f32.mrf.mxu0
    %v5357 = vadd.f32 0.0, %v5356
    %v5358 = vpop.f32.mrf.mxu0
    %v5359 = vpop.f32.mrf.mxu0
    %5360 = vdwg.mxu0
    %5361 = vmatprep.subr.bf16.mxu0 0
    %5362 = vmatpush1.bf16.msra.mxu0 0
    %5363 = vmatprep.subr.bf16.mxu0 0
    %5364 = vmatpush1.bf16.msra.mxu0 0
    %5365 = vmatprep.subr.bf16.mxu0 0
    %5366 = vmatpush1.bf16.msra.mxu0 0
    %5367 = vmatprep.subr.bf16.mxu0 0
    %5368 = vmatpush1.bf16.msra.mxu0 0
    %5369 = vmatprep.subr.bf16.mxu0 0
    %5370 = vmatpush1.bf16.msra.mxu0 0
    %5371 = vmatprep.subr.bf16.mxu0 0
    %5372 = vmatpush1.bf16.msra.mxu0 0
    %5373 = vmatprep.subr.bf16.mxu0 0
    %5374 = vmatpush1.bf16.msra.mxu0 0
    %5375 = vmatprep.subr.bf16.mxu0 %v5309
    %5376 = vmatpush1.bf16.msra.mxu0 %v5306
    %5377 = vmatprep.subr.bf16.mxu0 0
    %5378 = vmatpush2.bf16.msra.mxu0 0
    %5379 = vmatprep.subr.bf16.mxu0 0
    %5380 = vmatpush2.bf16.msra.mxu0 0
    %5381 = vmatprep.subr.bf16.mxu0 0
    %5382 = vmatpush2.bf16.msra.mxu0 0
    %5383 = vmatprep.subr.bf16.mxu0 0
    %5384 = vmatpush2.bf16.msra.mxu0 0
    %5385 = vmatprep.subr.bf16.mxu0 0
    %5386 = vmatpush2.bf16.msra.mxu0 0
    %5387 = vmatprep.subr.bf16.mxu0 0
    %5388 = vmatpush2.bf16.msra.mxu0 0
    %5389 = vmatprep.subr.bf16.mxu0 0
    %5390 = vmatpush2.bf16.msra.mxu0 0
    %5391 = vmatprep.subr.bf16.mxu0 0
    %5392 = vmatpush2.bf16.msra.mxu0 0
    %5393 = vmatprep.mubr.bf16.mxu0 0
    %5394 = vmatmul.mubr.bf16.gmra.mxu0 %v422
    %v5395 = vpop.f32.mrf.mxu0
    %v5396 = vadd.f32 0.0, %v5395
    %v5397 = vpop.f32.mrf.mxu0
    %v5398 = vadd.f32 0.0, %v5397
    %v5399 = vpop.f32.mrf.mxu0
    %v5400 = vpop.f32.mrf.mxu0
    %5401 = vdwg.mxu0
    %5402 = vmatprep.subr.bf16.mxu0 0
    %5403 = vmatpush1.bf16.msra.mxu0 0
    %5404 = vmatprep.subr.bf16.mxu0 0
    %5405 = vmatpush1.bf16.msra.mxu0 0
    %5406 = vmatprep.subr.bf16.mxu0 0
    %5407 = vmatpush1.bf16.msra.mxu0 0
    %5408 = vmatprep.subr.bf16.mxu0 0
    %5409 = vmatpush1.bf16.msra.mxu0 0
    %5410 = vmatprep.subr.bf16.mxu0 0
    %5411 = vmatpush1.bf16.msra.mxu0 0
    %5412 = vmatprep.subr.bf16.mxu0 0
    %5413 = vmatpush1.bf16.msra.mxu0 0
    %5414 = vmatprep.subr.bf16.mxu0 0
    %5415 = vmatpush1.bf16.msra.mxu0 0
    %5416 = vmatprep.subr.bf16.mxu0 %v5315
    %5417 = vmatpush1.bf16.msra.mxu0 %v5312
    %5418 = vmatprep.subr.bf16.mxu0 0
    %5419 = vmatpush2.bf16.msra.mxu0 0
    %5420 = vmatprep.subr.bf16.mxu0 0
    %5421 = vmatpush2.bf16.msra.mxu0 0
    %5422 = vmatprep.subr.bf16.mxu0 0
    %5423 = vmatpush2.bf16.msra.mxu0 0
    %5424 = vmatprep.subr.bf16.mxu0 0
    %5425 = vmatpush2.bf16.msra.mxu0 0
    %5426 = vmatprep.subr.bf16.mxu0 0
    %5427 = vmatpush2.bf16.msra.mxu0 0
    %5428 = vmatprep.subr.bf16.mxu0 0
    %5429 = vmatpush2.bf16.msra.mxu0 0
    %5430 = vmatprep.subr.bf16.mxu0 0
    %5431 = vmatpush2.bf16.msra.mxu0 0
    %5432 = vmatprep.subr.bf16.mxu0 0
    %5433 = vmatpush2.bf16.msra.mxu0 0
    %5434 = vmatprep.mubr.bf16.mxu0 0
    %5435 = vmatmul.mubr.bf16.gmra.mxu0 %v422
    %v5436 = vpop.f32.mrf.mxu0
    %v5437 = vadd.f32 0.0, %v5436
    %v5438 = vpop.f32.mrf.mxu0
    %v5439 = vadd.f32 0.0, %v5438
    %v5440 = vpop.f32.mrf.mxu0
    %v5441 = vpop.f32.mrf.mxu0
    %5442 = vdwg.mxu0
    %5443 = vmatprep.subr.bf16.mxu0 0
    %5444 = vmatpush1.bf16.msra.mxu0 0
    %5445 = vmatprep.subr.bf16.mxu0 0
    %5446 = vmatpush1.bf16.msra.mxu0 0
    %5447 = vmatprep.subr.bf16.mxu0 0
    %5448 = vmatpush1.bf16.msra.mxu0 0
    %5449 = vmatprep.subr.bf16.mxu0 0
    %5450 = vmatpush1.bf16.msra.mxu0 0
    %5451 = vmatprep.subr.bf16.mxu0 0
    %5452 = vmatpush1.bf16.msra.mxu0 0
    %5453 = vmatprep.subr.bf16.mxu0 0
    %5454 = vmatpush1.bf16.msra.mxu0 0
    %5455 = vmatprep.subr.bf16.mxu0 0
    %5456 = vmatpush1.bf16.msra.mxu0 0
    %5457 = vmatprep.subr.bf16.mxu0 0
    %5458 = vmatpush1.bf16.msra.mxu0 %v5318
    %5459 = vmatprep.subr.bf16.mxu0 0
    %5460 = vmatpush2.bf16.msra.mxu0 0
    %5461 = vmatprep.subr.bf16.mxu0 0
    %5462 = vmatpush2.bf16.msra.mxu0 0
    %5463 = vmatprep.subr.bf16.mxu0 0
    %5464 = vmatpush2.bf16.msra.mxu0 0
    %5465 = vmatprep.subr.bf16.mxu0 0
    %5466 = vmatpush2.bf16.msra.mxu0 0
    %5467 = vmatprep.subr.bf16.mxu0 0
    %5468 = vmatpush2.bf16.msra.mxu0 0
    %5469 = vmatprep.subr.bf16.mxu0 0
    %5470 = vmatpush2.bf16.msra.mxu0 0
    %5471 = vmatprep.subr.bf16.mxu0 0
    %5472 = vmatpush2.bf16.msra.mxu0 0
    %5473 = vmatprep.subr.bf16.mxu0 0
    %5474 = vmatpush2.bf16.msra.mxu0 0
    %5475 = vmatprep.mubr.bf16.mxu0 0
    %5476 = vmatmul.mubr.bf16.gmra.mxu0 %v422
    %v5477 = vpop.f32.mrf.mxu0
    %v5478 = vadd.f32 0.0, %v5477
    %v5479 = vpop.f32.mrf.mxu0
    %v5480 = vpop.f32.mrf.mxu0
    %v5481 = vpop.f32.mrf.mxu0
    %5482 = vdwg.mxu0
    %v5484 = vand.u32 %v5260, %v427
    %v5487 = vand.u32 %v5261, %v427
    %v5490 = vand.u32 %v5262, %v427
    %v5493 = vand.u32 %v5263, %v427
    %v5496 = vand.u32 %v5264, %v427
    %v5499 = vand.u32 %v5265, %v427
    %v5502 = vand.u32 %v5266, %v427
    %5504 = vmatprep.subr.bf16.mxu0 0
    %5505 = vmatpush1.bf16.msra.mxu0 0
    %5506 = vmatprep.subr.bf16.mxu0 0
    %5507 = vmatpush1.bf16.msra.mxu0 0
    %5508 = vmatprep.subr.bf16.mxu0 0
    %5509 = vmatpush1.bf16.msra.mxu0 0
    %5510 = vmatprep.subr.bf16.mxu0 0
    %5511 = vmatpush1.bf16.msra.mxu0 0
    %5512 = vmatprep.subr.bf16.mxu0 0
    %5513 = vmatpush1.bf16.msra.mxu0 0
    %5514 = vmatprep.subr.bf16.mxu0 0
    %5515 = vmatpush1.bf16.msra.mxu0 0
    %5516 = vmatprep.subr.bf16.mxu0 0
    %5517 = vmatpush1.bf16.msra.mxu0 0
    %5518 = vmatprep.subr.bf16.mxu0 %v5487
    %5519 = vmatpush1.bf16.msra.mxu0 %v5484
    %5520 = vmatprep.subr.bf16.mxu0 0
    %5521 = vmatpush2.bf16.msra.mxu0 0
    %5522 = vmatprep.subr.bf16.mxu0 0
    %5523 = vmatpush2.bf16.msra.mxu0 0
    %5524 = vmatprep.subr.bf16.mxu0 0
    %5525 = vmatpush2.bf16.msra.mxu0 0
    %5526 = vmatprep.subr.bf16.mxu0 0
    %5527 = vmatpush2.bf16.msra.mxu0 0
    %5528 = vmatprep.subr.bf16.mxu0 0
    %5529 = vmatpush2.bf16.msra.mxu0 0
    %5530 = vmatprep.subr.bf16.mxu0 0
    %5531 = vmatpush2.bf16.msra.mxu0 0
    %5532 = vmatprep.subr.bf16.mxu0 0
    %5533 = vmatpush2.bf16.msra.mxu0 0
    %5534 = vmatprep.subr.bf16.mxu0 0
    %5535 = vmatpush2.bf16.msra.mxu0 0
    %5536 = vmatprep.mubr.bf16.mxu0 0
    %5537 = vmatmul.mubr.bf16.gmra.mxu0 %v613
    %v5538 = vpop.f32.mrf.mxu0
    %v5539 = vadd.f32 %v5355, %v5538
    %v5540 = vpop.f32.mrf.mxu0
    %v5541 = vadd.f32 %v5357, %v5540
    %v5542 = vpop.f32.mrf.mxu0
    %v5543 = vpop.f32.mrf.mxu0
    %5544 = vdwg.mxu0
    %5545 = vmatprep.subr.bf16.mxu0 0
    %5546 = vmatpush1.bf16.msra.mxu0 0
    %5547 = vmatprep.subr.bf16.mxu0 0
    %5548 = vmatpush1.bf16.msra.mxu0 0
    %5549 = vmatprep.subr.bf16.mxu0 0
    %5550 = vmatpush1.bf16.msra.mxu0 0
    %5551 = vmatprep.subr.bf16.mxu0 0
    %5552 = vmatpush1.bf16.msra.mxu0 0
    %5553 = vmatprep.subr.bf16.mxu0 0
    %5554 = vmatpush1.bf16.msra.mxu0 0
    %5555 = vmatprep.subr.bf16.mxu0 0
    %5556 = vmatpush1.bf16.msra.mxu0 0
    %5557 = vmatprep.subr.bf16.mxu0 0
    %5558 = vmatpush1.bf16.msra.mxu0 0
    %5559 = vmatprep.subr.bf16.mxu0 %v5493
    %5560 = vmatpush1.bf16.msra.mxu0 %v5490
    %5561 = vmatprep.subr.bf16.mxu0 0
    %5562 = vmatpush2.bf16.msra.mxu0 0
    %5563 = vmatprep.subr.bf16.mxu0 0
    %5564 = vmatpush2.bf16.msra.mxu0 0
    %5565 = vmatprep.subr.bf16.mxu0 0
    %5566 = vmatpush2.bf16.msra.mxu0 0
    %5567 = vmatprep.subr.bf16.mxu0 0
    %5568 = vmatpush2.bf16.msra.mxu0 0
    %5569 = vmatprep.subr.bf16.mxu0 0
    %5570 = vmatpush2.bf16.msra.mxu0 0
    %5571 = vmatprep.subr.bf16.mxu0 0
    %5572 = vmatpush2.bf16.msra.mxu0 0
    %5573 = vmatprep.subr.bf16.mxu0 0
    %5574 = vmatpush2.bf16.msra.mxu0 0
    %5575 = vmatprep.subr.bf16.mxu0 0
    %5576 = vmatpush2.bf16.msra.mxu0 0
    %5577 = vmatprep.mubr.bf16.mxu0 0
    %5578 = vmatmul.mubr.bf16.gmra.mxu0 %v613
    %v5579 = vpop.f32.mrf.mxu0
    %v5580 = vadd.f32 %v5396, %v5579
    %v5581 = vpop.f32.mrf.mxu0
    %v5582 = vadd.f32 %v5398, %v5581
    %v5583 = vpop.f32.mrf.mxu0
    %v5584 = vpop.f32.mrf.mxu0
    %5585 = vdwg.mxu0
    %5586 = vmatprep.subr.bf16.mxu0 0
    %5587 = vmatpush1.bf16.msra.mxu0 0
    %5588 = vmatprep.subr.bf16.mxu0 0
    %5589 = vmatpush1.bf16.msra.mxu0 0
    %5590 = vmatprep.subr.bf16.mxu0 0
    %5591 = vmatpush1.bf16.msra.mxu0 0
    %5592 = vmatprep.subr.bf16.mxu0 0
    %5593 = vmatpush1.bf16.msra.mxu0 0
    %5594 = vmatprep.subr.bf16.mxu0 0
    %5595 = vmatpush1.bf16.msra.mxu0 0
    %5596 = vmatprep.subr.bf16.mxu0 0
    %5597 = vmatpush1.bf16.msra.mxu0 0
    %5598 = vmatprep.subr.bf16.mxu0 0
    %5599 = vmatpush1.bf16.msra.mxu0 0
    %5600 = vmatprep.subr.bf16.mxu0 %v5499
    %5601 = vmatpush1.bf16.msra.mxu0 %v5496
    %5602 = vmatprep.subr.bf16.mxu0 0
    %5603 = vmatpush2.bf16.msra.mxu0 0
    %5604 = vmatprep.subr.bf16.mxu0 0
    %5605 = vmatpush2.bf16.msra.mxu0 0
    %5606 = vmatprep.subr.bf16.mxu0 0
    %5607 = vmatpush2.bf16.msra.mxu0 0
    %5608 = vmatprep.subr.bf16.mxu0 0
    %5609 = vmatpush2.bf16.msra.mxu0 0
    %5610 = vmatprep.subr.bf16.mxu0 0
    %5611 = vmatpush2.bf16.msra.mxu0 0
    %5612 = vmatprep.subr.bf16.mxu0 0
    %5613 = vmatpush2.bf16.msra.mxu0 0
    %5614 = vmatprep.subr.bf16.mxu0 0
    %5615 = vmatpush2.bf16.msra.mxu0 0
    %5616 = vmatprep.subr.bf16.mxu0 0
    %5617 = vmatpush2.bf16.msra.mxu0 0
    %5618 = vmatprep.mubr.bf16.mxu0 0
    %5619 = vmatmul.mubr.bf16.gmra.mxu0 %v613
    %v5620 = vpop.f32.mrf.mxu0
    %v5621 = vadd.f32 %v5437, %v5620
    %v5622 = vpop.f32.mrf.mxu0
    %v5623 = vadd.f32 %v5439, %v5622
    %v5624 = vpop.f32.mrf.mxu0
    %v5625 = vpop.f32.mrf.mxu0
    %5626 = vdwg.mxu0
    %5627 = vmatprep.subr.bf16.mxu0 0
    %5628 = vmatpush1.bf16.msra.mxu0 0
    %5629 = vmatprep.subr.bf16.mxu0 0
    %5630 = vmatpush1.bf16.msra.mxu0 0
    %5631 = vmatprep.subr.bf16.mxu0 0
    %5632 = vmatpush1.bf16.msra.mxu0 0
    %5633 = vmatprep.subr.bf16.mxu0 0
    %5634 = vmatpush1.bf16.msra.mxu0 0
    %5635 = vmatprep.subr.bf16.mxu0 0
    %5636 = vmatpush1.bf16.msra.mxu0 0
    %5637 = vmatprep.subr.bf16.mxu0 0
    %5638 = vmatpush1.bf16.msra.mxu0 0
    %5639 = vmatprep.subr.bf16.mxu0 0
    %5640 = vmatpush1.bf16.msra.mxu0 0
    %5641 = vmatprep.subr.bf16.mxu0 0
    %5642 = vmatpush1.bf16.msra.mxu0 %v5502
    %5643 = vmatprep.subr.bf16.mxu0 0
    %5644 = vmatpush2.bf16.msra.mxu0 0
    %5645 = vmatprep.subr.bf16.mxu0 0
    %5646 = vmatpush2.bf16.msra.mxu0 0
    %5647 = vmatprep.subr.bf16.mxu0 0
    %5648 = vmatpush2.bf16.msra.mxu0 0
    %5649 = vmatprep.subr.bf16.mxu0 0
    %5650 = vmatpush2.bf16.msra.mxu0 0
    %5651 = vmatprep.subr.bf16.mxu0 0
    %5652 = vmatpush2.bf16.msra.mxu0 0
    %5653 = vmatprep.subr.bf16.mxu0 0
    %5654 = vmatpush2.bf16.msra.mxu0 0
    %5655 = vmatprep.subr.bf16.mxu0 0
    %5656 = vmatpush2.bf16.msra.mxu0 0
    %5657 = vmatprep.subr.bf16.mxu0 0
    %5658 = vmatpush2.bf16.msra.mxu0 0
    %5659 = vmatprep.mubr.bf16.mxu0 0
    %5660 = vmatmul.mubr.bf16.gmra.mxu0 %v613
    %v5661 = vpop.f32.mrf.mxu0
    %v5662 = vadd.f32 %v5478, %v5661
    %v5663 = vpop.f32.mrf.mxu0
    %v5664 = vpop.f32.mrf.mxu0
    %v5665 = vpop.f32.mrf.mxu0
    %5666 = vdwg.mxu0
    %5667 = vrot.lane.b32.xlu0 %v5260, 126
    %v5668 = vpop.permute.xlu0 %5667
    %5669 = vrot.lane.b32.xlu0 %v5261, 126
    %v5670 = vpop.permute.xlu0 %5669
    %5671 = vrot.lane.b32.xlu0 %v5262, 126
    %v5672 = vpop.permute.xlu0 %5671
    %5673 = vrot.lane.b32.xlu0 %v5263, 126
    %v5674 = vpop.permute.xlu0 %5673
    %5675 = vrot.lane.b32.xlu0 %v5264, 126
    %v5676 = vpop.permute.xlu0 %5675
    %5677 = vrot.lane.b32.xlu0 %v5265, 126
    %v5678 = vpop.permute.xlu0 %5677
    %5679 = vrot.lane.b32.xlu0 %v5266, 126
    %v5680 = vpop.permute.xlu0 %5679
    %5681 = vrot.lane.b32.xlu0 %v5267, 126
    %v5682 = vpop.permute.xlu0 %5681
    %v5683 = vsel %vm815, %v5668, %v5670
    %v5684 = vsel %vm815, %v5670, %v5672
    %v5685 = vsel %vm815, %v5672, %v5674
    %v5686 = vsel %vm815, %v5674, %v5676
    %v5687 = vsel %vm815, %v5676, %v5678
    %v5688 = vsel %vm815, %v5678, %v5680
    %v5689 = vsel %vm815, %v5680, %v5682
    %v5691 = vand.u32 %v5683, %v427
    %v5694 = vand.u32 %v5684, %v427
    %v5697 = vand.u32 %v5685, %v427
    %v5700 = vand.u32 %v5686, %v427
    %v5703 = vand.u32 %v5687, %v427
    %v5706 = vand.u32 %v5688, %v427
    %v5709 = vand.u32 %v5689, %v427
    %5711 = vmatprep.subr.bf16.mxu0 0
    %5712 = vmatpush1.bf16.msra.mxu0 0
    %5713 = vmatprep.subr.bf16.mxu0 0
    %5714 = vmatpush1.bf16.msra.mxu0 0
    %5715 = vmatprep.subr.bf16.mxu0 0
    %5716 = vmatpush1.bf16.msra.mxu0 0
    %5717 = vmatprep.subr.bf16.mxu0 0
    %5718 = vmatpush1.bf16.msra.mxu0 0
    %5719 = vmatprep.subr.bf16.mxu0 0
    %5720 = vmatpush1.bf16.msra.mxu0 0
    %5721 = vmatprep.subr.bf16.mxu0 0
    %5722 = vmatpush1.bf16.msra.mxu0 0
    %5723 = vmatprep.subr.bf16.mxu0 0
    %5724 = vmatpush1.bf16.msra.mxu0 0
    %5725 = vmatprep.subr.bf16.mxu0 %v5694
    %5726 = vmatpush1.bf16.msra.mxu0 %v5691
    %5727 = vmatprep.subr.bf16.mxu0 0
    %5728 = vmatpush2.bf16.msra.mxu0 0
    %5729 = vmatprep.subr.bf16.mxu0 0
    %5730 = vmatpush2.bf16.msra.mxu0 0
    %5731 = vmatprep.subr.bf16.mxu0 0
    %5732 = vmatpush2.bf16.msra.mxu0 0
    %5733 = vmatprep.subr.bf16.mxu0 0
    %5734 = vmatpush2.bf16.msra.mxu0 0
    %5735 = vmatprep.subr.bf16.mxu0 0
    %5736 = vmatpush2.bf16.msra.mxu0 0
    %5737 = vmatprep.subr.bf16.mxu0 0
    %5738 = vmatpush2.bf16.msra.mxu0 0
    %5739 = vmatprep.subr.bf16.mxu0 0
    %5740 = vmatpush2.bf16.msra.mxu0 0
    %5741 = vmatprep.subr.bf16.mxu0 0
    %5742 = vmatpush2.bf16.msra.mxu0 0
    %5743 = vmatprep.mubr.bf16.mxu0 0
    %5744 = vmatmul.mubr.bf16.gmra.mxu0 %v824
    %v5745 = vpop.f32.mrf.mxu0
    %v5746 = vadd.f32 0.0, %v5745
    %v5747 = vpop.f32.mrf.mxu0
    %v5748 = vadd.f32 0.0, %v5747
    %v5749 = vpop.f32.mrf.mxu0
    %v5750 = vpop.f32.mrf.mxu0
    %5751 = vdwg.mxu0
    %5752 = vmatprep.subr.bf16.mxu0 0
    %5753 = vmatpush1.bf16.msra.mxu0 0
    %5754 = vmatprep.subr.bf16.mxu0 0
    %5755 = vmatpush1.bf16.msra.mxu0 0
    %5756 = vmatprep.subr.bf16.mxu0 0
    %5757 = vmatpush1.bf16.msra.mxu0 0
    %5758 = vmatprep.subr.bf16.mxu0 0
    %5759 = vmatpush1.bf16.msra.mxu0 0
    %5760 = vmatprep.subr.bf16.mxu0 0
    %5761 = vmatpush1.bf16.msra.mxu0 0
    %5762 = vmatprep.subr.bf16.mxu0 0
    %5763 = vmatpush1.bf16.msra.mxu0 0
    %5764 = vmatprep.subr.bf16.mxu0 0
    %5765 = vmatpush1.bf16.msra.mxu0 0
    %5766 = vmatprep.subr.bf16.mxu0 %v5700
    %5767 = vmatpush1.bf16.msra.mxu0 %v5697
    %5768 = vmatprep.subr.bf16.mxu0 0
    %5769 = vmatpush2.bf16.msra.mxu0 0
    %5770 = vmatprep.subr.bf16.mxu0 0
    %5771 = vmatpush2.bf16.msra.mxu0 0
    %5772 = vmatprep.subr.bf16.mxu0 0
    %5773 = vmatpush2.bf16.msra.mxu0 0
    %5774 = vmatprep.subr.bf16.mxu0 0
    %5775 = vmatpush2.bf16.msra.mxu0 0
    %5776 = vmatprep.subr.bf16.mxu0 0
    %5777 = vmatpush2.bf16.msra.mxu0 0
    %5778 = vmatprep.subr.bf16.mxu0 0
    %5779 = vmatpush2.bf16.msra.mxu0 0
    %5780 = vmatprep.subr.bf16.mxu0 0
    %5781 = vmatpush2.bf16.msra.mxu0 0
    %5782 = vmatprep.subr.bf16.mxu0 0
    %5783 = vmatpush2.bf16.msra.mxu0 0
    %5784 = vmatprep.mubr.bf16.mxu0 0
    %5785 = vmatmul.mubr.bf16.gmra.mxu0 %v824
    %v5786 = vpop.f32.mrf.mxu0
    %v5787 = vadd.f32 0.0, %v5786
    %v5788 = vpop.f32.mrf.mxu0
    %v5789 = vadd.f32 0.0, %v5788
    %v5790 = vpop.f32.mrf.mxu0
    %v5791 = vpop.f32.mrf.mxu0
    %5792 = vdwg.mxu0
    %5793 = vmatprep.subr.bf16.mxu0 0
    %5794 = vmatpush1.bf16.msra.mxu0 0
    %5795 = vmatprep.subr.bf16.mxu0 0
    %5796 = vmatpush1.bf16.msra.mxu0 0
    %5797 = vmatprep.subr.bf16.mxu0 0
    %5798 = vmatpush1.bf16.msra.mxu0 0
    %5799 = vmatprep.subr.bf16.mxu0 0
    %5800 = vmatpush1.bf16.msra.mxu0 0
    %5801 = vmatprep.subr.bf16.mxu0 0
    %5802 = vmatpush1.bf16.msra.mxu0 0
    %5803 = vmatprep.subr.bf16.mxu0 0
    %5804 = vmatpush1.bf16.msra.mxu0 0
    %5805 = vmatprep.subr.bf16.mxu0 0
    %5806 = vmatpush1.bf16.msra.mxu0 0
    %5807 = vmatprep.subr.bf16.mxu0 %v5706
    %5808 = vmatpush1.bf16.msra.mxu0 %v5703
    %5809 = vmatprep.subr.bf16.mxu0 0
    %5810 = vmatpush2.bf16.msra.mxu0 0
    %5811 = vmatprep.subr.bf16.mxu0 0
    %5812 = vmatpush2.bf16.msra.mxu0 0
    %5813 = vmatprep.subr.bf16.mxu0 0
    %5814 = vmatpush2.bf16.msra.mxu0 0
    %5815 = vmatprep.subr.bf16.mxu0 0
    %5816 = vmatpush2.bf16.msra.mxu0 0
    %5817 = vmatprep.subr.bf16.mxu0 0
    %5818 = vmatpush2.bf16.msra.mxu0 0
    %5819 = vmatprep.subr.bf16.mxu0 0
    %5820 = vmatpush2.bf16.msra.mxu0 0
    %5821 = vmatprep.subr.bf16.mxu0 0
    %5822 = vmatpush2.bf16.msra.mxu0 0
    %5823 = vmatprep.subr.bf16.mxu0 0
    %5824 = vmatpush2.bf16.msra.mxu0 0
    %5825 = vmatprep.mubr.bf16.mxu0 0
    %5826 = vmatmul.mubr.bf16.gmra.mxu0 %v824
    %v5827 = vpop.f32.mrf.mxu0
    %v5828 = vadd.f32 0.0, %v5827
    %v5829 = vpop.f32.mrf.mxu0
    %v5830 = vadd.f32 0.0, %v5829
    %v5831 = vpop.f32.mrf.mxu0
    %v5832 = vpop.f32.mrf.mxu0
    %5833 = vdwg.mxu0
    %5834 = vmatprep.subr.bf16.mxu0 0
    %5835 = vmatpush1.bf16.msra.mxu0 0
    %5836 = vmatprep.subr.bf16.mxu0 0
    %5837 = vmatpush1.bf16.msra.mxu0 0
    %5838 = vmatprep.subr.bf16.mxu0 0
    %5839 = vmatpush1.bf16.msra.mxu0 0
    %5840 = vmatprep.subr.bf16.mxu0 0
    %5841 = vmatpush1.bf16.msra.mxu0 0
    %5842 = vmatprep.subr.bf16.mxu0 0
    %5843 = vmatpush1.bf16.msra.mxu0 0
    %5844 = vmatprep.subr.bf16.mxu0 0
    %5845 = vmatpush1.bf16.msra.mxu0 0
    %5846 = vmatprep.subr.bf16.mxu0 0
    %5847 = vmatpush1.bf16.msra.mxu0 0
    %5848 = vmatprep.subr.bf16.mxu0 0
    %5849 = vmatpush1.bf16.msra.mxu0 %v5709
    %5850 = vmatprep.subr.bf16.mxu0 0
    %5851 = vmatpush2.bf16.msra.mxu0 0
    %5852 = vmatprep.subr.bf16.mxu0 0
    %5853 = vmatpush2.bf16.msra.mxu0 0
    %5854 = vmatprep.subr.bf16.mxu0 0
    %5855 = vmatpush2.bf16.msra.mxu0 0
    %5856 = vmatprep.subr.bf16.mxu0 0
    %5857 = vmatpush2.bf16.msra.mxu0 0
    %5858 = vmatprep.subr.bf16.mxu0 0
    %5859 = vmatpush2.bf16.msra.mxu0 0
    %5860 = vmatprep.subr.bf16.mxu0 0
    %5861 = vmatpush2.bf16.msra.mxu0 0
    %5862 = vmatprep.subr.bf16.mxu0 0
    %5863 = vmatpush2.bf16.msra.mxu0 0
    %5864 = vmatprep.subr.bf16.mxu0 0
    %5865 = vmatpush2.bf16.msra.mxu0 0
    %5866 = vmatprep.mubr.bf16.mxu0 0
    %5867 = vmatmul.mubr.bf16.gmra.mxu0 %v824
    %v5868 = vpop.f32.mrf.mxu0
    %v5869 = vadd.f32 0.0, %v5868
    %v5870 = vpop.f32.mrf.mxu0
    %v5871 = vpop.f32.mrf.mxu0
    %v5872 = vpop.f32.mrf.mxu0
    %5873 = vdwg.mxu0
    %v5874 = vadd.f32 %v5539, %v5746
    %v5875 = vadd.f32 %v5541, %v5748
    %v5876 = vadd.f32 %v5580, %v5787
    %v5877 = vadd.f32 %v5582, %v5789
    %v5878 = vadd.f32 %v5621, %v5828
    %v5879 = vadd.f32 %v5623, %v5830
    %v5880 = vadd.f32 %v5662, %v5869
    %5881 = vrot.lane.b32.xlu0 %v5260, 125
    %v5882 = vpop.permute.xlu0 %5881
    %5883 = vrot.lane.b32.xlu0 %v5261, 125
    %v5884 = vpop.permute.xlu0 %5883
    %5885 = vrot.lane.b32.xlu0 %v5262, 125
    %v5886 = vpop.permute.xlu0 %5885
    %5887 = vrot.lane.b32.xlu0 %v5263, 125
    %v5888 = vpop.permute.xlu0 %5887
    %5889 = vrot.lane.b32.xlu0 %v5264, 125
    %v5890 = vpop.permute.xlu0 %5889
    %5891 = vrot.lane.b32.xlu0 %v5265, 125
    %v5892 = vpop.permute.xlu0 %5891
    %5893 = vrot.lane.b32.xlu0 %v5266, 125
    %v5894 = vpop.permute.xlu0 %5893
    %5895 = vrot.lane.b32.xlu0 %v5267, 125
    %v5896 = vpop.permute.xlu0 %5895
    %v5897 = vsel %vm1033, %v5882, %v5884
    %v5898 = vsel %vm1033, %v5884, %v5886
    %v5899 = vsel %vm1033, %v5886, %v5888
    %v5900 = vsel %vm1033, %v5888, %v5890
    %v5901 = vsel %vm1033, %v5890, %v5892
    %v5902 = vsel %vm1033, %v5892, %v5894
    %v5903 = vsel %vm1033, %v5894, %v5896
    %v5905 = vand.u32 %v5897, %v427
    %v5908 = vand.u32 %v5898, %v427
    %v5911 = vand.u32 %v5899, %v427
    %v5914 = vand.u32 %v5900, %v427
    %v5917 = vand.u32 %v5901, %v427
    %v5920 = vand.u32 %v5902, %v427
    %v5923 = vand.u32 %v5903, %v427
    %5925 = vmatprep.subr.bf16.mxu0 0
    %5926 = vmatpush1.bf16.msra.mxu0 0
    %5927 = vmatprep.subr.bf16.mxu0 0
    %5928 = vmatpush1.bf16.msra.mxu0 0
    %5929 = vmatprep.subr.bf16.mxu0 0
    %5930 = vmatpush1.bf16.msra.mxu0 0
    %5931 = vmatprep.subr.bf16.mxu0 0
    %5932 = vmatpush1.bf16.msra.mxu0 0
    %5933 = vmatprep.subr.bf16.mxu0 0
    %5934 = vmatpush1.bf16.msra.mxu0 0
    %5935 = vmatprep.subr.bf16.mxu0 0
    %5936 = vmatpush1.bf16.msra.mxu0 0
    %5937 = vmatprep.subr.bf16.mxu0 0
    %5938 = vmatpush1.bf16.msra.mxu0 0
    %5939 = vmatprep.subr.bf16.mxu0 %v5908
    %5940 = vmatpush1.bf16.msra.mxu0 %v5905
    %5941 = vmatprep.subr.bf16.mxu0 0
    %5942 = vmatpush2.bf16.msra.mxu0 0
    %5943 = vmatprep.subr.bf16.mxu0 0
    %5944 = vmatpush2.bf16.msra.mxu0 0
    %5945 = vmatprep.subr.bf16.mxu0 0
    %5946 = vmatpush2.bf16.msra.mxu0 0
    %5947 = vmatprep.subr.bf16.mxu0 0
    %5948 = vmatpush2.bf16.msra.mxu0 0
    %5949 = vmatprep.subr.bf16.mxu0 0
    %5950 = vmatpush2.bf16.msra.mxu0 0
    %5951 = vmatprep.subr.bf16.mxu0 0
    %5952 = vmatpush2.bf16.msra.mxu0 0
    %5953 = vmatprep.subr.bf16.mxu0 0
    %5954 = vmatpush2.bf16.msra.mxu0 0
    %5955 = vmatprep.subr.bf16.mxu0 0
    %5956 = vmatpush2.bf16.msra.mxu0 0
    %5957 = vmatprep.mubr.bf16.mxu0 0
    %5958 = vmatmul.mubr.bf16.gmra.mxu0 %v1042
    %v5959 = vpop.f32.mrf.mxu0
    %v5960 = vadd.f32 0.0, %v5959
    %v5961 = vpop.f32.mrf.mxu0
    %v5962 = vadd.f32 0.0, %v5961
    %v5963 = vpop.f32.mrf.mxu0
    %v5964 = vpop.f32.mrf.mxu0
    %5965 = vdwg.mxu0
    %5966 = vmatprep.subr.bf16.mxu0 0
    %5967 = vmatpush1.bf16.msra.mxu0 0
    %5968 = vmatprep.subr.bf16.mxu0 0
    %5969 = vmatpush1.bf16.msra.mxu0 0
    %5970 = vmatprep.subr.bf16.mxu0 0
    %5971 = vmatpush1.bf16.msra.mxu0 0
    %5972 = vmatprep.subr.bf16.mxu0 0
    %5973 = vmatpush1.bf16.msra.mxu0 0
    %5974 = vmatprep.subr.bf16.mxu0 0
    %5975 = vmatpush1.bf16.msra.mxu0 0
    %5976 = vmatprep.subr.bf16.mxu0 0
    %5977 = vmatpush1.bf16.msra.mxu0 0
    %5978 = vmatprep.subr.bf16.mxu0 0
    %5979 = vmatpush1.bf16.msra.mxu0 0
    %5980 = vmatprep.subr.bf16.mxu0 %v5914
    %5981 = vmatpush1.bf16.msra.mxu0 %v5911
    %5982 = vmatprep.subr.bf16.mxu0 0
    %5983 = vmatpush2.bf16.msra.mxu0 0
    %5984 = vmatprep.subr.bf16.mxu0 0
    %5985 = vmatpush2.bf16.msra.mxu0 0
    %5986 = vmatprep.subr.bf16.mxu0 0
    %5987 = vmatpush2.bf16.msra.mxu0 0
    %5988 = vmatprep.subr.bf16.mxu0 0
    %5989 = vmatpush2.bf16.msra.mxu0 0
    %5990 = vmatprep.subr.bf16.mxu0 0
    %5991 = vmatpush2.bf16.msra.mxu0 0
    %5992 = vmatprep.subr.bf16.mxu0 0
    %5993 = vmatpush2.bf16.msra.mxu0 0
    %5994 = vmatprep.subr.bf16.mxu0 0
    %5995 = vmatpush2.bf16.msra.mxu0 0
    %5996 = vmatprep.subr.bf16.mxu0 0
    %5997 = vmatpush2.bf16.msra.mxu0 0
    %5998 = vmatprep.mubr.bf16.mxu0 0
    %5999 = vmatmul.mubr.bf16.gmra.mxu0 %v1042
    %v6000 = vpop.f32.mrf.mxu0
    %v6001 = vadd.f32 0.0, %v6000
    %v6002 = vpop.f32.mrf.mxu0
    %v6003 = vadd.f32 0.0, %v6002
    %v6004 = vpop.f32.mrf.mxu0
    %v6005 = vpop.f32.mrf.mxu0
    %6006 = vdwg.mxu0
    %6007 = vmatprep.subr.bf16.mxu0 0
    %6008 = vmatpush1.bf16.msra.mxu0 0
    %6009 = vmatprep.subr.bf16.mxu0 0
    %6010 = vmatpush1.bf16.msra.mxu0 0
    %6011 = vmatprep.subr.bf16.mxu0 0
    %6012 = vmatpush1.bf16.msra.mxu0 0
    %6013 = vmatprep.subr.bf16.mxu0 0
    %6014 = vmatpush1.bf16.msra.mxu0 0
    %6015 = vmatprep.subr.bf16.mxu0 0
    %6016 = vmatpush1.bf16.msra.mxu0 0
    %6017 = vmatprep.subr.bf16.mxu0 0
    %6018 = vmatpush1.bf16.msra.mxu0 0
    %6019 = vmatprep.subr.bf16.mxu0 0
    %6020 = vmatpush1.bf16.msra.mxu0 0
    %6021 = vmatprep.subr.bf16.mxu0 %v5920
    %6022 = vmatpush1.bf16.msra.mxu0 %v5917
    %6023 = vmatprep.subr.bf16.mxu0 0
    %6024 = vmatpush2.bf16.msra.mxu0 0
    %6025 = vmatprep.subr.bf16.mxu0 0
    %6026 = vmatpush2.bf16.msra.mxu0 0
    %6027 = vmatprep.subr.bf16.mxu0 0
    %6028 = vmatpush2.bf16.msra.mxu0 0
    %6029 = vmatprep.subr.bf16.mxu0 0
    %6030 = vmatpush2.bf16.msra.mxu0 0
    %6031 = vmatprep.subr.bf16.mxu0 0
    %6032 = vmatpush2.bf16.msra.mxu0 0
    %6033 = vmatprep.subr.bf16.mxu0 0
    %6034 = vmatpush2.bf16.msra.mxu0 0
    %6035 = vmatprep.subr.bf16.mxu0 0
    %6036 = vmatpush2.bf16.msra.mxu0 0
    %6037 = vmatprep.subr.bf16.mxu0 0
    %6038 = vmatpush2.bf16.msra.mxu0 0
    %6039 = vmatprep.mubr.bf16.mxu0 0
    %6040 = vmatmul.mubr.bf16.gmra.mxu0 %v1042
    %v6041 = vpop.f32.mrf.mxu0
    %v6042 = vadd.f32 0.0, %v6041
    %v6043 = vpop.f32.mrf.mxu0
    %v6044 = vadd.f32 0.0, %v6043
    %v6045 = vpop.f32.mrf.mxu0
    %v6046 = vpop.f32.mrf.mxu0
    %6047 = vdwg.mxu0
    %6048 = vmatprep.subr.bf16.mxu0 0
    %6049 = vmatpush1.bf16.msra.mxu0 0
    %6050 = vmatprep.subr.bf16.mxu0 0
    %6051 = vmatpush1.bf16.msra.mxu0 0
    %6052 = vmatprep.subr.bf16.mxu0 0
    %6053 = vmatpush1.bf16.msra.mxu0 0
    %6054 = vmatprep.subr.bf16.mxu0 0
    %6055 = vmatpush1.bf16.msra.mxu0 0
    %6056 = vmatprep.subr.bf16.mxu0 0
    %6057 = vmatpush1.bf16.msra.mxu0 0
    %6058 = vmatprep.subr.bf16.mxu0 0
    %6059 = vmatpush1.bf16.msra.mxu0 0
    %6060 = vmatprep.subr.bf16.mxu0 0
    %6061 = vmatpush1.bf16.msra.mxu0 0
    %6062 = vmatprep.subr.bf16.mxu0 0
    %6063 = vmatpush1.bf16.msra.mxu0 %v5923
    %6064 = vmatprep.subr.bf16.mxu0 0
    %6065 = vmatpush2.bf16.msra.mxu0 0
    %6066 = vmatprep.subr.bf16.mxu0 0
    %6067 = vmatpush2.bf16.msra.mxu0 0
    %6068 = vmatprep.subr.bf16.mxu0 0
    %6069 = vmatpush2.bf16.msra.mxu0 0
    %6070 = vmatprep.subr.bf16.mxu0 0
    %6071 = vmatpush2.bf16.msra.mxu0 0
    %6072 = vmatprep.subr.bf16.mxu0 0
    %6073 = vmatpush2.bf16.msra.mxu0 0
    %6074 = vmatprep.subr.bf16.mxu0 0
    %6075 = vmatpush2.bf16.msra.mxu0 0
    %6076 = vmatprep.subr.bf16.mxu0 0
    %6077 = vmatpush2.bf16.msra.mxu0 0
    %6078 = vmatprep.subr.bf16.mxu0 0
    %6079 = vmatpush2.bf16.msra.mxu0 0
    %6080 = vmatprep.mubr.bf16.mxu0 0
    %6081 = vmatmul.mubr.bf16.gmra.mxu0 %v1042
    %v6082 = vpop.f32.mrf.mxu0
    %v6083 = vadd.f32 0.0, %v6082
    %v6084 = vpop.f32.mrf.mxu0
    %v6085 = vpop.f32.mrf.mxu0
    %v6086 = vpop.f32.mrf.mxu0
    %6087 = vdwg.mxu0
    %v6088 = vadd.f32 %v5874, %v5960
    %v6089 = vadd.f32 %v5875, %v5962
    %v6090 = vadd.f32 %v5876, %v6001
    %v6091 = vadd.f32 %v5877, %v6003
    %v6092 = vadd.f32 %v5878, %v6042
    %v6093 = vadd.f32 %v5879, %v6044
    %v6094 = vadd.f32 %v5880, %v6083
    %6095 = vrot.lane.b32.xlu0 %v5260, 124
    %v6096 = vpop.permute.xlu0 %6095
    %6097 = vrot.lane.b32.xlu0 %v5261, 124
    %v6098 = vpop.permute.xlu0 %6097
    %6099 = vrot.lane.b32.xlu0 %v5262, 124
    %v6100 = vpop.permute.xlu0 %6099
    %6101 = vrot.lane.b32.xlu0 %v5263, 124
    %v6102 = vpop.permute.xlu0 %6101
    %6103 = vrot.lane.b32.xlu0 %v5264, 124
    %v6104 = vpop.permute.xlu0 %6103
    %6105 = vrot.lane.b32.xlu0 %v5265, 124
    %v6106 = vpop.permute.xlu0 %6105
    %6107 = vrot.lane.b32.xlu0 %v5266, 124
    %v6108 = vpop.permute.xlu0 %6107
    %6109 = vrot.lane.b32.xlu0 %v5267, 124
    %v6110 = vpop.permute.xlu0 %6109
    %v6111 = vsel %vm1251, %v6096, %v6098
    %v6112 = vsel %vm1251, %v6098, %v6100
    %v6113 = vsel %vm1251, %v6100, %v6102
    %v6114 = vsel %vm1251, %v6102, %v6104
    %v6115 = vsel %vm1251, %v6104, %v6106
    %v6116 = vsel %vm1251, %v6106, %v6108
    %v6117 = vsel %vm1251, %v6108, %v6110
    %v6119 = vand.u32 %v6111, %v427
    %v6122 = vand.u32 %v6112, %v427
    %v6125 = vand.u32 %v6113, %v427
    %v6128 = vand.u32 %v6114, %v427
    %v6131 = vand.u32 %v6115, %v427
    %v6134 = vand.u32 %v6116, %v427
    %v6137 = vand.u32 %v6117, %v427
    %6139 = vmatprep.subr.bf16.mxu0 0
    %6140 = vmatpush1.bf16.msra.mxu0 0
    %6141 = vmatprep.subr.bf16.mxu0 0
    %6142 = vmatpush1.bf16.msra.mxu0 0
    %6143 = vmatprep.subr.bf16.mxu0 0
    %6144 = vmatpush1.bf16.msra.mxu0 0
    %6145 = vmatprep.subr.bf16.mxu0 0
    %6146 = vmatpush1.bf16.msra.mxu0 0
    %6147 = vmatprep.subr.bf16.mxu0 0
    %6148 = vmatpush1.bf16.msra.mxu0 0
    %6149 = vmatprep.subr.bf16.mxu0 0
    %6150 = vmatpush1.bf16.msra.mxu0 0
    %6151 = vmatprep.subr.bf16.mxu0 0
    %6152 = vmatpush1.bf16.msra.mxu0 0
    %6153 = vmatprep.subr.bf16.mxu0 %v6122
    %6154 = vmatpush1.bf16.msra.mxu0 %v6119
    %6155 = vmatprep.subr.bf16.mxu0 0
    %6156 = vmatpush2.bf16.msra.mxu0 0
    %6157 = vmatprep.subr.bf16.mxu0 0
    %6158 = vmatpush2.bf16.msra.mxu0 0
    %6159 = vmatprep.subr.bf16.mxu0 0
    %6160 = vmatpush2.bf16.msra.mxu0 0
    %6161 = vmatprep.subr.bf16.mxu0 0
    %6162 = vmatpush2.bf16.msra.mxu0 0
    %6163 = vmatprep.subr.bf16.mxu0 0
    %6164 = vmatpush2.bf16.msra.mxu0 0
    %6165 = vmatprep.subr.bf16.mxu0 0
    %6166 = vmatpush2.bf16.msra.mxu0 0
    %6167 = vmatprep.subr.bf16.mxu0 0
    %6168 = vmatpush2.bf16.msra.mxu0 0
    %6169 = vmatprep.subr.bf16.mxu0 0
    %6170 = vmatpush2.bf16.msra.mxu0 0
    %6171 = vmatprep.mubr.bf16.mxu0 0
    %6172 = vmatmul.mubr.bf16.gmra.mxu0 %v1260
    %v6173 = vpop.f32.mrf.mxu0
    %v6174 = vadd.f32 0.0, %v6173
    %v6175 = vpop.f32.mrf.mxu0
    %v6176 = vadd.f32 0.0, %v6175
    %v6177 = vpop.f32.mrf.mxu0
    %v6178 = vpop.f32.mrf.mxu0
    %6179 = vdwg.mxu0
    %6180 = vmatprep.subr.bf16.mxu0 0
    %6181 = vmatpush1.bf16.msra.mxu0 0
    %6182 = vmatprep.subr.bf16.mxu0 0
    %6183 = vmatpush1.bf16.msra.mxu0 0
    %6184 = vmatprep.subr.bf16.mxu0 0
    %6185 = vmatpush1.bf16.msra.mxu0 0
    %6186 = vmatprep.subr.bf16.mxu0 0
    %6187 = vmatpush1.bf16.msra.mxu0 0
    %6188 = vmatprep.subr.bf16.mxu0 0
    %6189 = vmatpush1.bf16.msra.mxu0 0
    %6190 = vmatprep.subr.bf16.mxu0 0
    %6191 = vmatpush1.bf16.msra.mxu0 0
    %6192 = vmatprep.subr.bf16.mxu0 0
    %6193 = vmatpush1.bf16.msra.mxu0 0
    %6194 = vmatprep.subr.bf16.mxu0 %v6128
    %6195 = vmatpush1.bf16.msra.mxu0 %v6125
    %6196 = vmatprep.subr.bf16.mxu0 0
    %6197 = vmatpush2.bf16.msra.mxu0 0
    %6198 = vmatprep.subr.bf16.mxu0 0
    %6199 = vmatpush2.bf16.msra.mxu0 0
    %6200 = vmatprep.subr.bf16.mxu0 0
    %6201 = vmatpush2.bf16.msra.mxu0 0
    %6202 = vmatprep.subr.bf16.mxu0 0
    %6203 = vmatpush2.bf16.msra.mxu0 0
    %6204 = vmatprep.subr.bf16.mxu0 0
    %6205 = vmatpush2.bf16.msra.mxu0 0
    %6206 = vmatprep.subr.bf16.mxu0 0
    %6207 = vmatpush2.bf16.msra.mxu0 0
    %6208 = vmatprep.subr.bf16.mxu0 0
    %6209 = vmatpush2.bf16.msra.mxu0 0
    %6210 = vmatprep.subr.bf16.mxu0 0
    %6211 = vmatpush2.bf16.msra.mxu0 0
    %6212 = vmatprep.mubr.bf16.mxu0 0
    %6213 = vmatmul.mubr.bf16.gmra.mxu0 %v1260
    %v6214 = vpop.f32.mrf.mxu0
    %v6215 = vadd.f32 0.0, %v6214
    %v6216 = vpop.f32.mrf.mxu0
    %v6217 = vadd.f32 0.0, %v6216
    %v6218 = vpop.f32.mrf.mxu0
    %v6219 = vpop.f32.mrf.mxu0
    %6220 = vdwg.mxu0
    %6221 = vmatprep.subr.bf16.mxu0 0
    %6222 = vmatpush1.bf16.msra.mxu0 0
    %6223 = vmatprep.subr.bf16.mxu0 0
    %6224 = vmatpush1.bf16.msra.mxu0 0
    %6225 = vmatprep.subr.bf16.mxu0 0
    %6226 = vmatpush1.bf16.msra.mxu0 0
    %6227 = vmatprep.subr.bf16.mxu0 0
    %6228 = vmatpush1.bf16.msra.mxu0 0
    %6229 = vmatprep.subr.bf16.mxu0 0
    %6230 = vmatpush1.bf16.msra.mxu0 0
    %6231 = vmatprep.subr.bf16.mxu0 0
    %6232 = vmatpush1.bf16.msra.mxu0 0
    %6233 = vmatprep.subr.bf16.mxu0 0
    %6234 = vmatpush1.bf16.msra.mxu0 0
    %6235 = vmatprep.subr.bf16.mxu0 %v6134
    %6236 = vmatpush1.bf16.msra.mxu0 %v6131
    %6237 = vmatprep.subr.bf16.mxu0 0
    %6238 = vmatpush2.bf16.msra.mxu0 0
    %6239 = vmatprep.subr.bf16.mxu0 0
    %6240 = vmatpush2.bf16.msra.mxu0 0
    %6241 = vmatprep.subr.bf16.mxu0 0
    %6242 = vmatpush2.bf16.msra.mxu0 0
    %6243 = vmatprep.subr.bf16.mxu0 0
    %6244 = vmatpush2.bf16.msra.mxu0 0
    %6245 = vmatprep.subr.bf16.mxu0 0
    %6246 = vmatpush2.bf16.msra.mxu0 0
    %6247 = vmatprep.subr.bf16.mxu0 0
    %6248 = vmatpush2.bf16.msra.mxu0 0
    %6249 = vmatprep.subr.bf16.mxu0 0
    %6250 = vmatpush2.bf16.msra.mxu0 0
    %6251 = vmatprep.subr.bf16.mxu0 0
    %6252 = vmatpush2.bf16.msra.mxu0 0
    %6253 = vmatprep.mubr.bf16.mxu0 0
    %6254 = vmatmul.mubr.bf16.gmra.mxu0 %v1260
    %v6255 = vpop.f32.mrf.mxu0
    %v6256 = vadd.f32 0.0, %v6255
    %v6257 = vpop.f32.mrf.mxu0
    %v6258 = vadd.f32 0.0, %v6257
    %v6259 = vpop.f32.mrf.mxu0
    %v6260 = vpop.f32.mrf.mxu0
    %6261 = vdwg.mxu0
    %6262 = vmatprep.subr.bf16.mxu0 0
    %6263 = vmatpush1.bf16.msra.mxu0 0
    %6264 = vmatprep.subr.bf16.mxu0 0
    %6265 = vmatpush1.bf16.msra.mxu0 0
    %6266 = vmatprep.subr.bf16.mxu0 0
    %6267 = vmatpush1.bf16.msra.mxu0 0
    %6268 = vmatprep.subr.bf16.mxu0 0
    %6269 = vmatpush1.bf16.msra.mxu0 0
    %6270 = vmatprep.subr.bf16.mxu0 0
    %6271 = vmatpush1.bf16.msra.mxu0 0
    %6272 = vmatprep.subr.bf16.mxu0 0
    %6273 = vmatpush1.bf16.msra.mxu0 0
    %6274 = vmatprep.subr.bf16.mxu0 0
    %6275 = vmatpush1.bf16.msra.mxu0 0
    %6276 = vmatprep.subr.bf16.mxu0 0
    %6277 = vmatpush1.bf16.msra.mxu0 %v6137
    %6278 = vmatprep.subr.bf16.mxu0 0
    %6279 = vmatpush2.bf16.msra.mxu0 0
    %6280 = vmatprep.subr.bf16.mxu0 0
    %6281 = vmatpush2.bf16.msra.mxu0 0
    %6282 = vmatprep.subr.bf16.mxu0 0
    %6283 = vmatpush2.bf16.msra.mxu0 0
    %6284 = vmatprep.subr.bf16.mxu0 0
    %6285 = vmatpush2.bf16.msra.mxu0 0
    %6286 = vmatprep.subr.bf16.mxu0 0
    %6287 = vmatpush2.bf16.msra.mxu0 0
    %6288 = vmatprep.subr.bf16.mxu0 0
    %6289 = vmatpush2.bf16.msra.mxu0 0
    %6290 = vmatprep.subr.bf16.mxu0 0
    %6291 = vmatpush2.bf16.msra.mxu0 0
    %6292 = vmatprep.subr.bf16.mxu0 0
    %6293 = vmatpush2.bf16.msra.mxu0 0
    %6294 = vmatprep.mubr.bf16.mxu0 0
    %6295 = vmatmul.mubr.bf16.gmra.mxu0 %v1260
    %v6296 = vpop.f32.mrf.mxu0
    %v6297 = vadd.f32 0.0, %v6296
    %v6298 = vpop.f32.mrf.mxu0
    %v6299 = vpop.f32.mrf.mxu0
    %v6300 = vpop.f32.mrf.mxu0
    %6301 = vdwg.mxu0
    %v6302 = vadd.f32 %v6088, %v6174
    %v6303 = vadd.f32 %v6089, %v6176
    %v6304 = vadd.f32 %v6090, %v6215
    %v6305 = vadd.f32 %v6091, %v6217
    %v6306 = vadd.f32 %v6092, %v6256
    %v6307 = vadd.f32 %v6093, %v6258
    %v6308 = vadd.f32 %v6094, %v6297
    %v6309 = vadd.f32 %v6302, %v1456
    %v6310 = vadd.f32 %v6303, %v1456
    %v6311 = vadd.f32 %v6304, %v1456
    %v6312 = vadd.f32 %v6305, %v1456
    %v6313 = vadd.f32 %v6306, %v1456
    %v6314 = vadd.f32 %v6307, %v1456
    %v6315 = vadd.f32 %v6308, %v1456
    %v6316 = vmax.f32 %v6309, 0.0
    %v6317 = vmax.f32 %v6310, 0.0
    %v6318 = vmax.f32 %v6311, 0.0
    %v6319 = vmax.f32 %v6312, 0.0
    %v6320 = vmax.f32 %v6313, 0.0
    %v6321 = vmax.f32 %v6314, 0.0
    %v6322 = vmax.f32 %v6315, 0.0
    %6330 = vrot.lane.b32.xlu0 %v6316, 127
    %v6331 = vpop.permute.xlu0 %6330
    %6332 = vrot.lane.b32.xlu0 %v6317, 127
    %v6333 = vpop.permute.xlu0 %6332
    %6334 = vrot.lane.b32.xlu0 %v6318, 127
    %v6335 = vpop.permute.xlu0 %6334
    %6336 = vrot.lane.b32.xlu0 %v6319, 127
    %v6337 = vpop.permute.xlu0 %6336
    %6338 = vrot.lane.b32.xlu0 %v6320, 127
    %v6339 = vpop.permute.xlu0 %6338
    %6340 = vrot.lane.b32.xlu0 %v6321, 127
    %v6341 = vpop.permute.xlu0 %6340
    %6342 = vrot.lane.b32.xlu0 %v6322, 127
    %v6343 = vpop.permute.xlu0 %6342
    %v6344 = vsel %vm1493, %v6331, %v6333
    %v6345 = vsel %vm1493, %v6333, %v6335
    %v6346 = vsel %vm1493, %v6335, %v6337
    %v6347 = vsel %vm1493, %v6337, %v6339
    %v6348 = vsel %vm1493, %v6339, %v6341
    %v6349 = vsel %vm1493, %v6341, %v6343
    %v6357 = vmax.f32 %v6316, %v6344
    %v6358 = vmax.f32 %v6317, %v6345
    %v6359 = vmax.f32 %v6318, %v6346
    %v6360 = vmax.f32 %v6319, %v6347
    %v6361 = vmax.f32 %v6320, %v6348
    %v6362 = vmax.f32 %v6321, %v6349
    %v6363 = vmax.f32 %v6322, %v6343
    %6371 = vrot.lane.b32.xlu0 %v6357, 96
    %v6372 = vpop.permute.xlu0 %6371
    %6373 = vrot.lane.b32.xlu0 %v6358, 96
    %v6374 = vpop.permute.xlu0 %6373
    %6375 = vrot.lane.b32.xlu0 %v6359, 96
    %v6376 = vpop.permute.xlu0 %6375
    %6377 = vrot.lane.b32.xlu0 %v6360, 96
    %v6378 = vpop.permute.xlu0 %6377
    %6379 = vrot.lane.b32.xlu0 %v6361, 96
    %v6380 = vpop.permute.xlu0 %6379
    %6381 = vrot.lane.b32.xlu0 %v6362, 96
    %v6382 = vpop.permute.xlu0 %6381
    %6383 = vrot.lane.b32.xlu0 %v6363, 96
    %v6384 = vpop.permute.xlu0 %6383
    %v6385 = vsel %vm1535, %v6372, %v6374
    %v6386 = vsel %vm1535, %v6374, %v6376
    %v6387 = vsel %vm1535, %v6376, %v6378
    %v6388 = vsel %vm1535, %v6378, %v6380
    %v6389 = vsel %vm1535, %v6380, %v6382
    %v6390 = vsel %vm1535, %v6382, %v6384
    %v6398 = vmax.f32 %v6357, %v6385
    %v6399 = vmax.f32 %v6358, %v6386
    %v6400 = vmax.f32 %v6359, %v6387
    %v6401 = vmax.f32 %v6360, %v6388
    %v6402 = vmax.f32 %v6361, %v6389
    %v6403 = vmax.f32 %v6362, %v6390
    %v6404 = vmax.f32 %v6363, %v6384
    %v6405 = vpack.c.bf16 %v6398, %v6398
    %v6406 = vpack.c.bf16 %v6399, %v6399
    %v6407 = vpack.c.bf16 %v6400, %v6400
    %v6408 = vpack.c.bf16 %v6401, %v6401
    %v6409 = vpack.c.bf16 %v6402, %v6402
    %v6410 = vpack.c.bf16 %v6403, %v6403
    %v6411 = vpack.c.bf16 %v6404, %v6404
    %v6413 = vsel %vm2101, %v6411, 0
    %6415 = vmatprep.subr.bf16.mxu0 %v1902
    %6416 = vmatpush1.bf16.msra.mxu0 %v1901
    %6417 = vmatprep.subr.bf16.mxu0 %v1900
    %6418 = vmatpush1.bf16.msra.mxu0 %v1899
    %6419 = vmatprep.subr.bf16.mxu0 %v1898
    %6420 = vmatpush1.bf16.msra.mxu0 %v1897
    %6421 = vmatprep.subr.bf16.mxu0 %v1896
    %6422 = vmatpush1.bf16.msra.mxu0 %v1895
    %6423 = vmatprep.subr.bf16.mxu0 %v1894
    %6424 = vmatpush1.bf16.msra.mxu0 %v1893
    %6425 = vmatprep.subr.bf16.mxu0 %v1892
    %6426 = vmatpush1.bf16.msra.mxu0 %v1891
    %6427 = vmatprep.subr.bf16.mxu0 %v1890
    %6428 = vmatpush1.bf16.msra.mxu0 %v1889
    %6429 = vmatprep.subr.bf16.mxu0 %v1888
    %6430 = vmatpush1.bf16.msra.mxu0 %v1887
    %6431 = vmatprep.subr.bf16.mxu0 %v1918
    %6432 = vmatpush2.bf16.msra.mxu0 %v1917
    %6433 = vmatprep.subr.bf16.mxu0 %v1916
    %6434 = vmatpush2.bf16.msra.mxu0 %v1915
    %6435 = vmatprep.subr.bf16.mxu0 %v1914
    %6436 = vmatpush2.bf16.msra.mxu0 %v1913
    %6437 = vmatprep.subr.bf16.mxu0 %v1912
    %6438 = vmatpush2.bf16.msra.mxu0 %v1911
    %6439 = vmatprep.subr.bf16.mxu0 %v1910
    %6440 = vmatpush2.bf16.msra.mxu0 %v1909
    %6441 = vmatprep.subr.bf16.mxu0 %v1908
    %6442 = vmatpush2.bf16.msra.mxu0 %v1907
    %6443 = vmatprep.subr.bf16.mxu0 %v1906
    %6444 = vmatpush2.bf16.msra.mxu0 %v1905
    %6445 = vmatprep.subr.bf16.mxu0 %v1904
    %6446 = vmatpush2.bf16.msra.mxu0 %v1903
    %6447 = vmatprep.mubr.bf16.mxu0 %v6406
    %6448 = vmatmul.mubr.bf16.gmra.mxu0 %v6405
    %v6449 = vpop.f32.mrf.mxu0
    %v6450 = vadd.f32 0.0, %v6449
    %v6451 = vpop.f32.mrf.mxu0
    %v6452 = vadd.f32 0.0, %v6451
    %v6453 = vpop.f32.mrf.mxu0
    %v6454 = vpop.f32.mrf.mxu0
    %6455 = vdwg.mxu0
    %6456 = vmatprep.subr.bf16.mxu0 %v1934
    %6457 = vmatpush1.bf16.msra.mxu0 %v1933
    %6458 = vmatprep.subr.bf16.mxu0 %v1932
    %6459 = vmatpush1.bf16.msra.mxu0 %v1931
    %6460 = vmatprep.subr.bf16.mxu0 %v1930
    %6461 = vmatpush1.bf16.msra.mxu0 %v1929
    %6462 = vmatprep.subr.bf16.mxu0 %v1928
    %6463 = vmatpush1.bf16.msra.mxu0 %v1927
    %6464 = vmatprep.subr.bf16.mxu0 %v1926
    %6465 = vmatpush1.bf16.msra.mxu0 %v1925
    %6466 = vmatprep.subr.bf16.mxu0 %v1924
    %6467 = vmatpush1.bf16.msra.mxu0 %v1923
    %6468 = vmatprep.subr.bf16.mxu0 %v1922
    %6469 = vmatpush1.bf16.msra.mxu0 %v1921
    %6470 = vmatprep.subr.bf16.mxu0 %v1920
    %6471 = vmatpush1.bf16.msra.mxu0 %v1919
    %6472 = vmatprep.subr.bf16.mxu0 %v1950
    %6473 = vmatpush2.bf16.msra.mxu0 %v1949
    %6474 = vmatprep.subr.bf16.mxu0 %v1948
    %6475 = vmatpush2.bf16.msra.mxu0 %v1947
    %6476 = vmatprep.subr.bf16.mxu0 %v1946
    %6477 = vmatpush2.bf16.msra.mxu0 %v1945
    %6478 = vmatprep.subr.bf16.mxu0 %v1944
    %6479 = vmatpush2.bf16.msra.mxu0 %v1943
    %6480 = vmatprep.subr.bf16.mxu0 %v1942
    %6481 = vmatpush2.bf16.msra.mxu0 %v1941
    %6482 = vmatprep.subr.bf16.mxu0 %v1940
    %6483 = vmatpush2.bf16.msra.mxu0 %v1939
    %6484 = vmatprep.subr.bf16.mxu0 %v1938
    %6485 = vmatpush2.bf16.msra.mxu0 %v1937
    %6486 = vmatprep.subr.bf16.mxu0 %v1936
    %6487 = vmatpush2.bf16.msra.mxu0 %v1935
    %6488 = vmatprep.mubr.bf16.mxu0 %v6408
    %6489 = vmatmul.mubr.bf16.gmra.mxu0 %v6407
    %v6490 = vpop.f32.mrf.mxu0
    %v6491 = vadd.f32 %v6450, %v6490
    %v6492 = vpop.f32.mrf.mxu0
    %v6493 = vadd.f32 %v6452, %v6492
    %v6494 = vpop.f32.mrf.mxu0
    %v6495 = vpop.f32.mrf.mxu0
    %6496 = vdwg.mxu0
    %6497 = vmatprep.subr.bf16.mxu0 %v1966
    %6498 = vmatpush1.bf16.msra.mxu0 %v1965
    %6499 = vmatprep.subr.bf16.mxu0 %v1964
    %6500 = vmatpush1.bf16.msra.mxu0 %v1963
    %6501 = vmatprep.subr.bf16.mxu0 %v1962
    %6502 = vmatpush1.bf16.msra.mxu0 %v1961
    %6503 = vmatprep.subr.bf16.mxu0 %v1960
    %6504 = vmatpush1.bf16.msra.mxu0 %v1959
    %6505 = vmatprep.subr.bf16.mxu0 %v1958
    %6506 = vmatpush1.bf16.msra.mxu0 %v1957
    %6507 = vmatprep.subr.bf16.mxu0 %v1956
    %6508 = vmatpush1.bf16.msra.mxu0 %v1955
    %6509 = vmatprep.subr.bf16.mxu0 %v1954
    %6510 = vmatpush1.bf16.msra.mxu0 %v1953
    %6511 = vmatprep.subr.bf16.mxu0 %v1952
    %6512 = vmatpush1.bf16.msra.mxu0 %v1951
    %6513 = vmatprep.subr.bf16.mxu0 %v1982
    %6514 = vmatpush2.bf16.msra.mxu0 %v1981
    %6515 = vmatprep.subr.bf16.mxu0 %v1980
    %6516 = vmatpush2.bf16.msra.mxu0 %v1979
    %6517 = vmatprep.subr.bf16.mxu0 %v1978
    %6518 = vmatpush2.bf16.msra.mxu0 %v1977
    %6519 = vmatprep.subr.bf16.mxu0 %v1976
    %6520 = vmatpush2.bf16.msra.mxu0 %v1975
    %6521 = vmatprep.subr.bf16.mxu0 %v1974
    %6522 = vmatpush2.bf16.msra.mxu0 %v1973
    %6523 = vmatprep.subr.bf16.mxu0 %v1972
    %6524 = vmatpush2.bf16.msra.mxu0 %v1971
    %6525 = vmatprep.subr.bf16.mxu0 %v1970
    %6526 = vmatpush2.bf16.msra.mxu0 %v1969
    %6527 = vmatprep.subr.bf16.mxu0 %v1968
    %6528 = vmatpush2.bf16.msra.mxu0 %v1967
    %6529 = vmatprep.mubr.bf16.mxu0 %v6410
    %6530 = vmatmul.mubr.bf16.gmra.mxu0 %v6409
    %v6531 = vpop.f32.mrf.mxu0
    %v6532 = vadd.f32 %v6491, %v6531
    %v6533 = vpop.f32.mrf.mxu0
    %v6534 = vadd.f32 %v6493, %v6533
    %v6535 = vpop.f32.mrf.mxu0
    %v6536 = vpop.f32.mrf.mxu0
    %6537 = vdwg.mxu0
    %6538 = vmatprep.subr.bf16.mxu0 0
    %6539 = vmatpush1.bf16.msra.mxu0 0
    %6540 = vmatprep.subr.bf16.mxu0 0
    %6541 = vmatpush1.bf16.msra.mxu0 0
    %6542 = vmatprep.subr.bf16.mxu0 %v2113
    %6543 = vmatpush1.bf16.msra.mxu0 %v2110
    %6544 = vmatprep.subr.bf16.mxu0 %v1992
    %6545 = vmatpush1.bf16.msra.mxu0 %v1991
    %6546 = vmatprep.subr.bf16.mxu0 %v1990
    %6547 = vmatpush1.bf16.msra.mxu0 %v1989
    %6548 = vmatprep.subr.bf16.mxu0 %v1988
    %6549 = vmatpush1.bf16.msra.mxu0 %v1987
    %6550 = vmatprep.subr.bf16.mxu0 %v1986
    %6551 = vmatpush1.bf16.msra.mxu0 %v1985
    %6552 = vmatprep.subr.bf16.mxu0 %v1984
    %6553 = vmatpush1.bf16.msra.mxu0 %v1983
    %6554 = vmatprep.subr.bf16.mxu0 0
    %6555 = vmatpush2.bf16.msra.mxu0 0
    %6556 = vmatprep.subr.bf16.mxu0 0
    %6557 = vmatpush2.bf16.msra.mxu0 0
    %6558 = vmatprep.subr.bf16.mxu0 0
    %6559 = vmatpush2.bf16.msra.mxu0 0
    %6560 = vmatprep.subr.bf16.mxu0 0
    %6561 = vmatpush2.bf16.msra.mxu0 0
    %6562 = vmatprep.subr.bf16.mxu0 0
    %6563 = vmatpush2.bf16.msra.mxu0 0
    %6564 = vmatprep.subr.bf16.mxu0 0
    %6565 = vmatpush2.bf16.msra.mxu0 0
    %6566 = vmatprep.subr.bf16.mxu0 0
    %6567 = vmatpush2.bf16.msra.mxu0 0
    %6568 = vmatprep.subr.bf16.mxu0 0
    %6569 = vmatpush2.bf16.msra.mxu0 0
    %6570 = vmatprep.mubr.bf16.mxu0 0
    %6571 = vmatmul.mubr.bf16.gmra.mxu0 %v6413
    %v6572 = vpop.f32.mrf.mxu0
    %v6573 = vadd.f32 %v6532, %v6572
    %v6574 = vpop.f32.mrf.mxu0
    %v6575 = vadd.f32 %v6534, %v6574
    %v6576 = vpop.f32.mrf.mxu0
    %v6577 = vpop.f32.mrf.mxu0
    %6578 = vdwg.mxu0
    %v6579 = vpack.c.bf16 %v6573, %v6573
    %v6580 = vpack.c.bf16 %v6575, %v6575
    %6583 = vrot.lane.b32.xlu0 %v6579, 127
    %v6584 = vpop.permute.xlu0 %6583
    %6585 = vrot.lane.b32.xlu0 %v6580, 127
    %v6586 = vpop.permute.xlu0 %6585
    %v6587 = vsel %vm412, %v6584, %v6586
    %v6589 = vsel %vm2297, %v6587, 0
    %v6592 = vsel %vm2297, %v6586, 0
    %6594 = vmatprep.subr.bf16.mxu0 0
    %6595 = vmatpush1.bf16.msra.mxu0 0
    %6596 = vmatprep.subr.bf16.mxu0 0
    %6597 = vmatpush1.bf16.msra.mxu0 0
    %6598 = vmatprep.subr.bf16.mxu0 0
    %6599 = vmatpush1.bf16.msra.mxu0 0
    %6600 = vmatprep.subr.bf16.mxu0 0
    %6601 = vmatpush1.bf16.msra.mxu0 0
    %6602 = vmatprep.subr.bf16.mxu0 0
    %6603 = vmatpush1.bf16.msra.mxu0 0
    %6604 = vmatprep.subr.bf16.mxu0 0
    %6605 = vmatpush1.bf16.msra.mxu0 0
    %6606 = vmatprep.subr.bf16.mxu0 0
    %6607 = vmatpush1.bf16.msra.mxu0 0
    %6608 = vmatprep.subr.bf16.mxu0 %v6592
    %6609 = vmatpush1.bf16.msra.mxu0 %v6589
    %6610 = vmatprep.subr.bf16.mxu0 0
    %6611 = vmatpush2.bf16.msra.mxu0 0
    %6612 = vmatprep.subr.bf16.mxu0 0
    %6613 = vmatpush2.bf16.msra.mxu0 0
    %6614 = vmatprep.subr.bf16.mxu0 0
    %6615 = vmatpush2.bf16.msra.mxu0 0
    %6616 = vmatprep.subr.bf16.mxu0 0
    %6617 = vmatpush2.bf16.msra.mxu0 0
    %6618 = vmatprep.subr.bf16.mxu0 0
    %6619 = vmatpush2.bf16.msra.mxu0 0
    %6620 = vmatprep.subr.bf16.mxu0 0
    %6621 = vmatpush2.bf16.msra.mxu0 0
    %6622 = vmatprep.subr.bf16.mxu0 0
    %6623 = vmatpush2.bf16.msra.mxu0 0
    %6624 = vmatprep.subr.bf16.mxu0 0
    %6625 = vmatpush2.bf16.msra.mxu0 0
    %6626 = vmatprep.mubr.bf16.mxu0 0
    %6627 = vmatmul.mubr.bf16.gmra.mxu0 %v2295
    %v6628 = vpop.f32.mrf.mxu0
    %v6629 = vadd.f32 0.0, %v6628
    %v6630 = vpop.f32.mrf.mxu0
    %v6631 = vadd.f32 0.0, %v6630
    %v6632 = vpop.f32.mrf.mxu0
    %v6633 = vadd.f32 0.0, %v6632
    %v6634 = vpop.f32.mrf.mxu0
    %v6635 = vadd.f32 0.0, %v6634
    %6636 = vdwg.mxu0
    %v6638 = vsel %vm2297, %v6579, 0
    %v6641 = vsel %vm2297, %v6580, 0
    %6643 = vmatprep.subr.bf16.mxu0 0
    %6644 = vmatpush1.bf16.msra.mxu0 0
    %6645 = vmatprep.subr.bf16.mxu0 0
    %6646 = vmatpush1.bf16.msra.mxu0 0
    %6647 = vmatprep.subr.bf16.mxu0 0
    %6648 = vmatpush1.bf16.msra.mxu0 0
    %6649 = vmatprep.subr.bf16.mxu0 0
    %6650 = vmatpush1.bf16.msra.mxu0 0
    %6651 = vmatprep.subr.bf16.mxu0 0
    %6652 = vmatpush1.bf16.msra.mxu0 0
    %6653 = vmatprep.subr.bf16.mxu0 0
    %6654 = vmatpush1.bf16.msra.mxu0 0
    %6655 = vmatprep.subr.bf16.mxu0 0
    %6656 = vmatpush1.bf16.msra.mxu0 0
    %6657 = vmatprep.subr.bf16.mxu0 %v6641
    %6658 = vmatpush1.bf16.msra.mxu0 %v6638
    %6659 = vmatprep.subr.bf16.mxu0 0
    %6660 = vmatpush2.bf16.msra.mxu0 0
    %6661 = vmatprep.subr.bf16.mxu0 0
    %6662 = vmatpush2.bf16.msra.mxu0 0
    %6663 = vmatprep.subr.bf16.mxu0 0
    %6664 = vmatpush2.bf16.msra.mxu0 0
    %6665 = vmatprep.subr.bf16.mxu0 0
    %6666 = vmatpush2.bf16.msra.mxu0 0
    %6667 = vmatprep.subr.bf16.mxu0 0
    %6668 = vmatpush2.bf16.msra.mxu0 0
    %6669 = vmatprep.subr.bf16.mxu0 0
    %6670 = vmatpush2.bf16.msra.mxu0 0
    %6671 = vmatprep.subr.bf16.mxu0 0
    %6672 = vmatpush2.bf16.msra.mxu0 0
    %6673 = vmatprep.subr.bf16.mxu0 0
    %6674 = vmatpush2.bf16.msra.mxu0 0
    %6675 = vmatprep.mubr.bf16.mxu0 0
    %6676 = vmatmul.mubr.bf16.gmra.mxu0 %v2353
    %v6677 = vpop.f32.mrf.mxu0
    %v6678 = vadd.f32 %v6629, %v6677
    %v6679 = vpop.f32.mrf.mxu0
    %v6680 = vadd.f32 %v6631, %v6679
    %v6681 = vpop.f32.mrf.mxu0
    %v6682 = vadd.f32 %v6633, %v6681
    %v6683 = vpop.f32.mrf.mxu0
    %v6684 = vadd.f32 %v6635, %v6683
    %6685 = vdwg.mxu0
    %6686 = vrot.lane.b32.xlu0 %v6579, 126
    %v6687 = vpop.permute.xlu0 %6686
    %6688 = vrot.lane.b32.xlu0 %v6580, 126
    %v6689 = vpop.permute.xlu0 %6688
    %v6690 = vsel %vm815, %v6687, %v6689
    %v6692 = vsel %vm2297, %v6690, 0
    %v6695 = vsel %vm2297, %v6689, 0
    %6697 = vmatprep.subr.bf16.mxu0 0
    %6698 = vmatpush1.bf16.msra.mxu0 0
    %6699 = vmatprep.subr.bf16.mxu0 0
    %6700 = vmatpush1.bf16.msra.mxu0 0
    %6701 = vmatprep.subr.bf16.mxu0 0
    %6702 = vmatpush1.bf16.msra.mxu0 0
    %6703 = vmatprep.subr.bf16.mxu0 0
    %6704 = vmatpush1.bf16.msra.mxu0 0
    %6705 = vmatprep.subr.bf16.mxu0 0
    %6706 = vmatpush1.bf16.msra.mxu0 0
    %6707 = vmatprep.subr.bf16.mxu0 0
    %6708 = vmatpush1.bf16.msra.mxu0 0
    %6709 = vmatprep.subr.bf16.mxu0 0
    %6710 = vmatpush1.bf16.msra.mxu0 0
    %6711 = vmatprep.subr.bf16.mxu0 %v6695
    %6712 = vmatpush1.bf16.msra.mxu0 %v6692
    %6713 = vmatprep.subr.bf16.mxu0 0
    %6714 = vmatpush2.bf16.msra.mxu0 0
    %6715 = vmatprep.subr.bf16.mxu0 0
    %6716 = vmatpush2.bf16.msra.mxu0 0
    %6717 = vmatprep.subr.bf16.mxu0 0
    %6718 = vmatpush2.bf16.msra.mxu0 0
    %6719 = vmatprep.subr.bf16.mxu0 0
    %6720 = vmatpush2.bf16.msra.mxu0 0
    %6721 = vmatprep.subr.bf16.mxu0 0
    %6722 = vmatpush2.bf16.msra.mxu0 0
    %6723 = vmatprep.subr.bf16.mxu0 0
    %6724 = vmatpush2.bf16.msra.mxu0 0
    %6725 = vmatprep.subr.bf16.mxu0 0
    %6726 = vmatpush2.bf16.msra.mxu0 0
    %6727 = vmatprep.subr.bf16.mxu0 0
    %6728 = vmatpush2.bf16.msra.mxu0 0
    %6729 = vmatprep.mubr.bf16.mxu0 0
    %6730 = vmatmul.mubr.bf16.gmra.mxu0 %v2415
    %v6731 = vpop.f32.mrf.mxu0
    %v6732 = vadd.f32 0.0, %v6731
    %v6733 = vpop.f32.mrf.mxu0
    %v6734 = vadd.f32 0.0, %v6733
    %v6735 = vpop.f32.mrf.mxu0
    %v6736 = vadd.f32 0.0, %v6735
    %v6737 = vpop.f32.mrf.mxu0
    %v6738 = vadd.f32 0.0, %v6737
    %6739 = vdwg.mxu0
    %v6740 = vadd.f32 %v6678, %v6732
    %v6741 = vadd.f32 %v6680, %v6734
    %v6742 = vadd.f32 %v6682, %v6736
    %v6743 = vadd.f32 %v6684, %v6738
    %6744 = vrot.lane.b32.xlu0 %v6579, 125
    %v6745 = vpop.permute.xlu0 %6744
    %6746 = vrot.lane.b32.xlu0 %v6580, 125
    %v6747 = vpop.permute.xlu0 %6746
    %v6748 = vsel %vm1033, %v6745, %v6747
    %v6750 = vsel %vm2297, %v6748, 0
    %v6753 = vsel %vm2297, %v6747, 0
    %6755 = vmatprep.subr.bf16.mxu0 0
    %6756 = vmatpush1.bf16.msra.mxu0 0
    %6757 = vmatprep.subr.bf16.mxu0 0
    %6758 = vmatpush1.bf16.msra.mxu0 0
    %6759 = vmatprep.subr.bf16.mxu0 0
    %6760 = vmatpush1.bf16.msra.mxu0 0
    %6761 = vmatprep.subr.bf16.mxu0 0
    %6762 = vmatpush1.bf16.msra.mxu0 0
    %6763 = vmatprep.subr.bf16.mxu0 0
    %6764 = vmatpush1.bf16.msra.mxu0 0
    %6765 = vmatprep.subr.bf16.mxu0 0
    %6766 = vmatpush1.bf16.msra.mxu0 0
    %6767 = vmatprep.subr.bf16.mxu0 0
    %6768 = vmatpush1.bf16.msra.mxu0 0
    %6769 = vmatprep.subr.bf16.mxu0 %v6753
    %6770 = vmatpush1.bf16.msra.mxu0 %v6750
    %6771 = vmatprep.subr.bf16.mxu0 0
    %6772 = vmatpush2.bf16.msra.mxu0 0
    %6773 = vmatprep.subr.bf16.mxu0 0
    %6774 = vmatpush2.bf16.msra.mxu0 0
    %6775 = vmatprep.subr.bf16.mxu0 0
    %6776 = vmatpush2.bf16.msra.mxu0 0
    %6777 = vmatprep.subr.bf16.mxu0 0
    %6778 = vmatpush2.bf16.msra.mxu0 0
    %6779 = vmatprep.subr.bf16.mxu0 0
    %6780 = vmatpush2.bf16.msra.mxu0 0
    %6781 = vmatprep.subr.bf16.mxu0 0
    %6782 = vmatpush2.bf16.msra.mxu0 0
    %6783 = vmatprep.subr.bf16.mxu0 0
    %6784 = vmatpush2.bf16.msra.mxu0 0
    %6785 = vmatprep.subr.bf16.mxu0 0
    %6786 = vmatpush2.bf16.msra.mxu0 0
    %6787 = vmatprep.mubr.bf16.mxu0 0
    %6788 = vmatmul.mubr.bf16.gmra.mxu0 %v2481
    %v6789 = vpop.f32.mrf.mxu0
    %v6790 = vadd.f32 0.0, %v6789
    %v6791 = vpop.f32.mrf.mxu0
    %v6792 = vadd.f32 0.0, %v6791
    %v6793 = vpop.f32.mrf.mxu0
    %v6794 = vadd.f32 0.0, %v6793
    %v6795 = vpop.f32.mrf.mxu0
    %v6796 = vadd.f32 0.0, %v6795
    %6797 = vdwg.mxu0
    %v6798 = vadd.f32 %v6740, %v6790
    %v6799 = vadd.f32 %v6741, %v6792
    %v6800 = vadd.f32 %v6742, %v6794
    %v6801 = vadd.f32 %v6743, %v6796
    %6802 = vrot.lane.b32.xlu0 %v6579, 124
    %v6803 = vpop.permute.xlu0 %6802
    %6804 = vrot.lane.b32.xlu0 %v6580, 124
    %v6805 = vpop.permute.xlu0 %6804
    %v6806 = vsel %vm1251, %v6803, %v6805
    %v6808 = vsel %vm2297, %v6806, 0
    %v6811 = vsel %vm2297, %v6805, 0
    %6813 = vmatprep.subr.bf16.mxu0 0
    %6814 = vmatpush1.bf16.msra.mxu0 0
    %6815 = vmatprep.subr.bf16.mxu0 0
    %6816 = vmatpush1.bf16.msra.mxu0 0
    %6817 = vmatprep.subr.bf16.mxu0 0
    %6818 = vmatpush1.bf16.msra.mxu0 0
    %6819 = vmatprep.subr.bf16.mxu0 0
    %6820 = vmatpush1.bf16.msra.mxu0 0
    %6821 = vmatprep.subr.bf16.mxu0 0
    %6822 = vmatpush1.bf16.msra.mxu0 0
    %6823 = vmatprep.subr.bf16.mxu0 0
    %6824 = vmatpush1.bf16.msra.mxu0 0
    %6825 = vmatprep.subr.bf16.mxu0 0
    %6826 = vmatpush1.bf16.msra.mxu0 0
    %6827 = vmatprep.subr.bf16.mxu0 %v6811
    %6828 = vmatpush1.bf16.msra.mxu0 %v6808
    %6829 = vmatprep.subr.bf16.mxu0 0
    %6830 = vmatpush2.bf16.msra.mxu0 0
    %6831 = vmatprep.subr.bf16.mxu0 0
    %6832 = vmatpush2.bf16.msra.mxu0 0
    %6833 = vmatprep.subr.bf16.mxu0 0
    %6834 = vmatpush2.bf16.msra.mxu0 0
    %6835 = vmatprep.subr.bf16.mxu0 0
    %6836 = vmatpush2.bf16.msra.mxu0 0
    %6837 = vmatprep.subr.bf16.mxu0 0
    %6838 = vmatpush2.bf16.msra.mxu0 0
    %6839 = vmatprep.subr.bf16.mxu0 0
    %6840 = vmatpush2.bf16.msra.mxu0 0
    %6841 = vmatprep.subr.bf16.mxu0 0
    %6842 = vmatpush2.bf16.msra.mxu0 0
    %6843 = vmatprep.subr.bf16.mxu0 0
    %6844 = vmatpush2.bf16.msra.mxu0 0
    %6845 = vmatprep.mubr.bf16.mxu0 0
    %6846 = vmatmul.mubr.bf16.gmra.mxu0 %v2547
    %v6847 = vpop.f32.mrf.mxu0
    %v6848 = vadd.f32 0.0, %v6847
    %v6849 = vpop.f32.mrf.mxu0
    %v6850 = vadd.f32 0.0, %v6849
    %v6851 = vpop.f32.mrf.mxu0
    %v6852 = vadd.f32 0.0, %v6851
    %v6853 = vpop.f32.mrf.mxu0
    %v6854 = vadd.f32 0.0, %v6853
    %6855 = vdwg.mxu0
    %v6856 = vadd.f32 %v6798, %v6848
    %v6857 = vadd.f32 %v6799, %v6850
    %v6858 = vadd.f32 %v6800, %v6852
    %v6859 = vadd.f32 %v6801, %v6854
    %6860 = vrot.lane.b32.xlu0 %v6579, 114
    %v6861 = vpop.permute.xlu0 %6860
    %6862 = vrot.lane.b32.xlu0 %v6580, 114
    %v6863 = vpop.permute.xlu0 %6862
    %v6864 = vsel %vm2611, %v6861, %v6863
    %v6866 = vsel %vm2297, %v6864, 0
    %v6869 = vsel %vm2297, %v6863, 0
    %6871 = vmatprep.subr.bf16.mxu0 0
    %6872 = vmatpush1.bf16.msra.mxu0 0
    %6873 = vmatprep.subr.bf16.mxu0 0
    %6874 = vmatpush1.bf16.msra.mxu0 0
    %6875 = vmatprep.subr.bf16.mxu0 0
    %6876 = vmatpush1.bf16.msra.mxu0 0
    %6877 = vmatprep.subr.bf16.mxu0 0
    %6878 = vmatpush1.bf16.msra.mxu0 0
    %6879 = vmatprep.subr.bf16.mxu0 0
    %6880 = vmatpush1.bf16.msra.mxu0 0
    %6881 = vmatprep.subr.bf16.mxu0 0
    %6882 = vmatpush1.bf16.msra.mxu0 0
    %6883 = vmatprep.subr.bf16.mxu0 0
    %6884 = vmatpush1.bf16.msra.mxu0 0
    %6885 = vmatprep.subr.bf16.mxu0 %v6869
    %6886 = vmatpush1.bf16.msra.mxu0 %v6866
    %6887 = vmatprep.subr.bf16.mxu0 0
    %6888 = vmatpush2.bf16.msra.mxu0 0
    %6889 = vmatprep.subr.bf16.mxu0 0
    %6890 = vmatpush2.bf16.msra.mxu0 0
    %6891 = vmatprep.subr.bf16.mxu0 0
    %6892 = vmatpush2.bf16.msra.mxu0 0
    %6893 = vmatprep.subr.bf16.mxu0 0
    %6894 = vmatpush2.bf16.msra.mxu0 0
    %6895 = vmatprep.subr.bf16.mxu0 0
    %6896 = vmatpush2.bf16.msra.mxu0 0
    %6897 = vmatprep.subr.bf16.mxu0 0
    %6898 = vmatpush2.bf16.msra.mxu0 0
    %6899 = vmatprep.subr.bf16.mxu0 0
    %6900 = vmatpush2.bf16.msra.mxu0 0
    %6901 = vmatprep.subr.bf16.mxu0 0
    %6902 = vmatpush2.bf16.msra.mxu0 0
    %6903 = vmatprep.mubr.bf16.mxu0 0
    %6904 = vmatmul.mubr.bf16.gmra.mxu0 %v2614
    %v6905 = vpop.f32.mrf.mxu0
    %v6906 = vadd.f32 0.0, %v6905
    %v6907 = vpop.f32.mrf.mxu0
    %v6908 = vadd.f32 0.0, %v6907
    %v6909 = vpop.f32.mrf.mxu0
    %v6910 = vadd.f32 0.0, %v6909
    %v6911 = vpop.f32.mrf.mxu0
    %v6912 = vadd.f32 0.0, %v6911
    %6913 = vdwg.mxu0
    %v6914 = vadd.f32 %v6856, %v6906
    %v6915 = vadd.f32 %v6857, %v6908
    %v6916 = vadd.f32 %v6858, %v6910
    %v6917 = vadd.f32 %v6859, %v6912
    %6918 = vrot.lane.b32.xlu0 %v6579, 113
    %v6919 = vpop.permute.xlu0 %6918
    %6920 = vrot.lane.b32.xlu0 %v6580, 113
    %v6921 = vpop.permute.xlu0 %6920
    %v6922 = vsel %vm2678, %v6919, %v6921
    %v6924 = vsel %vm2297, %v6922, 0
    %v6927 = vsel %vm2297, %v6921, 0
    %6929 = vmatprep.subr.bf16.mxu0 0
    %6930 = vmatpush1.bf16.msra.mxu0 0
    %6931 = vmatprep.subr.bf16.mxu0 0
    %6932 = vmatpush1.bf16.msra.mxu0 0
    %6933 = vmatprep.subr.bf16.mxu0 0
    %6934 = vmatpush1.bf16.msra.mxu0 0
    %6935 = vmatprep.subr.bf16.mxu0 0
    %6936 = vmatpush1.bf16.msra.mxu0 0
    %6937 = vmatprep.subr.bf16.mxu0 0
    %6938 = vmatpush1.bf16.msra.mxu0 0
    %6939 = vmatprep.subr.bf16.mxu0 0
    %6940 = vmatpush1.bf16.msra.mxu0 0
    %6941 = vmatprep.subr.bf16.mxu0 0
    %6942 = vmatpush1.bf16.msra.mxu0 0
    %6943 = vmatprep.subr.bf16.mxu0 %v6927
    %6944 = vmatpush1.bf16.msra.mxu0 %v6924
    %6945 = vmatprep.subr.bf16.mxu0 0
    %6946 = vmatpush2.bf16.msra.mxu0 0
    %6947 = vmatprep.subr.bf16.mxu0 0
    %6948 = vmatpush2.bf16.msra.mxu0 0
    %6949 = vmatprep.subr.bf16.mxu0 0
    %6950 = vmatpush2.bf16.msra.mxu0 0
    %6951 = vmatprep.subr.bf16.mxu0 0
    %6952 = vmatpush2.bf16.msra.mxu0 0
    %6953 = vmatprep.subr.bf16.mxu0 0
    %6954 = vmatpush2.bf16.msra.mxu0 0
    %6955 = vmatprep.subr.bf16.mxu0 0
    %6956 = vmatpush2.bf16.msra.mxu0 0
    %6957 = vmatprep.subr.bf16.mxu0 0
    %6958 = vmatpush2.bf16.msra.mxu0 0
    %6959 = vmatprep.subr.bf16.mxu0 0
    %6960 = vmatpush2.bf16.msra.mxu0 0
    %6961 = vmatprep.mubr.bf16.mxu0 0
    %6962 = vmatmul.mubr.bf16.gmra.mxu0 %v2681
    %v6963 = vpop.f32.mrf.mxu0
    %v6964 = vadd.f32 0.0, %v6963
    %v6965 = vpop.f32.mrf.mxu0
    %v6966 = vadd.f32 0.0, %v6965
    %v6967 = vpop.f32.mrf.mxu0
    %v6968 = vadd.f32 0.0, %v6967
    %v6969 = vpop.f32.mrf.mxu0
    %v6970 = vadd.f32 0.0, %v6969
    %6971 = vdwg.mxu0
    %v6972 = vadd.f32 %v6914, %v6964
    %v6973 = vadd.f32 %v6915, %v6966
    %v6974 = vadd.f32 %v6916, %v6968
    %v6975 = vadd.f32 %v6917, %v6970
    %6976 = vrot.lane.b32.xlu0 %v6579, 112
    %v6977 = vpop.permute.xlu0 %6976
    %6978 = vrot.lane.b32.xlu0 %v6580, 112
    %v6979 = vpop.permute.xlu0 %6978
    %v6980 = vsel %vm2745, %v6977, %v6979
    %v6982 = vsel %vm2297, %v6980, 0
    %v6985 = vsel %vm2297, %v6979, 0
    %6987 = vmatprep.subr.bf16.mxu0 0
    %6988 = vmatpush1.bf16.msra.mxu0 0
    %6989 = vmatprep.subr.bf16.mxu0 0
    %6990 = vmatpush1.bf16.msra.mxu0 0
    %6991 = vmatprep.subr.bf16.mxu0 0
    %6992 = vmatpush1.bf16.msra.mxu0 0
    %6993 = vmatprep.subr.bf16.mxu0 0
    %6994 = vmatpush1.bf16.msra.mxu0 0
    %6995 = vmatprep.subr.bf16.mxu0 0
    %6996 = vmatpush1.bf16.msra.mxu0 0
    %6997 = vmatprep.subr.bf16.mxu0 0
    %6998 = vmatpush1.bf16.msra.mxu0 0
    %6999 = vmatprep.subr.bf16.mxu0 0
    %7000 = vmatpush1.bf16.msra.mxu0 0
    %7001 = vmatprep.subr.bf16.mxu0 %v6985
    %7002 = vmatpush1.bf16.msra.mxu0 %v6982
    %7003 = vmatprep.subr.bf16.mxu0 0
    %7004 = vmatpush2.bf16.msra.mxu0 0
    %7005 = vmatprep.subr.bf16.mxu0 0
    %7006 = vmatpush2.bf16.msra.mxu0 0
    %7007 = vmatprep.subr.bf16.mxu0 0
    %7008 = vmatpush2.bf16.msra.mxu0 0
    %7009 = vmatprep.subr.bf16.mxu0 0
    %7010 = vmatpush2.bf16.msra.mxu0 0
    %7011 = vmatprep.subr.bf16.mxu0 0
    %7012 = vmatpush2.bf16.msra.mxu0 0
    %7013 = vmatprep.subr.bf16.mxu0 0
    %7014 = vmatpush2.bf16.msra.mxu0 0
    %7015 = vmatprep.subr.bf16.mxu0 0
    %7016 = vmatpush2.bf16.msra.mxu0 0
    %7017 = vmatprep.subr.bf16.mxu0 0
    %7018 = vmatpush2.bf16.msra.mxu0 0
    %7019 = vmatprep.mubr.bf16.mxu0 0
    %7020 = vmatmul.mubr.bf16.gmra.mxu0 %v2748
    %v7021 = vpop.f32.mrf.mxu0
    %v7022 = vadd.f32 0.0, %v7021
    %v7023 = vpop.f32.mrf.mxu0
    %v7024 = vadd.f32 0.0, %v7023
    %v7025 = vpop.f32.mrf.mxu0
    %v7026 = vadd.f32 0.0, %v7025
    %v7027 = vpop.f32.mrf.mxu0
    %v7028 = vadd.f32 0.0, %v7027
    %7029 = vdwg.mxu0
    %v7030 = vadd.f32 %v6972, %v7022
    %v7031 = vadd.f32 %v6973, %v7024
    %v7032 = vadd.f32 %v6974, %v7026
    %v7033 = vadd.f32 %v6975, %v7028
    %7034 = vrot.lane.b32.xlu0 %v6579, 111
    %v7035 = vpop.permute.xlu0 %7034
    %7036 = vrot.lane.b32.xlu0 %v6580, 111
    %v7037 = vpop.permute.xlu0 %7036
    %v7038 = vsel %vm2812, %v7035, %v7037
    %v7040 = vsel %vm2297, %v7038, 0
    %v7043 = vsel %vm2297, %v7037, 0
    %7045 = vmatprep.subr.bf16.mxu0 0
    %7046 = vmatpush1.bf16.msra.mxu0 0
    %7047 = vmatprep.subr.bf16.mxu0 0
    %7048 = vmatpush1.bf16.msra.mxu0 0
    %7049 = vmatprep.subr.bf16.mxu0 0
    %7050 = vmatpush1.bf16.msra.mxu0 0
    %7051 = vmatprep.subr.bf16.mxu0 0
    %7052 = vmatpush1.bf16.msra.mxu0 0
    %7053 = vmatprep.subr.bf16.mxu0 0
    %7054 = vmatpush1.bf16.msra.mxu0 0
    %7055 = vmatprep.subr.bf16.mxu0 0
    %7056 = vmatpush1.bf16.msra.mxu0 0
    %7057 = vmatprep.subr.bf16.mxu0 0
    %7058 = vmatpush1.bf16.msra.mxu0 0
    %7059 = vmatprep.subr.bf16.mxu0 %v7043
    %7060 = vmatpush1.bf16.msra.mxu0 %v7040
    %7061 = vmatprep.subr.bf16.mxu0 0
    %7062 = vmatpush2.bf16.msra.mxu0 0
    %7063 = vmatprep.subr.bf16.mxu0 0
    %7064 = vmatpush2.bf16.msra.mxu0 0
    %7065 = vmatprep.subr.bf16.mxu0 0
    %7066 = vmatpush2.bf16.msra.mxu0 0
    %7067 = vmatprep.subr.bf16.mxu0 0
    %7068 = vmatpush2.bf16.msra.mxu0 0
    %7069 = vmatprep.subr.bf16.mxu0 0
    %7070 = vmatpush2.bf16.msra.mxu0 0
    %7071 = vmatprep.subr.bf16.mxu0 0
    %7072 = vmatpush2.bf16.msra.mxu0 0
    %7073 = vmatprep.subr.bf16.mxu0 0
    %7074 = vmatpush2.bf16.msra.mxu0 0
    %7075 = vmatprep.subr.bf16.mxu0 0
    %7076 = vmatpush2.bf16.msra.mxu0 0
    %7077 = vmatprep.mubr.bf16.mxu0 0
    %7078 = vmatmul.mubr.bf16.gmra.mxu0 %v2815
    %v7079 = vpop.f32.mrf.mxu0
    %v7080 = vadd.f32 0.0, %v7079
    %v7081 = vpop.f32.mrf.mxu0
    %v7082 = vadd.f32 0.0, %v7081
    %v7083 = vpop.f32.mrf.mxu0
    %v7084 = vadd.f32 0.0, %v7083
    %v7085 = vpop.f32.mrf.mxu0
    %v7086 = vadd.f32 0.0, %v7085
    %7087 = vdwg.mxu0
    %v7088 = vadd.f32 %v7030, %v7080
    %v7089 = vadd.f32 %v7031, %v7082
    %v7090 = vadd.f32 %v7032, %v7084
    %v7091 = vadd.f32 %v7033, %v7086
    %7092 = vrot.lane.b32.xlu0 %v6579, 110
    %v7093 = vpop.permute.xlu0 %7092
    %7094 = vrot.lane.b32.xlu0 %v6580, 110
    %v7095 = vpop.permute.xlu0 %7094
    %v7096 = vsel %vm2879, %v7093, %v7095
    %v7098 = vsel %vm2297, %v7096, 0
    %v7101 = vsel %vm2297, %v7095, 0
    %7103 = vmatprep.subr.bf16.mxu0 0
    %7104 = vmatpush1.bf16.msra.mxu0 0
    %7105 = vmatprep.subr.bf16.mxu0 0
    %7106 = vmatpush1.bf16.msra.mxu0 0
    %7107 = vmatprep.subr.bf16.mxu0 0
    %7108 = vmatpush1.bf16.msra.mxu0 0
    %7109 = vmatprep.subr.bf16.mxu0 0
    %7110 = vmatpush1.bf16.msra.mxu0 0
    %7111 = vmatprep.subr.bf16.mxu0 0
    %7112 = vmatpush1.bf16.msra.mxu0 0
    %7113 = vmatprep.subr.bf16.mxu0 0
    %7114 = vmatpush1.bf16.msra.mxu0 0
    %7115 = vmatprep.subr.bf16.mxu0 0
    %7116 = vmatpush1.bf16.msra.mxu0 0
    %7117 = vmatprep.subr.bf16.mxu0 %v7101
    %7118 = vmatpush1.bf16.msra.mxu0 %v7098
    %7119 = vmatprep.subr.bf16.mxu0 0
    %7120 = vmatpush2.bf16.msra.mxu0 0
    %7121 = vmatprep.subr.bf16.mxu0 0
    %7122 = vmatpush2.bf16.msra.mxu0 0
    %7123 = vmatprep.subr.bf16.mxu0 0
    %7124 = vmatpush2.bf16.msra.mxu0 0
    %7125 = vmatprep.subr.bf16.mxu0 0
    %7126 = vmatpush2.bf16.msra.mxu0 0
    %7127 = vmatprep.subr.bf16.mxu0 0
    %7128 = vmatpush2.bf16.msra.mxu0 0
    %7129 = vmatprep.subr.bf16.mxu0 0
    %7130 = vmatpush2.bf16.msra.mxu0 0
    %7131 = vmatprep.subr.bf16.mxu0 0
    %7132 = vmatpush2.bf16.msra.mxu0 0
    %7133 = vmatprep.subr.bf16.mxu0 0
    %7134 = vmatpush2.bf16.msra.mxu0 0
    %7135 = vmatprep.mubr.bf16.mxu0 0
    %7136 = vmatmul.mubr.bf16.gmra.mxu0 %v2882
    %v7137 = vpop.f32.mrf.mxu0
    %v7138 = vadd.f32 0.0, %v7137
    %v7139 = vpop.f32.mrf.mxu0
    %v7140 = vadd.f32 0.0, %v7139
    %v7141 = vpop.f32.mrf.mxu0
    %v7142 = vadd.f32 0.0, %v7141
    %v7143 = vpop.f32.mrf.mxu0
    %v7144 = vadd.f32 0.0, %v7143
    %7145 = vdwg.mxu0
    %v7146 = vadd.f32 %v7088, %v7138
    %v7147 = vadd.f32 %v7089, %v7140
    %v7148 = vadd.f32 %v7090, %v7142
    %v7149 = vadd.f32 %v7091, %v7144
    %7150 = vrot.lane.b32.xlu0 %v6579, 100
    %v7151 = vpop.permute.xlu0 %7150
    %7152 = vrot.lane.b32.xlu0 %v6580, 100
    %v7153 = vpop.permute.xlu0 %7152
    %v7154 = vsel %vm2946, %v7151, %v7153
    %v7156 = vsel %vm2297, %v7154, 0
    %v7159 = vsel %vm2297, %v7153, 0
    %7161 = vmatprep.subr.bf16.mxu0 0
    %7162 = vmatpush1.bf16.msra.mxu0 0
    %7163 = vmatprep.subr.bf16.mxu0 0
    %7164 = vmatpush1.bf16.msra.mxu0 0
    %7165 = vmatprep.subr.bf16.mxu0 0
    %7166 = vmatpush1.bf16.msra.mxu0 0
    %7167 = vmatprep.subr.bf16.mxu0 0
    %7168 = vmatpush1.bf16.msra.mxu0 0
    %7169 = vmatprep.subr.bf16.mxu0 0
    %7170 = vmatpush1.bf16.msra.mxu0 0
    %7171 = vmatprep.subr.bf16.mxu0 0
    %7172 = vmatpush1.bf16.msra.mxu0 0
    %7173 = vmatprep.subr.bf16.mxu0 0
    %7174 = vmatpush1.bf16.msra.mxu0 0
    %7175 = vmatprep.subr.bf16.mxu0 %v7159
    %7176 = vmatpush1.bf16.msra.mxu0 %v7156
    %7177 = vmatprep.subr.bf16.mxu0 0
    %7178 = vmatpush2.bf16.msra.mxu0 0
    %7179 = vmatprep.subr.bf16.mxu0 0
    %7180 = vmatpush2.bf16.msra.mxu0 0
    %7181 = vmatprep.subr.bf16.mxu0 0
    %7182 = vmatpush2.bf16.msra.mxu0 0
    %7183 = vmatprep.subr.bf16.mxu0 0
    %7184 = vmatpush2.bf16.msra.mxu0 0
    %7185 = vmatprep.subr.bf16.mxu0 0
    %7186 = vmatpush2.bf16.msra.mxu0 0
    %7187 = vmatprep.subr.bf16.mxu0 0
    %7188 = vmatpush2.bf16.msra.mxu0 0
    %7189 = vmatprep.subr.bf16.mxu0 0
    %7190 = vmatpush2.bf16.msra.mxu0 0
    %7191 = vmatprep.subr.bf16.mxu0 0
    %7192 = vmatpush2.bf16.msra.mxu0 0
    %7193 = vmatprep.mubr.bf16.mxu0 0
    %7194 = vmatmul.mubr.bf16.gmra.mxu0 %v2949
    %v7195 = vpop.f32.mrf.mxu0
    %v7196 = vadd.f32 0.0, %v7195
    %v7197 = vpop.f32.mrf.mxu0
    %v7198 = vadd.f32 0.0, %v7197
    %v7199 = vpop.f32.mrf.mxu0
    %v7200 = vadd.f32 0.0, %v7199
    %v7201 = vpop.f32.mrf.mxu0
    %v7202 = vadd.f32 0.0, %v7201
    %7203 = vdwg.mxu0
    %v7204 = vadd.f32 %v7146, %v7196
    %v7205 = vadd.f32 %v7147, %v7198
    %v7206 = vadd.f32 %v7148, %v7200
    %v7207 = vadd.f32 %v7149, %v7202
    %7208 = vrot.lane.b32.xlu0 %v6579, 99
    %v7209 = vpop.permute.xlu0 %7208
    %7210 = vrot.lane.b32.xlu0 %v6580, 99
    %v7211 = vpop.permute.xlu0 %7210
    %v7212 = vsel %vm3013, %v7209, %v7211
    %v7214 = vsel %vm2297, %v7212, 0
    %v7217 = vsel %vm2297, %v7211, 0
    %7219 = vmatprep.subr.bf16.mxu0 0
    %7220 = vmatpush1.bf16.msra.mxu0 0
    %7221 = vmatprep.subr.bf16.mxu0 0
    %7222 = vmatpush1.bf16.msra.mxu0 0
    %7223 = vmatprep.subr.bf16.mxu0 0
    %7224 = vmatpush1.bf16.msra.mxu0 0
    %7225 = vmatprep.subr.bf16.mxu0 0
    %7226 = vmatpush1.bf16.msra.mxu0 0
    %7227 = vmatprep.subr.bf16.mxu0 0
    %7228 = vmatpush1.bf16.msra.mxu0 0
    %7229 = vmatprep.subr.bf16.mxu0 0
    %7230 = vmatpush1.bf16.msra.mxu0 0
    %7231 = vmatprep.subr.bf16.mxu0 0
    %7232 = vmatpush1.bf16.msra.mxu0 0
    %7233 = vmatprep.subr.bf16.mxu0 %v7217
    %7234 = vmatpush1.bf16.msra.mxu0 %v7214
    %7235 = vmatprep.subr.bf16.mxu0 0
    %7236 = vmatpush2.bf16.msra.mxu0 0
    %7237 = vmatprep.subr.bf16.mxu0 0
    %7238 = vmatpush2.bf16.msra.mxu0 0
    %7239 = vmatprep.subr.bf16.mxu0 0
    %7240 = vmatpush2.bf16.msra.mxu0 0
    %7241 = vmatprep.subr.bf16.mxu0 0
    %7242 = vmatpush2.bf16.msra.mxu0 0
    %7243 = vmatprep.subr.bf16.mxu0 0
    %7244 = vmatpush2.bf16.msra.mxu0 0
    %7245 = vmatprep.subr.bf16.mxu0 0
    %7246 = vmatpush2.bf16.msra.mxu0 0
    %7247 = vmatprep.subr.bf16.mxu0 0
    %7248 = vmatpush2.bf16.msra.mxu0 0
    %7249 = vmatprep.subr.bf16.mxu0 0
    %7250 = vmatpush2.bf16.msra.mxu0 0
    %7251 = vmatprep.mubr.bf16.mxu0 0
    %7252 = vmatmul.mubr.bf16.gmra.mxu0 %v3016
    %v7253 = vpop.f32.mrf.mxu0
    %v7254 = vadd.f32 0.0, %v7253
    %v7255 = vpop.f32.mrf.mxu0
    %v7256 = vadd.f32 0.0, %v7255
    %v7257 = vpop.f32.mrf.mxu0
    %v7258 = vadd.f32 0.0, %v7257
    %v7259 = vpop.f32.mrf.mxu0
    %v7260 = vadd.f32 0.0, %v7259
    %7261 = vdwg.mxu0
    %v7262 = vadd.f32 %v7204, %v7254
    %v7263 = vadd.f32 %v7205, %v7256
    %v7264 = vadd.f32 %v7206, %v7258
    %v7265 = vadd.f32 %v7207, %v7260
    %7266 = vrot.lane.b32.xlu0 %v6579, 98
    %v7267 = vpop.permute.xlu0 %7266
    %7268 = vrot.lane.b32.xlu0 %v6580, 98
    %v7269 = vpop.permute.xlu0 %7268
    %v7270 = vsel %vm3080, %v7267, %v7269
    %v7272 = vsel %vm2297, %v7270, 0
    %v7275 = vsel %vm2297, %v7269, 0
    %7277 = vmatprep.subr.bf16.mxu0 0
    %7278 = vmatpush1.bf16.msra.mxu0 0
    %7279 = vmatprep.subr.bf16.mxu0 0
    %7280 = vmatpush1.bf16.msra.mxu0 0
    %7281 = vmatprep.subr.bf16.mxu0 0
    %7282 = vmatpush1.bf16.msra.mxu0 0
    %7283 = vmatprep.subr.bf16.mxu0 0
    %7284 = vmatpush1.bf16.msra.mxu0 0
    %7285 = vmatprep.subr.bf16.mxu0 0
    %7286 = vmatpush1.bf16.msra.mxu0 0
    %7287 = vmatprep.subr.bf16.mxu0 0
    %7288 = vmatpush1.bf16.msra.mxu0 0
    %7289 = vmatprep.subr.bf16.mxu0 0
    %7290 = vmatpush1.bf16.msra.mxu0 0
    %7291 = vmatprep.subr.bf16.mxu0 %v7275
    %7292 = vmatpush1.bf16.msra.mxu0 %v7272
    %7293 = vmatprep.subr.bf16.mxu0 0
    %7294 = vmatpush2.bf16.msra.mxu0 0
    %7295 = vmatprep.subr.bf16.mxu0 0
    %7296 = vmatpush2.bf16.msra.mxu0 0
    %7297 = vmatprep.subr.bf16.mxu0 0
    %7298 = vmatpush2.bf16.msra.mxu0 0
    %7299 = vmatprep.subr.bf16.mxu0 0
    %7300 = vmatpush2.bf16.msra.mxu0 0
    %7301 = vmatprep.subr.bf16.mxu0 0
    %7302 = vmatpush2.bf16.msra.mxu0 0
    %7303 = vmatprep.subr.bf16.mxu0 0
    %7304 = vmatpush2.bf16.msra.mxu0 0
    %7305 = vmatprep.subr.bf16.mxu0 0
    %7306 = vmatpush2.bf16.msra.mxu0 0
    %7307 = vmatprep.subr.bf16.mxu0 0
    %7308 = vmatpush2.bf16.msra.mxu0 0
    %7309 = vmatprep.mubr.bf16.mxu0 0
    %7310 = vmatmul.mubr.bf16.gmra.mxu0 %v3083
    %v7311 = vpop.f32.mrf.mxu0
    %v7312 = vadd.f32 0.0, %v7311
    %v7313 = vpop.f32.mrf.mxu0
    %v7314 = vadd.f32 0.0, %v7313
    %v7315 = vpop.f32.mrf.mxu0
    %v7316 = vadd.f32 0.0, %v7315
    %v7317 = vpop.f32.mrf.mxu0
    %v7318 = vadd.f32 0.0, %v7317
    %7319 = vdwg.mxu0
    %v7320 = vadd.f32 %v7262, %v7312
    %v7321 = vadd.f32 %v7263, %v7314
    %v7322 = vadd.f32 %v7264, %v7316
    %v7323 = vadd.f32 %v7265, %v7318
    %7324 = vrot.lane.b32.xlu0 %v6579, 97
    %v7325 = vpop.permute.xlu0 %7324
    %7326 = vrot.lane.b32.xlu0 %v6580, 97
    %v7327 = vpop.permute.xlu0 %7326
    %v7328 = vsel %vm3147, %v7325, %v7327
    %v7330 = vsel %vm2297, %v7328, 0
    %v7333 = vsel %vm2297, %v7327, 0
    %7335 = vmatprep.subr.bf16.mxu0 0
    %7336 = vmatpush1.bf16.msra.mxu0 0
    %7337 = vmatprep.subr.bf16.mxu0 0
    %7338 = vmatpush1.bf16.msra.mxu0 0
    %7339 = vmatprep.subr.bf16.mxu0 0
    %7340 = vmatpush1.bf16.msra.mxu0 0
    %7341 = vmatprep.subr.bf16.mxu0 0
    %7342 = vmatpush1.bf16.msra.mxu0 0
    %7343 = vmatprep.subr.bf16.mxu0 0
    %7344 = vmatpush1.bf16.msra.mxu0 0
    %7345 = vmatprep.subr.bf16.mxu0 0
    %7346 = vmatpush1.bf16.msra.mxu0 0
    %7347 = vmatprep.subr.bf16.mxu0 0
    %7348 = vmatpush1.bf16.msra.mxu0 0
    %7349 = vmatprep.subr.bf16.mxu0 %v7333
    %7350 = vmatpush1.bf16.msra.mxu0 %v7330
    %7351 = vmatprep.subr.bf16.mxu0 0
    %7352 = vmatpush2.bf16.msra.mxu0 0
    %7353 = vmatprep.subr.bf16.mxu0 0
    %7354 = vmatpush2.bf16.msra.mxu0 0
    %7355 = vmatprep.subr.bf16.mxu0 0
    %7356 = vmatpush2.bf16.msra.mxu0 0
    %7357 = vmatprep.subr.bf16.mxu0 0
    %7358 = vmatpush2.bf16.msra.mxu0 0
    %7359 = vmatprep.subr.bf16.mxu0 0
    %7360 = vmatpush2.bf16.msra.mxu0 0
    %7361 = vmatprep.subr.bf16.mxu0 0
    %7362 = vmatpush2.bf16.msra.mxu0 0
    %7363 = vmatprep.subr.bf16.mxu0 0
    %7364 = vmatpush2.bf16.msra.mxu0 0
    %7365 = vmatprep.subr.bf16.mxu0 0
    %7366 = vmatpush2.bf16.msra.mxu0 0
    %7367 = vmatprep.mubr.bf16.mxu0 0
    %7368 = vmatmul.mubr.bf16.gmra.mxu0 %v3150
    %v7369 = vpop.f32.mrf.mxu0
    %v7370 = vadd.f32 0.0, %v7369
    %v7371 = vpop.f32.mrf.mxu0
    %v7372 = vadd.f32 0.0, %v7371
    %v7373 = vpop.f32.mrf.mxu0
    %v7374 = vadd.f32 0.0, %v7373
    %v7375 = vpop.f32.mrf.mxu0
    %v7376 = vadd.f32 0.0, %v7375
    %7377 = vdwg.mxu0
    %v7378 = vadd.f32 %v7320, %v7370
    %v7379 = vadd.f32 %v7321, %v7372
    %v7380 = vadd.f32 %v7322, %v7374
    %v7381 = vadd.f32 %v7323, %v7376
    %7382 = vrot.lane.b32.xlu0 %v6579, 96
    %v7383 = vpop.permute.xlu0 %7382
    %7384 = vrot.lane.b32.xlu0 %v6580, 96
    %v7385 = vpop.permute.xlu0 %7384
    %v7386 = vsel %vm3214, %v7383, %v7385
    %v7388 = vsel %vm2297, %v7386, 0
    %v7391 = vsel %vm2297, %v7385, 0
    %7393 = vmatprep.subr.bf16.mxu0 0
    %7394 = vmatpush1.bf16.msra.mxu0 0
    %7395 = vmatprep.subr.bf16.mxu0 0
    %7396 = vmatpush1.bf16.msra.mxu0 0
    %7397 = vmatprep.subr.bf16.mxu0 0
    %7398 = vmatpush1.bf16.msra.mxu0 0
    %7399 = vmatprep.subr.bf16.mxu0 0
    %7400 = vmatpush1.bf16.msra.mxu0 0
    %7401 = vmatprep.subr.bf16.mxu0 0
    %7402 = vmatpush1.bf16.msra.mxu0 0
    %7403 = vmatprep.subr.bf16.mxu0 0
    %7404 = vmatpush1.bf16.msra.mxu0 0
    %7405 = vmatprep.subr.bf16.mxu0 0
    %7406 = vmatpush1.bf16.msra.mxu0 0
    %7407 = vmatprep.subr.bf16.mxu0 %v7391
    %7408 = vmatpush1.bf16.msra.mxu0 %v7388
    %7409 = vmatprep.subr.bf16.mxu0 0
    %7410 = vmatpush2.bf16.msra.mxu0 0
    %7411 = vmatprep.subr.bf16.mxu0 0
    %7412 = vmatpush2.bf16.msra.mxu0 0
    %7413 = vmatprep.subr.bf16.mxu0 0
    %7414 = vmatpush2.bf16.msra.mxu0 0
    %7415 = vmatprep.subr.bf16.mxu0 0
    %7416 = vmatpush2.bf16.msra.mxu0 0
    %7417 = vmatprep.subr.bf16.mxu0 0
    %7418 = vmatpush2.bf16.msra.mxu0 0
    %7419 = vmatprep.subr.bf16.mxu0 0
    %7420 = vmatpush2.bf16.msra.mxu0 0
    %7421 = vmatprep.subr.bf16.mxu0 0
    %7422 = vmatpush2.bf16.msra.mxu0 0
    %7423 = vmatprep.subr.bf16.mxu0 0
    %7424 = vmatpush2.bf16.msra.mxu0 0
    %7425 = vmatprep.mubr.bf16.mxu0 0
    %7426 = vmatmul.mubr.bf16.gmra.mxu0 %v3217
    %v7427 = vpop.f32.mrf.mxu0
    %v7428 = vadd.f32 0.0, %v7427
    %v7429 = vpop.f32.mrf.mxu0
    %v7430 = vadd.f32 0.0, %v7429
    %v7431 = vpop.f32.mrf.mxu0
    %v7432 = vadd.f32 0.0, %v7431
    %v7433 = vpop.f32.mrf.mxu0
    %v7434 = vadd.f32 0.0, %v7433
    %7435 = vdwg.mxu0
    %v7436 = vadd.f32 %v7378, %v7428
    %v7437 = vadd.f32 %v7379, %v7430
    %v7438 = vadd.f32 %v7380, %v7432
    %v7439 = vadd.f32 %v7381, %v7434
    %7440 = vrot.lane.b32.xlu0 %v6579, 86
    %v7441 = vpop.permute.xlu0 %7440
    %7442 = vrot.lane.b32.xlu0 %v6580, 86
    %v7443 = vpop.permute.xlu0 %7442
    %v7444 = vsel %vm3281, %v7441, %v7443
    %v7446 = vsel %vm2297, %v7444, 0
    %v7449 = vsel %vm2297, %v7443, 0
    %7451 = vmatprep.subr.bf16.mxu0 0
    %7452 = vmatpush1.bf16.msra.mxu0 0
    %7453 = vmatprep.subr.bf16.mxu0 0
    %7454 = vmatpush1.bf16.msra.mxu0 0
    %7455 = vmatprep.subr.bf16.mxu0 0
    %7456 = vmatpush1.bf16.msra.mxu0 0
    %7457 = vmatprep.subr.bf16.mxu0 0
    %7458 = vmatpush1.bf16.msra.mxu0 0
    %7459 = vmatprep.subr.bf16.mxu0 0
    %7460 = vmatpush1.bf16.msra.mxu0 0
    %7461 = vmatprep.subr.bf16.mxu0 0
    %7462 = vmatpush1.bf16.msra.mxu0 0
    %7463 = vmatprep.subr.bf16.mxu0 0
    %7464 = vmatpush1.bf16.msra.mxu0 0
    %7465 = vmatprep.subr.bf16.mxu0 %v7449
    %7466 = vmatpush1.bf16.msra.mxu0 %v7446
    %7467 = vmatprep.subr.bf16.mxu0 0
    %7468 = vmatpush2.bf16.msra.mxu0 0
    %7469 = vmatprep.subr.bf16.mxu0 0
    %7470 = vmatpush2.bf16.msra.mxu0 0
    %7471 = vmatprep.subr.bf16.mxu0 0
    %7472 = vmatpush2.bf16.msra.mxu0 0
    %7473 = vmatprep.subr.bf16.mxu0 0
    %7474 = vmatpush2.bf16.msra.mxu0 0
    %7475 = vmatprep.subr.bf16.mxu0 0
    %7476 = vmatpush2.bf16.msra.mxu0 0
    %7477 = vmatprep.subr.bf16.mxu0 0
    %7478 = vmatpush2.bf16.msra.mxu0 0
    %7479 = vmatprep.subr.bf16.mxu0 0
    %7480 = vmatpush2.bf16.msra.mxu0 0
    %7481 = vmatprep.subr.bf16.mxu0 0
    %7482 = vmatpush2.bf16.msra.mxu0 0
    %7483 = vmatprep.mubr.bf16.mxu0 0
    %7484 = vmatmul.mubr.bf16.gmra.mxu0 %v3284
    %v7485 = vpop.f32.mrf.mxu0
    %v7486 = vadd.f32 0.0, %v7485
    %v7487 = vpop.f32.mrf.mxu0
    %v7488 = vadd.f32 0.0, %v7487
    %v7489 = vpop.f32.mrf.mxu0
    %v7490 = vadd.f32 0.0, %v7489
    %v7491 = vpop.f32.mrf.mxu0
    %v7492 = vadd.f32 0.0, %v7491
    %7493 = vdwg.mxu0
    %v7494 = vadd.f32 %v7436, %v7486
    %v7495 = vadd.f32 %v7437, %v7488
    %v7496 = vadd.f32 %v7438, %v7490
    %v7497 = vadd.f32 %v7439, %v7492
    %7498 = vrot.lane.b32.xlu0 %v6579, 85
    %v7499 = vpop.permute.xlu0 %7498
    %7500 = vrot.lane.b32.xlu0 %v6580, 85
    %v7501 = vpop.permute.xlu0 %7500
    %v7502 = vsel %vm3348, %v7499, %v7501
    %v7504 = vsel %vm2297, %v7502, 0
    %v7507 = vsel %vm2297, %v7501, 0
    %7509 = vmatprep.subr.bf16.mxu0 0
    %7510 = vmatpush1.bf16.msra.mxu0 0
    %7511 = vmatprep.subr.bf16.mxu0 0
    %7512 = vmatpush1.bf16.msra.mxu0 0
    %7513 = vmatprep.subr.bf16.mxu0 0
    %7514 = vmatpush1.bf16.msra.mxu0 0
    %7515 = vmatprep.subr.bf16.mxu0 0
    %7516 = vmatpush1.bf16.msra.mxu0 0
    %7517 = vmatprep.subr.bf16.mxu0 0
    %7518 = vmatpush1.bf16.msra.mxu0 0
    %7519 = vmatprep.subr.bf16.mxu0 0
    %7520 = vmatpush1.bf16.msra.mxu0 0
    %7521 = vmatprep.subr.bf16.mxu0 0
    %7522 = vmatpush1.bf16.msra.mxu0 0
    %7523 = vmatprep.subr.bf16.mxu0 %v7507
    %7524 = vmatpush1.bf16.msra.mxu0 %v7504
    %7525 = vmatprep.subr.bf16.mxu0 0
    %7526 = vmatpush2.bf16.msra.mxu0 0
    %7527 = vmatprep.subr.bf16.mxu0 0
    %7528 = vmatpush2.bf16.msra.mxu0 0
    %7529 = vmatprep.subr.bf16.mxu0 0
    %7530 = vmatpush2.bf16.msra.mxu0 0
    %7531 = vmatprep.subr.bf16.mxu0 0
    %7532 = vmatpush2.bf16.msra.mxu0 0
    %7533 = vmatprep.subr.bf16.mxu0 0
    %7534 = vmatpush2.bf16.msra.mxu0 0
    %7535 = vmatprep.subr.bf16.mxu0 0
    %7536 = vmatpush2.bf16.msra.mxu0 0
    %7537 = vmatprep.subr.bf16.mxu0 0
    %7538 = vmatpush2.bf16.msra.mxu0 0
    %7539 = vmatprep.subr.bf16.mxu0 0
    %7540 = vmatpush2.bf16.msra.mxu0 0
    %7541 = vmatprep.mubr.bf16.mxu0 0
    %7542 = vmatmul.mubr.bf16.gmra.mxu0 %v3351
    %v7543 = vpop.f32.mrf.mxu0
    %v7544 = vadd.f32 0.0, %v7543
    %v7545 = vpop.f32.mrf.mxu0
    %v7546 = vadd.f32 0.0, %v7545
    %v7547 = vpop.f32.mrf.mxu0
    %v7548 = vadd.f32 0.0, %v7547
    %v7549 = vpop.f32.mrf.mxu0
    %v7550 = vadd.f32 0.0, %v7549
    %7551 = vdwg.mxu0
    %v7552 = vadd.f32 %v7494, %v7544
    %v7553 = vadd.f32 %v7495, %v7546
    %v7554 = vadd.f32 %v7496, %v7548
    %v7555 = vadd.f32 %v7497, %v7550
    %7556 = vrot.lane.b32.xlu0 %v6579, 84
    %v7557 = vpop.permute.xlu0 %7556
    %7558 = vrot.lane.b32.xlu0 %v6580, 84
    %v7559 = vpop.permute.xlu0 %7558
    %v7560 = vsel %vm3415, %v7557, %v7559
    %v7562 = vsel %vm2297, %v7560, 0
    %v7565 = vsel %vm2297, %v7559, 0
    %7567 = vmatprep.subr.bf16.mxu0 0
    %7568 = vmatpush1.bf16.msra.mxu0 0
    %7569 = vmatprep.subr.bf16.mxu0 0
    %7570 = vmatpush1.bf16.msra.mxu0 0
    %7571 = vmatprep.subr.bf16.mxu0 0
    %7572 = vmatpush1.bf16.msra.mxu0 0
    %7573 = vmatprep.subr.bf16.mxu0 0
    %7574 = vmatpush1.bf16.msra.mxu0 0
    %7575 = vmatprep.subr.bf16.mxu0 0
    %7576 = vmatpush1.bf16.msra.mxu0 0
    %7577 = vmatprep.subr.bf16.mxu0 0
    %7578 = vmatpush1.bf16.msra.mxu0 0
    %7579 = vmatprep.subr.bf16.mxu0 0
    %7580 = vmatpush1.bf16.msra.mxu0 0
    %7581 = vmatprep.subr.bf16.mxu0 %v7565
    %7582 = vmatpush1.bf16.msra.mxu0 %v7562
    %7583 = vmatprep.subr.bf16.mxu0 0
    %7584 = vmatpush2.bf16.msra.mxu0 0
    %7585 = vmatprep.subr.bf16.mxu0 0
    %7586 = vmatpush2.bf16.msra.mxu0 0
    %7587 = vmatprep.subr.bf16.mxu0 0
    %7588 = vmatpush2.bf16.msra.mxu0 0
    %7589 = vmatprep.subr.bf16.mxu0 0
    %7590 = vmatpush2.bf16.msra.mxu0 0
    %7591 = vmatprep.subr.bf16.mxu0 0
    %7592 = vmatpush2.bf16.msra.mxu0 0
    %7593 = vmatprep.subr.bf16.mxu0 0
    %7594 = vmatpush2.bf16.msra.mxu0 0
    %7595 = vmatprep.subr.bf16.mxu0 0
    %7596 = vmatpush2.bf16.msra.mxu0 0
    %7597 = vmatprep.subr.bf16.mxu0 0
    %7598 = vmatpush2.bf16.msra.mxu0 0
    %7599 = vmatprep.mubr.bf16.mxu0 0
    %7600 = vmatmul.mubr.bf16.gmra.mxu0 %v3418
    %v7601 = vpop.f32.mrf.mxu0
    %v7602 = vadd.f32 0.0, %v7601
    %v7603 = vpop.f32.mrf.mxu0
    %v7604 = vadd.f32 0.0, %v7603
    %v7605 = vpop.f32.mrf.mxu0
    %v7606 = vadd.f32 0.0, %v7605
    %v7607 = vpop.f32.mrf.mxu0
    %v7608 = vadd.f32 0.0, %v7607
    %7609 = vdwg.mxu0
    %v7610 = vadd.f32 %v7552, %v7602
    %v7611 = vadd.f32 %v7553, %v7604
    %v7612 = vadd.f32 %v7554, %v7606
    %v7613 = vadd.f32 %v7555, %v7608
    %7614 = vrot.lane.b32.xlu0 %v6579, 83
    %v7615 = vpop.permute.xlu0 %7614
    %7616 = vrot.lane.b32.xlu0 %v6580, 83
    %v7617 = vpop.permute.xlu0 %7616
    %v7618 = vsel %vm3482, %v7615, %v7617
    %v7620 = vsel %vm2297, %v7618, 0
    %v7623 = vsel %vm2297, %v7617, 0
    %7625 = vmatprep.subr.bf16.mxu0 0
    %7626 = vmatpush1.bf16.msra.mxu0 0
    %7627 = vmatprep.subr.bf16.mxu0 0
    %7628 = vmatpush1.bf16.msra.mxu0 0
    %7629 = vmatprep.subr.bf16.mxu0 0
    %7630 = vmatpush1.bf16.msra.mxu0 0
    %7631 = vmatprep.subr.bf16.mxu0 0
    %7632 = vmatpush1.bf16.msra.mxu0 0
    %7633 = vmatprep.subr.bf16.mxu0 0
    %7634 = vmatpush1.bf16.msra.mxu0 0
    %7635 = vmatprep.subr.bf16.mxu0 0
    %7636 = vmatpush1.bf16.msra.mxu0 0
    %7637 = vmatprep.subr.bf16.mxu0 0
    %7638 = vmatpush1.bf16.msra.mxu0 0
    %7639 = vmatprep.subr.bf16.mxu0 %v7623
    %7640 = vmatpush1.bf16.msra.mxu0 %v7620
    %7641 = vmatprep.subr.bf16.mxu0 0
    %7642 = vmatpush2.bf16.msra.mxu0 0
    %7643 = vmatprep.subr.bf16.mxu0 0
    %7644 = vmatpush2.bf16.msra.mxu0 0
    %7645 = vmatprep.subr.bf16.mxu0 0
    %7646 = vmatpush2.bf16.msra.mxu0 0
    %7647 = vmatprep.subr.bf16.mxu0 0
    %7648 = vmatpush2.bf16.msra.mxu0 0
    %7649 = vmatprep.subr.bf16.mxu0 0
    %7650 = vmatpush2.bf16.msra.mxu0 0
    %7651 = vmatprep.subr.bf16.mxu0 0
    %7652 = vmatpush2.bf16.msra.mxu0 0
    %7653 = vmatprep.subr.bf16.mxu0 0
    %7654 = vmatpush2.bf16.msra.mxu0 0
    %7655 = vmatprep.subr.bf16.mxu0 0
    %7656 = vmatpush2.bf16.msra.mxu0 0
    %7657 = vmatprep.mubr.bf16.mxu0 0
    %7658 = vmatmul.mubr.bf16.gmra.mxu0 %v3485
    %v7659 = vpop.f32.mrf.mxu0
    %v7660 = vadd.f32 0.0, %v7659
    %v7661 = vpop.f32.mrf.mxu0
    %v7662 = vadd.f32 0.0, %v7661
    %v7663 = vpop.f32.mrf.mxu0
    %v7664 = vadd.f32 0.0, %v7663
    %v7665 = vpop.f32.mrf.mxu0
    %v7666 = vadd.f32 0.0, %v7665
    %7667 = vdwg.mxu0
    %v7668 = vadd.f32 %v7610, %v7660
    %v7669 = vadd.f32 %v7611, %v7662
    %v7670 = vadd.f32 %v7612, %v7664
    %v7671 = vadd.f32 %v7613, %v7666
    %7672 = vrot.lane.b32.xlu0 %v6579, 82
    %v7673 = vpop.permute.xlu0 %7672
    %7674 = vrot.lane.b32.xlu0 %v6580, 82
    %v7675 = vpop.permute.xlu0 %7674
    %v7676 = vsel %vm3549, %v7673, %v7675
    %v7678 = vsel %vm2297, %v7676, 0
    %v7681 = vsel %vm2297, %v7675, 0
    %7683 = vmatprep.subr.bf16.mxu0 0
    %7684 = vmatpush1.bf16.msra.mxu0 0
    %7685 = vmatprep.subr.bf16.mxu0 0
    %7686 = vmatpush1.bf16.msra.mxu0 0
    %7687 = vmatprep.subr.bf16.mxu0 0
    %7688 = vmatpush1.bf16.msra.mxu0 0
    %7689 = vmatprep.subr.bf16.mxu0 0
    %7690 = vmatpush1.bf16.msra.mxu0 0
    %7691 = vmatprep.subr.bf16.mxu0 0
    %7692 = vmatpush1.bf16.msra.mxu0 0
    %7693 = vmatprep.subr.bf16.mxu0 0
    %7694 = vmatpush1.bf16.msra.mxu0 0
    %7695 = vmatprep.subr.bf16.mxu0 0
    %7696 = vmatpush1.bf16.msra.mxu0 0
    %7697 = vmatprep.subr.bf16.mxu0 %v7681
    %7698 = vmatpush1.bf16.msra.mxu0 %v7678
    %7699 = vmatprep.subr.bf16.mxu0 0
    %7700 = vmatpush2.bf16.msra.mxu0 0
    %7701 = vmatprep.subr.bf16.mxu0 0
    %7702 = vmatpush2.bf16.msra.mxu0 0
    %7703 = vmatprep.subr.bf16.mxu0 0
    %7704 = vmatpush2.bf16.msra.mxu0 0
    %7705 = vmatprep.subr.bf16.mxu0 0
    %7706 = vmatpush2.bf16.msra.mxu0 0
    %7707 = vmatprep.subr.bf16.mxu0 0
    %7708 = vmatpush2.bf16.msra.mxu0 0
    %7709 = vmatprep.subr.bf16.mxu0 0
    %7710 = vmatpush2.bf16.msra.mxu0 0
    %7711 = vmatprep.subr.bf16.mxu0 0
    %7712 = vmatpush2.bf16.msra.mxu0 0
    %7713 = vmatprep.subr.bf16.mxu0 0
    %7714 = vmatpush2.bf16.msra.mxu0 0
    %7715 = vmatprep.mubr.bf16.mxu0 0
    %7716 = vmatmul.mubr.bf16.gmra.mxu0 %v3552
    %v7717 = vpop.f32.mrf.mxu0
    %v7718 = vadd.f32 0.0, %v7717
    %v7719 = vpop.f32.mrf.mxu0
    %v7720 = vadd.f32 0.0, %v7719
    %v7721 = vpop.f32.mrf.mxu0
    %v7722 = vadd.f32 0.0, %v7721
    %v7723 = vpop.f32.mrf.mxu0
    %v7724 = vadd.f32 0.0, %v7723
    %7725 = vdwg.mxu0
    %v7726 = vadd.f32 %v7668, %v7718
    %v7727 = vadd.f32 %v7669, %v7720
    %v7728 = vadd.f32 %v7670, %v7722
    %v7729 = vadd.f32 %v7671, %v7724
    %7730 = vrot.lane.b32.xlu0 %v6579, 72
    %v7731 = vpop.permute.xlu0 %7730
    %7732 = vrot.lane.b32.xlu0 %v6580, 72
    %v7733 = vpop.permute.xlu0 %7732
    %v7734 = vsel %vm3616, %v7731, %v7733
    %v7736 = vsel %vm2297, %v7734, 0
    %v7739 = vsel %vm2297, %v7733, 0
    %7741 = vmatprep.subr.bf16.mxu0 0
    %7742 = vmatpush1.bf16.msra.mxu0 0
    %7743 = vmatprep.subr.bf16.mxu0 0
    %7744 = vmatpush1.bf16.msra.mxu0 0
    %7745 = vmatprep.subr.bf16.mxu0 0
    %7746 = vmatpush1.bf16.msra.mxu0 0
    %7747 = vmatprep.subr.bf16.mxu0 0
    %7748 = vmatpush1.bf16.msra.mxu0 0
    %7749 = vmatprep.subr.bf16.mxu0 0
    %7750 = vmatpush1.bf16.msra.mxu0 0
    %7751 = vmatprep.subr.bf16.mxu0 0
    %7752 = vmatpush1.bf16.msra.mxu0 0
    %7753 = vmatprep.subr.bf16.mxu0 0
    %7754 = vmatpush1.bf16.msra.mxu0 0
    %7755 = vmatprep.subr.bf16.mxu0 %v7739
    %7756 = vmatpush1.bf16.msra.mxu0 %v7736
    %7757 = vmatprep.subr.bf16.mxu0 0
    %7758 = vmatpush2.bf16.msra.mxu0 0
    %7759 = vmatprep.subr.bf16.mxu0 0
    %7760 = vmatpush2.bf16.msra.mxu0 0
    %7761 = vmatprep.subr.bf16.mxu0 0
    %7762 = vmatpush2.bf16.msra.mxu0 0
    %7763 = vmatprep.subr.bf16.mxu0 0
    %7764 = vmatpush2.bf16.msra.mxu0 0
    %7765 = vmatprep.subr.bf16.mxu0 0
    %7766 = vmatpush2.bf16.msra.mxu0 0
    %7767 = vmatprep.subr.bf16.mxu0 0
    %7768 = vmatpush2.bf16.msra.mxu0 0
    %7769 = vmatprep.subr.bf16.mxu0 0
    %7770 = vmatpush2.bf16.msra.mxu0 0
    %7771 = vmatprep.subr.bf16.mxu0 0
    %7772 = vmatpush2.bf16.msra.mxu0 0
    %7773 = vmatprep.mubr.bf16.mxu0 0
    %7774 = vmatmul.mubr.bf16.gmra.mxu0 %v3619
    %v7775 = vpop.f32.mrf.mxu0
    %v7776 = vadd.f32 0.0, %v7775
    %v7777 = vpop.f32.mrf.mxu0
    %v7778 = vadd.f32 0.0, %v7777
    %v7779 = vpop.f32.mrf.mxu0
    %v7780 = vadd.f32 0.0, %v7779
    %v7781 = vpop.f32.mrf.mxu0
    %v7782 = vadd.f32 0.0, %v7781
    %7783 = vdwg.mxu0
    %v7784 = vadd.f32 %v7726, %v7776
    %v7785 = vadd.f32 %v7727, %v7778
    %v7786 = vadd.f32 %v7728, %v7780
    %v7787 = vadd.f32 %v7729, %v7782
    %7788 = vrot.lane.b32.xlu0 %v6579, 71
    %v7789 = vpop.permute.xlu0 %7788
    %7790 = vrot.lane.b32.xlu0 %v6580, 71
    %v7791 = vpop.permute.xlu0 %7790
    %v7792 = vsel %vm3683, %v7789, %v7791
    %v7794 = vsel %vm2297, %v7792, 0
    %v7797 = vsel %vm2297, %v7791, 0
    %7799 = vmatprep.subr.bf16.mxu0 0
    %7800 = vmatpush1.bf16.msra.mxu0 0
    %7801 = vmatprep.subr.bf16.mxu0 0
    %7802 = vmatpush1.bf16.msra.mxu0 0
    %7803 = vmatprep.subr.bf16.mxu0 0
    %7804 = vmatpush1.bf16.msra.mxu0 0
    %7805 = vmatprep.subr.bf16.mxu0 0
    %7806 = vmatpush1.bf16.msra.mxu0 0
    %7807 = vmatprep.subr.bf16.mxu0 0
    %7808 = vmatpush1.bf16.msra.mxu0 0
    %7809 = vmatprep.subr.bf16.mxu0 0
    %7810 = vmatpush1.bf16.msra.mxu0 0
    %7811 = vmatprep.subr.bf16.mxu0 0
    %7812 = vmatpush1.bf16.msra.mxu0 0
    %7813 = vmatprep.subr.bf16.mxu0 %v7797
    %7814 = vmatpush1.bf16.msra.mxu0 %v7794
    %7815 = vmatprep.subr.bf16.mxu0 0
    %7816 = vmatpush2.bf16.msra.mxu0 0
    %7817 = vmatprep.subr.bf16.mxu0 0
    %7818 = vmatpush2.bf16.msra.mxu0 0
    %7819 = vmatprep.subr.bf16.mxu0 0
    %7820 = vmatpush2.bf16.msra.mxu0 0
    %7821 = vmatprep.subr.bf16.mxu0 0
    %7822 = vmatpush2.bf16.msra.mxu0 0
    %7823 = vmatprep.subr.bf16.mxu0 0
    %7824 = vmatpush2.bf16.msra.mxu0 0
    %7825 = vmatprep.subr.bf16.mxu0 0
    %7826 = vmatpush2.bf16.msra.mxu0 0
    %7827 = vmatprep.subr.bf16.mxu0 0
    %7828 = vmatpush2.bf16.msra.mxu0 0
    %7829 = vmatprep.subr.bf16.mxu0 0
    %7830 = vmatpush2.bf16.msra.mxu0 0
    %7831 = vmatprep.mubr.bf16.mxu0 0
    %7832 = vmatmul.mubr.bf16.gmra.mxu0 %v3686
    %v7833 = vpop.f32.mrf.mxu0
    %v7834 = vadd.f32 0.0, %v7833
    %v7835 = vpop.f32.mrf.mxu0
    %v7836 = vadd.f32 0.0, %v7835
    %v7837 = vpop.f32.mrf.mxu0
    %v7838 = vadd.f32 0.0, %v7837
    %v7839 = vpop.f32.mrf.mxu0
    %v7840 = vadd.f32 0.0, %v7839
    %7841 = vdwg.mxu0
    %v7842 = vadd.f32 %v7784, %v7834
    %v7843 = vadd.f32 %v7785, %v7836
    %v7844 = vadd.f32 %v7786, %v7838
    %v7845 = vadd.f32 %v7787, %v7840
    %7846 = vrot.lane.b32.xlu0 %v6579, 70
    %v7847 = vpop.permute.xlu0 %7846
    %7848 = vrot.lane.b32.xlu0 %v6580, 70
    %v7849 = vpop.permute.xlu0 %7848
    %v7850 = vsel %vm3750, %v7847, %v7849
    %v7852 = vsel %vm2297, %v7850, 0
    %v7855 = vsel %vm2297, %v7849, 0
    %7857 = vmatprep.subr.bf16.mxu0 0
    %7858 = vmatpush1.bf16.msra.mxu0 0
    %7859 = vmatprep.subr.bf16.mxu0 0
    %7860 = vmatpush1.bf16.msra.mxu0 0
    %7861 = vmatprep.subr.bf16.mxu0 0
    %7862 = vmatpush1.bf16.msra.mxu0 0
    %7863 = vmatprep.subr.bf16.mxu0 0
    %7864 = vmatpush1.bf16.msra.mxu0 0
    %7865 = vmatprep.subr.bf16.mxu0 0
    %7866 = vmatpush1.bf16.msra.mxu0 0
    %7867 = vmatprep.subr.bf16.mxu0 0
    %7868 = vmatpush1.bf16.msra.mxu0 0
    %7869 = vmatprep.subr.bf16.mxu0 0
    %7870 = vmatpush1.bf16.msra.mxu0 0
    %7871 = vmatprep.subr.bf16.mxu0 %v7855
    %7872 = vmatpush1.bf16.msra.mxu0 %v7852
    %7873 = vmatprep.subr.bf16.mxu0 0
    %7874 = vmatpush2.bf16.msra.mxu0 0
    %7875 = vmatprep.subr.bf16.mxu0 0
    %7876 = vmatpush2.bf16.msra.mxu0 0
    %7877 = vmatprep.subr.bf16.mxu0 0
    %7878 = vmatpush2.bf16.msra.mxu0 0
    %7879 = vmatprep.subr.bf16.mxu0 0
    %7880 = vmatpush2.bf16.msra.mxu0 0
    %7881 = vmatprep.subr.bf16.mxu0 0
    %7882 = vmatpush2.bf16.msra.mxu0 0
    %7883 = vmatprep.subr.bf16.mxu0 0
    %7884 = vmatpush2.bf16.msra.mxu0 0
    %7885 = vmatprep.subr.bf16.mxu0 0
    %7886 = vmatpush2.bf16.msra.mxu0 0
    %7887 = vmatprep.subr.bf16.mxu0 0
    %7888 = vmatpush2.bf16.msra.mxu0 0
    %7889 = vmatprep.mubr.bf16.mxu0 0
    %7890 = vmatmul.mubr.bf16.gmra.mxu0 %v3753
    %v7891 = vpop.f32.mrf.mxu0
    %v7892 = vadd.f32 0.0, %v7891
    %v7893 = vpop.f32.mrf.mxu0
    %v7894 = vadd.f32 0.0, %v7893
    %v7895 = vpop.f32.mrf.mxu0
    %v7896 = vadd.f32 0.0, %v7895
    %v7897 = vpop.f32.mrf.mxu0
    %v7898 = vadd.f32 0.0, %v7897
    %7899 = vdwg.mxu0
    %v7900 = vadd.f32 %v7842, %v7892
    %v7901 = vadd.f32 %v7843, %v7894
    %v7902 = vadd.f32 %v7844, %v7896
    %v7903 = vadd.f32 %v7845, %v7898
    %7904 = vrot.lane.b32.xlu0 %v6579, 69
    %v7905 = vpop.permute.xlu0 %7904
    %7906 = vrot.lane.b32.xlu0 %v6580, 69
    %v7907 = vpop.permute.xlu0 %7906
    %v7908 = vsel %vm3817, %v7905, %v7907
    %v7910 = vsel %vm2297, %v7908, 0
    %v7913 = vsel %vm2297, %v7907, 0
    %7915 = vmatprep.subr.bf16.mxu0 0
    %7916 = vmatpush1.bf16.msra.mxu0 0
    %7917 = vmatprep.subr.bf16.mxu0 0
    %7918 = vmatpush1.bf16.msra.mxu0 0
    %7919 = vmatprep.subr.bf16.mxu0 0
    %7920 = vmatpush1.bf16.msra.mxu0 0
    %7921 = vmatprep.subr.bf16.mxu0 0
    %7922 = vmatpush1.bf16.msra.mxu0 0
    %7923 = vmatprep.subr.bf16.mxu0 0
    %7924 = vmatpush1.bf16.msra.mxu0 0
    %7925 = vmatprep.subr.bf16.mxu0 0
    %7926 = vmatpush1.bf16.msra.mxu0 0
    %7927 = vmatprep.subr.bf16.mxu0 0
    %7928 = vmatpush1.bf16.msra.mxu0 0
    %7929 = vmatprep.subr.bf16.mxu0 %v7913
    %7930 = vmatpush1.bf16.msra.mxu0 %v7910
    %7931 = vmatprep.subr.bf16.mxu0 0
    %7932 = vmatpush2.bf16.msra.mxu0 0
    %7933 = vmatprep.subr.bf16.mxu0 0
    %7934 = vmatpush2.bf16.msra.mxu0 0
    %7935 = vmatprep.subr.bf16.mxu0 0
    %7936 = vmatpush2.bf16.msra.mxu0 0
    %7937 = vmatprep.subr.bf16.mxu0 0
    %7938 = vmatpush2.bf16.msra.mxu0 0
    %7939 = vmatprep.subr.bf16.mxu0 0
    %7940 = vmatpush2.bf16.msra.mxu0 0
    %7941 = vmatprep.subr.bf16.mxu0 0
    %7942 = vmatpush2.bf16.msra.mxu0 0
    %7943 = vmatprep.subr.bf16.mxu0 0
    %7944 = vmatpush2.bf16.msra.mxu0 0
    %7945 = vmatprep.subr.bf16.mxu0 0
    %7946 = vmatpush2.bf16.msra.mxu0 0
    %7947 = vmatprep.mubr.bf16.mxu0 0
    %7948 = vmatmul.mubr.bf16.gmra.mxu0 %v3820
    %v7949 = vpop.f32.mrf.mxu0
    %v7950 = vadd.f32 0.0, %v7949
    %v7951 = vpop.f32.mrf.mxu0
    %v7952 = vadd.f32 0.0, %v7951
    %v7953 = vpop.f32.mrf.mxu0
    %v7954 = vadd.f32 0.0, %v7953
    %v7955 = vpop.f32.mrf.mxu0
    %v7956 = vadd.f32 0.0, %v7955
    %7957 = vdwg.mxu0
    %v7958 = vadd.f32 %v7900, %v7950
    %v7959 = vadd.f32 %v7901, %v7952
    %v7960 = vadd.f32 %v7902, %v7954
    %v7961 = vadd.f32 %v7903, %v7956
    %7962 = vrot.lane.b32.xlu0 %v6579, 68
    %v7963 = vpop.permute.xlu0 %7962
    %7964 = vrot.lane.b32.xlu0 %v6580, 68
    %v7965 = vpop.permute.xlu0 %7964
    %v7966 = vsel %vm3884, %v7963, %v7965
    %v7968 = vsel %vm2297, %v7966, 0
    %v7971 = vsel %vm2297, %v7965, 0
    %7973 = vmatprep.subr.bf16.mxu0 0
    %7974 = vmatpush1.bf16.msra.mxu0 0
    %7975 = vmatprep.subr.bf16.mxu0 0
    %7976 = vmatpush1.bf16.msra.mxu0 0
    %7977 = vmatprep.subr.bf16.mxu0 0
    %7978 = vmatpush1.bf16.msra.mxu0 0
    %7979 = vmatprep.subr.bf16.mxu0 0
    %7980 = vmatpush1.bf16.msra.mxu0 0
    %7981 = vmatprep.subr.bf16.mxu0 0
    %7982 = vmatpush1.bf16.msra.mxu0 0
    %7983 = vmatprep.subr.bf16.mxu0 0
    %7984 = vmatpush1.bf16.msra.mxu0 0
    %7985 = vmatprep.subr.bf16.mxu0 0
    %7986 = vmatpush1.bf16.msra.mxu0 0
    %7987 = vmatprep.subr.bf16.mxu0 %v7971
    %7988 = vmatpush1.bf16.msra.mxu0 %v7968
    %7989 = vmatprep.subr.bf16.mxu0 0
    %7990 = vmatpush2.bf16.msra.mxu0 0
    %7991 = vmatprep.subr.bf16.mxu0 0
    %7992 = vmatpush2.bf16.msra.mxu0 0
    %7993 = vmatprep.subr.bf16.mxu0 0
    %7994 = vmatpush2.bf16.msra.mxu0 0
    %7995 = vmatprep.subr.bf16.mxu0 0
    %7996 = vmatpush2.bf16.msra.mxu0 0
    %7997 = vmatprep.subr.bf16.mxu0 0
    %7998 = vmatpush2.bf16.msra.mxu0 0
    %7999 = vmatprep.subr.bf16.mxu0 0
    %8000 = vmatpush2.bf16.msra.mxu0 0
    %8001 = vmatprep.subr.bf16.mxu0 0
    %8002 = vmatpush2.bf16.msra.mxu0 0
    %8003 = vmatprep.subr.bf16.mxu0 0
    %8004 = vmatpush2.bf16.msra.mxu0 0
    %8005 = vmatprep.mubr.bf16.mxu0 0
    %8006 = vmatmul.mubr.bf16.gmra.mxu0 %v3887
    %v8007 = vpop.f32.mrf.mxu0
    %v8008 = vadd.f32 0.0, %v8007
    %v8009 = vpop.f32.mrf.mxu0
    %v8010 = vadd.f32 0.0, %v8009
    %v8011 = vpop.f32.mrf.mxu0
    %v8012 = vadd.f32 0.0, %v8011
    %v8013 = vpop.f32.mrf.mxu0
    %v8014 = vadd.f32 0.0, %v8013
    %8015 = vdwg.mxu0
    %v8016 = vadd.f32 %v7958, %v8008
    %v8017 = vadd.f32 %v7959, %v8010
    %v8018 = vadd.f32 %v7960, %v8012
    %v8019 = vadd.f32 %v7961, %v8014
    %v8020 = vadd.f32 %v8016, %v3945
    %v8021 = vadd.f32 %v8017, %v3945
    %v8022 = vadd.f32 %v8018, %v3950
    %v8023 = vadd.f32 %v8019, %v3950
    %v8024 = vmax.f32 %v8020, 0.0
    %v8025 = vmax.f32 %v8021, 0.0
    %v8026 = vmax.f32 %v8022, 0.0
    %v8027 = vmax.f32 %v8023, 0.0
    %8030 = vrot.lane.b32.xlu0 %v8024, 127
    %v8031 = vpop.permute.xlu0 %8030
    %8032 = vrot.lane.b32.xlu0 %v8026, 127
    %v8033 = vpop.permute.xlu0 %8032
    %v8036 = vmax.f32 %v8024, %v8031
    %v8037 = vmax.f32 %v8026, %v8033
    %8040 = vrot.lane.b32.xlu0 %v8025, 127
    %v8041 = vpop.permute.xlu0 %8040
    %8042 = vrot.lane.b32.xlu0 %v8027, 127
    %v8043 = vpop.permute.xlu0 %8042
    %v8044 = vsel %vm1493, %v8031, %v8041
    %v8045 = vsel %vm1493, %v8033, %v8043
    %v8050 = vmax.f32 %v8024, %v8044
    %v8051 = vmax.f32 %v8025, %v8041
    %v8052 = vmax.f32 %v8026, %v8045
    %v8053 = vmax.f32 %v8027, %v8043
    %8058 = vrot.lane.b32.xlu0 %v8050, 114
    %v8059 = vpop.permute.xlu0 %8058
    %8060 = vrot.lane.b32.xlu0 %v8051, 114
    %v8061 = vpop.permute.xlu0 %8060
    %8062 = vrot.lane.b32.xlu0 %v8052, 114
    %v8063 = vpop.permute.xlu0 %8062
    %8064 = vrot.lane.b32.xlu0 %v8053, 114
    %v8065 = vpop.permute.xlu0 %8064
    %v8066 = vsel %vm3998, %v8059, %v8061
    %v8067 = vsel %vm3998, %v8063, %v8065
    %v8070 = vmax.f32 %v8036, %v8066
    %v8071 = vmax.f32 %v8037, %v8067
    %v8072 = vpack.c.bf16 %v8071, %v8070
    %v8074 = vsel %vm4053, %v8072, 0
    %8076 = vmatprep.subr.bf16.mxu0 0
    %8077 = vmatpush1.bf16.msra.mxu0 %v4061
    %8078 = vmatprep.subr.bf16.mxu0 0
    %8079 = vmatpush1.bf16.msra.mxu0 %v4044
    %8080 = vmatprep.subr.bf16.mxu0 0
    %8081 = vmatpush1.bf16.msra.mxu0 %v4043
    %8082 = vmatprep.subr.bf16.mxu0 0
    %8083 = vmatpush1.bf16.msra.mxu0 %v4042
    %8084 = vmatprep.subr.bf16.mxu0 0
    %8085 = vmatpush1.bf16.msra.mxu0 %v4041
    %8086 = vmatprep.subr.bf16.mxu0 0
    %8087 = vmatpush1.bf16.msra.mxu0 %v4040
    %8088 = vmatprep.subr.bf16.mxu0 0
    %8089 = vmatpush1.bf16.msra.mxu0 %v4039
    %8090 = vmatprep.subr.bf16.mxu0 0
    %8091 = vmatpush1.bf16.msra.mxu0 %v4038
    %8092 = vmatprep.subr.bf16.mxu0 0
    %8093 = vmatpush2.bf16.msra.mxu0 0
    %8094 = vmatprep.subr.bf16.mxu0 0
    %8095 = vmatpush2.bf16.msra.mxu0 0
    %8096 = vmatprep.subr.bf16.mxu0 0
    %8097 = vmatpush2.bf16.msra.mxu0 0
    %8098 = vmatprep.subr.bf16.mxu0 0
    %8099 = vmatpush2.bf16.msra.mxu0 0
    %8100 = vmatprep.subr.bf16.mxu0 0
    %8101 = vmatpush2.bf16.msra.mxu0 0
    %8102 = vmatprep.subr.bf16.mxu0 0
    %8103 = vmatpush2.bf16.msra.mxu0 0
    %8104 = vmatprep.subr.bf16.mxu0 0
    %8105 = vmatpush2.bf16.msra.mxu0 0
    %8106 = vmatprep.subr.bf16.mxu0 0
    %8107 = vmatpush2.bf16.msra.mxu0 0
    %8108 = vmatprep.mubr.bf16.mxu0 0
    %8109 = vmatmul.mubr.bf16.gmra.mxu0 %v8074
    %v8110 = vpop.f32.mrf.mxu0
    %v8111 = vadd.f32 0.0, %v8110
    %v8112 = vpop.f32.mrf.mxu0
    %v8113 = vpop.f32.mrf.mxu0
    %v8114 = vadd.f32 0.0, %v8113
    %v8115 = vpop.f32.mrf.mxu0
    %8116 = vdwg.mxu0
    %v8117 = vpack.c.bf16 %v8111, %v8111
    %v8119 = vshrl.u32 %v8117, 16
    %v8122 = vsel %vm4119, %v8119, 0
    %8124 = vmatprep.subr.bf16.mxu0 0
    %8125 = vmatpush1.bf16.msra.mxu0 0
    %8126 = vmatprep.subr.bf16.mxu0 0
    %8127 = vmatpush1.bf16.msra.mxu0 0
    %8128 = vmatprep.subr.bf16.mxu0 0
    %8129 = vmatpush1.bf16.msra.mxu0 0
    %8130 = vmatprep.subr.bf16.mxu0 0
    %8131 = vmatpush1.bf16.msra.mxu0 0
    %8132 = vmatprep.subr.bf16.mxu0 0
    %8133 = vmatpush1.bf16.msra.mxu0 0
    %8134 = vmatprep.subr.bf16.mxu0 0
    %8135 = vmatpush1.bf16.msra.mxu0 0
    %8136 = vmatprep.subr.bf16.mxu0 0
    %8137 = vmatpush1.bf16.msra.mxu0 %v4124
    %8138 = vmatprep.subr.bf16.mxu0 0
    %8139 = vmatpush1.bf16.msra.mxu0 %v4116
    %8140 = vmatprep.subr.bf16.mxu0 0
    %8141 = vmatpush2.bf16.msra.mxu0 0
    %8142 = vmatprep.subr.bf16.mxu0 0
    %8143 = vmatpush2.bf16.msra.mxu0 0
    %8144 = vmatprep.subr.bf16.mxu0 0
    %8145 = vmatpush2.bf16.msra.mxu0 0
    %8146 = vmatprep.subr.bf16.mxu0 0
    %8147 = vmatpush2.bf16.msra.mxu0 0
    %8148 = vmatprep.subr.bf16.mxu0 0
    %8149 = vmatpush2.bf16.msra.mxu0 0
    %8150 = vmatprep.subr.bf16.mxu0 0
    %8151 = vmatpush2.bf16.msra.mxu0 0
    %8152 = vmatprep.subr.bf16.mxu0 0
    %8153 = vmatpush2.bf16.msra.mxu0 0
    %8154 = vmatprep.subr.bf16.mxu0 0
    %8155 = vmatpush2.bf16.msra.mxu0 0
    %8156 = vmatprep.mubr.bf16.mxu0 0
    %8157 = vmatmul.mubr.bf16.gmra.mxu0 %v8122
    %v8158 = vpop.f32.mrf.mxu0
    %v8159 = vadd.f32 0.0, %v8158
    %v8160 = vpop.f32.mrf.mxu0
    %v8161 = vpop.f32.mrf.mxu0
    %v8162 = vpop.f32.mrf.mxu0
    %8163 = vdwg.mxu0
    %v8164 = vsel %vm4119, %v8117, 0
    %8166 = vmatprep.subr.bf16.mxu0 0
    %8167 = vmatpush1.bf16.msra.mxu0 0
    %8168 = vmatprep.subr.bf16.mxu0 0
    %8169 = vmatpush1.bf16.msra.mxu0 0
    %8170 = vmatprep.subr.bf16.mxu0 0
    %8171 = vmatpush1.bf16.msra.mxu0 0
    %8172 = vmatprep.subr.bf16.mxu0 0
    %8173 = vmatpush1.bf16.msra.mxu0 0
    %8174 = vmatprep.subr.bf16.mxu0 0
    %8175 = vmatpush1.bf16.msra.mxu0 0
    %8176 = vmatprep.subr.bf16.mxu0 0
    %8177 = vmatpush1.bf16.msra.mxu0 0
    %8178 = vmatprep.subr.bf16.mxu0 0
    %8179 = vmatpush1.bf16.msra.mxu0 %v4180
    %8180 = vmatprep.subr.bf16.mxu0 0
    %8181 = vmatpush1.bf16.msra.mxu0 %v4174
    %8182 = vmatprep.subr.bf16.mxu0 0
    %8183 = vmatpush2.bf16.msra.mxu0 0
    %8184 = vmatprep.subr.bf16.mxu0 0
    %8185 = vmatpush2.bf16.msra.mxu0 0
    %8186 = vmatprep.subr.bf16.mxu0 0
    %8187 = vmatpush2.bf16.msra.mxu0 0
    %8188 = vmatprep.subr.bf16.mxu0 0
    %8189 = vmatpush2.bf16.msra.mxu0 0
    %8190 = vmatprep.subr.bf16.mxu0 0
    %8191 = vmatpush2.bf16.msra.mxu0 0
    %8192 = vmatprep.subr.bf16.mxu0 0
    %8193 = vmatpush2.bf16.msra.mxu0 0
    %8194 = vmatprep.subr.bf16.mxu0 0
    %8195 = vmatpush2.bf16.msra.mxu0 0
    %8196 = vmatprep.subr.bf16.mxu0 0
    %8197 = vmatpush2.bf16.msra.mxu0 0
    %8198 = vmatprep.mubr.bf16.mxu0 0
    %8199 = vmatmul.mubr.bf16.gmra.mxu0 %v8164
    %v8200 = vpop.f32.mrf.mxu0
    %v8201 = vadd.f32 %v8159, %v8200
    %v8202 = vpop.f32.mrf.mxu0
    %v8203 = vpop.f32.mrf.mxu0
    %v8204 = vpop.f32.mrf.mxu0
    %8205 = vdwg.mxu0
    %v8207 = vrot.slane %v8117, 1
    %v8209 = vsel %vm4119, %v8207, 0
    %8211 = vmatprep.subr.bf16.mxu0 0
    %8212 = vmatpush1.bf16.msra.mxu0 0
    %8213 = vmatprep.subr.bf16.mxu0 0
    %8214 = vmatpush1.bf16.msra.mxu0 0
    %8215 = vmatprep.subr.bf16.mxu0 0
    %8216 = vmatpush1.bf16.msra.mxu0 0
    %8217 = vmatprep.subr.bf16.mxu0 0
    %8218 = vmatpush1.bf16.msra.mxu0 0
    %8219 = vmatprep.subr.bf16.mxu0 0
    %8220 = vmatpush1.bf16.msra.mxu0 0
    %8221 = vmatprep.subr.bf16.mxu0 0
    %8222 = vmatpush1.bf16.msra.mxu0 0
    %8223 = vmatprep.subr.bf16.mxu0 0
    %8224 = vmatpush1.bf16.msra.mxu0 %v4239
    %8225 = vmatprep.subr.bf16.mxu0 0
    %8226 = vmatpush1.bf16.msra.mxu0 %v4232
    %8227 = vmatprep.subr.bf16.mxu0 0
    %8228 = vmatpush2.bf16.msra.mxu0 0
    %8229 = vmatprep.subr.bf16.mxu0 0
    %8230 = vmatpush2.bf16.msra.mxu0 0
    %8231 = vmatprep.subr.bf16.mxu0 0
    %8232 = vmatpush2.bf16.msra.mxu0 0
    %8233 = vmatprep.subr.bf16.mxu0 0
    %8234 = vmatpush2.bf16.msra.mxu0 0
    %8235 = vmatprep.subr.bf16.mxu0 0
    %8236 = vmatpush2.bf16.msra.mxu0 0
    %8237 = vmatprep.subr.bf16.mxu0 0
    %8238 = vmatpush2.bf16.msra.mxu0 0
    %8239 = vmatprep.subr.bf16.mxu0 0
    %8240 = vmatpush2.bf16.msra.mxu0 0
    %8241 = vmatprep.subr.bf16.mxu0 0
    %8242 = vmatpush2.bf16.msra.mxu0 0
    %8243 = vmatprep.mubr.bf16.mxu0 0
    %8244 = vmatmul.mubr.bf16.gmra.mxu0 %v8209
    %v8245 = vpop.f32.mrf.mxu0
    %v8246 = vadd.f32 0.0, %v8245
    %v8247 = vpop.f32.mrf.mxu0
    %v8248 = vpop.f32.mrf.mxu0
    %v8249 = vpop.f32.mrf.mxu0
    %8250 = vdwg.mxu0
    %v8251 = vadd.f32 %v8201, %v8246
    %v8252 = vrot.slane %v8119, 1
    %v8254 = vsel %vm4119, %v8252, 0
    %8256 = vmatprep.subr.bf16.mxu0 0
    %8257 = vmatpush1.bf16.msra.mxu0 0
    %8258 = vmatprep.subr.bf16.mxu0 0
    %8259 = vmatpush1.bf16.msra.mxu0 0
    %8260 = vmatprep.subr.bf16.mxu0 0
    %8261 = vmatpush1.bf16.msra.mxu0 0
    %8262 = vmatprep.subr.bf16.mxu0 0
    %8263 = vmatpush1.bf16.msra.mxu0 0
    %8264 = vmatprep.subr.bf16.mxu0 0
    %8265 = vmatpush1.bf16.msra.mxu0 0
    %8266 = vmatprep.subr.bf16.mxu0 0
    %8267 = vmatpush1.bf16.msra.mxu0 0
    %8268 = vmatprep.subr.bf16.mxu0 0
    %8269 = vmatpush1.bf16.msra.mxu0 %v4298
    %8270 = vmatprep.subr.bf16.mxu0 0
    %8271 = vmatpush1.bf16.msra.mxu0 %v4291
    %8272 = vmatprep.subr.bf16.mxu0 0
    %8273 = vmatpush2.bf16.msra.mxu0 0
    %8274 = vmatprep.subr.bf16.mxu0 0
    %8275 = vmatpush2.bf16.msra.mxu0 0
    %8276 = vmatprep.subr.bf16.mxu0 0
    %8277 = vmatpush2.bf16.msra.mxu0 0
    %8278 = vmatprep.subr.bf16.mxu0 0
    %8279 = vmatpush2.bf16.msra.mxu0 0
    %8280 = vmatprep.subr.bf16.mxu0 0
    %8281 = vmatpush2.bf16.msra.mxu0 0
    %8282 = vmatprep.subr.bf16.mxu0 0
    %8283 = vmatpush2.bf16.msra.mxu0 0
    %8284 = vmatprep.subr.bf16.mxu0 0
    %8285 = vmatpush2.bf16.msra.mxu0 0
    %8286 = vmatprep.subr.bf16.mxu0 0
    %8287 = vmatpush2.bf16.msra.mxu0 0
    %8288 = vmatprep.mubr.bf16.mxu0 0
    %8289 = vmatmul.mubr.bf16.gmra.mxu0 %v8254
    %v8290 = vpop.f32.mrf.mxu0
    %v8291 = vadd.f32 0.0, %v8290
    %v8292 = vpop.f32.mrf.mxu0
    %v8293 = vpop.f32.mrf.mxu0
    %v8294 = vpop.f32.mrf.mxu0
    %8295 = vdwg.mxu0
    %v8296 = vadd.f32 %v8251, %v8291
    %v8297 = vrot.slane %v8117, 2
    %v8299 = vsel %vm4119, %v8297, 0
    %8301 = vmatprep.subr.bf16.mxu0 0
    %8302 = vmatpush1.bf16.msra.mxu0 0
    %8303 = vmatprep.subr.bf16.mxu0 0
    %8304 = vmatpush1.bf16.msra.mxu0 0
    %8305 = vmatprep.subr.bf16.mxu0 0
    %8306 = vmatpush1.bf16.msra.mxu0 0
    %8307 = vmatprep.subr.bf16.mxu0 0
    %8308 = vmatpush1.bf16.msra.mxu0 0
    %8309 = vmatprep.subr.bf16.mxu0 0
    %8310 = vmatpush1.bf16.msra.mxu0 0
    %8311 = vmatprep.subr.bf16.mxu0 0
    %8312 = vmatpush1.bf16.msra.mxu0 0
    %8313 = vmatprep.subr.bf16.mxu0 0
    %8314 = vmatpush1.bf16.msra.mxu0 %v4357
    %8315 = vmatprep.subr.bf16.mxu0 0
    %8316 = vmatpush1.bf16.msra.mxu0 %v4350
    %8317 = vmatprep.subr.bf16.mxu0 0
    %8318 = vmatpush2.bf16.msra.mxu0 0
    %8319 = vmatprep.subr.bf16.mxu0 0
    %8320 = vmatpush2.bf16.msra.mxu0 0
    %8321 = vmatprep.subr.bf16.mxu0 0
    %8322 = vmatpush2.bf16.msra.mxu0 0
    %8323 = vmatprep.subr.bf16.mxu0 0
    %8324 = vmatpush2.bf16.msra.mxu0 0
    %8325 = vmatprep.subr.bf16.mxu0 0
    %8326 = vmatpush2.bf16.msra.mxu0 0
    %8327 = vmatprep.subr.bf16.mxu0 0
    %8328 = vmatpush2.bf16.msra.mxu0 0
    %8329 = vmatprep.subr.bf16.mxu0 0
    %8330 = vmatpush2.bf16.msra.mxu0 0
    %8331 = vmatprep.subr.bf16.mxu0 0
    %8332 = vmatpush2.bf16.msra.mxu0 0
    %8333 = vmatprep.mubr.bf16.mxu0 0
    %8334 = vmatmul.mubr.bf16.gmra.mxu0 %v8299
    %v8335 = vpop.f32.mrf.mxu0
    %v8336 = vadd.f32 0.0, %v8335
    %v8337 = vpop.f32.mrf.mxu0
    %v8338 = vpop.f32.mrf.mxu0
    %v8339 = vpop.f32.mrf.mxu0
    %8340 = vdwg.mxu0
    %v8341 = vadd.f32 %v8296, %v8336
    %v8342 = vrot.slane %v8119, 2
    %v8344 = vsel %vm4119, %v8342, 0
    %8346 = vmatprep.subr.bf16.mxu0 0
    %8347 = vmatpush1.bf16.msra.mxu0 0
    %8348 = vmatprep.subr.bf16.mxu0 0
    %8349 = vmatpush1.bf16.msra.mxu0 0
    %8350 = vmatprep.subr.bf16.mxu0 0
    %8351 = vmatpush1.bf16.msra.mxu0 0
    %8352 = vmatprep.subr.bf16.mxu0 0
    %8353 = vmatpush1.bf16.msra.mxu0 0
    %8354 = vmatprep.subr.bf16.mxu0 0
    %8355 = vmatpush1.bf16.msra.mxu0 0
    %8356 = vmatprep.subr.bf16.mxu0 0
    %8357 = vmatpush1.bf16.msra.mxu0 0
    %8358 = vmatprep.subr.bf16.mxu0 0
    %8359 = vmatpush1.bf16.msra.mxu0 %v4416
    %8360 = vmatprep.subr.bf16.mxu0 0
    %8361 = vmatpush1.bf16.msra.mxu0 %v4409
    %8362 = vmatprep.subr.bf16.mxu0 0
    %8363 = vmatpush2.bf16.msra.mxu0 0
    %8364 = vmatprep.subr.bf16.mxu0 0
    %8365 = vmatpush2.bf16.msra.mxu0 0
    %8366 = vmatprep.subr.bf16.mxu0 0
    %8367 = vmatpush2.bf16.msra.mxu0 0
    %8368 = vmatprep.subr.bf16.mxu0 0
    %8369 = vmatpush2.bf16.msra.mxu0 0
    %8370 = vmatprep.subr.bf16.mxu0 0
    %8371 = vmatpush2.bf16.msra.mxu0 0
    %8372 = vmatprep.subr.bf16.mxu0 0
    %8373 = vmatpush2.bf16.msra.mxu0 0
    %8374 = vmatprep.subr.bf16.mxu0 0
    %8375 = vmatpush2.bf16.msra.mxu0 0
    %8376 = vmatprep.subr.bf16.mxu0 0
    %8377 = vmatpush2.bf16.msra.mxu0 0
    %8378 = vmatprep.mubr.bf16.mxu0 0
    %8379 = vmatmul.mubr.bf16.gmra.mxu0 %v8344
    %v8380 = vpop.f32.mrf.mxu0
    %v8381 = vadd.f32 0.0, %v8380
    %v8382 = vpop.f32.mrf.mxu0
    %v8383 = vpop.f32.mrf.mxu0
    %v8384 = vpop.f32.mrf.mxu0
    %8385 = vdwg.mxu0
    %v8386 = vadd.f32 %v8341, %v8381
    %v8387 = vrot.slane %v8117, 3
    %v8389 = vsel %vm4119, %v8387, 0
    %8391 = vmatprep.subr.bf16.mxu0 0
    %8392 = vmatpush1.bf16.msra.mxu0 0
    %8393 = vmatprep.subr.bf16.mxu0 0
    %8394 = vmatpush1.bf16.msra.mxu0 0
    %8395 = vmatprep.subr.bf16.mxu0 0
    %8396 = vmatpush1.bf16.msra.mxu0 0
    %8397 = vmatprep.subr.bf16.mxu0 0
    %8398 = vmatpush1.bf16.msra.mxu0 0
    %8399 = vmatprep.subr.bf16.mxu0 0
    %8400 = vmatpush1.bf16.msra.mxu0 0
    %8401 = vmatprep.subr.bf16.mxu0 0
    %8402 = vmatpush1.bf16.msra.mxu0 0
    %8403 = vmatprep.subr.bf16.mxu0 0
    %8404 = vmatpush1.bf16.msra.mxu0 %v4475
    %8405 = vmatprep.subr.bf16.mxu0 0
    %8406 = vmatpush1.bf16.msra.mxu0 %v4468
    %8407 = vmatprep.subr.bf16.mxu0 0
    %8408 = vmatpush2.bf16.msra.mxu0 0
    %8409 = vmatprep.subr.bf16.mxu0 0
    %8410 = vmatpush2.bf16.msra.mxu0 0
    %8411 = vmatprep.subr.bf16.mxu0 0
    %8412 = vmatpush2.bf16.msra.mxu0 0
    %8413 = vmatprep.subr.bf16.mxu0 0
    %8414 = vmatpush2.bf16.msra.mxu0 0
    %8415 = vmatprep.subr.bf16.mxu0 0
    %8416 = vmatpush2.bf16.msra.mxu0 0
    %8417 = vmatprep.subr.bf16.mxu0 0
    %8418 = vmatpush2.bf16.msra.mxu0 0
    %8419 = vmatprep.subr.bf16.mxu0 0
    %8420 = vmatpush2.bf16.msra.mxu0 0
    %8421 = vmatprep.subr.bf16.mxu0 0
    %8422 = vmatpush2.bf16.msra.mxu0 0
    %8423 = vmatprep.mubr.bf16.mxu0 0
    %8424 = vmatmul.mubr.bf16.gmra.mxu0 %v8389
    %v8425 = vpop.f32.mrf.mxu0
    %v8426 = vadd.f32 0.0, %v8425
    %v8427 = vpop.f32.mrf.mxu0
    %v8428 = vpop.f32.mrf.mxu0
    %v8429 = vpop.f32.mrf.mxu0
    %8430 = vdwg.mxu0
    %v8431 = vadd.f32 %v8386, %v8426
    %v8432 = vrot.slane %v8119, 3
    %v8434 = vsel %vm4119, %v8432, 0
    %8436 = vmatprep.subr.bf16.mxu0 0
    %8437 = vmatpush1.bf16.msra.mxu0 0
    %8438 = vmatprep.subr.bf16.mxu0 0
    %8439 = vmatpush1.bf16.msra.mxu0 0
    %8440 = vmatprep.subr.bf16.mxu0 0
    %8441 = vmatpush1.bf16.msra.mxu0 0
    %8442 = vmatprep.subr.bf16.mxu0 0
    %8443 = vmatpush1.bf16.msra.mxu0 0
    %8444 = vmatprep.subr.bf16.mxu0 0
    %8445 = vmatpush1.bf16.msra.mxu0 0
    %8446 = vmatprep.subr.bf16.mxu0 0
    %8447 = vmatpush1.bf16.msra.mxu0 0
    %8448 = vmatprep.subr.bf16.mxu0 0
    %8449 = vmatpush1.bf16.msra.mxu0 %v4534
    %8450 = vmatprep.subr.bf16.mxu0 0
    %8451 = vmatpush1.bf16.msra.mxu0 %v4527
    %8452 = vmatprep.subr.bf16.mxu0 0
    %8453 = vmatpush2.bf16.msra.mxu0 0
    %8454 = vmatprep.subr.bf16.mxu0 0
    %8455 = vmatpush2.bf16.msra.mxu0 0
    %8456 = vmatprep.subr.bf16.mxu0 0
    %8457 = vmatpush2.bf16.msra.mxu0 0
    %8458 = vmatprep.subr.bf16.mxu0 0
    %8459 = vmatpush2.bf16.msra.mxu0 0
    %8460 = vmatprep.subr.bf16.mxu0 0
    %8461 = vmatpush2.bf16.msra.mxu0 0
    %8462 = vmatprep.subr.bf16.mxu0 0
    %8463 = vmatpush2.bf16.msra.mxu0 0
    %8464 = vmatprep.subr.bf16.mxu0 0
    %8465 = vmatpush2.bf16.msra.mxu0 0
    %8466 = vmatprep.subr.bf16.mxu0 0
    %8467 = vmatpush2.bf16.msra.mxu0 0
    %8468 = vmatprep.mubr.bf16.mxu0 0
    %8469 = vmatmul.mubr.bf16.gmra.mxu0 %v8434
    %v8470 = vpop.f32.mrf.mxu0
    %v8471 = vadd.f32 0.0, %v8470
    %v8472 = vpop.f32.mrf.mxu0
    %v8473 = vpop.f32.mrf.mxu0
    %v8474 = vpop.f32.mrf.mxu0
    %8475 = vdwg.mxu0
    %v8476 = vadd.f32 %v8431, %v8471
    %v8477 = vpack.c.bf16 %v8114, %v8114
    %v8479 = vsel %vm4119, %v8477, 0
    %8481 = vmatprep.subr.bf16.mxu0 0
    %8482 = vmatpush1.bf16.msra.mxu0 0
    %8483 = vmatprep.subr.bf16.mxu0 0
    %8484 = vmatpush1.bf16.msra.mxu0 0
    %8485 = vmatprep.subr.bf16.mxu0 0
    %8486 = vmatpush1.bf16.msra.mxu0 0
    %8487 = vmatprep.subr.bf16.mxu0 0
    %8488 = vmatpush1.bf16.msra.mxu0 0
    %8489 = vmatprep.subr.bf16.mxu0 0
    %8490 = vmatpush1.bf16.msra.mxu0 0
    %8491 = vmatprep.subr.bf16.mxu0 0
    %8492 = vmatpush1.bf16.msra.mxu0 0
    %8493 = vmatprep.subr.bf16.mxu0 0
    %8494 = vmatpush1.bf16.msra.mxu0 %v4593
    %8495 = vmatprep.subr.bf16.mxu0 0
    %8496 = vmatpush1.bf16.msra.mxu0 %v4586
    %8497 = vmatprep.subr.bf16.mxu0 0
    %8498 = vmatpush2.bf16.msra.mxu0 0
    %8499 = vmatprep.subr.bf16.mxu0 0
    %8500 = vmatpush2.bf16.msra.mxu0 0
    %8501 = vmatprep.subr.bf16.mxu0 0
    %8502 = vmatpush2.bf16.msra.mxu0 0
    %8503 = vmatprep.subr.bf16.mxu0 0
    %8504 = vmatpush2.bf16.msra.mxu0 0
    %8505 = vmatprep.subr.bf16.mxu0 0
    %8506 = vmatpush2.bf16.msra.mxu0 0
    %8507 = vmatprep.subr.bf16.mxu0 0
    %8508 = vmatpush2.bf16.msra.mxu0 0
    %8509 = vmatprep.subr.bf16.mxu0 0
    %8510 = vmatpush2.bf16.msra.mxu0 0
    %8511 = vmatprep.subr.bf16.mxu0 0
    %8512 = vmatpush2.bf16.msra.mxu0 0
    %8513 = vmatprep.mubr.bf16.mxu0 0
    %8514 = vmatmul.mubr.bf16.gmra.mxu0 %v8479
    %v8515 = vpop.f32.mrf.mxu0
    %v8516 = vadd.f32 0.0, %v8515
    %v8517 = vpop.f32.mrf.mxu0
    %v8518 = vpop.f32.mrf.mxu0
    %v8519 = vpop.f32.mrf.mxu0
    %8520 = vdwg.mxu0
    %v8521 = vadd.f32 %v8476, %v8516
    %v8522 = vshrl.u32 %v8477, 16
    %v8525 = vsel %vm4119, %v8522, 0
    %8527 = vmatprep.subr.bf16.mxu0 0
    %8528 = vmatpush1.bf16.msra.mxu0 0
    %8529 = vmatprep.subr.bf16.mxu0 0
    %8530 = vmatpush1.bf16.msra.mxu0 0
    %8531 = vmatprep.subr.bf16.mxu0 0
    %8532 = vmatpush1.bf16.msra.mxu0 0
    %8533 = vmatprep.subr.bf16.mxu0 0
    %8534 = vmatpush1.bf16.msra.mxu0 0
    %8535 = vmatprep.subr.bf16.mxu0 0
    %8536 = vmatpush1.bf16.msra.mxu0 0
    %8537 = vmatprep.subr.bf16.mxu0 0
    %8538 = vmatpush1.bf16.msra.mxu0 0
    %8539 = vmatprep.subr.bf16.mxu0 0
    %8540 = vmatpush1.bf16.msra.mxu0 %v4653
    %8541 = vmatprep.subr.bf16.mxu0 0
    %8542 = vmatpush1.bf16.msra.mxu0 %v4646
    %8543 = vmatprep.subr.bf16.mxu0 0
    %8544 = vmatpush2.bf16.msra.mxu0 0
    %8545 = vmatprep.subr.bf16.mxu0 0
    %8546 = vmatpush2.bf16.msra.mxu0 0
    %8547 = vmatprep.subr.bf16.mxu0 0
    %8548 = vmatpush2.bf16.msra.mxu0 0
    %8549 = vmatprep.subr.bf16.mxu0 0
    %8550 = vmatpush2.bf16.msra.mxu0 0
    %8551 = vmatprep.subr.bf16.mxu0 0
    %8552 = vmatpush2.bf16.msra.mxu0 0
    %8553 = vmatprep.subr.bf16.mxu0 0
    %8554 = vmatpush2.bf16.msra.mxu0 0
    %8555 = vmatprep.subr.bf16.mxu0 0
    %8556 = vmatpush2.bf16.msra.mxu0 0
    %8557 = vmatprep.subr.bf16.mxu0 0
    %8558 = vmatpush2.bf16.msra.mxu0 0
    %8559 = vmatprep.mubr.bf16.mxu0 0
    %8560 = vmatmul.mubr.bf16.gmra.mxu0 %v8525
    %v8561 = vpop.f32.mrf.mxu0
    %v8562 = vadd.f32 0.0, %v8561
    %v8563 = vpop.f32.mrf.mxu0
    %v8564 = vpop.f32.mrf.mxu0
    %v8565 = vpop.f32.mrf.mxu0
    %8566 = vdwg.mxu0
    %v8567 = vadd.f32 %v8521, %v8562
    %v8569 = vrot.slane %v8477, 1
    %v8571 = vsel %vm4119, %v8569, 0
    %8573 = vmatprep.subr.bf16.mxu0 0
    %8574 = vmatpush1.bf16.msra.mxu0 0
    %8575 = vmatprep.subr.bf16.mxu0 0
    %8576 = vmatpush1.bf16.msra.mxu0 0
    %8577 = vmatprep.subr.bf16.mxu0 0
    %8578 = vmatpush1.bf16.msra.mxu0 0
    %8579 = vmatprep.subr.bf16.mxu0 0
    %8580 = vmatpush1.bf16.msra.mxu0 0
    %8581 = vmatprep.subr.bf16.mxu0 0
    %8582 = vmatpush1.bf16.msra.mxu0 0
    %8583 = vmatprep.subr.bf16.mxu0 0
    %8584 = vmatpush1.bf16.msra.mxu0 0
    %8585 = vmatprep.subr.bf16.mxu0 0
    %8586 = vmatpush1.bf16.msra.mxu0 %v4713
    %8587 = vmatprep.subr.bf16.mxu0 0
    %8588 = vmatpush1.bf16.msra.mxu0 %v4706
    %8589 = vmatprep.subr.bf16.mxu0 0
    %8590 = vmatpush2.bf16.msra.mxu0 0
    %8591 = vmatprep.subr.bf16.mxu0 0
    %8592 = vmatpush2.bf16.msra.mxu0 0
    %8593 = vmatprep.subr.bf16.mxu0 0
    %8594 = vmatpush2.bf16.msra.mxu0 0
    %8595 = vmatprep.subr.bf16.mxu0 0
    %8596 = vmatpush2.bf16.msra.mxu0 0
    %8597 = vmatprep.subr.bf16.mxu0 0
    %8598 = vmatpush2.bf16.msra.mxu0 0
    %8599 = vmatprep.subr.bf16.mxu0 0
    %8600 = vmatpush2.bf16.msra.mxu0 0
    %8601 = vmatprep.subr.bf16.mxu0 0
    %8602 = vmatpush2.bf16.msra.mxu0 0
    %8603 = vmatprep.subr.bf16.mxu0 0
    %8604 = vmatpush2.bf16.msra.mxu0 0
    %8605 = vmatprep.mubr.bf16.mxu0 0
    %8606 = vmatmul.mubr.bf16.gmra.mxu0 %v8571
    %v8607 = vpop.f32.mrf.mxu0
    %v8608 = vadd.f32 0.0, %v8607
    %v8609 = vpop.f32.mrf.mxu0
    %v8610 = vpop.f32.mrf.mxu0
    %v8611 = vpop.f32.mrf.mxu0
    %8612 = vdwg.mxu0
    %v8613 = vadd.f32 %v8567, %v8608
    %v8614 = vrot.slane %v8522, 1
    %v8616 = vsel %vm4119, %v8614, 0
    %8618 = vmatprep.subr.bf16.mxu0 0
    %8619 = vmatpush1.bf16.msra.mxu0 0
    %8620 = vmatprep.subr.bf16.mxu0 0
    %8621 = vmatpush1.bf16.msra.mxu0 0
    %8622 = vmatprep.subr.bf16.mxu0 0
    %8623 = vmatpush1.bf16.msra.mxu0 0
    %8624 = vmatprep.subr.bf16.mxu0 0
    %8625 = vmatpush1.bf16.msra.mxu0 0
    %8626 = vmatprep.subr.bf16.mxu0 0
    %8627 = vmatpush1.bf16.msra.mxu0 0
    %8628 = vmatprep.subr.bf16.mxu0 0
    %8629 = vmatpush1.bf16.msra.mxu0 0
    %8630 = vmatprep.subr.bf16.mxu0 0
    %8631 = vmatpush1.bf16.msra.mxu0 %v4772
    %8632 = vmatprep.subr.bf16.mxu0 0
    %8633 = vmatpush1.bf16.msra.mxu0 %v4765
    %8634 = vmatprep.subr.bf16.mxu0 0
    %8635 = vmatpush2.bf16.msra.mxu0 0
    %8636 = vmatprep.subr.bf16.mxu0 0
    %8637 = vmatpush2.bf16.msra.mxu0 0
    %8638 = vmatprep.subr.bf16.mxu0 0
    %8639 = vmatpush2.bf16.msra.mxu0 0
    %8640 = vmatprep.subr.bf16.mxu0 0
    %8641 = vmatpush2.bf16.msra.mxu0 0
    %8642 = vmatprep.subr.bf16.mxu0 0
    %8643 = vmatpush2.bf16.msra.mxu0 0
    %8644 = vmatprep.subr.bf16.mxu0 0
    %8645 = vmatpush2.bf16.msra.mxu0 0
    %8646 = vmatprep.subr.bf16.mxu0 0
    %8647 = vmatpush2.bf16.msra.mxu0 0
    %8648 = vmatprep.subr.bf16.mxu0 0
    %8649 = vmatpush2.bf16.msra.mxu0 0
    %8650 = vmatprep.mubr.bf16.mxu0 0
    %8651 = vmatmul.mubr.bf16.gmra.mxu0 %v8616
    %v8652 = vpop.f32.mrf.mxu0
    %v8653 = vadd.f32 0.0, %v8652
    %v8654 = vpop.f32.mrf.mxu0
    %v8655 = vpop.f32.mrf.mxu0
    %v8656 = vpop.f32.mrf.mxu0
    %8657 = vdwg.mxu0
    %v8658 = vadd.f32 %v8613, %v8653
    %v8659 = vrot.slane %v8477, 2
    %v8661 = vsel %vm4119, %v8659, 0
    %8663 = vmatprep.subr.bf16.mxu0 0
    %8664 = vmatpush1.bf16.msra.mxu0 0
    %8665 = vmatprep.subr.bf16.mxu0 0
    %8666 = vmatpush1.bf16.msra.mxu0 0
    %8667 = vmatprep.subr.bf16.mxu0 0
    %8668 = vmatpush1.bf16.msra.mxu0 0
    %8669 = vmatprep.subr.bf16.mxu0 0
    %8670 = vmatpush1.bf16.msra.mxu0 0
    %8671 = vmatprep.subr.bf16.mxu0 0
    %8672 = vmatpush1.bf16.msra.mxu0 0
    %8673 = vmatprep.subr.bf16.mxu0 0
    %8674 = vmatpush1.bf16.msra.mxu0 0
    %8675 = vmatprep.subr.bf16.mxu0 0
    %8676 = vmatpush1.bf16.msra.mxu0 %v4831
    %8677 = vmatprep.subr.bf16.mxu0 0
    %8678 = vmatpush1.bf16.msra.mxu0 %v4824
    %8679 = vmatprep.subr.bf16.mxu0 0
    %8680 = vmatpush2.bf16.msra.mxu0 0
    %8681 = vmatprep.subr.bf16.mxu0 0
    %8682 = vmatpush2.bf16.msra.mxu0 0
    %8683 = vmatprep.subr.bf16.mxu0 0
    %8684 = vmatpush2.bf16.msra.mxu0 0
    %8685 = vmatprep.subr.bf16.mxu0 0
    %8686 = vmatpush2.bf16.msra.mxu0 0
    %8687 = vmatprep.subr.bf16.mxu0 0
    %8688 = vmatpush2.bf16.msra.mxu0 0
    %8689 = vmatprep.subr.bf16.mxu0 0
    %8690 = vmatpush2.bf16.msra.mxu0 0
    %8691 = vmatprep.subr.bf16.mxu0 0
    %8692 = vmatpush2.bf16.msra.mxu0 0
    %8693 = vmatprep.subr.bf16.mxu0 0
    %8694 = vmatpush2.bf16.msra.mxu0 0
    %8695 = vmatprep.mubr.bf16.mxu0 0
    %8696 = vmatmul.mubr.bf16.gmra.mxu0 %v8661
    %v8697 = vpop.f32.mrf.mxu0
    %v8698 = vadd.f32 0.0, %v8697
    %v8699 = vpop.f32.mrf.mxu0
    %v8700 = vpop.f32.mrf.mxu0
    %v8701 = vpop.f32.mrf.mxu0
    %8702 = vdwg.mxu0
    %v8703 = vadd.f32 %v8658, %v8698
    %v8704 = vrot.slane %v8522, 2
    %v8706 = vsel %vm4119, %v8704, 0
    %8708 = vmatprep.subr.bf16.mxu0 0
    %8709 = vmatpush1.bf16.msra.mxu0 0
    %8710 = vmatprep.subr.bf16.mxu0 0
    %8711 = vmatpush1.bf16.msra.mxu0 0
    %8712 = vmatprep.subr.bf16.mxu0 0
    %8713 = vmatpush1.bf16.msra.mxu0 0
    %8714 = vmatprep.subr.bf16.mxu0 0
    %8715 = vmatpush1.bf16.msra.mxu0 0
    %8716 = vmatprep.subr.bf16.mxu0 0
    %8717 = vmatpush1.bf16.msra.mxu0 0
    %8718 = vmatprep.subr.bf16.mxu0 0
    %8719 = vmatpush1.bf16.msra.mxu0 0
    %8720 = vmatprep.subr.bf16.mxu0 0
    %8721 = vmatpush1.bf16.msra.mxu0 %v4890
    %8722 = vmatprep.subr.bf16.mxu0 0
    %8723 = vmatpush1.bf16.msra.mxu0 %v4883
    %8724 = vmatprep.subr.bf16.mxu0 0
    %8725 = vmatpush2.bf16.msra.mxu0 0
    %8726 = vmatprep.subr.bf16.mxu0 0
    %8727 = vmatpush2.bf16.msra.mxu0 0
    %8728 = vmatprep.subr.bf16.mxu0 0
    %8729 = vmatpush2.bf16.msra.mxu0 0
    %8730 = vmatprep.subr.bf16.mxu0 0
    %8731 = vmatpush2.bf16.msra.mxu0 0
    %8732 = vmatprep.subr.bf16.mxu0 0
    %8733 = vmatpush2.bf16.msra.mxu0 0
    %8734 = vmatprep.subr.bf16.mxu0 0
    %8735 = vmatpush2.bf16.msra.mxu0 0
    %8736 = vmatprep.subr.bf16.mxu0 0
    %8737 = vmatpush2.bf16.msra.mxu0 0
    %8738 = vmatprep.subr.bf16.mxu0 0
    %8739 = vmatpush2.bf16.msra.mxu0 0
    %8740 = vmatprep.mubr.bf16.mxu0 0
    %8741 = vmatmul.mubr.bf16.gmra.mxu0 %v8706
    %v8742 = vpop.f32.mrf.mxu0
    %v8743 = vadd.f32 0.0, %v8742
    %v8744 = vpop.f32.mrf.mxu0
    %v8745 = vpop.f32.mrf.mxu0
    %v8746 = vpop.f32.mrf.mxu0
    %8747 = vdwg.mxu0
    %v8748 = vadd.f32 %v8703, %v8743
    %v8749 = vrot.slane %v8477, 3
    %v8751 = vsel %vm4119, %v8749, 0
    %8753 = vmatprep.subr.bf16.mxu0 0
    %8754 = vmatpush1.bf16.msra.mxu0 0
    %8755 = vmatprep.subr.bf16.mxu0 0
    %8756 = vmatpush1.bf16.msra.mxu0 0
    %8757 = vmatprep.subr.bf16.mxu0 0
    %8758 = vmatpush1.bf16.msra.mxu0 0
    %8759 = vmatprep.subr.bf16.mxu0 0
    %8760 = vmatpush1.bf16.msra.mxu0 0
    %8761 = vmatprep.subr.bf16.mxu0 0
    %8762 = vmatpush1.bf16.msra.mxu0 0
    %8763 = vmatprep.subr.bf16.mxu0 0
    %8764 = vmatpush1.bf16.msra.mxu0 0
    %8765 = vmatprep.subr.bf16.mxu0 0
    %8766 = vmatpush1.bf16.msra.mxu0 %v4949
    %8767 = vmatprep.subr.bf16.mxu0 0
    %8768 = vmatpush1.bf16.msra.mxu0 %v4942
    %8769 = vmatprep.subr.bf16.mxu0 0
    %8770 = vmatpush2.bf16.msra.mxu0 0
    %8771 = vmatprep.subr.bf16.mxu0 0
    %8772 = vmatpush2.bf16.msra.mxu0 0
    %8773 = vmatprep.subr.bf16.mxu0 0
    %8774 = vmatpush2.bf16.msra.mxu0 0
    %8775 = vmatprep.subr.bf16.mxu0 0
    %8776 = vmatpush2.bf16.msra.mxu0 0
    %8777 = vmatprep.subr.bf16.mxu0 0
    %8778 = vmatpush2.bf16.msra.mxu0 0
    %8779 = vmatprep.subr.bf16.mxu0 0
    %8780 = vmatpush2.bf16.msra.mxu0 0
    %8781 = vmatprep.subr.bf16.mxu0 0
    %8782 = vmatpush2.bf16.msra.mxu0 0
    %8783 = vmatprep.subr.bf16.mxu0 0
    %8784 = vmatpush2.bf16.msra.mxu0 0
    %8785 = vmatprep.mubr.bf16.mxu0 0
    %8786 = vmatmul.mubr.bf16.gmra.mxu0 %v8751
    %v8787 = vpop.f32.mrf.mxu0
    %v8788 = vadd.f32 0.0, %v8787
    %v8789 = vpop.f32.mrf.mxu0
    %v8790 = vpop.f32.mrf.mxu0
    %v8791 = vpop.f32.mrf.mxu0
    %8792 = vdwg.mxu0
    %v8793 = vadd.f32 %v8748, %v8788
    %v8794 = vrot.slane %v8522, 3
    %v8796 = vsel %vm4119, %v8794, 0
    %8798 = vmatprep.subr.bf16.mxu0 0
    %8799 = vmatpush1.bf16.msra.mxu0 0
    %8800 = vmatprep.subr.bf16.mxu0 0
    %8801 = vmatpush1.bf16.msra.mxu0 0
    %8802 = vmatprep.subr.bf16.mxu0 0
    %8803 = vmatpush1.bf16.msra.mxu0 0
    %8804 = vmatprep.subr.bf16.mxu0 0
    %8805 = vmatpush1.bf16.msra.mxu0 0
    %8806 = vmatprep.subr.bf16.mxu0 0
    %8807 = vmatpush1.bf16.msra.mxu0 0
    %8808 = vmatprep.subr.bf16.mxu0 0
    %8809 = vmatpush1.bf16.msra.mxu0 0
    %8810 = vmatprep.subr.bf16.mxu0 0
    %8811 = vmatpush1.bf16.msra.mxu0 %v5008
    %8812 = vmatprep.subr.bf16.mxu0 0
    %8813 = vmatpush1.bf16.msra.mxu0 %v5001
    %8814 = vmatprep.subr.bf16.mxu0 0
    %8815 = vmatpush2.bf16.msra.mxu0 0
    %8816 = vmatprep.subr.bf16.mxu0 0
    %8817 = vmatpush2.bf16.msra.mxu0 0
    %8818 = vmatprep.subr.bf16.mxu0 0
    %8819 = vmatpush2.bf16.msra.mxu0 0
    %8820 = vmatprep.subr.bf16.mxu0 0
    %8821 = vmatpush2.bf16.msra.mxu0 0
    %8822 = vmatprep.subr.bf16.mxu0 0
    %8823 = vmatpush2.bf16.msra.mxu0 0
    %8824 = vmatprep.subr.bf16.mxu0 0
    %8825 = vmatpush2.bf16.msra.mxu0 0
    %8826 = vmatprep.subr.bf16.mxu0 0
    %8827 = vmatpush2.bf16.msra.mxu0 0
    %8828 = vmatprep.subr.bf16.mxu0 0
    %8829 = vmatpush2.bf16.msra.mxu0 0
    %8830 = vmatprep.mubr.bf16.mxu0 0
    %8831 = vmatmul.mubr.bf16.gmra.mxu0 %v8796
    %v8832 = vpop.f32.mrf.mxu0
    %v8833 = vadd.f32 0.0, %v8832
    %v8834 = vpop.f32.mrf.mxu0
    %v8835 = vpop.f32.mrf.mxu0
    %v8836 = vpop.f32.mrf.mxu0
    %8837 = vdwg.mxu0
    %v8838 = vadd.f32 %v8793, %v8833
    %v8839 = vadd.f32 %v8838, %v335
    %v8840 = vmax.f32 %v8839, 0.0
    %v8841 = vpack.c.bf16 %v8840, %v8840
    %v8843 = vsel %vm5099, %v8841, 0
    %8845 = vmatprep.subr.bf16.mxu0 0
    %8846 = vmatpush1.bf16.msra.mxu0 %v5104
    %8847 = vmatprep.subr.bf16.mxu0 0
    %8848 = vmatpush1.bf16.msra.mxu0 %v5090
    %8849 = vmatprep.subr.bf16.mxu0 0
    %8850 = vmatpush1.bf16.msra.mxu0 %v5089
    %8851 = vmatprep.subr.bf16.mxu0 0
    %8852 = vmatpush1.bf16.msra.mxu0 %v5088
    %8853 = vmatprep.subr.bf16.mxu0 0
    %8854 = vmatpush1.bf16.msra.mxu0 %v5087
    %8855 = vmatprep.subr.bf16.mxu0 0
    %8856 = vmatpush1.bf16.msra.mxu0 %v5086
    %8857 = vmatprep.subr.bf16.mxu0 0
    %8858 = vmatpush1.bf16.msra.mxu0 %v5085
    %8859 = vmatprep.subr.bf16.mxu0 0
    %8860 = vmatpush1.bf16.msra.mxu0 %v5084
    %8861 = vmatprep.subr.bf16.mxu0 0
    %8862 = vmatpush2.bf16.msra.mxu0 0
    %8863 = vmatprep.subr.bf16.mxu0 0
    %8864 = vmatpush2.bf16.msra.mxu0 0
    %8865 = vmatprep.subr.bf16.mxu0 0
    %8866 = vmatpush2.bf16.msra.mxu0 0
    %8867 = vmatprep.subr.bf16.mxu0 0
    %8868 = vmatpush2.bf16.msra.mxu0 0
    %8869 = vmatprep.subr.bf16.mxu0 0
    %8870 = vmatpush2.bf16.msra.mxu0 0
    %8871 = vmatprep.subr.bf16.mxu0 0
    %8872 = vmatpush2.bf16.msra.mxu0 0
    %8873 = vmatprep.subr.bf16.mxu0 0
    %8874 = vmatpush2.bf16.msra.mxu0 0
    %8875 = vmatprep.subr.bf16.mxu0 0
    %8876 = vmatpush2.bf16.msra.mxu0 0
    %8877 = vmatprep.mubr.bf16.mxu0 0
    %8878 = vmatmul.mubr.bf16.gmra.mxu0 %v8843
    %v8879 = vpop.f32.mrf.mxu0
    %v8880 = vadd.f32 %v351, %v8879
    %v8881 = vpop.f32.mrf.mxu0
    %v8882 = vpop.f32.mrf.mxu0
    %v8883 = vpop.f32.mrf.mxu0
    %8884 = vdwg.mxu0
    %v8885 = vmax.f32 %v8880, 0.0
    %v8886 = vpack.c.bf16 %v8885, %v8885
    %v8888 = vsel %vm5181, %v8886, 0
    %8890 = vmatprep.subr.bf16.mxu0 0
    %8891 = vmatpush1.bf16.msra.mxu0 0
    %8892 = vmatprep.subr.bf16.mxu0 0
    %8893 = vmatpush1.bf16.msra.mxu0 0
    %8894 = vmatprep.subr.bf16.mxu0 0
    %8895 = vmatpush1.bf16.msra.mxu0 %v5187
    %8896 = vmatprep.subr.bf16.mxu0 0
    %8897 = vmatpush1.bf16.msra.mxu0 %v5174
    %8898 = vmatprep.subr.bf16.mxu0 0
    %8899 = vmatpush1.bf16.msra.mxu0 %v5173
    %8900 = vmatprep.subr.bf16.mxu0 0
    %8901 = vmatpush1.bf16.msra.mxu0 %v5172
    %8902 = vmatprep.subr.bf16.mxu0 0
    %8903 = vmatpush1.bf16.msra.mxu0 %v5171
    %8904 = vmatprep.subr.bf16.mxu0 0
    %8905 = vmatpush1.bf16.msra.mxu0 %v5170
    %8906 = vmatprep.subr.bf16.mxu0 0
    %8907 = vmatpush2.bf16.msra.mxu0 0
    %8908 = vmatprep.subr.bf16.mxu0 0
    %8909 = vmatpush2.bf16.msra.mxu0 0
    %8910 = vmatprep.subr.bf16.mxu0 0
    %8911 = vmatpush2.bf16.msra.mxu0 0
    %8912 = vmatprep.subr.bf16.mxu0 0
    %8913 = vmatpush2.bf16.msra.mxu0 0
    %8914 = vmatprep.subr.bf16.mxu0 0
    %8915 = vmatpush2.bf16.msra.mxu0 0
    %8916 = vmatprep.subr.bf16.mxu0 0
    %8917 = vmatpush2.bf16.msra.mxu0 0
    %8918 = vmatprep.subr.bf16.mxu0 0
    %8919 = vmatpush2.bf16.msra.mxu0 0
    %8920 = vmatprep.subr.bf16.mxu0 0
    %8921 = vmatpush2.bf16.msra.mxu0 0
    %8922 = vmatprep.mubr.bf16.mxu0 0
    %8923 = vmatmul.mubr.bf16.gmra.mxu0 %v8888
    %v8924 = vpop.f32.mrf.mxu0
    %v8925 = vadd.f32 %v363, %v8924
    %v8926 = vpop.f32.mrf.mxu0
    %v8927 = vpop.f32.mrf.mxu0
    %v8928 = vpop.f32.mrf.mxu0
    %8929 = vdwg.mxu0
    %v8930 = vsel %vm5229, %v8925, -inf
    %8931 = vmax.xlane.f32.xlu0 %v8930
    %v8932 = vpop.xlane.xlu0 %8931
    %v8933 = vsub.f32 %v8925, %v8932
    %v8934 = vmul.f32 %v8933, 1.442695
    %v8935 = vpow.pop %v8934
    %v8936 = vsel %vm5229, %v8935, 0.0
    %8937 = vadd.xlane.f32.xlu0 %v8936
    %v8938 = vpop.xlane.xlu0 %8937
    %v8939 = vlog2.pop %v8938
    %v8940 = vmul.f32 %v8939, 0.6931472
    %v8941 = vsub.f32 %v8933, %v8940
    %s8942 = scalar_lea.vmem [#allocation2], 1
    %8943 = vst.msk [vmem:[%s8942] sm:$0x1] %vm5229, %v8941
    // Predicated region
    $region54: #{cifar10_net_simple_forward.1} parent=1 // pred_check
      _
    $region55: #{cifar10_net_simple_forward.1} parent=1 // pred_check_branch
      %8945 = sbr.rel (0) target = $region57
    $region56: #{cifar10_net_simple_forward.1} parent=1 // pred_region
      %s8947 = ssub.s32 32, 32
      %8948 = vsyncadd [#allocation3], %s8947
      %s8949 = sshll.u32 [#allocation2], 4
      %s8950 = int_to_ptr.vmem [resolvable:$true] %s8949
      %8955 = dma.vmem_to_hbm [thread:$0]  %s8950, 32, %s13, [#allocation3], 16, 16, 1
    $region57: #{cifar10_net_simple_forward.1} parent=1 // pred_fallthru
      _
    // Predicated region
    $region58: #{cifar10_net_simple_forward.1} parent=1 // pred_check
      _
    $region59: #{cifar10_net_simple_forward.1} parent=1 // pred_check_branch
      %8957 = sbr.rel (0) target = $region61
    $region60: #{cifar10_net_simple_forward.1} parent=1 // pred_region
      %8958 = dma.done [#allocation3], 32
    $region61: #{cifar10_net_simple_forward.1} parent=1 // pred_fallthru
      _
    %8959 = vsyncpa [#allocation3], 1

</llo_original>
